<compile_context>
chip_gen: v7x
topology: tpu7x:2x2x1
jax: 0.10.0
libtpu: 0.0.40
codegen_flags: <defaults>
</compile_context>

<pallas_src>
import jax
import jax.numpy as jnp
from jax.experimental import pallas as pl
from jax.experimental.pallas import tpu as pltpu

FEAT_CH = 2048          # flattened feature size expected by Linear(2048, 512)
KH = KW = 3             # conv stem kernel size (stride 1, pad 1 => "same")
OUT_W = 128             # lane-dense packed output: emb [0,64) | logit @ 64 | 0
EMB_D = 64
NC = 512                # FEAT_CH chunk per stem step (temp/VALU relief)


# ----------------------------------------------------------------------------
# Pallas kernel: streamed conv-stem + GAP accumulate, MLP head in epilogue
# ----------------------------------------------------------------------------
def siamese_kernel(patches_ref, wc_ref,
                   w1_ref, b1_ref, w2_ref, b2_ref, w3_ref, b3_ref,
                   w4_ref, b4_ref, w5_ref, b5_ref,
                   out_ref, acc_ref):
    p_idx = pl.program_id(1)
    n_p = pl.num_programs(1)

    @pl.when(p_idx == 0)
    def _init():
        acc_ref[...] = jnp.zeros_like(acc_ref)

    # --- backbone stem: conv as im2col matmul (bias folded into ones column),
    #     ReLU, global-average-pool running sum (1/P folded into w1).
    #     Processed in FEAT_CH chunks of NC to keep the f32 temp small. ------
    patches = patches_ref[...]                               # [TB, TP, KPAD] bf16
    tb, tp, kpad = patches.shape
    p2d = patches.reshape(tb * tp, kpad)
    for n0 in range(0, FEAT_CH, NC):
        conv = jnp.dot(p2d, wc_ref[:, n0:n0 + NC],
                       preferred_element_type=jnp.float32)   # [tb*tp, NC] f32
        conv = jnp.maximum(conv, 0.0)
        acc_ref[:, n0:n0 + NC] += conv.reshape(tb, tp, NC).sum(axis=1)

    # --- MLP head: only once, after the last patch tile ---------------------
    @pl.when(p_idx == n_p - 1)
    def _head():
        feat = acc_ref[...].astype(jnp.bfloat16)             # [TB, 2048]
        # embedding MLP (Dropout == identity at inference); bf16 in, f32 acc
        h = jnp.maximum(
            jnp.dot(feat, w1_ref[...], preferred_element_type=jnp.float32)
            + b1_ref[...], 0.0)
        h = jnp.maximum(
            jnp.dot(h.astype(jnp.bfloat16), w2_ref[...],
                    preferred_element_type=jnp.float32) + b2_ref[...], 0.0)
        # w3/b3 packed into 128 lanes: embedding lands in lanes [0, EMB_D)
        emb128 = (jnp.dot(h.astype(jnp.bfloat16), w3_ref[...],
                          preferred_element_type=jnp.float32) + b3_ref[...])
        # classifier head on the embedding
        c = jnp.maximum(
            jnp.dot(emb128[:, :EMB_D].astype(jnp.bfloat16), w4_ref[...],
                    preferred_element_type=jnp.float32) + b4_ref[...], 0.0)
        # w5/b5 packed into 128 lanes: logit lands at lane EMB_D, rest zero
        logit128 = (jnp.dot(c.astype(jnp.bfloat16), w5_ref[...],
                            preferred_element_type=jnp.float32) + b5_ref[...])
        out_ref[...] = (emb128 + logit128).reshape(out_ref.shape)


# ----------------------------------------------------------------------------
# Glue: im2col for the NCHW input (stride 1, pad 1), bf16, ones bias column,
# K+1 padded to KPAD
# ----------------------------------------------------------------------------
def im2col_nchw(x, kpad):
    B, C, H, W = x.shape
    xp = jnp.pad(x, ((0, 0), (0, 0), (1, 1), (1, 1)))
    cols = []
    for c in range(C):                       # channel-major, (i, j) minor —
        for i in range(KH):                  # matches flattened conv weight
            for j in range(KW):
                cols.append(xp[:, c, i:i + H, j:j + W])      # [B, H, W]
    cols.append(jnp.ones((B, H, W), x.dtype))                # folded-bias column
    k1 = C * KH * KW + 1
    patches = jnp.stack(cols, axis=-1).reshape(B, H * W, k1)
    if kpad > k1:
        patches = jnp.pad(patches, ((0, 0), (0, 0), (0, kpad - k1)))
    return patches.astype(jnp.bfloat16)


def _pick_batch_tile(b, target=8):
    """Largest divisor of b (<= target) that keeps the parallel batch grid
    extent >= 2 (both v7x TensorCores busy)."""
    if b == 1:
        return 1
    best = 1
    for t in range(1, min(b, target) + 1):
        if b % t == 0 and b // t >= 2:
            best = t
    return best


def _pick_row_tile(p, tb, kpad, target=512, budget=20 * 1024 * 1024):
    """Largest multiple-of-8 divisor of p (<= target) whose per-step temps fit
    the VMEM budget: double-buffered bf16 patch tile + ~3x the f32 chunk."""
    if p <= 8:
        return p
    best = None
    for t in range(8, min(p, target) + 1, 8):
        if p % t:
            continue
        footprint = 2 * tb * t * kpad * 2 + 3 * tb * t * NC * 4
        if footprint <= budget:
            best = t
    # TODO(synk): if p has no multiple-of-8 divisor <= target this falls back
    # to TP=p; switch to cdiv tiling with masked partial rows for huge images.
    return best if best is not None else p


# ----------------------------------------------------------------------------
# Wrapper
# ----------------------------------------------------------------------------
def siamese_forward(x, params):
    B, C, H, W = x.shape
    P = H * W
    K = C * KH * KW
    KPAD = max(32, ((K + 1 + 31) // 32) * 32)

    patches = im2col_nchw(x, KPAD)                           # [B, P, KPAD] bf16

    # layout plumbing: conv weight rows padded to KPAD with bc folded into the
    # ones-column row K; bf16 matmul inputs; GAP 1/P folded into w1;
    # w3/b3 and w5/b5 packed into 128-lane slabs (emb lanes [0,64), logit @ 64).
    wc = jnp.zeros((KPAD, FEAT_CH), jnp.float32)
    wc = wc.at[:K, :].set(params['wc'])
    wc = wc.at[K, :].set(params['bc'][0])
    wc = wc.astype(jnp.bfloat16)
    w1 = (params['w1'] * (1.0 / float(P))).astype(jnp.bfloat16)
    w2 = params['w2'].astype(jnp.bfloat16)
    w3 = jnp.zeros((params['w3'].shape[0], OUT_W), jnp.float32)
    w3 = w3.at[:, :EMB_D].set(params['w3']).astype(jnp.bfloat16)
    b3 = jnp.zeros((1, OUT_W), jnp.float32).at[:, :EMB_D].set(params['b3'])
    w4 = params['w4'].astype(jnp.bfloat16)
    w5 = jnp.zeros((params['w5'].shape[0], OUT_W), jnp.float32)
    w5 = w5.at[:, EMB_D:EMB_D + 1].set(params['w5']).astype(jnp.bfloat16)
    b5 = jnp.zeros((1, OUT_W), jnp.float32).at[:, EMB_D:EMB_D + 1].set(params['b5'])

    args = (patches, wc,
            w1, params['b1'], w2, params['b2'], w3, b3,
            w4, params['b4'], w5, b5)

    TB = _pick_batch_tile(B)
    TP = _pick_row_tile(P, TB, KPAD)
    grid = (B // TB, P // TP)

    resident_kwargs = {}
    if hasattr(pl, "Buffered"):                 # single-buffer resident weights
        resident_kwargs["pipeline_mode"] = pl.Buffered(1)

    def resident(arr):  # whole-array, same block every step -> stays in VMEM
        return pl.BlockSpec(arr.shape, lambda b, p: (0, 0), **resident_kwargs)

    in_specs = [pl.BlockSpec((TB, TP, KPAD), lambda b, p: (b, p, 0))]
    in_specs += [resident(a) for a in args[1:]]

    out = pl.pallas_call(
        siamese_kernel,
        out_shape=jax.ShapeDtypeStruct((B, 1, OUT_W), jnp.float32),
        grid_spec=pltpu.PrefetchScalarGridSpec(
            num_scalar_prefetch=0,
            grid=grid,
            in_specs=in_specs,
            out_specs=pl.BlockSpec((TB, 1, OUT_W), lambda b, p: (b, 0, 0)),
            scratch_shapes=[pltpu.VMEM((TB, FEAT_CH), jnp.float32)]),
        compiler_params=pltpu.CompilerParams(
            dimension_semantics=("parallel", "arbitrary"),
            vmem_limit_bytes=32 * 1024 * 1024),
    )(*args)

    out = out.reshape(B, OUT_W)
    emb = out[:, :EMB_D]
    logit = out[:, EMB_D:EMB_D + 1]
    return emb, logit


# ----------------------------------------------------------------------------
# Deterministic parameter init (PyTorch-style U(-1/sqrt(fan_in), 1/sqrt(fan_in)))
# ----------------------------------------------------------------------------
def _linear(key, fan_in, fan_out):
    kw, kb = jax.random.split(key)
    bound = 1.0 / float(fan_in) ** 0.5
    w = jax.random.uniform(kw, (fan_in, fan_out), jnp.float32, -bound, bound)
    b = jax.random.uniform(kb, (1, fan_out), jnp.float32, -bound, bound)
    return w, b


def init_params(key, c_in):
    ks = jax.random.split(key, 6)
    p = {}
    p['wc'], p['bc'] = _linear(ks[0], c_in * KH * KW, FEAT_CH)   # conv stem
    p['w1'], p['b1'] = _linear(ks[1], FEAT_CH, 512)
    p['w2'], p['b2'] = _linear(ks[2], 512, 256)
    p['w3'], p['b3'] = _linear(ks[3], 256, 64)
    p['w4'], p['b4'] = _linear(ks[4], 64, 32)
    p['w5'], p['b5'] = _linear(ks[5], 32, 1)
    return p


if __name__ == "__main__":
    key = jax.random.PRNGKey(0)
    k_x, k_p = jax.random.split(key)

    B, C, H, W = 2, 3, 16, 16                 # small NCHW image batch
    x = jax.random.normal(k_x, (B, C, H, W), jnp.float32)
    params = init_params(k_p, C)

    emb, logit = jax.jit(siamese_forward)(x, params)
    jax.block_until_ready((emb, logit))

    assert emb.shape == (B, 64) and emb.dtype == jnp.float32
    assert logit.shape == (B, 1) and logit.dtype == jnp.float32
    assert bool(jnp.all(jnp.isfinite(emb))) and bool(jnp.all(jnp.isfinite(logit)))
    print("KERNEL_OK")
</pallas_src>

<mosaic_0001>
module attributes {stable_mosaic.version = 11 : i64} {
  func.func @siamese_kernel(%arg0: i32, %arg1: i32, %arg2: memref<1x256x32xbf16, #tpu.memory_space<vmem>>, %arg3: memref<32x2048xbf16, #tpu.memory_space<vmem>>, %arg4: memref<2048x512xbf16, #tpu.memory_space<vmem>>, %arg5: memref<1x512xf32, #tpu.memory_space<vmem>>, %arg6: memref<512x256xbf16, #tpu.memory_space<vmem>>, %arg7: memref<1x256xf32, #tpu.memory_space<vmem>>, %arg8: memref<256x128xbf16, #tpu.memory_space<vmem>>, %arg9: memref<1x128xf32, #tpu.memory_space<vmem>>, %arg10: memref<64x32xbf16, #tpu.memory_space<vmem>>, %arg11: memref<1x32xf32, #tpu.memory_space<vmem>>, %arg12: memref<32x128xbf16, #tpu.memory_space<vmem>>, %arg13: memref<1x128xf32, #tpu.memory_space<vmem>>, %arg14: memref<1x1x128xf32, #tpu.memory_space<vmem>>, %arg15: memref<1x2048xf32, #tpu.memory_space<vmem>>) attributes {dimension_semantics = [#tpu.dimension_semantics<parallel>, #tpu.dimension_semantics<arbitrary>], iteration_bounds = array<i64: 2, 1>, scalar_prefetch = 0 : i64, scratch_operands = 1 : i64, tpu.core_type = #tpu.core_type<tc>, window_params = [{transform_indices = @transform_0, window_bounds = array<i64: 1, 256, 32>}, {pipeline_mode = #tpu.pipeline_mode<synchronous>, transform_indices = @transform_1, window_bounds = array<i64: 32, 2048>}, {pipeline_mode = #tpu.pipeline_mode<synchronous>, transform_indices = @transform_2, window_bounds = array<i64: 2048, 512>}, {pipeline_mode = #tpu.pipeline_mode<synchronous>, transform_indices = @transform_3, window_bounds = array<i64: 1, 512>}, {pipeline_mode = #tpu.pipeline_mode<synchronous>, transform_indices = @transform_4, window_bounds = array<i64: 512, 256>}, {pipeline_mode = #tpu.pipeline_mode<synchronous>, transform_indices = @transform_5, window_bounds = array<i64: 1, 256>}, {pipeline_mode = #tpu.pipeline_mode<synchronous>, transform_indices = @transform_6, window_bounds = array<i64: 256, 128>}, {pipeline_mode = #tpu.pipeline_mode<synchronous>, transform_indices = @transform_7, window_bounds = array<i64: 1, 128>}, {pipeline_mode = #tpu.pipeline_mode<synchronous>, transform_indices = @transform_8, window_bounds = array<i64: 64, 32>}, {pipeline_mode = #tpu.pipeline_mode<synchronous>, transform_indices = @transform_9, window_bounds = array<i64: 1, 32>}, {pipeline_mode = #tpu.pipeline_mode<synchronous>, transform_indices = @transform_10, window_bounds = array<i64: 32, 128>}, {pipeline_mode = #tpu.pipeline_mode<synchronous>, transform_indices = @transform_11, window_bounds = array<i64: 1, 128>}, {transform_indices = @transform_12, window_bounds = array<i64: 1, 1, 128>}]} {
    %c0_i32 = arith.constant 0 : i32
    %0 = arith.cmpi eq, %arg1, %c0_i32 : i32
    %1 = arith.extui %0 : i1 to i32
    %c0_i32_0 = arith.constant 0 : i32
    %2 = arith.cmpi ne, %1, %c0_i32_0 : i32
    scf.if %2 {
      %cst_37 = arith.constant 0.000000e+00 : f32
      %44 = vector.broadcast %cst_37 : f32 to vector<1x2048xf32>
      %c0_38 = arith.constant 0 : index
      %c0_39 = arith.constant 0 : index
      %45 = vector.load %arg15[%c0_38, %c0_39] : memref<1x2048xf32, #tpu.memory_space<vmem>>, vector<1x2048xf32>
      tpu.vector_store %arg15[%c0_38, %c0_39], %44 {strides = array<i32>} : memref<1x2048xf32, #tpu.memory_space<vmem>>, vector<1x2048xf32>,
    } else {
    }
    %c0 = arith.constant 0 : index
    %c0_1 = arith.constant 0 : index
    %c0_2 = arith.constant 0 : index
    %3 = vector.load %arg2[%c0, %c0_1, %c0_2] : memref<1x256x32xbf16, #tpu.memory_space<vmem>>, vector<1x256x32xbf16>
    %4 = vector.shape_cast %3 : vector<1x256x32xbf16> to vector<256x32xbf16>
    %c0_3 = arith.constant 0 : index
    %c0_4 = arith.constant 0 : index
    %5 = vector.load %arg3[%c0_3, %c0_4] : memref<32x2048xbf16, #tpu.memory_space<vmem>>, vector<32x512xbf16>
    %cst = arith.constant dense<0.000000e+00> : vector<256x512xf32>
    %6 = tpu.matmul %4, %5, %cst {dimension_numbers = #tpu.dot_dimension_numbers<[1], [0], [0], [1], [0, 0, 1, 1], [], []>} : vector<256x32xbf16>, vector<32x512xbf16>, vector<256x512xf32> -> vector<256x512xf32>
    %cst_5 = arith.constant 0.000000e+00 : f32
    %7 = vector.broadcast %cst_5 : f32 to vector<256x512xf32>
    %8 = arith.maximumf %6, %7 : vector<256x512xf32>
    %c0_6 = arith.constant 0 : index
    %c0_7 = arith.constant 0 : index
    %9 = vector.load %arg15[%c0_6, %c0_7] : memref<1x2048xf32, #tpu.memory_space<vmem>>, vector<1x512xf32>
    %10 = vector.shape_cast %8 : vector<256x512xf32> to vector<1x256x512xf32>
    %cst_8 = arith.constant dense<0.000000e+00> : vector<1x512xf32>
    %11 = vector.multi_reduction <add>, %10, %cst_8 [1] : vector<1x256x512xf32> to vector<1x512xf32>
    %12 = arith.addf %9, %11 : vector<1x512xf32>
    %c0_9 = arith.constant 0 : index
    %c0_10 = arith.constant 0 : index
    %13 = vector.load %arg15[%c0_9, %c0_10] : memref<1x2048xf32, #tpu.memory_space<vmem>>, vector<1x512xf32>
    tpu.vector_store %arg15[%c0_9, %c0_10], %12 {strides = array<i32>} : memref<1x2048xf32, #tpu.memory_space<vmem>>, vector<1x512xf32>,
    %c0_11 = arith.constant 0 : index
    %c512 = arith.constant 512 : index
    %14 = vector.load %arg3[%c0_11, %c512] : memref<32x2048xbf16, #tpu.memory_space<vmem>>, vector<32x512xbf16>
    %cst_12 = arith.constant dense<0.000000e+00> : vector<256x512xf32>
    %15 = tpu.matmul %4, %14, %cst_12 {dimension_numbers = #tpu.dot_dimension_numbers<[1], [0], [0], [1], [0, 0, 1, 1], [], []>} : vector<256x32xbf16>, vector<32x512xbf16>, vector<256x512xf32> -> vector<256x512xf32>
    %cst_13 = arith.constant 0.000000e+00 : f32
    %16 = vector.broadcast %cst_13 : f32 to vector<256x512xf32>
    %17 = arith.maximumf %15, %16 : vector<256x512xf32>
    %c0_14 = arith.constant 0 : index
    %c512_15 = arith.constant 512 : index
    %18 = vector.load %arg15[%c0_14, %c512_15] : memref<1x2048xf32, #tpu.memory_space<vmem>>, vector<1x512xf32>
    %19 = vector.shape_cast %17 : vector<256x512xf32> to vector<1x256x512xf32>
    %cst_16 = arith.constant dense<0.000000e+00> : vector<1x512xf32>
    %20 = vector.multi_reduction <add>, %19, %cst_16 [1] : vector<1x256x512xf32> to vector<1x512xf32>
    %21 = arith.addf %18, %20 : vector<1x512xf32>
    %c0_17 = arith.constant 0 : index
    %c512_18 = arith.constant 512 : index
    %22 = vector.load %arg15[%c0_17, %c512_18] : memref<1x2048xf32, #tpu.memory_space<vmem>>, vector<1x512xf32>
    tpu.vector_store %arg15[%c0_17, %c512_18], %21 {strides = array<i32>} : memref<1x2048xf32, #tpu.memory_space<vmem>>, vector<1x512xf32>,
    %c0_19 = arith.constant 0 : index
    %c1024 = arith.constant 1024 : index
    %23 = vector.load %arg3[%c0_19, %c1024] : memref<32x2048xbf16, #tpu.memory_space<vmem>>, vector<32x512xbf16>
    %cst_20 = arith.constant dense<0.000000e+00> : vector<256x512xf32>
    %24 = tpu.matmul %4, %23, %cst_20 {dimension_numbers = #tpu.dot_dimension_numbers<[1], [0], [0], [1], [0, 0, 1, 1], [], []>} : vector<256x32xbf16>, vector<32x512xbf16>, vector<256x512xf32> -> vector<256x512xf32>
    %cst_21 = arith.constant 0.000000e+00 : f32
    %25 = vector.broadcast %cst_21 : f32 to vector<256x512xf32>
    %26 = arith.maximumf %24, %25 : vector<256x512xf32>
    %c0_22 = arith.constant 0 : index
    %c1024_23 = arith.constant 1024 : index
    %27 = vector.load %arg15[%c0_22, %c1024_23] : memref<1x2048xf32, #tpu.memory_space<vmem>>, vector<1x512xf32>
    %28 = vector.shape_cast %26 : vector<256x512xf32> to vector<1x256x512xf32>
    %cst_24 = arith.constant dense<0.000000e+00> : vector<1x512xf32>
    %29 = vector.multi_reduction <add>, %28, %cst_24 [1] : vector<1x256x512xf32> to vector<1x512xf32>
    %30 = arith.addf %27, %29 : vector<1x512xf32>
    %c0_25 = arith.constant 0 : index
    %c1024_26 = arith.constant 1024 : index
    %31 = vector.load %arg15[%c0_25, %c1024_26] : memref<1x2048xf32, #tpu.memory_space<vmem>>, vector<1x512xf32>
    tpu.vector_store %arg15[%c0_25, %c1024_26], %30 {strides = array<i32>} : memref<1x2048xf32, #tpu.memory_space<vmem>>, vector<1x512xf32>,
    %c0_27 = arith.constant 0 : index
    %c1536 = arith.constant 1536 : index
    %32 = vector.load %arg3[%c0_27, %c1536] : memref<32x2048xbf16, #tpu.memory_space<vmem>>, vector<32x512xbf16>
    %cst_28 = arith.constant dense<0.000000e+00> : vector<256x512xf32>
    %33 = tpu.matmul %4, %32, %cst_28 {dimension_numbers = #tpu.dot_dimension_numbers<[1], [0], [0], [1], [0, 0, 1, 1], [], []>} : vector<256x32xbf16>, vector<32x512xbf16>, vector<256x512xf32> -> vector<256x512xf32>
    %cst_29 = arith.constant 0.000000e+00 : f32
    %34 = vector.broadcast %cst_29 : f32 to vector<256x512xf32>
    %35 = arith.maximumf %33, %34 : vector<256x512xf32>
    %c0_30 = arith.constant 0 : index
    %c1536_31 = arith.constant 1536 : index
    %36 = vector.load %arg15[%c0_30, %c1536_31] : memref<1x2048xf32, #tpu.memory_space<vmem>>, vector<1x512xf32>
    %37 = vector.shape_cast %35 : vector<256x512xf32> to vector<1x256x512xf32>
    %cst_32 = arith.constant dense<0.000000e+00> : vector<1x512xf32>
    %38 = vector.multi_reduction <add>, %37, %cst_32 [1] : vector<1x256x512xf32> to vector<1x512xf32>
    %39 = arith.addf %36, %38 : vector<1x512xf32>
    %c0_33 = arith.constant 0 : index
    %c1536_34 = arith.constant 1536 : index
    %40 = vector.load %arg15[%c0_33, %c1536_34] : memref<1x2048xf32, #tpu.memory_space<vmem>>, vector<1x512xf32>
    tpu.vector_store %arg15[%c0_33, %c1536_34], %39 {strides = array<i32>} : memref<1x2048xf32, #tpu.memory_space<vmem>>, vector<1x512xf32>,
    %c0_i32_35 = arith.constant 0 : i32
    %41 = arith.cmpi eq, %arg1, %c0_i32_35 : i32
    %42 = arith.extui %41 : i1 to i32
    %c0_i32_36 = arith.constant 0 : i32
    %43 = arith.cmpi ne, %42, %c0_i32_36 : i32
    scf.if %43 {
      %c0_37 = arith.constant 0 : index
      %c0_38 = arith.constant 0 : index
      %44 = vector.load %arg15[%c0_37, %c0_38] : memref<1x2048xf32, #tpu.memory_space<vmem>>, vector<1x2048xf32>
      %45 = arith.truncf %44 : vector<1x2048xf32> to vector<1x2048xbf16>
      %c0_39 = arith.constant 0 : index
      %c0_40 = arith.constant 0 : index
      %46 = vector.load %arg4[%c0_39, %c0_40] : memref<2048x512xbf16, #tpu.memory_space<vmem>>, vector<2048x512xbf16>
      %cst_41 = arith.constant dense<0.000000e+00> : vector<1x512xf32>
      %47 = tpu.matmul %45, %46, %cst_41 {dimension_numbers = #tpu.dot_dimension_numbers<[1], [0], [0], [1], [0, 0, 1, 1], [], []>} : vector<1x2048xbf16>, vector<2048x512xbf16>, vector<1x512xf32> -> vector<1x512xf32>
      %c0_42 = arith.constant 0 : index
      %c0_43 = arith.constant 0 : index
      %48 = vector.load %arg5[%c0_42, %c0_43] : memref<1x512xf32, #tpu.memory_space<vmem>>, vector<1x512xf32>
      %49 = arith.addf %47, %48 : vector<1x512xf32>
      %cst_44 = arith.constant 0.000000e+00 : f32
      %50 = vector.broadcast %cst_44 : f32 to vector<1x512xf32>
      %51 = arith.maximumf %49, %50 : vector<1x512xf32>
      %52 = arith.truncf %51 : vector<1x512xf32> to vector<1x512xbf16>
      %c0_45 = arith.constant 0 : index
      %c0_46 = arith.constant 0 : index
      %53 = vector.load %arg6[%c0_45, %c0_46] : memref<512x256xbf16, #tpu.memory_space<vmem>>, vector<512x256xbf16>
      %cst_47 = arith.constant dense<0.000000e+00> : vector<1x256xf32>
      %54 = tpu.matmul %52, %53, %cst_47 {dimension_numbers = #tpu.dot_dimension_numbers<[1], [0], [0], [1], [0, 0, 1, 1], [], []>} : vector<1x512xbf16>, vector<512x256xbf16>, vector<1x256xf32> -> vector<1x256xf32>
      %c0_48 = arith.constant 0 : index
      %c0_49 = arith.constant 0 : index
      %55 = vector.load %arg7[%c0_48, %c0_49] : memref<1x256xf32, #tpu.memory_space<vmem>>, vector<1x256xf32>
      %56 = arith.addf %54, %55 : vector<1x256xf32>
      %cst_50 = arith.constant 0.000000e+00 : f32
      %57 = vector.broadcast %cst_50 : f32 to vector<1x256xf32>
      %58 = arith.maximumf %56, %57 : vector<1x256xf32>
      %59 = arith.truncf %58 : vector<1x256xf32> to vector<1x256xbf16>
      %c0_51 = arith.constant 0 : index
      %c0_52 = arith.constant 0 : index
      %60 = vector.load %arg8[%c0_51, %c0_52] : memref<256x128xbf16, #tpu.memory_space<vmem>>, vector<256x128xbf16>
      %cst_53 = arith.constant dense<0.000000e+00> : vector<1x128xf32>
      %61 = tpu.matmul %59, %60, %cst_53 {dimension_numbers = #tpu.dot_dimension_numbers<[1], [0], [0], [1], [0, 0, 1, 1], [], []>} : vector<1x256xbf16>, vector<256x128xbf16>, vector<1x128xf32> -> vector<1x128xf32>
      %c0_54 = arith.constant 0 : index
      %c0_55 = arith.constant 0 : index
      %62 = vector.load %arg9[%c0_54, %c0_55] : memref<1x128xf32, #tpu.memory_space<vmem>>, vector<1x128xf32>
      %63 = arith.addf %61, %62 : vector<1x128xf32>
      %64 = vector.extract_strided_slice %63 {offsets = [0, 0], sizes = [1, 64], strides = [1, 1]} : vector<1x128xf32> to vector<1x64xf32>
      %65 = arith.truncf %64 : vector<1x64xf32> to vector<1x64xbf16>
      %c0_56 = arith.constant 0 : index
      %c0_57 = arith.constant 0 : index
      %66 = vector.load %arg10[%c0_56, %c0_57] : memref<64x32xbf16, #tpu.memory_space<vmem>>, vector<64x32xbf16>
      %cst_58 = arith.constant dense<0.000000e+00> : vector<1x32xf32>
      %67 = tpu.matmul %65, %66, %cst_58 {dimension_numbers = #tpu.dot_dimension_numbers<[1], [0], [0], [1], [0, 0, 1, 1], [], []>} : vector<1x64xbf16>, vector<64x32xbf16>, vector<1x32xf32> -> vector<1x32xf32>
      %c0_59 = arith.constant 0 : index
      %c0_60 = arith.constant 0 : index
      %68 = vector.load %arg11[%c0_59, %c0_60] : memref<1x32xf32, #tpu.memory_space<vmem>>, vector<1x32xf32>
      %69 = arith.addf %67, %68 : vector<1x32xf32>
      %cst_61 = arith.constant 0.000000e+00 : f32
      %70 = vector.broadcast %cst_61 : f32 to vector<1x32xf32>
      %71 = arith.maximumf %69, %70 : vector<1x32xf32>
      %72 = arith.truncf %71 : vector<1x32xf32> to vector<1x32xbf16>
      %c0_62 = arith.constant 0 : index
      %c0_63 = arith.constant 0 : index
      %73 = vector.load %arg12[%c0_62, %c0_63] : memref<32x128xbf16, #tpu.memory_space<vmem>>, vector<32x128xbf16>
      %cst_64 = arith.constant dense<0.000000e+00> : vector<1x128xf32>
      %74 = tpu.matmul %72, %73, %cst_64 {dimension_numbers = #tpu.dot_dimension_numbers<[1], [0], [0], [1], [0, 0, 1, 1], [], []>} : vector<1x32xbf16>, vector<32x128xbf16>, vector<1x128xf32> -> vector<1x128xf32>
      %c0_65 = arith.constant 0 : index
      %c0_66 = arith.constant 0 : index
      %75 = vector.load %arg13[%c0_65, %c0_66] : memref<1x128xf32, #tpu.memory_space<vmem>>, vector<1x128xf32>
      %76 = arith.addf %74, %75 : vector<1x128xf32>
      %77 = arith.addf %63, %76 : vector<1x128xf32>
      %78 = vector.shape_cast %77 : vector<1x128xf32> to vector<1x1x128xf32>
      %c0_67 = arith.constant 0 : index
      %c0_68 = arith.constant 0 : index
      %c0_69 = arith.constant 0 : index
      %79 = vector.load %arg14[%c0_67, %c0_68, %c0_69] : memref<1x1x128xf32, #tpu.memory_space<vmem>>, vector<1x1x128xf32>
      tpu.vector_store %arg14[%c0_67, %c0_68, %c0_69], %78 {strides = array<i32>} : memref<1x1x128xf32, #tpu.memory_space<vmem>>, vector<1x1x128xf32>,
    } else {
    }
    return
  }
  func.func @transform_0(%arg0: i32, %arg1: i32) -> (i32, i32, i32) {
    %c0_i32 = arith.constant 0 : i32
    %c0_i32_0 = arith.constant 0 : i32
    return %arg0, %arg1, %c0_i32 : i32, i32, i32
  }
  func.func @transform_1(%arg0: i32, %arg1: i32) -> (i32, i32) {
    %c0_i32 = arith.constant 0 : i32
    %c0_i32_0 = arith.constant 0 : i32
    %c0_i32_1 = arith.constant 0 : i32
    return %c0_i32, %c0_i32_0 : i32, i32
  }
  func.func @transform_2(%arg0: i32, %arg1: i32) -> (i32, i32) {
    %c0_i32 = arith.constant 0 : i32
    %c0_i32_0 = arith.constant 0 : i32
    %c0_i32_1 = arith.constant 0 : i32
    return %c0_i32, %c0_i32_0 : i32, i32
  }
  func.func @transform_3(%arg0: i32, %arg1: i32) -> (i32, i32) {
    %c0_i32 = arith.constant 0 : i32
    %c0_i32_0 = arith.constant 0 : i32
    %c0_i32_1 = arith.constant 0 : i32
    return %c0_i32, %c0_i32_0 : i32, i32
  }
  func.func @transform_4(%arg0: i32, %arg1: i32) -> (i32, i32) {
    %c0_i32 = arith.constant 0 : i32
    %c0_i32_0 = arith.constant 0 : i32
    %c0_i32_1 = arith.constant 0 : i32
    return %c0_i32, %c0_i32_0 : i32, i32
  }
  func.func @transform_5(%arg0: i32, %arg1: i32) -> (i32, i32) {
    %c0_i32 = arith.constant 0 : i32
    %c0_i32_0 = arith.constant 0 : i32
    %c0_i32_1 = arith.constant 0 : i32
    return %c0_i32, %c0_i32_0 : i32, i32
  }
  func.func @transform_6(%arg0: i32, %arg1: i32) -> (i32, i32) {
    %c0_i32 = arith.constant 0 : i32
    %c0_i32_0 = arith.constant 0 : i32
    %c0_i32_1 = arith.constant 0 : i32
    return %c0_i32, %c0_i32_0 : i32, i32
  }
  func.func @transform_7(%arg0: i32, %arg1: i32) -> (i32, i32) {
    %c0_i32 = arith.constant 0 : i32
    %c0_i32_0 = arith.constant 0 : i32
    %c0_i32_1 = arith.constant 0 : i32
    return %c0_i32, %c0_i32_0 : i32, i32
  }
  func.func @transform_8(%arg0: i32, %arg1: i32) -> (i32, i32) {
    %c0_i32 = arith.constant 0 : i32
    %c0_i32_0 = arith.constant 0 : i32
    %c0_i32_1 = arith.constant 0 : i32
    return %c0_i32, %c0_i32_0 : i32, i32
  }
  func.func @transform_9(%arg0: i32, %arg1: i32) -> (i32, i32) {
    %c0_i32 = arith.constant 0 : i32
    %c0_i32_0 = arith.constant 0 : i32
    %c0_i32_1 = arith.constant 0 : i32
    return %c0_i32, %c0_i32_0 : i32, i32
  }
  func.func @transform_10(%arg0: i32, %arg1: i32) -> (i32, i32) {
    %c0_i32 = arith.constant 0 : i32
    %c0_i32_0 = arith.constant 0 : i32
    %c0_i32_1 = arith.constant 0 : i32
    return %c0_i32, %c0_i32_0 : i32, i32
  }
  func.func @transform_11(%arg0: i32, %arg1: i32) -> (i32, i32) {
    %c0_i32 = arith.constant 0 : i32
    %c0_i32_0 = arith.constant 0 : i32
    %c0_i32_1 = arith.constant 0 : i32
    return %c0_i32, %c0_i32_0 : i32, i32
  }
  func.func @transform_12(%arg0: i32, %arg1: i32) -> (i32, i32, i32) {
    %c0_i32 = arith.constant 0 : i32
    %c0_i32_0 = arith.constant 0 : i32
    %c0_i32_1 = arith.constant 0 : i32
    return %arg0, %c0_i32, %c0_i32_0 : i32, i32, i32
  }
}

</mosaic_0001>

<llo_original>
// kernel: siamese_forward.1
$region0: #{siamese_forward.1}
  #allocation0 [shape = 'u32[]', space=smem, size = 0x4, offset = 0x4, fixed_abs, tag = 'smem constant byte address 0x4 - core index']
  #allocation1 [shape = 'u32[144,128]{1,0:T(1,128)}', space=vmem, size = 0x12000, scoped, tag = 'internal scratch']
  #allocation2 [shape = 'f32[1,2048]{1,0:T(1,128)}', space=vmem, size = 0x2000, scoped, tag = 'scratch operand']
  %s0 = inlined_call_operand.vmem [shape: bf16[2,256,32], index: 0, kind: input, shape index: {}]
  %s1 = inlined_call_operand.vmem [shape: bf16[32,2048], index: 1, kind: input, shape index: {}]
  %s2 = inlined_call_operand.vmem [shape: bf16[2048,512], index: 2, kind: input, shape index: {}]
  %s3 = inlined_call_operand.vmem [shape: f32[1,512], index: 3, kind: input, shape index: {}]
  %s4 = inlined_call_operand.vmem [shape: bf16[512,256], index: 4, kind: input, shape index: {}]
  %s5 = inlined_call_operand.vmem [shape: f32[1,256], index: 5, kind: input, shape index: {}]
  %s6 = inlined_call_operand.vmem [shape: bf16[256,128], index: 6, kind: input, shape index: {}]
  %s7 = inlined_call_operand.vmem [shape: f32[1,128], index: 7, kind: input, shape index: {}]
  %s8 = inlined_call_operand.vmem [shape: bf16[64,32], index: 8, kind: input, shape index: {}]
  %s9 = inlined_call_operand.vmem [shape: f32[1,32], index: 9, kind: input, shape index: {}]
  %s10 = inlined_call_operand.vmem [shape: bf16[32,128], index: 10, kind: input, shape index: {}]
  %s11 = inlined_call_operand.vmem [shape: f32[1,128], index: 11, kind: input, shape index: {}]
  %s12 = inlined_call_operand.vmem [shape: f32[2,1,128], index: 12, kind: output, shape index: {}]
  %s13 = sld [smem:[#allocation0]]
  $region89: #{siamese_forward.1} parent=0
    _
  %s15 = ssub.s32 1, %s13
  %s16 = scalar_select 0, %s15, %s13
  loop: start=0, step=1, limit=4
  $region2: #{siamese_forward.1} parent=0 // loop_pre_header
    _
  $region3: #{siamese_forward.1} parent=0 // loop_header
    %s18 = sphi 0, %s22
    %p19 = scmp.ge.s32.totalorder %s18, 4
    %s25 = sphi 0, %s37
    %s26 = sphi 0, %s33
    %s27 = sphi 0, %s25
    %s28 = sphi 0, %s26
    %s29 = sphi 0, %s27
    %s30 = sphi 0, %s28
    %s42 = sphi 0, %s44
    %s45 = sphi 0, %s42
    %s46 = sphi 0, %s45
    %s62 = sphi 0, %s46
    %s66 = sphi 0, %s66
    %s68 = sphi 0, %s66
    %s69 = sphi 0, %s68
    %s83 = sphi 0, %s69
    %s87 = sphi 0, %s87
    %s89 = sphi 0, %s87
    %s90 = sphi 0, %s89
    %s104 = sphi 0, %s90
    %s108 = sphi 0, %s108
    %s110 = sphi 0, %s108
    %s111 = sphi 0, %s110
    %s125 = sphi 0, %s111
    %s129 = sphi 0, %s129
    %s131 = sphi 0, %s129
    %s132 = sphi 0, %s131
    %s146 = sphi 0, %s132
    %s150 = sphi 0, %s150
    %s152 = sphi 0, %s150
    %s153 = sphi 0, %s152
    %s167 = sphi 0, %s153
    %s171 = sphi 0, %s171
    %s173 = sphi 0, %s171
    %s174 = sphi 0, %s173
    %s188 = sphi 0, %s174
    %s192 = sphi 0, %s192
    %s194 = sphi 0, %s192
    %s195 = sphi 0, %s194
    %s209 = sphi 0, %s195
    %s213 = sphi 0, %s213
    %s215 = sphi 0, %s213
    %s216 = sphi 0, %s215
    %s230 = sphi 0, %s216
    %s234 = sphi 0, %s234
    %s236 = sphi 0, %s234
    %s237 = sphi 0, %s236
    %s251 = sphi 0, %s237
    %s255 = sphi 0, %s255
    %s257 = sphi 0, %s255
    %s258 = sphi 0, %s257
    %s272 = sphi 0, %s258
    %s276 = sphi 0, %s276
    %s278 = sphi 0, %s276
    %s279 = sphi 0, %s278
    %s293 = sphi 0, %s279
    %s299 = sphi 0, %s301
    %s302 = sphi 0, %s299
    %s303 = sphi 0, %s302
    %s319 = sphi 0, %s303
  $region4: #{siamese_forward.1} parent=0 // loop_header_branch
    %21 = sbr.rel (%p19) target = $region8
  $region5: #{siamese_forward.1} parent=0 // loop_body
    %s23 = ssub.s32 %s18, 1
    %s24 = ssub.s32 %s18, 2
    %s31 = sadd.s32 1, %s26
    %p32 = scmp.ge.s32.totalorder %s31, 1
    %s33 = scalar_select %p32, 0, %s31
    %s34 = sadd.s32 1, %s25
    %s35 = scalar_select %p32, %s34, %s25
    %p36 = scmp.ge.s32.totalorder %s35, 2
    %s37 = scalar_select %p36, 0, %s35
    %s38 = ssub.s32 %s25, %s37
    %s39 = ssub.s32 %s26, %s33
    %s40 = sor.u32 %s38, %s39
    %p41 = scmp.eq.s32.totalorder %s40, 0
    %s43 = sadd.s32 %s42, 1
    %s44 = scalar_select %p41, %s42, %s43
    %p47 = pneg %p41
    %p48 = scmp.eq.s32.totalorder %s18, 1
    %p49 = por %p47, %p48
    %p50 = scmp.ne.s32.totalorder %s42, %s45
    %p51 = scmp.eq.s32.totalorder %s18, 0
    %p52 = por %p50, %p51
    %p53 = scmp.ne.s32.totalorder %s42, %s45
    %p54 = scmp.eq.s32.totalorder %s23, 1
    %p55 = por %p53, %p54
    %p56 = scmp.ne.s32.totalorder %s45, %s46
    %p57 = scmp.eq.s32.totalorder %s23, 0
    %p58 = por %p56, %p57
    %p59 = scmp.ne.s32.totalorder %s45, %s46
    %p60 = scmp.eq.s32.totalorder %s24, 1
    %p61 = por %p59, %p60
    %p63 = scmp.ne.s32.totalorder %s46, %s62
    %p64 = scmp.eq.s32.totalorder %s24, 0
    %p65 = por %p63, %p64
    %s67 = sadd.s32 %s66, 1
    %p70 = scmp.eq.s32.totalorder %s18, 1
    %p71 = scmp.ne.s32.totalorder %s66, %s68
    %p72 = scmp.eq.s32.totalorder %s18, 0
    %p73 = por %p71, %p72
    %p74 = scmp.ne.s32.totalorder %s66, %s68
    %p75 = scmp.eq.s32.totalorder %s23, 1
    %p76 = por %p74, %p75
    %p77 = scmp.ne.s32.totalorder %s68, %s69
    %p78 = scmp.eq.s32.totalorder %s23, 0
    %p79 = por %p77, %p78
    %p80 = scmp.ne.s32.totalorder %s68, %s69
    %p81 = scmp.eq.s32.totalorder %s24, 1
    %p82 = por %p80, %p81
    %p84 = scmp.ne.s32.totalorder %s69, %s83
    %p85 = scmp.eq.s32.totalorder %s24, 0
    %p86 = por %p84, %p85
    %s88 = sadd.s32 %s87, 1
    %p91 = scmp.eq.s32.totalorder %s18, 1
    %p92 = scmp.ne.s32.totalorder %s87, %s89
    %p93 = scmp.eq.s32.totalorder %s18, 0
    %p94 = por %p92, %p93
    %p95 = scmp.ne.s32.totalorder %s87, %s89
    %p96 = scmp.eq.s32.totalorder %s23, 1
    %p97 = por %p95, %p96
    %p98 = scmp.ne.s32.totalorder %s89, %s90
    %p99 = scmp.eq.s32.totalorder %s23, 0
    %p100 = por %p98, %p99
    %p101 = scmp.ne.s32.totalorder %s89, %s90
    %p102 = scmp.eq.s32.totalorder %s24, 1
    %p103 = por %p101, %p102
    %p105 = scmp.ne.s32.totalorder %s90, %s104
    %p106 = scmp.eq.s32.totalorder %s24, 0
    %p107 = por %p105, %p106
    %s109 = sadd.s32 %s108, 1
    %p112 = scmp.eq.s32.totalorder %s18, 1
    %p113 = scmp.ne.s32.totalorder %s108, %s110
    %p114 = scmp.eq.s32.totalorder %s18, 0
    %p115 = por %p113, %p114
    %p116 = scmp.ne.s32.totalorder %s108, %s110
    %p117 = scmp.eq.s32.totalorder %s23, 1
    %p118 = por %p116, %p117
    %p119 = scmp.ne.s32.totalorder %s110, %s111
    %p120 = scmp.eq.s32.totalorder %s23, 0
    %p121 = por %p119, %p120
    %p122 = scmp.ne.s32.totalorder %s110, %s111
    %p123 = scmp.eq.s32.totalorder %s24, 1
    %p124 = por %p122, %p123
    %p126 = scmp.ne.s32.totalorder %s111, %s125
    %p127 = scmp.eq.s32.totalorder %s24, 0
    %p128 = por %p126, %p127
    %s130 = sadd.s32 %s129, 1
    %p133 = scmp.eq.s32.totalorder %s18, 1
    %p134 = scmp.ne.s32.totalorder %s129, %s131
    %p135 = scmp.eq.s32.totalorder %s18, 0
    %p136 = por %p134, %p135
    %p137 = scmp.ne.s32.totalorder %s129, %s131
    %p138 = scmp.eq.s32.totalorder %s23, 1
    %p139 = por %p137, %p138
    %p140 = scmp.ne.s32.totalorder %s131, %s132
    %p141 = scmp.eq.s32.totalorder %s23, 0
    %p142 = por %p140, %p141
    %p143 = scmp.ne.s32.totalorder %s131, %s132
    %p144 = scmp.eq.s32.totalorder %s24, 1
    %p145 = por %p143, %p144
    %p147 = scmp.ne.s32.totalorder %s132, %s146
    %p148 = scmp.eq.s32.totalorder %s24, 0
    %p149 = por %p147, %p148
    %s151 = sadd.s32 %s150, 1
    %p154 = scmp.eq.s32.totalorder %s18, 1
    %p155 = scmp.ne.s32.totalorder %s150, %s152
    %p156 = scmp.eq.s32.totalorder %s18, 0
    %p157 = por %p155, %p156
    %p158 = scmp.ne.s32.totalorder %s150, %s152
    %p159 = scmp.eq.s32.totalorder %s23, 1
    %p160 = por %p158, %p159
    %p161 = scmp.ne.s32.totalorder %s152, %s153
    %p162 = scmp.eq.s32.totalorder %s23, 0
    %p163 = por %p161, %p162
    %p164 = scmp.ne.s32.totalorder %s152, %s153
    %p165 = scmp.eq.s32.totalorder %s24, 1
    %p166 = por %p164, %p165
    %p168 = scmp.ne.s32.totalorder %s153, %s167
    %p169 = scmp.eq.s32.totalorder %s24, 0
    %p170 = por %p168, %p169
    %s172 = sadd.s32 %s171, 1
    %p175 = scmp.eq.s32.totalorder %s18, 1
    %p176 = scmp.ne.s32.totalorder %s171, %s173
    %p177 = scmp.eq.s32.totalorder %s18, 0
    %p178 = por %p176, %p177
    %p179 = scmp.ne.s32.totalorder %s171, %s173
    %p180 = scmp.eq.s32.totalorder %s23, 1
    %p181 = por %p179, %p180
    %p182 = scmp.ne.s32.totalorder %s173, %s174
    %p183 = scmp.eq.s32.totalorder %s23, 0
    %p184 = por %p182, %p183
    %p185 = scmp.ne.s32.totalorder %s173, %s174
    %p186 = scmp.eq.s32.totalorder %s24, 1
    %p187 = por %p185, %p186
    %p189 = scmp.ne.s32.totalorder %s174, %s188
    %p190 = scmp.eq.s32.totalorder %s24, 0
    %p191 = por %p189, %p190
    %s193 = sadd.s32 %s192, 1
    %p196 = scmp.eq.s32.totalorder %s18, 1
    %p197 = scmp.ne.s32.totalorder %s192, %s194
    %p198 = scmp.eq.s32.totalorder %s18, 0
    %p199 = por %p197, %p198
    %p200 = scmp.ne.s32.totalorder %s192, %s194
    %p201 = scmp.eq.s32.totalorder %s23, 1
    %p202 = por %p200, %p201
    %p203 = scmp.ne.s32.totalorder %s194, %s195
    %p204 = scmp.eq.s32.totalorder %s23, 0
    %p205 = por %p203, %p204
    %p206 = scmp.ne.s32.totalorder %s194, %s195
    %p207 = scmp.eq.s32.totalorder %s24, 1
    %p208 = por %p206, %p207
    %p210 = scmp.ne.s32.totalorder %s195, %s209
    %p211 = scmp.eq.s32.totalorder %s24, 0
    %p212 = por %p210, %p211
    %s214 = sadd.s32 %s213, 1
    %p217 = scmp.eq.s32.totalorder %s18, 1
    %p218 = scmp.ne.s32.totalorder %s213, %s215
    %p219 = scmp.eq.s32.totalorder %s18, 0
    %p220 = por %p218, %p219
    %p221 = scmp.ne.s32.totalorder %s213, %s215
    %p222 = scmp.eq.s32.totalorder %s23, 1
    %p223 = por %p221, %p222
    %p224 = scmp.ne.s32.totalorder %s215, %s216
    %p225 = scmp.eq.s32.totalorder %s23, 0
    %p226 = por %p224, %p225
    %p227 = scmp.ne.s32.totalorder %s215, %s216
    %p228 = scmp.eq.s32.totalorder %s24, 1
    %p229 = por %p227, %p228
    %p231 = scmp.ne.s32.totalorder %s216, %s230
    %p232 = scmp.eq.s32.totalorder %s24, 0
    %p233 = por %p231, %p232
    %s235 = sadd.s32 %s234, 1
    %p238 = scmp.eq.s32.totalorder %s18, 1
    %p239 = scmp.ne.s32.totalorder %s234, %s236
    %p240 = scmp.eq.s32.totalorder %s18, 0
    %p241 = por %p239, %p240
    %p242 = scmp.ne.s32.totalorder %s234, %s236
    %p243 = scmp.eq.s32.totalorder %s23, 1
    %p244 = por %p242, %p243
    %p245 = scmp.ne.s32.totalorder %s236, %s237
    %p246 = scmp.eq.s32.totalorder %s23, 0
    %p247 = por %p245, %p246
    %p248 = scmp.ne.s32.totalorder %s236, %s237
    %p249 = scmp.eq.s32.totalorder %s24, 1
    %p250 = por %p248, %p249
    %p252 = scmp.ne.s32.totalorder %s237, %s251
    %p253 = scmp.eq.s32.totalorder %s24, 0
    %p254 = por %p252, %p253
    %s256 = sadd.s32 %s255, 1
    %p259 = scmp.eq.s32.totalorder %s18, 1
    %p260 = scmp.ne.s32.totalorder %s255, %s257
    %p261 = scmp.eq.s32.totalorder %s18, 0
    %p262 = por %p260, %p261
    %p263 = scmp.ne.s32.totalorder %s255, %s257
    %p264 = scmp.eq.s32.totalorder %s23, 1
    %p265 = por %p263, %p264
    %p266 = scmp.ne.s32.totalorder %s257, %s258
    %p267 = scmp.eq.s32.totalorder %s23, 0
    %p268 = por %p266, %p267
    %p269 = scmp.ne.s32.totalorder %s257, %s258
    %p270 = scmp.eq.s32.totalorder %s24, 1
    %p271 = por %p269, %p270
    %p273 = scmp.ne.s32.totalorder %s258, %s272
    %p274 = scmp.eq.s32.totalorder %s24, 0
    %p275 = por %p273, %p274
    %s277 = sadd.s32 %s276, 1
    %p280 = scmp.eq.s32.totalorder %s18, 1
    %p281 = scmp.ne.s32.totalorder %s276, %s278
    %p282 = scmp.eq.s32.totalorder %s18, 0
    %p283 = por %p281, %p282
    %p284 = scmp.ne.s32.totalorder %s276, %s278
    %p285 = scmp.eq.s32.totalorder %s23, 1
    %p286 = por %p284, %p285
    %p287 = scmp.ne.s32.totalorder %s278, %s279
    %p288 = scmp.eq.s32.totalorder %s23, 0
    %p289 = por %p287, %p288
    %p290 = scmp.ne.s32.totalorder %s278, %s279
    %p291 = scmp.eq.s32.totalorder %s24, 1
    %p292 = por %p290, %p291
    %p294 = scmp.ne.s32.totalorder %s279, %s293
    %p295 = scmp.eq.s32.totalorder %s24, 0
    %p296 = por %p294, %p295
    %s297 = ssub.s32 %s25, %s37
    %p298 = scmp.eq.s32.totalorder %s297, 0
    %s300 = sadd.s32 %s299, 1
    %s301 = scalar_select %p298, %s299, %s300
    %p304 = pneg %p298
    %p305 = scmp.eq.s32.totalorder %s18, 1
    %p306 = por %p304, %p305
    %p307 = scmp.ne.s32.totalorder %s299, %s302
    %p308 = scmp.eq.s32.totalorder %s18, 0
    %p309 = por %p307, %p308
    %p310 = scmp.ne.s32.totalorder %s299, %s302
    %p311 = scmp.eq.s32.totalorder %s23, 1
    %p312 = por %p310, %p311
    %p313 = scmp.ne.s32.totalorder %s302, %s303
    %p314 = scmp.eq.s32.totalorder %s23, 0
    %p315 = por %p313, %p314
    %p316 = scmp.ne.s32.totalorder %s302, %s303
    %p317 = scmp.eq.s32.totalorder %s24, 1
    %p318 = por %p316, %p317
    %p320 = scmp.ne.s32.totalorder %s303, %s319
    %p321 = scmp.eq.s32.totalorder %s24, 0
    %p322 = por %p320, %p321
    %p323 = scmp.le.s32.totalorder 1, %s18
    %p324 = scmp.lt.s32.totalorder %s18, 3
    %p325 = pnand %p323, %p324
    %p326 = pneg %p325
    // Predicated region
    $region9: #{siamese_forward.1} parent=5 // pred_check
      _
    $region10: #{siamese_forward.1} parent=5 // pred_check_branch
      %328 = sbr.rel (%p325) target = $region12
    $region11: #{siamese_forward.1} parent=5 // pred_region
      %s329 = ssub.s32 %s18, 1
      // Predicated region
      $region13: #{siamese_forward.1} parent=11 // pred_check
        %p330 = pneg %p79
      $region14: #{siamese_forward.1} parent=11 // pred_check_branch
        %332 = sbr.rel (%p330) target = $region16
      $region15: #{siamese_forward.1} parent=11 // pred_region
        _
      $region16: #{siamese_forward.1} parent=11 // pred_fallthru
        _
      // Predicated region
      $region17: #{siamese_forward.1} parent=11 // pred_check
        %p333 = pneg %p100
      $region18: #{siamese_forward.1} parent=11 // pred_check_branch
        %335 = sbr.rel (%p333) target = $region20
      $region19: #{siamese_forward.1} parent=11 // pred_region
        _
      $region20: #{siamese_forward.1} parent=11 // pred_fallthru
        _
      // Predicated region
      $region21: #{siamese_forward.1} parent=11 // pred_check
        %p336 = pneg %p121
      $region22: #{siamese_forward.1} parent=11 // pred_check_branch
        %338 = sbr.rel (%p336) target = $region24
      $region23: #{siamese_forward.1} parent=11 // pred_region
        _
      $region24: #{siamese_forward.1} parent=11 // pred_fallthru
        _
      // Predicated region
      $region25: #{siamese_forward.1} parent=11 // pred_check
        %p339 = pneg %p142
      $region26: #{siamese_forward.1} parent=11 // pred_check_branch
        %341 = sbr.rel (%p339) target = $region28
      $region27: #{siamese_forward.1} parent=11 // pred_region
        _
      $region28: #{siamese_forward.1} parent=11 // pred_fallthru
        _
      // Predicated region
      $region29: #{siamese_forward.1} parent=11 // pred_check
        %p342 = pneg %p163
      $region30: #{siamese_forward.1} parent=11 // pred_check_branch
        %344 = sbr.rel (%p342) target = $region32
      $region31: #{siamese_forward.1} parent=11 // pred_region
        _
      $region32: #{siamese_forward.1} parent=11 // pred_fallthru
        _
      // Predicated region
      $region33: #{siamese_forward.1} parent=11 // pred_check
        %p345 = pneg %p184
      $region34: #{siamese_forward.1} parent=11 // pred_check_branch
        %347 = sbr.rel (%p345) target = $region36
      $region35: #{siamese_forward.1} parent=11 // pred_region
        _
      $region36: #{siamese_forward.1} parent=11 // pred_fallthru
        _
      // Predicated region
      $region37: #{siamese_forward.1} parent=11 // pred_check
        %p348 = pneg %p205
      $region38: #{siamese_forward.1} parent=11 // pred_check_branch
        %350 = sbr.rel (%p348) target = $region40
      $region39: #{siamese_forward.1} parent=11 // pred_region
        _
      $region40: #{siamese_forward.1} parent=11 // pred_fallthru
        _
      // Predicated region
      $region41: #{siamese_forward.1} parent=11 // pred_check
        %p351 = pneg %p226
      $region42: #{siamese_forward.1} parent=11 // pred_check_branch
        %353 = sbr.rel (%p351) target = $region44
      $region43: #{siamese_forward.1} parent=11 // pred_region
        _
      $region44: #{siamese_forward.1} parent=11 // pred_fallthru
        _
      // Predicated region
      $region45: #{siamese_forward.1} parent=11 // pred_check
        %p354 = pneg %p247
      $region46: #{siamese_forward.1} parent=11 // pred_check_branch
        %356 = sbr.rel (%p354) target = $region48
      $region47: #{siamese_forward.1} parent=11 // pred_region
        _
      $region48: #{siamese_forward.1} parent=11 // pred_fallthru
        _
      // Predicated region
      $region49: #{siamese_forward.1} parent=11 // pred_check
        %p357 = pneg %p268
      $region50: #{siamese_forward.1} parent=11 // pred_check_branch
        %359 = sbr.rel (%p357) target = $region52
      $region51: #{siamese_forward.1} parent=11 // pred_region
        _
      $region52: #{siamese_forward.1} parent=11 // pred_fallthru
        _
      // Predicated region
      $region53: #{siamese_forward.1} parent=11 // pred_check
        %p360 = pneg %p289
      $region54: #{siamese_forward.1} parent=11 // pred_check_branch
        %362 = sbr.rel (%p360) target = $region56
      $region55: #{siamese_forward.1} parent=11 // pred_region
        _
      $region56: #{siamese_forward.1} parent=11 // pred_fallthru
        _
    $region12: #{siamese_forward.1} parent=5 // pred_fallthru
      _
    %p363 = scmp.lt.s32.totalorder %s18, 2
    // Predicated region
    $region57: #{siamese_forward.1} parent=5 // pred_check
      %p364 = pneg %p363
    $region58: #{siamese_forward.1} parent=5 // pred_check_branch
      %366 = sbr.rel (%p364) target = $region60
    $region59: #{siamese_forward.1} parent=5 // pred_region
      // Predicated region
      $region61: #{siamese_forward.1} parent=59 // pred_check
        %p367 = pneg %p52
      $region62: #{siamese_forward.1} parent=59 // pred_check_branch
        %369 = sbr.rel (%p367) target = $region64
      $region63: #{siamese_forward.1} parent=59 // pred_region
        %s370 = smul.u32 32, %s26
        %p371 = scmp.lt.s32.totalorder %s25, 1
        %s372 = scalar_select %p371, %s25, 1
        %p373 = scmp.lt.s32.totalorder %s370, 31
        %s374 = scalar_select %p373, %s370, 31
        %s375 = smul.addr %s372, 32
        %s376 = sadd.s32 %s374, %s375
        %s377 = smul.addr %s376, 4
        %s378 = scalar_lea.vmem %s0, %s377
        %s379 = smul.u32 32, %s26
      $region64: #{siamese_forward.1} parent=59 // pred_fallthru
        _
    $region60: #{siamese_forward.1} parent=5 // pred_fallthru
      _
    %p380 = scmp.le.s32.totalorder 1, %s18
    %p381 = scmp.lt.s32.totalorder %s18, 3
    %p382 = pnand %p380, %p381
    %p383 = pneg %p382
    // Predicated region
    $region65: #{siamese_forward.1} parent=5 // pred_check
      _
    $region66: #{siamese_forward.1} parent=5 // pred_check_branch
      %385 = sbr.rel (%p382) target = $region68
    $region67: #{siamese_forward.1} parent=5 // pred_region
      %s386 = ssub.s32 %s18, 1
      %s387 = smul.u32 32, %s28
      %p388 = scmp.lt.s32.totalorder %s27, 1
      %s389 = scalar_select %p388, %s27, 1
      %p390 = scmp.lt.s32.totalorder %s387, 31
      %s391 = scalar_select %p390, %s387, 31
      %s392 = smul.addr %s389, 32
      %s393 = sadd.s32 %s391, %s392
      %s394 = smul.addr %s393, 4
      %s395 = scalar_lea.vmem %s0, %s394
      %p396 = pneg %p58
      %p397 = pneg %p55
      %p398 = pneg %p79
      %p399 = pneg %p76
      %p400 = pneg %p100
      %p401 = pneg %p97
      %p402 = pneg %p121
      %p403 = pneg %p118
      %p404 = pneg %p142
      %p405 = pneg %p139
      %p406 = pneg %p163
      %p407 = pneg %p160
      %p408 = pneg %p184
      %p409 = pneg %p181
      %p410 = pneg %p205
      %p411 = pneg %p202
      %p412 = pneg %p226
      %p413 = pneg %p223
      %p414 = pneg %p247
      %p415 = pneg %p244
      %p416 = pneg %p268
      %p417 = pneg %p265
      %p418 = pneg %p289
      %p419 = pneg %p286
      %p420 = pneg %p315
      %p421 = pneg %p312
      %p422 = scmp.lt.s32.totalorder %s27, 1
      %s423 = scalar_select %p422, %s27, 1
      %s424 = scalar_lea.vmem %s12, %s423
      %s425 = smul.u32 32, %s28
      %p426 = scmp.lt.s32.totalorder %s27, 1
      %s427 = scalar_select %p426, %s27, 1
      %p428 = scmp.lt.s32.totalorder %s425, 31
      %s429 = scalar_select %p428, %s425, 31
      %s430 = smul.addr %s427, 32
      %s431 = sadd.s32 %s429, %s430
      %s432 = smul.addr %s431, 4
      %s433 = scalar_lea.vmem %s0, %s432
      %s434 = smul.u32 32, %s28
      %p435 = scmp.lt.s32.totalorder %s27, 1
      %s436 = scalar_select %p435, %s27, 1
      %s437 = scalar_lea.vmem %s12, %s436
      %p439 = scmp.eq.s32.totalorder %s28, 0
      // Predicated region
      $region69: #{siamese_forward.1} parent=67 // pred_check
        %p440 = pneg %p439
      $region70: #{siamese_forward.1} parent=67 // pred_check_branch
        %442 = sbr.rel (%p440) target = $region72
      $region71: #{siamese_forward.1} parent=67 // pred_region
        %443 = vst [vmem:[#allocation2] sm:$0xff] 0.0
        %444 = vst [vmem:[#allocation2 + $0x8] sm:$0xff] 0.0
      $region72: #{siamese_forward.1} parent=67 // pred_fallthru
        _
      %v445 = vld [vmem:[%s433] sm:$0xf]
      %v446 = vld [vmem:[%s433 + $0x4] sm:$0xf]
      %v447 = vld [vmem:[%s433 + $0x8] sm:$0xf]
      %v448 = vld [vmem:[%s433 + $0xc] sm:$0xf]
      %v449 = vld [vmem:[%s433 + $0x10] sm:$0xf]
      %v450 = vld [vmem:[%s433 + $0x14] sm:$0xf]
      %v451 = vld [vmem:[%s433 + $0x18] sm:$0xf]
      %v452 = vld [vmem:[%s433 + $0x1c] sm:$0xf]
      %v453 = vld [vmem:[%s433 + $0x20] sm:$0xf]
      %v454 = vld [vmem:[%s433 + $0x24] sm:$0xf]
      %v455 = vld [vmem:[%s433 + $0x28] sm:$0xf]
      %v456 = vld [vmem:[%s433 + $0x2c] sm:$0xf]
      %v457 = vld [vmem:[%s433 + $0x30] sm:$0xf]
      %v458 = vld [vmem:[%s433 + $0x34] sm:$0xf]
      %v459 = vld [vmem:[%s433 + $0x38] sm:$0xf]
      %v460 = vld [vmem:[%s433 + $0x3c] sm:$0xf]
      %v461 = vld [vmem:[%s433 + $0x40] sm:$0xf]
      %v462 = vld [vmem:[%s433 + $0x44] sm:$0xf]
      %v463 = vld [vmem:[%s433 + $0x48] sm:$0xf]
      %v464 = vld [vmem:[%s433 + $0x4c] sm:$0xf]
      %v465 = vld [vmem:[%s433 + $0x50] sm:$0xf]
      %v466 = vld [vmem:[%s433 + $0x54] sm:$0xf]
      %v467 = vld [vmem:[%s433 + $0x58] sm:$0xf]
      %v468 = vld [vmem:[%s433 + $0x5c] sm:$0xf]
      %v469 = vld [vmem:[%s433 + $0x60] sm:$0xf]
      %v470 = vld [vmem:[%s433 + $0x64] sm:$0xf]
      %v471 = vld [vmem:[%s433 + $0x68] sm:$0xf]
      %v472 = vld [vmem:[%s433 + $0x6c] sm:$0xf]
      %v473 = vld [vmem:[%s433 + $0x70] sm:$0xf]
      %v474 = vld [vmem:[%s433 + $0x74] sm:$0xf]
      %v475 = vld [vmem:[%s433 + $0x78] sm:$0xf]
      %v476 = vld [vmem:[%s433 + $0x7c] sm:$0xf]
      %v477 = vld [vmem:[%s1] sm:$0xff]
      %v478 = vld [vmem:[%s1 + $0x8] sm:$0xff]
      %v479 = vld [vmem:[%s1 + $0x40] sm:$0xff]
      %v480 = vld [vmem:[%s1 + $0x48] sm:$0xff]
      %v481 = vld [vmem:[%s1 + $0x80] sm:$0xff]
      %v482 = vld [vmem:[%s1 + $0x88] sm:$0xff]
      %v483 = vld [vmem:[%s1 + $0xc0] sm:$0xff]
      %v484 = vld [vmem:[%s1 + $0xc8] sm:$0xff]
      %v517 = vunpack.c.l.b16 %v445
      %v518 = vunpack.c.l.b16 %v446
      %v519 = vunpack.c.l.b16 %v447
      %v520 = vunpack.c.l.b16 %v448
      %v521 = vunpack.c.l.b16 %v449
      %v522 = vunpack.c.l.b16 %v450
      %v523 = vunpack.c.l.b16 %v451
      %v524 = vunpack.c.l.b16 %v452
      %v525 = vunpack.c.l.b16 %v453
      %v526 = vunpack.c.l.b16 %v454
      %v527 = vunpack.c.l.b16 %v455
      %v528 = vunpack.c.l.b16 %v456
      %v529 = vunpack.c.l.b16 %v457
      %v530 = vunpack.c.l.b16 %v458
      %v531 = vunpack.c.l.b16 %v459
      %v532 = vunpack.c.l.b16 %v460
      %v533 = vunpack.c.l.b16 %v461
      %v534 = vunpack.c.l.b16 %v462
      %v535 = vunpack.c.l.b16 %v463
      %v536 = vunpack.c.l.b16 %v464
      %v537 = vunpack.c.l.b16 %v465
      %v538 = vunpack.c.l.b16 %v466
      %v539 = vunpack.c.l.b16 %v467
      %v540 = vunpack.c.l.b16 %v468
      %v541 = vunpack.c.l.b16 %v469
      %v542 = vunpack.c.l.b16 %v470
      %v543 = vunpack.c.l.b16 %v471
      %v544 = vunpack.c.l.b16 %v472
      %v545 = vunpack.c.l.b16 %v473
      %v546 = vunpack.c.l.b16 %v474
      %v547 = vunpack.c.l.b16 %v475
      %v548 = vunpack.c.l.b16 %v476
      %v549 = vpack.c.b16 %v518, %v517
      %v550 = vpack.c.b16 %v520, %v519
      %v551 = vpack.c.b16 %v522, %v521
      %v552 = vpack.c.b16 %v524, %v523
      %v553 = vpack.c.b16 %v526, %v525
      %v554 = vpack.c.b16 %v528, %v527
      %v555 = vpack.c.b16 %v530, %v529
      %v556 = vpack.c.b16 %v532, %v531
      %v557 = vpack.c.b16 %v534, %v533
      %v558 = vpack.c.b16 %v536, %v535
      %v559 = vpack.c.b16 %v538, %v537
      %v560 = vpack.c.b16 %v540, %v539
      %v561 = vpack.c.b16 %v542, %v541
      %v562 = vpack.c.b16 %v544, %v543
      %v563 = vpack.c.b16 %v546, %v545
      %v564 = vpack.c.b16 %v548, %v547
      %v573 = vunpack.c.l.b16 %v477
      %v574 = vunpack.c.h.b16 %v477
      %v575 = vunpack.c.l.b16 %v478
      %v576 = vunpack.c.h.b16 %v478
      %v577 = vunpack.c.l.b16 %v479
      %v578 = vunpack.c.h.b16 %v479
      %v579 = vunpack.c.l.b16 %v480
      %v580 = vunpack.c.h.b16 %v480
      %v581 = vunpack.c.l.b16 %v481
      %v582 = vunpack.c.h.b16 %v481
      %v583 = vunpack.c.l.b16 %v482
      %v584 = vunpack.c.h.b16 %v482
      %v585 = vunpack.c.l.b16 %v483
      %v586 = vunpack.c.h.b16 %v483
      %v587 = vunpack.c.l.b16 %v484
      %v588 = vunpack.c.h.b16 %v484
      %v589 = vpack.c.b16 %v577, %v573
      %v590 = vpack.c.b16 %v578, %v574
      %v591 = vpack.c.b16 %v579, %v575
      %v592 = vpack.c.b16 %v580, %v576
      %v593 = vpack.c.b16 %v585, %v581
      %v594 = vpack.c.b16 %v586, %v582
      %v595 = vpack.c.b16 %v587, %v583
      %v596 = vpack.c.b16 %v588, %v584
      %vm605 = vcmask 261120
      %v607 = vsel %vm605, %v549, 0
      %v610 = vsel %vm605, %v550, 0
      %v613 = vsel %vm605, %v551, 0
      %v616 = vsel %vm605, %v552, 0
      %v619 = vsel %vm605, %v553, 0
      %v622 = vsel %vm605, %v554, 0
      %v625 = vsel %vm605, %v555, 0
      %v628 = vsel %vm605, %v556, 0
      %v631 = vsel %vm605, %v557, 0
      %v634 = vsel %vm605, %v558, 0
      %v637 = vsel %vm605, %v559, 0
      %v640 = vsel %vm605, %v560, 0
      %v643 = vsel %vm605, %v561, 0
      %v646 = vsel %vm605, %v562, 0
      %v649 = vsel %vm605, %v563, 0
      %v652 = vsel %vm605, %v564, 0
      %654 = vmatprep.subr.bf16.mxu0 %v590
      %655 = vmatpush1.bf16.msra.mxu0 %v589
      %656 = vmatprep.subr.bf16.mxu0 %v594
      %657 = vmatpush1.bf16.msra.mxu0 %v593
      %658 = vmatprep.subr.bf16.mxu0 0
      %659 = vmatpush1.bf16.msra.mxu0 0
      %660 = vmatprep.subr.bf16.mxu0 0
      %661 = vmatpush1.bf16.msra.mxu0 0
      %662 = vmatprep.subr.bf16.mxu0 0
      %663 = vmatpush1.bf16.msra.mxu0 0
      %664 = vmatprep.subr.bf16.mxu0 0
      %665 = vmatpush1.bf16.msra.mxu0 0
      %666 = vmatprep.subr.bf16.mxu0 0
      %667 = vmatpush1.bf16.msra.mxu0 0
      %668 = vmatprep.subr.bf16.mxu0 0
      %669 = vmatpush1.bf16.msra.mxu0 0
      %670 = vmatprep.subr.bf16.mxu0 0
      %671 = vmatpush1.bf16.msra.mxu0 0
      %672 = vmatprep.subr.bf16.mxu0 0
      %673 = vmatpush1.bf16.msra.mxu0 0
      %674 = vmatprep.subr.bf16.mxu0 0
      %675 = vmatpush1.bf16.msra.mxu0 0
      %676 = vmatprep.subr.bf16.mxu0 0
      %677 = vmatpush1.bf16.msra.mxu0 0
      %678 = vmatprep.subr.bf16.mxu0 0
      %679 = vmatpush1.bf16.msra.mxu0 0
      %680 = vmatprep.subr.bf16.mxu0 0
      %681 = vmatpush1.bf16.msra.mxu0 0
      %682 = vmatprep.subr.bf16.mxu0 0
      %683 = vmatpush1.bf16.msra.mxu0 0
      %684 = vmatprep.subr.bf16.mxu0 0
      %685 = vmatpush1.bf16.msra.mxu0 0
      %686 = vmatprep.mubr.bf16.mxu0 0
      %687 = vmatmul.mubr.bf16.gmra.mrb[0].mxu0 %v607
      %v688 = vpop.f32.mrb[0].mxu0
      %v689 = vadd.f32 0.0, %v688
      %v690 = vpop.f32.mrb[0].mxu0
      %v691 = vadd.f32 0.0, %v690
      %v692 = vpop.f32.mrb[0].mxu0
      %v693 = vadd.f32 0.0, %v692
      %v694 = vpop.f32.mrb[0].mxu0
      %v695 = vadd.f32 0.0, %v694
      %696 = vmatprep.mubr.bf16.mxu0 0
      %697 = vmatmul.mubr.bf16.gmra.mrb[0].mxu0 %v610
      %v698 = vpop.f32.mrb[0].mxu0
      %v699 = vadd.f32 0.0, %v698
      %v700 = vpop.f32.mrb[0].mxu0
      %v701 = vadd.f32 0.0, %v700
      %v702 = vpop.f32.mrb[0].mxu0
      %v703 = vadd.f32 0.0, %v702
      %v704 = vpop.f32.mrb[0].mxu0
      %v705 = vadd.f32 0.0, %v704
      %706 = vmatprep.mubr.bf16.mxu0 0
      %707 = vmatmul.mubr.bf16.gmra.mrb[0].mxu0 %v613
      %v708 = vpop.f32.mrb[0].mxu0
      %v709 = vadd.f32 0.0, %v708
      %v710 = vpop.f32.mrb[0].mxu0
      %v711 = vadd.f32 0.0, %v710
      %v712 = vpop.f32.mrb[0].mxu0
      %v713 = vadd.f32 0.0, %v712
      %v714 = vpop.f32.mrb[0].mxu0
      %v715 = vadd.f32 0.0, %v714
      %716 = vmatprep.mubr.bf16.mxu0 0
      %717 = vmatmul.mubr.bf16.gmra.mrb[0].mxu0 %v616
      %v718 = vpop.f32.mrb[0].mxu0
      %v719 = vadd.f32 0.0, %v718
      %v720 = vpop.f32.mrb[0].mxu0
      %v721 = vadd.f32 0.0, %v720
      %v722 = vpop.f32.mrb[0].mxu0
      %v723 = vadd.f32 0.0, %v722
      %v724 = vpop.f32.mrb[0].mxu0
      %v725 = vadd.f32 0.0, %v724
      %726 = vmatprep.mubr.bf16.mxu0 0
      %727 = vmatmul.mubr.bf16.gmra.mrb[0].mxu0 %v619
      %v728 = vpop.f32.mrb[0].mxu0
      %v729 = vadd.f32 0.0, %v728
      %v730 = vpop.f32.mrb[0].mxu0
      %v731 = vadd.f32 0.0, %v730
      %v732 = vpop.f32.mrb[0].mxu0
      %v733 = vadd.f32 0.0, %v732
      %v734 = vpop.f32.mrb[0].mxu0
      %v735 = vadd.f32 0.0, %v734
      %736 = vmatprep.mubr.bf16.mxu0 0
      %737 = vmatmul.mubr.bf16.gmra.mrb[0].mxu0 %v622
      %v738 = vpop.f32.mrb[0].mxu0
      %v739 = vadd.f32 0.0, %v738
      %v740 = vpop.f32.mrb[0].mxu0
      %v741 = vadd.f32 0.0, %v740
      %v742 = vpop.f32.mrb[0].mxu0
      %v743 = vadd.f32 0.0, %v742
      %v744 = vpop.f32.mrb[0].mxu0
      %v745 = vadd.f32 0.0, %v744
      %746 = vmatprep.mubr.bf16.mxu0 0
      %747 = vmatmul.mubr.bf16.gmra.mrb[0].mxu0 %v625
      %v748 = vpop.f32.mrb[0].mxu0
      %v749 = vadd.f32 0.0, %v748
      %v750 = vpop.f32.mrb[0].mxu0
      %v751 = vadd.f32 0.0, %v750
      %v752 = vpop.f32.mrb[0].mxu0
      %v753 = vadd.f32 0.0, %v752
      %v754 = vpop.f32.mrb[0].mxu0
      %v755 = vadd.f32 0.0, %v754
      %756 = vmatprep.mubr.bf16.mxu0 0
      %757 = vmatmul.mubr.bf16.gmra.mrb[0].mxu0 %v628
      %v758 = vpop.f32.mrb[0].mxu0
      %v759 = vadd.f32 0.0, %v758
      %v760 = vpop.f32.mrb[0].mxu0
      %v761 = vadd.f32 0.0, %v760
      %v762 = vpop.f32.mrb[0].mxu0
      %v763 = vadd.f32 0.0, %v762
      %v764 = vpop.f32.mrb[0].mxu0
      %v765 = vadd.f32 0.0, %v764
      %766 = vmatprep.mubr.bf16.mxu0 0
      %767 = vmatmul.mubr.bf16.gmra.mrb[0].mxu0 %v631
      %v768 = vpop.f32.mrb[0].mxu0
      %v769 = vadd.f32 0.0, %v768
      %v770 = vpop.f32.mrb[0].mxu0
      %v771 = vadd.f32 0.0, %v770
      %v772 = vpop.f32.mrb[0].mxu0
      %v773 = vadd.f32 0.0, %v772
      %v774 = vpop.f32.mrb[0].mxu0
      %v775 = vadd.f32 0.0, %v774
      %776 = vmatprep.mubr.bf16.mxu0 0
      %777 = vmatmul.mubr.bf16.gmra.mrb[0].mxu0 %v634
      %v778 = vpop.f32.mrb[0].mxu0
      %v779 = vadd.f32 0.0, %v778
      %v780 = vpop.f32.mrb[0].mxu0
      %v781 = vadd.f32 0.0, %v780
      %v782 = vpop.f32.mrb[0].mxu0
      %v783 = vadd.f32 0.0, %v782
      %v784 = vpop.f32.mrb[0].mxu0
      %v785 = vadd.f32 0.0, %v784
      %786 = vmatprep.mubr.bf16.mxu0 0
      %787 = vmatmul.mubr.bf16.gmra.mrb[0].mxu0 %v637
      %v788 = vpop.f32.mrb[0].mxu0
      %v789 = vadd.f32 0.0, %v788
      %v790 = vpop.f32.mrb[0].mxu0
      %v791 = vadd.f32 0.0, %v790
      %v792 = vpop.f32.mrb[0].mxu0
      %v793 = vadd.f32 0.0, %v792
      %v794 = vpop.f32.mrb[0].mxu0
      %v795 = vadd.f32 0.0, %v794
      %796 = vmatprep.mubr.bf16.mxu0 0
      %797 = vmatmul.mubr.bf16.gmra.mrb[0].mxu0 %v640
      %v798 = vpop.f32.mrb[0].mxu0
      %v799 = vadd.f32 0.0, %v798
      %v800 = vpop.f32.mrb[0].mxu0
      %v801 = vadd.f32 0.0, %v800
      %v802 = vpop.f32.mrb[0].mxu0
      %v803 = vadd.f32 0.0, %v802
      %v804 = vpop.f32.mrb[0].mxu0
      %v805 = vadd.f32 0.0, %v804
      %806 = vmatprep.mubr.bf16.mxu0 0
      %807 = vmatmul.mubr.bf16.gmra.mrb[0].mxu0 %v643
      %v808 = vpop.f32.mrb[0].mxu0
      %v809 = vadd.f32 0.0, %v808
      %v810 = vpop.f32.mrb[0].mxu0
      %v811 = vadd.f32 0.0, %v810
      %v812 = vpop.f32.mrb[0].mxu0
      %v813 = vadd.f32 0.0, %v812
      %v814 = vpop.f32.mrb[0].mxu0
      %v815 = vadd.f32 0.0, %v814
      %816 = vmatprep.mubr.bf16.mxu0 0
      %817 = vmatmul.mubr.bf16.gmra.mrb[0].mxu0 %v646
      %v818 = vpop.f32.mrb[0].mxu0
      %v819 = vadd.f32 0.0, %v818
      %v820 = vpop.f32.mrb[0].mxu0
      %v821 = vadd.f32 0.0, %v820
      %v822 = vpop.f32.mrb[0].mxu0
      %v823 = vadd.f32 0.0, %v822
      %v824 = vpop.f32.mrb[0].mxu0
      %v825 = vadd.f32 0.0, %v824
      %826 = vmatprep.mubr.bf16.mxu0 0
      %827 = vmatmul.mubr.bf16.gmra.mrb[0].mxu0 %v649
      %v828 = vpop.f32.mrb[0].mxu0
      %v829 = vadd.f32 0.0, %v828
      %v830 = vpop.f32.mrb[0].mxu0
      %v831 = vadd.f32 0.0, %v830
      %v832 = vpop.f32.mrb[0].mxu0
      %v833 = vadd.f32 0.0, %v832
      %v834 = vpop.f32.mrb[0].mxu0
      %v835 = vadd.f32 0.0, %v834
      %836 = vmatprep.mubr.bf16.mxu0 0
      %837 = vmatmul.mubr.bf16.gmra.mrb[0].mxu0 %v652
      %v838 = vpop.f32.mrb[0].mxu0
      %v839 = vadd.f32 0.0, %v838
      %v840 = vpop.f32.mrb[0].mxu0
      %v841 = vadd.f32 0.0, %v840
      %v842 = vpop.f32.mrb[0].mxu0
      %v843 = vadd.f32 0.0, %v842
      %v844 = vpop.f32.mrb[0].mxu0
      %v845 = vadd.f32 0.0, %v844
      %846 = vdwg.mxu0
      %847 = vmatprep.subr.bf16.mxu0 %v592
      %848 = vmatpush1.bf16.msra.mxu0 %v591
      %849 = vmatprep.subr.bf16.mxu0 %v596
      %850 = vmatpush1.bf16.msra.mxu0 %v595
      %851 = vmatprep.subr.bf16.mxu0 0
      %852 = vmatpush1.bf16.msra.mxu0 0
      %853 = vmatprep.subr.bf16.mxu0 0
      %854 = vmatpush1.bf16.msra.mxu0 0
      %855 = vmatprep.subr.bf16.mxu0 0
      %856 = vmatpush1.bf16.msra.mxu0 0
      %857 = vmatprep.subr.bf16.mxu0 0
      %858 = vmatpush1.bf16.msra.mxu0 0
      %859 = vmatprep.subr.bf16.mxu0 0
      %860 = vmatpush1.bf16.msra.mxu0 0
      %861 = vmatprep.subr.bf16.mxu0 0
      %862 = vmatpush1.bf16.msra.mxu0 0
      %863 = vmatprep.subr.bf16.mxu0 0
      %864 = vmatpush1.bf16.msra.mxu0 0
      %865 = vmatprep.subr.bf16.mxu0 0
      %866 = vmatpush1.bf16.msra.mxu0 0
      %867 = vmatprep.subr.bf16.mxu0 0
      %868 = vmatpush1.bf16.msra.mxu0 0
      %869 = vmatprep.subr.bf16.mxu0 0
      %870 = vmatpush1.bf16.msra.mxu0 0
      %871 = vmatprep.subr.bf16.mxu0 0
      %872 = vmatpush1.bf16.msra.mxu0 0
      %873 = vmatprep.subr.bf16.mxu0 0
      %874 = vmatpush1.bf16.msra.mxu0 0
      %875 = vmatprep.subr.bf16.mxu0 0
      %876 = vmatpush1.bf16.msra.mxu0 0
      %877 = vmatprep.subr.bf16.mxu0 0
      %878 = vmatpush1.bf16.msra.mxu0 0
      %879 = vmatprep.mubr.bf16.mxu0 0
      %880 = vmatmul.mubr.bf16.gmra.mrb[0].mxu0 %v607
      %v881 = vpop.f32.mrb[0].mxu0
      %v882 = vadd.f32 0.0, %v881
      %v883 = vpop.f32.mrb[0].mxu0
      %v884 = vadd.f32 0.0, %v883
      %v885 = vpop.f32.mrb[0].mxu0
      %v886 = vadd.f32 0.0, %v885
      %v887 = vpop.f32.mrb[0].mxu0
      %v888 = vadd.f32 0.0, %v887
      %889 = vmatprep.mubr.bf16.mxu0 0
      %890 = vmatmul.mubr.bf16.gmra.mrb[0].mxu0 %v610
      %v891 = vpop.f32.mrb[0].mxu0
      %v892 = vadd.f32 0.0, %v891
      %v893 = vpop.f32.mrb[0].mxu0
      %v894 = vadd.f32 0.0, %v893
      %v895 = vpop.f32.mrb[0].mxu0
      %v896 = vadd.f32 0.0, %v895
      %v897 = vpop.f32.mrb[0].mxu0
      %v898 = vadd.f32 0.0, %v897
      %899 = vmatprep.mubr.bf16.mxu0 0
      %900 = vmatmul.mubr.bf16.gmra.mrb[0].mxu0 %v613
      %v901 = vpop.f32.mrb[0].mxu0
      %v902 = vadd.f32 0.0, %v901
      %v903 = vpop.f32.mrb[0].mxu0
      %v904 = vadd.f32 0.0, %v903
      %v905 = vpop.f32.mrb[0].mxu0
      %v906 = vadd.f32 0.0, %v905
      %v907 = vpop.f32.mrb[0].mxu0
      %v908 = vadd.f32 0.0, %v907
      %909 = vmatprep.mubr.bf16.mxu0 0
      %910 = vmatmul.mubr.bf16.gmra.mrb[0].mxu0 %v616
      %v911 = vpop.f32.mrb[0].mxu0
      %v912 = vadd.f32 0.0, %v911
      %v913 = vpop.f32.mrb[0].mxu0
      %v914 = vadd.f32 0.0, %v913
      %v915 = vpop.f32.mrb[0].mxu0
      %v916 = vadd.f32 0.0, %v915
      %v917 = vpop.f32.mrb[0].mxu0
      %v918 = vadd.f32 0.0, %v917
      %919 = vmatprep.mubr.bf16.mxu0 0
      %920 = vmatmul.mubr.bf16.gmra.mrb[0].mxu0 %v619
      %v921 = vpop.f32.mrb[0].mxu0
      %v922 = vadd.f32 0.0, %v921
      %v923 = vpop.f32.mrb[0].mxu0
      %v924 = vadd.f32 0.0, %v923
      %v925 = vpop.f32.mrb[0].mxu0
      %v926 = vadd.f32 0.0, %v925
      %v927 = vpop.f32.mrb[0].mxu0
      %v928 = vadd.f32 0.0, %v927
      %929 = vmatprep.mubr.bf16.mxu0 0
      %930 = vmatmul.mubr.bf16.gmra.mrb[0].mxu0 %v622
      %v931 = vpop.f32.mrb[0].mxu0
      %v932 = vadd.f32 0.0, %v931
      %v933 = vpop.f32.mrb[0].mxu0
      %v934 = vadd.f32 0.0, %v933
      %v935 = vpop.f32.mrb[0].mxu0
      %v936 = vadd.f32 0.0, %v935
      %v937 = vpop.f32.mrb[0].mxu0
      %v938 = vadd.f32 0.0, %v937
      %939 = vmatprep.mubr.bf16.mxu0 0
      %940 = vmatmul.mubr.bf16.gmra.mrb[0].mxu0 %v625
      %v941 = vpop.f32.mrb[0].mxu0
      %v942 = vadd.f32 0.0, %v941
      %v943 = vpop.f32.mrb[0].mxu0
      %v944 = vadd.f32 0.0, %v943
      %v945 = vpop.f32.mrb[0].mxu0
      %v946 = vadd.f32 0.0, %v945
      %v947 = vpop.f32.mrb[0].mxu0
      %v948 = vadd.f32 0.0, %v947
      %949 = vmatprep.mubr.bf16.mxu0 0
      %950 = vmatmul.mubr.bf16.gmra.mrb[0].mxu0 %v628
      %v951 = vpop.f32.mrb[0].mxu0
      %v952 = vadd.f32 0.0, %v951
      %v953 = vpop.f32.mrb[0].mxu0
      %v954 = vadd.f32 0.0, %v953
      %v955 = vpop.f32.mrb[0].mxu0
      %v956 = vadd.f32 0.0, %v955
      %v957 = vpop.f32.mrb[0].mxu0
      %v958 = vadd.f32 0.0, %v957
      %959 = vmatprep.mubr.bf16.mxu0 0
      %960 = vmatmul.mubr.bf16.gmra.mrb[0].mxu0 %v631
      %v961 = vpop.f32.mrb[0].mxu0
      %v962 = vadd.f32 0.0, %v961
      %v963 = vpop.f32.mrb[0].mxu0
      %v964 = vadd.f32 0.0, %v963
      %v965 = vpop.f32.mrb[0].mxu0
      %v966 = vadd.f32 0.0, %v965
      %v967 = vpop.f32.mrb[0].mxu0
      %v968 = vadd.f32 0.0, %v967
      %969 = vmatprep.mubr.bf16.mxu0 0
      %970 = vmatmul.mubr.bf16.gmra.mrb[0].mxu0 %v634
      %v971 = vpop.f32.mrb[0].mxu0
      %v972 = vadd.f32 0.0, %v971
      %v973 = vpop.f32.mrb[0].mxu0
      %v974 = vadd.f32 0.0, %v973
      %v975 = vpop.f32.mrb[0].mxu0
      %v976 = vadd.f32 0.0, %v975
      %v977 = vpop.f32.mrb[0].mxu0
      %v978 = vadd.f32 0.0, %v977
      %979 = vmatprep.mubr.bf16.mxu0 0
      %980 = vmatmul.mubr.bf16.gmra.mrb[0].mxu0 %v637
      %v981 = vpop.f32.mrb[0].mxu0
      %v982 = vadd.f32 0.0, %v981
      %v983 = vpop.f32.mrb[0].mxu0
      %v984 = vadd.f32 0.0, %v983
      %v985 = vpop.f32.mrb[0].mxu0
      %v986 = vadd.f32 0.0, %v985
      %v987 = vpop.f32.mrb[0].mxu0
      %v988 = vadd.f32 0.0, %v987
      %989 = vmatprep.mubr.bf16.mxu0 0
      %990 = vmatmul.mubr.bf16.gmra.mrb[0].mxu0 %v640
      %v991 = vpop.f32.mrb[0].mxu0
      %v992 = vadd.f32 0.0, %v991
      %v993 = vpop.f32.mrb[0].mxu0
      %v994 = vadd.f32 0.0, %v993
      %v995 = vpop.f32.mrb[0].mxu0
      %v996 = vadd.f32 0.0, %v995
      %v997 = vpop.f32.mrb[0].mxu0
      %v998 = vadd.f32 0.0, %v997
      %999 = vmatprep.mubr.bf16.mxu0 0
      %1000 = vmatmul.mubr.bf16.gmra.mrb[0].mxu0 %v643
      %v1001 = vpop.f32.mrb[0].mxu0
      %v1002 = vadd.f32 0.0, %v1001
      %v1003 = vpop.f32.mrb[0].mxu0
      %v1004 = vadd.f32 0.0, %v1003
      %v1005 = vpop.f32.mrb[0].mxu0
      %v1006 = vadd.f32 0.0, %v1005
      %v1007 = vpop.f32.mrb[0].mxu0
      %v1008 = vadd.f32 0.0, %v1007
      %1009 = vmatprep.mubr.bf16.mxu0 0
      %1010 = vmatmul.mubr.bf16.gmra.mrb[0].mxu0 %v646
      %v1011 = vpop.f32.mrb[0].mxu0
      %v1012 = vadd.f32 0.0, %v1011
      %v1013 = vpop.f32.mrb[0].mxu0
      %v1014 = vadd.f32 0.0, %v1013
      %v1015 = vpop.f32.mrb[0].mxu0
      %v1016 = vadd.f32 0.0, %v1015
      %v1017 = vpop.f32.mrb[0].mxu0
      %v1018 = vadd.f32 0.0, %v1017
      %1019 = vmatprep.mubr.bf16.mxu0 0
      %1020 = vmatmul.mubr.bf16.gmra.mrb[0].mxu0 %v649
      %v1021 = vpop.f32.mrb[0].mxu0
      %v1022 = vadd.f32 0.0, %v1021
      %v1023 = vpop.f32.mrb[0].mxu0
      %v1024 = vadd.f32 0.0, %v1023
      %v1025 = vpop.f32.mrb[0].mxu0
      %v1026 = vadd.f32 0.0, %v1025
      %v1027 = vpop.f32.mrb[0].mxu0
      %v1028 = vadd.f32 0.0, %v1027
      %1029 = vmatprep.mubr.bf16.mxu0 0
      %1030 = vmatmul.mubr.bf16.gmra.mrb[0].mxu0 %v652
      %v1031 = vpop.f32.mrb[0].mxu0
      %v1032 = vadd.f32 0.0, %v1031
      %v1033 = vpop.f32.mrb[0].mxu0
      %v1034 = vadd.f32 0.0, %v1033
      %v1035 = vpop.f32.mrb[0].mxu0
      %v1036 = vadd.f32 0.0, %v1035
      %v1037 = vpop.f32.mrb[0].mxu0
      %v1038 = vadd.f32 0.0, %v1037
      %1039 = vdwg.mxu0
      %v1040 = vmax.f32 %v689, 0.0
      %v1041 = vmax.f32 %v691, 0.0
      %v1042 = vmax.f32 %v882, 0.0
      %v1043 = vmax.f32 %v884, 0.0
      %v1044 = vmax.f32 %v693, 0.0
      %v1045 = vmax.f32 %v695, 0.0
      %v1046 = vmax.f32 %v886, 0.0
      %v1047 = vmax.f32 %v888, 0.0
      %v1048 = vmax.f32 %v699, 0.0
      %v1049 = vmax.f32 %v701, 0.0
      %v1050 = vmax.f32 %v892, 0.0
      %v1051 = vmax.f32 %v894, 0.0
      %v1052 = vmax.f32 %v703, 0.0
      %v1053 = vmax.f32 %v705, 0.0
      %v1054 = vmax.f32 %v896, 0.0
      %v1055 = vmax.f32 %v898, 0.0
      %v1056 = vmax.f32 %v709, 0.0
      %v1057 = vmax.f32 %v711, 0.0
      %v1058 = vmax.f32 %v902, 0.0
      %v1059 = vmax.f32 %v904, 0.0
      %v1060 = vmax.f32 %v713, 0.0
      %v1061 = vmax.f32 %v715, 0.0
      %v1062 = vmax.f32 %v906, 0.0
      %v1063 = vmax.f32 %v908, 0.0
      %v1064 = vmax.f32 %v719, 0.0
      %v1065 = vmax.f32 %v721, 0.0
      %v1066 = vmax.f32 %v912, 0.0
      %v1067 = vmax.f32 %v914, 0.0
      %v1068 = vmax.f32 %v723, 0.0
      %v1069 = vmax.f32 %v725, 0.0
      %v1070 = vmax.f32 %v916, 0.0
      %v1071 = vmax.f32 %v918, 0.0
      %v1072 = vmax.f32 %v729, 0.0
      %v1073 = vmax.f32 %v731, 0.0
      %v1074 = vmax.f32 %v922, 0.0
      %v1075 = vmax.f32 %v924, 0.0
      %v1076 = vmax.f32 %v733, 0.0
      %v1077 = vmax.f32 %v735, 0.0
      %v1078 = vmax.f32 %v926, 0.0
      %v1079 = vmax.f32 %v928, 0.0
      %v1080 = vmax.f32 %v739, 0.0
      %v1081 = vmax.f32 %v741, 0.0
      %v1082 = vmax.f32 %v932, 0.0
      %v1083 = vmax.f32 %v934, 0.0
      %v1084 = vmax.f32 %v743, 0.0
      %v1085 = vmax.f32 %v745, 0.0
      %v1086 = vmax.f32 %v936, 0.0
      %v1087 = vmax.f32 %v938, 0.0
      %v1088 = vmax.f32 %v749, 0.0
      %v1089 = vmax.f32 %v751, 0.0
      %v1090 = vmax.f32 %v942, 0.0
      %v1091 = vmax.f32 %v944, 0.0
      %v1092 = vmax.f32 %v753, 0.0
      %v1093 = vmax.f32 %v755, 0.0
      %v1094 = vmax.f32 %v946, 0.0
      %v1095 = vmax.f32 %v948, 0.0
      %v1096 = vmax.f32 %v759, 0.0
      %v1097 = vmax.f32 %v761, 0.0
      %v1098 = vmax.f32 %v952, 0.0
      %v1099 = vmax.f32 %v954, 0.0
      %v1100 = vmax.f32 %v763, 0.0
      %v1101 = vmax.f32 %v765, 0.0
      %v1102 = vmax.f32 %v956, 0.0
      %v1103 = vmax.f32 %v958, 0.0
      %v1104 = vmax.f32 %v769, 0.0
      %v1105 = vmax.f32 %v771, 0.0
      %v1106 = vmax.f32 %v962, 0.0
      %v1107 = vmax.f32 %v964, 0.0
      %v1108 = vmax.f32 %v773, 0.0
      %v1109 = vmax.f32 %v775, 0.0
      %v1110 = vmax.f32 %v966, 0.0
      %v1111 = vmax.f32 %v968, 0.0
      %v1112 = vmax.f32 %v779, 0.0
      %v1113 = vmax.f32 %v781, 0.0
      %v1114 = vmax.f32 %v972, 0.0
      %v1115 = vmax.f32 %v974, 0.0
      %v1116 = vmax.f32 %v783, 0.0
      %v1117 = vmax.f32 %v785, 0.0
      %v1118 = vmax.f32 %v976, 0.0
      %v1119 = vmax.f32 %v978, 0.0
      %v1120 = vmax.f32 %v789, 0.0
      %v1121 = vmax.f32 %v791, 0.0
      %v1122 = vmax.f32 %v982, 0.0
      %v1123 = vmax.f32 %v984, 0.0
      %v1124 = vmax.f32 %v793, 0.0
      %v1125 = vmax.f32 %v795, 0.0
      %v1126 = vmax.f32 %v986, 0.0
      %v1127 = vmax.f32 %v988, 0.0
      %v1128 = vmax.f32 %v799, 0.0
      %v1129 = vmax.f32 %v801, 0.0
      %v1130 = vmax.f32 %v992, 0.0
      %v1131 = vmax.f32 %v994, 0.0
      %v1132 = vmax.f32 %v803, 0.0
      %v1133 = vmax.f32 %v805, 0.0
      %v1134 = vmax.f32 %v996, 0.0
      %v1135 = vmax.f32 %v998, 0.0
      %v1136 = vmax.f32 %v809, 0.0
      %v1137 = vmax.f32 %v811, 0.0
      %v1138 = vmax.f32 %v1002, 0.0
      %v1139 = vmax.f32 %v1004, 0.0
      %v1140 = vmax.f32 %v813, 0.0
      %v1141 = vmax.f32 %v815, 0.0
      %v1142 = vmax.f32 %v1006, 0.0
      %v1143 = vmax.f32 %v1008, 0.0
      %v1144 = vmax.f32 %v819, 0.0
      %v1145 = vmax.f32 %v821, 0.0
      %v1146 = vmax.f32 %v1012, 0.0
      %v1147 = vmax.f32 %v1014, 0.0
      %v1148 = vmax.f32 %v823, 0.0
      %v1149 = vmax.f32 %v825, 0.0
      %v1150 = vmax.f32 %v1016, 0.0
      %v1151 = vmax.f32 %v1018, 0.0
      %v1152 = vmax.f32 %v829, 0.0
      %v1153 = vmax.f32 %v831, 0.0
      %v1154 = vmax.f32 %v1022, 0.0
      %v1155 = vmax.f32 %v1024, 0.0
      %v1156 = vmax.f32 %v833, 0.0
      %v1157 = vmax.f32 %v835, 0.0
      %v1158 = vmax.f32 %v1026, 0.0
      %v1159 = vmax.f32 %v1028, 0.0
      %v1160 = vmax.f32 %v839, 0.0
      %v1161 = vmax.f32 %v841, 0.0
      %v1162 = vmax.f32 %v1032, 0.0
      %v1163 = vmax.f32 %v1034, 0.0
      %v1164 = vmax.f32 %v843, 0.0
      %v1165 = vmax.f32 %v845, 0.0
      %v1166 = vmax.f32 %v1036, 0.0
      %v1167 = vmax.f32 %v1038, 0.0
      %v1168 = vld [vmem:[#allocation2] sm:$0xf]
      %v1169 = vadd.f32 %v1040, %v1044
      %v1170 = vadd.f32 %v1169, %v1048
      %v1171 = vadd.f32 %v1170, %v1052
      %v1172 = vadd.f32 %v1171, %v1056
      %v1173 = vadd.f32 %v1172, %v1060
      %v1174 = vadd.f32 %v1173, %v1064
      %v1175 = vadd.f32 %v1174, %v1068
      %v1176 = vadd.f32 %v1175, %v1072
      %v1177 = vadd.f32 %v1176, %v1076
      %v1178 = vadd.f32 %v1177, %v1080
      %v1179 = vadd.f32 %v1178, %v1084
      %v1180 = vadd.f32 %v1179, %v1088
      %v1181 = vadd.f32 %v1180, %v1092
      %v1182 = vadd.f32 %v1181, %v1096
      %v1183 = vadd.f32 %v1182, %v1100
      %v1184 = vadd.f32 %v1183, %v1104
      %v1185 = vadd.f32 %v1184, %v1108
      %v1186 = vadd.f32 %v1185, %v1112
      %v1187 = vadd.f32 %v1186, %v1116
      %v1188 = vadd.f32 %v1187, %v1120
      %v1189 = vadd.f32 %v1188, %v1124
      %v1190 = vadd.f32 %v1189, %v1128
      %v1191 = vadd.f32 %v1190, %v1132
      %v1192 = vadd.f32 %v1191, %v1136
      %v1193 = vadd.f32 %v1192, %v1140
      %v1194 = vadd.f32 %v1193, %v1144
      %v1195 = vadd.f32 %v1194, %v1148
      %v1196 = vadd.f32 %v1195, %v1152
      %v1197 = vadd.f32 %v1196, %v1156
      %v1198 = vadd.f32 %v1197, %v1160
      %v1199 = vadd.f32 %v1198, %v1164
      %v1200 = vrot.slane %v1199, 4
      %v1201 = vadd.f32 %v1199, %v1200
      %v1202 = vrot.slane %v1201, 2
      %v1203 = vadd.f32 %v1201, %v1202
      %v1204 = vrot.slane %v1203, 1
      %v1205 = vadd.f32 %v1203, %v1204
      %v1206 = vadd.f32 %v1041, %v1045
      %v1207 = vadd.f32 %v1206, %v1049
      %v1208 = vadd.f32 %v1207, %v1053
      %v1209 = vadd.f32 %v1208, %v1057
      %v1210 = vadd.f32 %v1209, %v1061
      %v1211 = vadd.f32 %v1210, %v1065
      %v1212 = vadd.f32 %v1211, %v1069
      %v1213 = vadd.f32 %v1212, %v1073
      %v1214 = vadd.f32 %v1213, %v1077
      %v1215 = vadd.f32 %v1214, %v1081
      %v1216 = vadd.f32 %v1215, %v1085
      %v1217 = vadd.f32 %v1216, %v1089
      %v1218 = vadd.f32 %v1217, %v1093
      %v1219 = vadd.f32 %v1218, %v1097
      %v1220 = vadd.f32 %v1219, %v1101
      %v1221 = vadd.f32 %v1220, %v1105
      %v1222 = vadd.f32 %v1221, %v1109
      %v1223 = vadd.f32 %v1222, %v1113
      %v1224 = vadd.f32 %v1223, %v1117
      %v1225 = vadd.f32 %v1224, %v1121
      %v1226 = vadd.f32 %v1225, %v1125
      %v1227 = vadd.f32 %v1226, %v1129
      %v1228 = vadd.f32 %v1227, %v1133
      %v1229 = vadd.f32 %v1228, %v1137
      %v1230 = vadd.f32 %v1229, %v1141
      %v1231 = vadd.f32 %v1230, %v1145
      %v1232 = vadd.f32 %v1231, %v1149
      %v1233 = vadd.f32 %v1232, %v1153
      %v1234 = vadd.f32 %v1233, %v1157
      %v1235 = vadd.f32 %v1234, %v1161
      %v1236 = vadd.f32 %v1235, %v1165
      %v1237 = vrot.slane %v1236, 4
      %v1238 = vadd.f32 %v1236, %v1237
      %v1239 = vrot.slane %v1238, 2
      %v1240 = vadd.f32 %v1238, %v1239
      %v1241 = vrot.slane %v1240, 1
      %v1242 = vadd.f32 %v1240, %v1241
      %v1243 = vadd.f32 %v1042, %v1046
      %v1244 = vadd.f32 %v1243, %v1050
      %v1245 = vadd.f32 %v1244, %v1054
      %v1246 = vadd.f32 %v1245, %v1058
      %v1247 = vadd.f32 %v1246, %v1062
      %v1248 = vadd.f32 %v1247, %v1066
      %v1249 = vadd.f32 %v1248, %v1070
      %v1250 = vadd.f32 %v1249, %v1074
      %v1251 = vadd.f32 %v1250, %v1078
      %v1252 = vadd.f32 %v1251, %v1082
      %v1253 = vadd.f32 %v1252, %v1086
      %v1254 = vadd.f32 %v1253, %v1090
      %v1255 = vadd.f32 %v1254, %v1094
      %v1256 = vadd.f32 %v1255, %v1098
      %v1257 = vadd.f32 %v1256, %v1102
      %v1258 = vadd.f32 %v1257, %v1106
      %v1259 = vadd.f32 %v1258, %v1110
      %v1260 = vadd.f32 %v1259, %v1114
      %v1261 = vadd.f32 %v1260, %v1118
      %v1262 = vadd.f32 %v1261, %v1122
      %v1263 = vadd.f32 %v1262, %v1126
      %v1264 = vadd.f32 %v1263, %v1130
      %v1265 = vadd.f32 %v1264, %v1134
      %v1266 = vadd.f32 %v1265, %v1138
      %v1267 = vadd.f32 %v1266, %v1142
      %v1268 = vadd.f32 %v1267, %v1146
      %v1269 = vadd.f32 %v1268, %v1150
      %v1270 = vadd.f32 %v1269, %v1154
      %v1271 = vadd.f32 %v1270, %v1158
      %v1272 = vadd.f32 %v1271, %v1162
      %v1273 = vadd.f32 %v1272, %v1166
      %v1274 = vrot.slane %v1273, 4
      %v1275 = vadd.f32 %v1273, %v1274
      %v1276 = vrot.slane %v1275, 2
      %v1277 = vadd.f32 %v1275, %v1276
      %v1278 = vrot.slane %v1277, 1
      %v1279 = vadd.f32 %v1277, %v1278
      %v1280 = vadd.f32 %v1043, %v1047
      %v1281 = vadd.f32 %v1280, %v1051
      %v1282 = vadd.f32 %v1281, %v1055
      %v1283 = vadd.f32 %v1282, %v1059
      %v1284 = vadd.f32 %v1283, %v1063
      %v1285 = vadd.f32 %v1284, %v1067
      %v1286 = vadd.f32 %v1285, %v1071
      %v1287 = vadd.f32 %v1286, %v1075
      %v1288 = vadd.f32 %v1287, %v1079
      %v1289 = vadd.f32 %v1288, %v1083
      %v1290 = vadd.f32 %v1289, %v1087
      %v1291 = vadd.f32 %v1290, %v1091
      %v1292 = vadd.f32 %v1291, %v1095
      %v1293 = vadd.f32 %v1292, %v1099
      %v1294 = vadd.f32 %v1293, %v1103
      %v1295 = vadd.f32 %v1294, %v1107
      %v1296 = vadd.f32 %v1295, %v1111
      %v1297 = vadd.f32 %v1296, %v1115
      %v1298 = vadd.f32 %v1297, %v1119
      %v1299 = vadd.f32 %v1298, %v1123
      %v1300 = vadd.f32 %v1299, %v1127
      %v1301 = vadd.f32 %v1300, %v1131
      %v1302 = vadd.f32 %v1301, %v1135
      %v1303 = vadd.f32 %v1302, %v1139
      %v1304 = vadd.f32 %v1303, %v1143
      %v1305 = vadd.f32 %v1304, %v1147
      %v1306 = vadd.f32 %v1305, %v1151
      %v1307 = vadd.f32 %v1306, %v1155
      %v1308 = vadd.f32 %v1307, %v1159
      %v1309 = vadd.f32 %v1308, %v1163
      %v1310 = vadd.f32 %v1309, %v1167
      %v1311 = vrot.slane %v1310, 4
      %v1312 = vadd.f32 %v1310, %v1311
      %v1313 = vrot.slane %v1312, 2
      %v1314 = vadd.f32 %v1312, %v1313
      %v1315 = vrot.slane %v1314, 1
      %v1316 = vadd.f32 %v1314, %v1315
      %v1321 = vcombine.low %v1205, %v1242
      %v1322 = vcombine.low %v1279, %v1316
      %v1324 = vunpack.c.l.s4 1966171168
      %v1325 = vunpack.c.0.s8 %v1324
      %v1326 = vlaneseq
      %v1327 = vshrl.u32 %v1326, 7
      %v1328 = vsub.s32 %v1325, %v1327
      %v1329 = vrot.slane %v1321, %v1328
      %v1331 = vunpack.c.l.s4 1966171168
      %v1332 = vunpack.c.0.s8 %v1331
      %v1333 = vlaneseq
      %v1334 = vshrl.u32 %v1333, 7
      %v1335 = vsub.s32 %v1332, %v1334
      %v1336 = vrot.slane %v1322, %v1335
      %v1337 = vcombine.low %v1329, %v1336
      %v1339 = vunpack.c.l.s4 1966171168
      %v1340 = vunpack.c.0.s8 %v1339
      %v1341 = vlaneseq
      %v1342 = vshrl.u32 %v1341, 7
      %v1343 = vsub.s32 %v1340, %v1342
      %v1344 = vrot.slane %v1337, %v1343
      %v1346 = vadd.f32 %v1168, %v1344
      %v1347 = vlaneseq
      %vm1348 = vcmp.ge.s32.totalorder %v1347, 0
      %vm1349 = vcmp.lt.s32.totalorder %v1347, 512
      %vm1350 = vmand %vm1348, %vm1349
      %1351 = vst.msk [vmem:[#allocation2] sm:$0xf] %vm1350, %v1346
      %v1352 = vld [vmem:[%s1 + $0x10] sm:$0xff]
      %v1353 = vld [vmem:[%s1 + $0x18] sm:$0xff]
      %v1354 = vld [vmem:[%s1 + $0x50] sm:$0xff]
      %v1355 = vld [vmem:[%s1 + $0x58] sm:$0xff]
      %v1356 = vld [vmem:[%s1 + $0x90] sm:$0xff]
      %v1357 = vld [vmem:[%s1 + $0x98] sm:$0xff]
      %v1358 = vld [vmem:[%s1 + $0xd0] sm:$0xff]
      %v1359 = vld [vmem:[%s1 + $0xd8] sm:$0xff]
      %v1368 = vunpack.c.l.b16 %v1352
      %v1369 = vunpack.c.h.b16 %v1352
      %v1370 = vunpack.c.l.b16 %v1353
      %v1371 = vunpack.c.h.b16 %v1353
      %v1372 = vunpack.c.l.b16 %v1354
      %v1373 = vunpack.c.h.b16 %v1354
      %v1374 = vunpack.c.l.b16 %v1355
      %v1375 = vunpack.c.h.b16 %v1355
      %v1376 = vunpack.c.l.b16 %v1356
      %v1377 = vunpack.c.h.b16 %v1356
      %v1378 = vunpack.c.l.b16 %v1357
      %v1379 = vunpack.c.h.b16 %v1357
      %v1380 = vunpack.c.l.b16 %v1358
      %v1381 = vunpack.c.h.b16 %v1358
      %v1382 = vunpack.c.l.b16 %v1359
      %v1383 = vunpack.c.h.b16 %v1359
      %v1384 = vpack.c.b16 %v1372, %v1368
      %v1385 = vpack.c.b16 %v1373, %v1369
      %v1386 = vpack.c.b16 %v1374, %v1370
      %v1387 = vpack.c.b16 %v1375, %v1371
      %v1388 = vpack.c.b16 %v1380, %v1376
      %v1389 = vpack.c.b16 %v1381, %v1377
      %v1390 = vpack.c.b16 %v1382, %v1378
      %v1391 = vpack.c.b16 %v1383, %v1379
      %1400 = vmatprep.subr.bf16.mxu0 %v1385
      %1401 = vmatpush1.bf16.msra.mxu0 %v1384
      %1402 = vmatprep.subr.bf16.mxu0 %v1389
      %1403 = vmatpush1.bf16.msra.mxu0 %v1388
      %1404 = vmatprep.subr.bf16.mxu0 0
      %1405 = vmatpush1.bf16.msra.mxu0 0
      %1406 = vmatprep.subr.bf16.mxu0 0
      %1407 = vmatpush1.bf16.msra.mxu0 0
      %1408 = vmatprep.subr.bf16.mxu0 0
      %1409 = vmatpush1.bf16.msra.mxu0 0
      %1410 = vmatprep.subr.bf16.mxu0 0
      %1411 = vmatpush1.bf16.msra.mxu0 0
      %1412 = vmatprep.subr.bf16.mxu0 0
      %1413 = vmatpush1.bf16.msra.mxu0 0
      %1414 = vmatprep.subr.bf16.mxu0 0
      %1415 = vmatpush1.bf16.msra.mxu0 0
      %1416 = vmatprep.subr.bf16.mxu0 0
      %1417 = vmatpush1.bf16.msra.mxu0 0
      %1418 = vmatprep.subr.bf16.mxu0 0
      %1419 = vmatpush1.bf16.msra.mxu0 0
      %1420 = vmatprep.subr.bf16.mxu0 0
      %1421 = vmatpush1.bf16.msra.mxu0 0
      %1422 = vmatprep.subr.bf16.mxu0 0
      %1423 = vmatpush1.bf16.msra.mxu0 0
      %1424 = vmatprep.subr.bf16.mxu0 0
      %1425 = vmatpush1.bf16.msra.mxu0 0
      %1426 = vmatprep.subr.bf16.mxu0 0
      %1427 = vmatpush1.bf16.msra.mxu0 0
      %1428 = vmatprep.subr.bf16.mxu0 0
      %1429 = vmatpush1.bf16.msra.mxu0 0
      %1430 = vmatprep.subr.bf16.mxu0 0
      %1431 = vmatpush1.bf16.msra.mxu0 0
      %1432 = vmatprep.mubr.bf16.mxu0 0
      %1433 = vmatmul.mubr.bf16.gmra.mrb[0].mxu0 %v607
      %v1434 = vpop.f32.mrb[0].mxu0
      %v1435 = vadd.f32 0.0, %v1434
      %v1436 = vpop.f32.mrb[0].mxu0
      %v1437 = vadd.f32 0.0, %v1436
      %v1438 = vpop.f32.mrb[0].mxu0
      %v1439 = vadd.f32 0.0, %v1438
      %v1440 = vpop.f32.mrb[0].mxu0
      %v1441 = vadd.f32 0.0, %v1440
      %1442 = vmatprep.mubr.bf16.mxu0 0
      %1443 = vmatmul.mubr.bf16.gmra.mrb[0].mxu0 %v610
      %v1444 = vpop.f32.mrb[0].mxu0
      %v1445 = vadd.f32 0.0, %v1444
      %v1446 = vpop.f32.mrb[0].mxu0
      %v1447 = vadd.f32 0.0, %v1446
      %v1448 = vpop.f32.mrb[0].mxu0
      %v1449 = vadd.f32 0.0, %v1448
      %v1450 = vpop.f32.mrb[0].mxu0
      %v1451 = vadd.f32 0.0, %v1450
      %1452 = vmatprep.mubr.bf16.mxu0 0
      %1453 = vmatmul.mubr.bf16.gmra.mrb[0].mxu0 %v613
      %v1454 = vpop.f32.mrb[0].mxu0
      %v1455 = vadd.f32 0.0, %v1454
      %v1456 = vpop.f32.mrb[0].mxu0
      %v1457 = vadd.f32 0.0, %v1456
      %v1458 = vpop.f32.mrb[0].mxu0
      %v1459 = vadd.f32 0.0, %v1458
      %v1460 = vpop.f32.mrb[0].mxu0
      %v1461 = vadd.f32 0.0, %v1460
      %1462 = vmatprep.mubr.bf16.mxu0 0
      %1463 = vmatmul.mubr.bf16.gmra.mrb[0].mxu0 %v616
      %v1464 = vpop.f32.mrb[0].mxu0
      %v1465 = vadd.f32 0.0, %v1464
      %v1466 = vpop.f32.mrb[0].mxu0
      %v1467 = vadd.f32 0.0, %v1466
      %v1468 = vpop.f32.mrb[0].mxu0
      %v1469 = vadd.f32 0.0, %v1468
      %v1470 = vpop.f32.mrb[0].mxu0
      %v1471 = vadd.f32 0.0, %v1470
      %1472 = vmatprep.mubr.bf16.mxu0 0
      %1473 = vmatmul.mubr.bf16.gmra.mrb[0].mxu0 %v619
      %v1474 = vpop.f32.mrb[0].mxu0
      %v1475 = vadd.f32 0.0, %v1474
      %v1476 = vpop.f32.mrb[0].mxu0
      %v1477 = vadd.f32 0.0, %v1476
      %v1478 = vpop.f32.mrb[0].mxu0
      %v1479 = vadd.f32 0.0, %v1478
      %v1480 = vpop.f32.mrb[0].mxu0
      %v1481 = vadd.f32 0.0, %v1480
      %1482 = vmatprep.mubr.bf16.mxu0 0
      %1483 = vmatmul.mubr.bf16.gmra.mrb[0].mxu0 %v622
      %v1484 = vpop.f32.mrb[0].mxu0
      %v1485 = vadd.f32 0.0, %v1484
      %v1486 = vpop.f32.mrb[0].mxu0
      %v1487 = vadd.f32 0.0, %v1486
      %v1488 = vpop.f32.mrb[0].mxu0
      %v1489 = vadd.f32 0.0, %v1488
      %v1490 = vpop.f32.mrb[0].mxu0
      %v1491 = vadd.f32 0.0, %v1490
      %1492 = vmatprep.mubr.bf16.mxu0 0
      %1493 = vmatmul.mubr.bf16.gmra.mrb[0].mxu0 %v625
      %v1494 = vpop.f32.mrb[0].mxu0
      %v1495 = vadd.f32 0.0, %v1494
      %v1496 = vpop.f32.mrb[0].mxu0
      %v1497 = vadd.f32 0.0, %v1496
      %v1498 = vpop.f32.mrb[0].mxu0
      %v1499 = vadd.f32 0.0, %v1498
      %v1500 = vpop.f32.mrb[0].mxu0
      %v1501 = vadd.f32 0.0, %v1500
      %1502 = vmatprep.mubr.bf16.mxu0 0
      %1503 = vmatmul.mubr.bf16.gmra.mrb[0].mxu0 %v628
      %v1504 = vpop.f32.mrb[0].mxu0
      %v1505 = vadd.f32 0.0, %v1504
      %v1506 = vpop.f32.mrb[0].mxu0
      %v1507 = vadd.f32 0.0, %v1506
      %v1508 = vpop.f32.mrb[0].mxu0
      %v1509 = vadd.f32 0.0, %v1508
      %v1510 = vpop.f32.mrb[0].mxu0
      %v1511 = vadd.f32 0.0, %v1510
      %1512 = vmatprep.mubr.bf16.mxu0 0
      %1513 = vmatmul.mubr.bf16.gmra.mrb[0].mxu0 %v631
      %v1514 = vpop.f32.mrb[0].mxu0
      %v1515 = vadd.f32 0.0, %v1514
      %v1516 = vpop.f32.mrb[0].mxu0
      %v1517 = vadd.f32 0.0, %v1516
      %v1518 = vpop.f32.mrb[0].mxu0
      %v1519 = vadd.f32 0.0, %v1518
      %v1520 = vpop.f32.mrb[0].mxu0
      %v1521 = vadd.f32 0.0, %v1520
      %1522 = vmatprep.mubr.bf16.mxu0 0
      %1523 = vmatmul.mubr.bf16.gmra.mrb[0].mxu0 %v634
      %v1524 = vpop.f32.mrb[0].mxu0
      %v1525 = vadd.f32 0.0, %v1524
      %v1526 = vpop.f32.mrb[0].mxu0
      %v1527 = vadd.f32 0.0, %v1526
      %v1528 = vpop.f32.mrb[0].mxu0
      %v1529 = vadd.f32 0.0, %v1528
      %v1530 = vpop.f32.mrb[0].mxu0
      %v1531 = vadd.f32 0.0, %v1530
      %1532 = vmatprep.mubr.bf16.mxu0 0
      %1533 = vmatmul.mubr.bf16.gmra.mrb[0].mxu0 %v637
      %v1534 = vpop.f32.mrb[0].mxu0
      %v1535 = vadd.f32 0.0, %v1534
      %v1536 = vpop.f32.mrb[0].mxu0
      %v1537 = vadd.f32 0.0, %v1536
      %v1538 = vpop.f32.mrb[0].mxu0
      %v1539 = vadd.f32 0.0, %v1538
      %v1540 = vpop.f32.mrb[0].mxu0
      %v1541 = vadd.f32 0.0, %v1540
      %1542 = vmatprep.mubr.bf16.mxu0 0
      %1543 = vmatmul.mubr.bf16.gmra.mrb[0].mxu0 %v640
      %v1544 = vpop.f32.mrb[0].mxu0
      %v1545 = vadd.f32 0.0, %v1544
      %v1546 = vpop.f32.mrb[0].mxu0
      %v1547 = vadd.f32 0.0, %v1546
      %v1548 = vpop.f32.mrb[0].mxu0
      %v1549 = vadd.f32 0.0, %v1548
      %v1550 = vpop.f32.mrb[0].mxu0
      %v1551 = vadd.f32 0.0, %v1550
      %1552 = vmatprep.mubr.bf16.mxu0 0
      %1553 = vmatmul.mubr.bf16.gmra.mrb[0].mxu0 %v643
      %v1554 = vpop.f32.mrb[0].mxu0
      %v1555 = vadd.f32 0.0, %v1554
      %v1556 = vpop.f32.mrb[0].mxu0
      %v1557 = vadd.f32 0.0, %v1556
      %v1558 = vpop.f32.mrb[0].mxu0
      %v1559 = vadd.f32 0.0, %v1558
      %v1560 = vpop.f32.mrb[0].mxu0
      %v1561 = vadd.f32 0.0, %v1560
      %1562 = vmatprep.mubr.bf16.mxu0 0
      %1563 = vmatmul.mubr.bf16.gmra.mrb[0].mxu0 %v646
      %v1564 = vpop.f32.mrb[0].mxu0
      %v1565 = vadd.f32 0.0, %v1564
      %v1566 = vpop.f32.mrb[0].mxu0
      %v1567 = vadd.f32 0.0, %v1566
      %v1568 = vpop.f32.mrb[0].mxu0
      %v1569 = vadd.f32 0.0, %v1568
      %v1570 = vpop.f32.mrb[0].mxu0
      %v1571 = vadd.f32 0.0, %v1570
      %1572 = vmatprep.mubr.bf16.mxu0 0
      %1573 = vmatmul.mubr.bf16.gmra.mrb[0].mxu0 %v649
      %v1574 = vpop.f32.mrb[0].mxu0
      %v1575 = vadd.f32 0.0, %v1574
      %v1576 = vpop.f32.mrb[0].mxu0
      %v1577 = vadd.f32 0.0, %v1576
      %v1578 = vpop.f32.mrb[0].mxu0
      %v1579 = vadd.f32 0.0, %v1578
      %v1580 = vpop.f32.mrb[0].mxu0
      %v1581 = vadd.f32 0.0, %v1580
      %1582 = vmatprep.mubr.bf16.mxu0 0
      %1583 = vmatmul.mubr.bf16.gmra.mrb[0].mxu0 %v652
      %v1584 = vpop.f32.mrb[0].mxu0
      %v1585 = vadd.f32 0.0, %v1584
      %v1586 = vpop.f32.mrb[0].mxu0
      %v1587 = vadd.f32 0.0, %v1586
      %v1588 = vpop.f32.mrb[0].mxu0
      %v1589 = vadd.f32 0.0, %v1588
      %v1590 = vpop.f32.mrb[0].mxu0
      %v1591 = vadd.f32 0.0, %v1590
      %1592 = vdwg.mxu0
      %1593 = vmatprep.subr.bf16.mxu0 %v1387
      %1594 = vmatpush1.bf16.msra.mxu0 %v1386
      %1595 = vmatprep.subr.bf16.mxu0 %v1391
      %1596 = vmatpush1.bf16.msra.mxu0 %v1390
      %1597 = vmatprep.subr.bf16.mxu0 0
      %1598 = vmatpush1.bf16.msra.mxu0 0
      %1599 = vmatprep.subr.bf16.mxu0 0
      %1600 = vmatpush1.bf16.msra.mxu0 0
      %1601 = vmatprep.subr.bf16.mxu0 0
      %1602 = vmatpush1.bf16.msra.mxu0 0
      %1603 = vmatprep.subr.bf16.mxu0 0
      %1604 = vmatpush1.bf16.msra.mxu0 0
      %1605 = vmatprep.subr.bf16.mxu0 0
      %1606 = vmatpush1.bf16.msra.mxu0 0
      %1607 = vmatprep.subr.bf16.mxu0 0
      %1608 = vmatpush1.bf16.msra.mxu0 0
      %1609 = vmatprep.subr.bf16.mxu0 0
      %1610 = vmatpush1.bf16.msra.mxu0 0
      %1611 = vmatprep.subr.bf16.mxu0 0
      %1612 = vmatpush1.bf16.msra.mxu0 0
      %1613 = vmatprep.subr.bf16.mxu0 0
      %1614 = vmatpush1.bf16.msra.mxu0 0
      %1615 = vmatprep.subr.bf16.mxu0 0
      %1616 = vmatpush1.bf16.msra.mxu0 0
      %1617 = vmatprep.subr.bf16.mxu0 0
      %1618 = vmatpush1.bf16.msra.mxu0 0
      %1619 = vmatprep.subr.bf16.mxu0 0
      %1620 = vmatpush1.bf16.msra.mxu0 0
      %1621 = vmatprep.subr.bf16.mxu0 0
      %1622 = vmatpush1.bf16.msra.mxu0 0
      %1623 = vmatprep.subr.bf16.mxu0 0
      %1624 = vmatpush1.bf16.msra.mxu0 0
      %1625 = vmatprep.mubr.bf16.mxu0 0
      %1626 = vmatmul.mubr.bf16.gmra.mrb[0].mxu0 %v607
      %v1627 = vpop.f32.mrb[0].mxu0
      %v1628 = vadd.f32 0.0, %v1627
      %v1629 = vpop.f32.mrb[0].mxu0
      %v1630 = vadd.f32 0.0, %v1629
      %v1631 = vpop.f32.mrb[0].mxu0
      %v1632 = vadd.f32 0.0, %v1631
      %v1633 = vpop.f32.mrb[0].mxu0
      %v1634 = vadd.f32 0.0, %v1633
      %1635 = vmatprep.mubr.bf16.mxu0 0
      %1636 = vmatmul.mubr.bf16.gmra.mrb[0].mxu0 %v610
      %v1637 = vpop.f32.mrb[0].mxu0
      %v1638 = vadd.f32 0.0, %v1637
      %v1639 = vpop.f32.mrb[0].mxu0
      %v1640 = vadd.f32 0.0, %v1639
      %v1641 = vpop.f32.mrb[0].mxu0
      %v1642 = vadd.f32 0.0, %v1641
      %v1643 = vpop.f32.mrb[0].mxu0
      %v1644 = vadd.f32 0.0, %v1643
      %1645 = vmatprep.mubr.bf16.mxu0 0
      %1646 = vmatmul.mubr.bf16.gmra.mrb[0].mxu0 %v613
      %v1647 = vpop.f32.mrb[0].mxu0
      %v1648 = vadd.f32 0.0, %v1647
      %v1649 = vpop.f32.mrb[0].mxu0
      %v1650 = vadd.f32 0.0, %v1649
      %v1651 = vpop.f32.mrb[0].mxu0
      %v1652 = vadd.f32 0.0, %v1651
      %v1653 = vpop.f32.mrb[0].mxu0
      %v1654 = vadd.f32 0.0, %v1653
      %1655 = vmatprep.mubr.bf16.mxu0 0
      %1656 = vmatmul.mubr.bf16.gmra.mrb[0].mxu0 %v616
      %v1657 = vpop.f32.mrb[0].mxu0
      %v1658 = vadd.f32 0.0, %v1657
      %v1659 = vpop.f32.mrb[0].mxu0
      %v1660 = vadd.f32 0.0, %v1659
      %v1661 = vpop.f32.mrb[0].mxu0
      %v1662 = vadd.f32 0.0, %v1661
      %v1663 = vpop.f32.mrb[0].mxu0
      %v1664 = vadd.f32 0.0, %v1663
      %1665 = vmatprep.mubr.bf16.mxu0 0
      %1666 = vmatmul.mubr.bf16.gmra.mrb[0].mxu0 %v619
      %v1667 = vpop.f32.mrb[0].mxu0
      %v1668 = vadd.f32 0.0, %v1667
      %v1669 = vpop.f32.mrb[0].mxu0
      %v1670 = vadd.f32 0.0, %v1669
      %v1671 = vpop.f32.mrb[0].mxu0
      %v1672 = vadd.f32 0.0, %v1671
      %v1673 = vpop.f32.mrb[0].mxu0
      %v1674 = vadd.f32 0.0, %v1673
      %1675 = vmatprep.mubr.bf16.mxu0 0
      %1676 = vmatmul.mubr.bf16.gmra.mrb[0].mxu0 %v622
      %v1677 = vpop.f32.mrb[0].mxu0
      %v1678 = vadd.f32 0.0, %v1677
      %v1679 = vpop.f32.mrb[0].mxu0
      %v1680 = vadd.f32 0.0, %v1679
      %v1681 = vpop.f32.mrb[0].mxu0
      %v1682 = vadd.f32 0.0, %v1681
      %v1683 = vpop.f32.mrb[0].mxu0
      %v1684 = vadd.f32 0.0, %v1683
      %1685 = vmatprep.mubr.bf16.mxu0 0
      %1686 = vmatmul.mubr.bf16.gmra.mrb[0].mxu0 %v625
      %v1687 = vpop.f32.mrb[0].mxu0
      %v1688 = vadd.f32 0.0, %v1687
      %v1689 = vpop.f32.mrb[0].mxu0
      %v1690 = vadd.f32 0.0, %v1689
      %v1691 = vpop.f32.mrb[0].mxu0
      %v1692 = vadd.f32 0.0, %v1691
      %v1693 = vpop.f32.mrb[0].mxu0
      %v1694 = vadd.f32 0.0, %v1693
      %1695 = vmatprep.mubr.bf16.mxu0 0
      %1696 = vmatmul.mubr.bf16.gmra.mrb[0].mxu0 %v628
      %v1697 = vpop.f32.mrb[0].mxu0
      %v1698 = vadd.f32 0.0, %v1697
      %v1699 = vpop.f32.mrb[0].mxu0
      %v1700 = vadd.f32 0.0, %v1699
      %v1701 = vpop.f32.mrb[0].mxu0
      %v1702 = vadd.f32 0.0, %v1701
      %v1703 = vpop.f32.mrb[0].mxu0
      %v1704 = vadd.f32 0.0, %v1703
      %1705 = vmatprep.mubr.bf16.mxu0 0
      %1706 = vmatmul.mubr.bf16.gmra.mrb[0].mxu0 %v631
      %v1707 = vpop.f32.mrb[0].mxu0
      %v1708 = vadd.f32 0.0, %v1707
      %v1709 = vpop.f32.mrb[0].mxu0
      %v1710 = vadd.f32 0.0, %v1709
      %v1711 = vpop.f32.mrb[0].mxu0
      %v1712 = vadd.f32 0.0, %v1711
      %v1713 = vpop.f32.mrb[0].mxu0
      %v1714 = vadd.f32 0.0, %v1713
      %1715 = vmatprep.mubr.bf16.mxu0 0
      %1716 = vmatmul.mubr.bf16.gmra.mrb[0].mxu0 %v634
      %v1717 = vpop.f32.mrb[0].mxu0
      %v1718 = vadd.f32 0.0, %v1717
      %v1719 = vpop.f32.mrb[0].mxu0
      %v1720 = vadd.f32 0.0, %v1719
      %v1721 = vpop.f32.mrb[0].mxu0
      %v1722 = vadd.f32 0.0, %v1721
      %v1723 = vpop.f32.mrb[0].mxu0
      %v1724 = vadd.f32 0.0, %v1723
      %1725 = vmatprep.mubr.bf16.mxu0 0
      %1726 = vmatmul.mubr.bf16.gmra.mrb[0].mxu0 %v637
      %v1727 = vpop.f32.mrb[0].mxu0
      %v1728 = vadd.f32 0.0, %v1727
      %v1729 = vpop.f32.mrb[0].mxu0
      %v1730 = vadd.f32 0.0, %v1729
      %v1731 = vpop.f32.mrb[0].mxu0
      %v1732 = vadd.f32 0.0, %v1731
      %v1733 = vpop.f32.mrb[0].mxu0
      %v1734 = vadd.f32 0.0, %v1733
      %1735 = vmatprep.mubr.bf16.mxu0 0
      %1736 = vmatmul.mubr.bf16.gmra.mrb[0].mxu0 %v640
      %v1737 = vpop.f32.mrb[0].mxu0
      %v1738 = vadd.f32 0.0, %v1737
      %v1739 = vpop.f32.mrb[0].mxu0
      %v1740 = vadd.f32 0.0, %v1739
      %v1741 = vpop.f32.mrb[0].mxu0
      %v1742 = vadd.f32 0.0, %v1741
      %v1743 = vpop.f32.mrb[0].mxu0
      %v1744 = vadd.f32 0.0, %v1743
      %1745 = vmatprep.mubr.bf16.mxu0 0
      %1746 = vmatmul.mubr.bf16.gmra.mrb[0].mxu0 %v643
      %v1747 = vpop.f32.mrb[0].mxu0
      %v1748 = vadd.f32 0.0, %v1747
      %v1749 = vpop.f32.mrb[0].mxu0
      %v1750 = vadd.f32 0.0, %v1749
      %v1751 = vpop.f32.mrb[0].mxu0
      %v1752 = vadd.f32 0.0, %v1751
      %v1753 = vpop.f32.mrb[0].mxu0
      %v1754 = vadd.f32 0.0, %v1753
      %1755 = vmatprep.mubr.bf16.mxu0 0
      %1756 = vmatmul.mubr.bf16.gmra.mrb[0].mxu0 %v646
      %v1757 = vpop.f32.mrb[0].mxu0
      %v1758 = vadd.f32 0.0, %v1757
      %v1759 = vpop.f32.mrb[0].mxu0
      %v1760 = vadd.f32 0.0, %v1759
      %v1761 = vpop.f32.mrb[0].mxu0
      %v1762 = vadd.f32 0.0, %v1761
      %v1763 = vpop.f32.mrb[0].mxu0
      %v1764 = vadd.f32 0.0, %v1763
      %1765 = vmatprep.mubr.bf16.mxu0 0
      %1766 = vmatmul.mubr.bf16.gmra.mrb[0].mxu0 %v649
      %v1767 = vpop.f32.mrb[0].mxu0
      %v1768 = vadd.f32 0.0, %v1767
      %v1769 = vpop.f32.mrb[0].mxu0
      %v1770 = vadd.f32 0.0, %v1769
      %v1771 = vpop.f32.mrb[0].mxu0
      %v1772 = vadd.f32 0.0, %v1771
      %v1773 = vpop.f32.mrb[0].mxu0
      %v1774 = vadd.f32 0.0, %v1773
      %1775 = vmatprep.mubr.bf16.mxu0 0
      %1776 = vmatmul.mubr.bf16.gmra.mrb[0].mxu0 %v652
      %v1777 = vpop.f32.mrb[0].mxu0
      %v1778 = vadd.f32 0.0, %v1777
      %v1779 = vpop.f32.mrb[0].mxu0
      %v1780 = vadd.f32 0.0, %v1779
      %v1781 = vpop.f32.mrb[0].mxu0
      %v1782 = vadd.f32 0.0, %v1781
      %v1783 = vpop.f32.mrb[0].mxu0
      %v1784 = vadd.f32 0.0, %v1783
      %1785 = vdwg.mxu0
      %v1786 = vmax.f32 %v1435, 0.0
      %v1787 = vmax.f32 %v1437, 0.0
      %v1788 = vmax.f32 %v1628, 0.0
      %v1789 = vmax.f32 %v1630, 0.0
      %v1790 = vmax.f32 %v1439, 0.0
      %v1791 = vmax.f32 %v1441, 0.0
      %v1792 = vmax.f32 %v1632, 0.0
      %v1793 = vmax.f32 %v1634, 0.0
      %v1794 = vmax.f32 %v1445, 0.0
      %v1795 = vmax.f32 %v1447, 0.0
      %v1796 = vmax.f32 %v1638, 0.0
      %v1797 = vmax.f32 %v1640, 0.0
      %v1798 = vmax.f32 %v1449, 0.0
      %v1799 = vmax.f32 %v1451, 0.0
      %v1800 = vmax.f32 %v1642, 0.0
      %v1801 = vmax.f32 %v1644, 0.0
      %v1802 = vmax.f32 %v1455, 0.0
      %v1803 = vmax.f32 %v1457, 0.0
      %v1804 = vmax.f32 %v1648, 0.0
      %v1805 = vmax.f32 %v1650, 0.0
      %v1806 = vmax.f32 %v1459, 0.0
      %v1807 = vmax.f32 %v1461, 0.0
      %v1808 = vmax.f32 %v1652, 0.0
      %v1809 = vmax.f32 %v1654, 0.0
      %v1810 = vmax.f32 %v1465, 0.0
      %v1811 = vmax.f32 %v1467, 0.0
      %v1812 = vmax.f32 %v1658, 0.0
      %v1813 = vmax.f32 %v1660, 0.0
      %v1814 = vmax.f32 %v1469, 0.0
      %v1815 = vmax.f32 %v1471, 0.0
      %v1816 = vmax.f32 %v1662, 0.0
      %v1817 = vmax.f32 %v1664, 0.0
      %v1818 = vmax.f32 %v1475, 0.0
      %v1819 = vmax.f32 %v1477, 0.0
      %v1820 = vmax.f32 %v1668, 0.0
      %v1821 = vmax.f32 %v1670, 0.0
      %v1822 = vmax.f32 %v1479, 0.0
      %v1823 = vmax.f32 %v1481, 0.0
      %v1824 = vmax.f32 %v1672, 0.0
      %v1825 = vmax.f32 %v1674, 0.0
      %v1826 = vmax.f32 %v1485, 0.0
      %v1827 = vmax.f32 %v1487, 0.0
      %v1828 = vmax.f32 %v1678, 0.0
      %v1829 = vmax.f32 %v1680, 0.0
      %v1830 = vmax.f32 %v1489, 0.0
      %v1831 = vmax.f32 %v1491, 0.0
      %v1832 = vmax.f32 %v1682, 0.0
      %v1833 = vmax.f32 %v1684, 0.0
      %v1834 = vmax.f32 %v1495, 0.0
      %v1835 = vmax.f32 %v1497, 0.0
      %v1836 = vmax.f32 %v1688, 0.0
      %v1837 = vmax.f32 %v1690, 0.0
      %v1838 = vmax.f32 %v1499, 0.0
      %v1839 = vmax.f32 %v1501, 0.0
      %v1840 = vmax.f32 %v1692, 0.0
      %v1841 = vmax.f32 %v1694, 0.0
      %v1842 = vmax.f32 %v1505, 0.0
      %v1843 = vmax.f32 %v1507, 0.0
      %v1844 = vmax.f32 %v1698, 0.0
      %v1845 = vmax.f32 %v1700, 0.0
      %v1846 = vmax.f32 %v1509, 0.0
      %v1847 = vmax.f32 %v1511, 0.0
      %v1848 = vmax.f32 %v1702, 0.0
      %v1849 = vmax.f32 %v1704, 0.0
      %v1850 = vmax.f32 %v1515, 0.0
      %v1851 = vmax.f32 %v1517, 0.0
      %v1852 = vmax.f32 %v1708, 0.0
      %v1853 = vmax.f32 %v1710, 0.0
      %v1854 = vmax.f32 %v1519, 0.0
      %v1855 = vmax.f32 %v1521, 0.0
      %v1856 = vmax.f32 %v1712, 0.0
      %v1857 = vmax.f32 %v1714, 0.0
      %v1858 = vmax.f32 %v1525, 0.0
      %v1859 = vmax.f32 %v1527, 0.0
      %v1860 = vmax.f32 %v1718, 0.0
      %v1861 = vmax.f32 %v1720, 0.0
      %v1862 = vmax.f32 %v1529, 0.0
      %v1863 = vmax.f32 %v1531, 0.0
      %v1864 = vmax.f32 %v1722, 0.0
      %v1865 = vmax.f32 %v1724, 0.0
      %v1866 = vmax.f32 %v1535, 0.0
      %v1867 = vmax.f32 %v1537, 0.0
      %v1868 = vmax.f32 %v1728, 0.0
      %v1869 = vmax.f32 %v1730, 0.0
      %v1870 = vmax.f32 %v1539, 0.0
      %v1871 = vmax.f32 %v1541, 0.0
      %v1872 = vmax.f32 %v1732, 0.0
      %v1873 = vmax.f32 %v1734, 0.0
      %v1874 = vmax.f32 %v1545, 0.0
      %v1875 = vmax.f32 %v1547, 0.0
      %v1876 = vmax.f32 %v1738, 0.0
      %v1877 = vmax.f32 %v1740, 0.0
      %v1878 = vmax.f32 %v1549, 0.0
      %v1879 = vmax.f32 %v1551, 0.0
      %v1880 = vmax.f32 %v1742, 0.0
      %v1881 = vmax.f32 %v1744, 0.0
      %v1882 = vmax.f32 %v1555, 0.0
      %v1883 = vmax.f32 %v1557, 0.0
      %v1884 = vmax.f32 %v1748, 0.0
      %v1885 = vmax.f32 %v1750, 0.0
      %v1886 = vmax.f32 %v1559, 0.0
      %v1887 = vmax.f32 %v1561, 0.0
      %v1888 = vmax.f32 %v1752, 0.0
      %v1889 = vmax.f32 %v1754, 0.0
      %v1890 = vmax.f32 %v1565, 0.0
      %v1891 = vmax.f32 %v1567, 0.0
      %v1892 = vmax.f32 %v1758, 0.0
      %v1893 = vmax.f32 %v1760, 0.0
      %v1894 = vmax.f32 %v1569, 0.0
      %v1895 = vmax.f32 %v1571, 0.0
      %v1896 = vmax.f32 %v1762, 0.0
      %v1897 = vmax.f32 %v1764, 0.0
      %v1898 = vmax.f32 %v1575, 0.0
      %v1899 = vmax.f32 %v1577, 0.0
      %v1900 = vmax.f32 %v1768, 0.0
      %v1901 = vmax.f32 %v1770, 0.0
      %v1902 = vmax.f32 %v1579, 0.0
      %v1903 = vmax.f32 %v1581, 0.0
      %v1904 = vmax.f32 %v1772, 0.0
      %v1905 = vmax.f32 %v1774, 0.0
      %v1906 = vmax.f32 %v1585, 0.0
      %v1907 = vmax.f32 %v1587, 0.0
      %v1908 = vmax.f32 %v1778, 0.0
      %v1909 = vmax.f32 %v1780, 0.0
      %v1910 = vmax.f32 %v1589, 0.0
      %v1911 = vmax.f32 %v1591, 0.0
      %v1912 = vmax.f32 %v1782, 0.0
      %v1913 = vmax.f32 %v1784, 0.0
      %v1914 = vld [vmem:[#allocation2 + $0x4] sm:$0xf]
      %v1915 = vadd.f32 %v1786, %v1790
      %v1916 = vadd.f32 %v1915, %v1794
      %v1917 = vadd.f32 %v1916, %v1798
      %v1918 = vadd.f32 %v1917, %v1802
      %v1919 = vadd.f32 %v1918, %v1806
      %v1920 = vadd.f32 %v1919, %v1810
      %v1921 = vadd.f32 %v1920, %v1814
      %v1922 = vadd.f32 %v1921, %v1818
      %v1923 = vadd.f32 %v1922, %v1822
      %v1924 = vadd.f32 %v1923, %v1826
      %v1925 = vadd.f32 %v1924, %v1830
      %v1926 = vadd.f32 %v1925, %v1834
      %v1927 = vadd.f32 %v1926, %v1838
      %v1928 = vadd.f32 %v1927, %v1842
      %v1929 = vadd.f32 %v1928, %v1846
      %v1930 = vadd.f32 %v1929, %v1850
      %v1931 = vadd.f32 %v1930, %v1854
      %v1932 = vadd.f32 %v1931, %v1858
      %v1933 = vadd.f32 %v1932, %v1862
      %v1934 = vadd.f32 %v1933, %v1866
      %v1935 = vadd.f32 %v1934, %v1870
      %v1936 = vadd.f32 %v1935, %v1874
      %v1937 = vadd.f32 %v1936, %v1878
      %v1938 = vadd.f32 %v1937, %v1882
      %v1939 = vadd.f32 %v1938, %v1886
      %v1940 = vadd.f32 %v1939, %v1890
      %v1941 = vadd.f32 %v1940, %v1894
      %v1942 = vadd.f32 %v1941, %v1898
      %v1943 = vadd.f32 %v1942, %v1902
      %v1944 = vadd.f32 %v1943, %v1906
      %v1945 = vadd.f32 %v1944, %v1910
      %v1946 = vrot.slane %v1945, 4
      %v1947 = vadd.f32 %v1945, %v1946
      %v1948 = vrot.slane %v1947, 2
      %v1949 = vadd.f32 %v1947, %v1948
      %v1950 = vrot.slane %v1949, 1
      %v1951 = vadd.f32 %v1949, %v1950
      %v1952 = vadd.f32 %v1787, %v1791
      %v1953 = vadd.f32 %v1952, %v1795
      %v1954 = vadd.f32 %v1953, %v1799
      %v1955 = vadd.f32 %v1954, %v1803
      %v1956 = vadd.f32 %v1955, %v1807
      %v1957 = vadd.f32 %v1956, %v1811
      %v1958 = vadd.f32 %v1957, %v1815
      %v1959 = vadd.f32 %v1958, %v1819
      %v1960 = vadd.f32 %v1959, %v1823
      %v1961 = vadd.f32 %v1960, %v1827
      %v1962 = vadd.f32 %v1961, %v1831
      %v1963 = vadd.f32 %v1962, %v1835
      %v1964 = vadd.f32 %v1963, %v1839
      %v1965 = vadd.f32 %v1964, %v1843
      %v1966 = vadd.f32 %v1965, %v1847
      %v1967 = vadd.f32 %v1966, %v1851
      %v1968 = vadd.f32 %v1967, %v1855
      %v1969 = vadd.f32 %v1968, %v1859
      %v1970 = vadd.f32 %v1969, %v1863
      %v1971 = vadd.f32 %v1970, %v1867
      %v1972 = vadd.f32 %v1971, %v1871
      %v1973 = vadd.f32 %v1972, %v1875
      %v1974 = vadd.f32 %v1973, %v1879
      %v1975 = vadd.f32 %v1974, %v1883
      %v1976 = vadd.f32 %v1975, %v1887
      %v1977 = vadd.f32 %v1976, %v1891
      %v1978 = vadd.f32 %v1977, %v1895
      %v1979 = vadd.f32 %v1978, %v1899
      %v1980 = vadd.f32 %v1979, %v1903
      %v1981 = vadd.f32 %v1980, %v1907
      %v1982 = vadd.f32 %v1981, %v1911
      %v1983 = vrot.slane %v1982, 4
      %v1984 = vadd.f32 %v1982, %v1983
      %v1985 = vrot.slane %v1984, 2
      %v1986 = vadd.f32 %v1984, %v1985
      %v1987 = vrot.slane %v1986, 1
      %v1988 = vadd.f32 %v1986, %v1987
      %v1989 = vadd.f32 %v1788, %v1792
      %v1990 = vadd.f32 %v1989, %v1796
      %v1991 = vadd.f32 %v1990, %v1800
      %v1992 = vadd.f32 %v1991, %v1804
      %v1993 = vadd.f32 %v1992, %v1808
      %v1994 = vadd.f32 %v1993, %v1812
      %v1995 = vadd.f32 %v1994, %v1816
      %v1996 = vadd.f32 %v1995, %v1820
      %v1997 = vadd.f32 %v1996, %v1824
      %v1998 = vadd.f32 %v1997, %v1828
      %v1999 = vadd.f32 %v1998, %v1832
      %v2000 = vadd.f32 %v1999, %v1836
      %v2001 = vadd.f32 %v2000, %v1840
      %v2002 = vadd.f32 %v2001, %v1844
      %v2003 = vadd.f32 %v2002, %v1848
      %v2004 = vadd.f32 %v2003, %v1852
      %v2005 = vadd.f32 %v2004, %v1856
      %v2006 = vadd.f32 %v2005, %v1860
      %v2007 = vadd.f32 %v2006, %v1864
      %v2008 = vadd.f32 %v2007, %v1868
      %v2009 = vadd.f32 %v2008, %v1872
      %v2010 = vadd.f32 %v2009, %v1876
      %v2011 = vadd.f32 %v2010, %v1880
      %v2012 = vadd.f32 %v2011, %v1884
      %v2013 = vadd.f32 %v2012, %v1888
      %v2014 = vadd.f32 %v2013, %v1892
      %v2015 = vadd.f32 %v2014, %v1896
      %v2016 = vadd.f32 %v2015, %v1900
      %v2017 = vadd.f32 %v2016, %v1904
      %v2018 = vadd.f32 %v2017, %v1908
      %v2019 = vadd.f32 %v2018, %v1912
      %v2020 = vrot.slane %v2019, 4
      %v2021 = vadd.f32 %v2019, %v2020
      %v2022 = vrot.slane %v2021, 2
      %v2023 = vadd.f32 %v2021, %v2022
      %v2024 = vrot.slane %v2023, 1
      %v2025 = vadd.f32 %v2023, %v2024
      %v2026 = vadd.f32 %v1789, %v1793
      %v2027 = vadd.f32 %v2026, %v1797
      %v2028 = vadd.f32 %v2027, %v1801
      %v2029 = vadd.f32 %v2028, %v1805
      %v2030 = vadd.f32 %v2029, %v1809
      %v2031 = vadd.f32 %v2030, %v1813
      %v2032 = vadd.f32 %v2031, %v1817
      %v2033 = vadd.f32 %v2032, %v1821
      %v2034 = vadd.f32 %v2033, %v1825
      %v2035 = vadd.f32 %v2034, %v1829
      %v2036 = vadd.f32 %v2035, %v1833
      %v2037 = vadd.f32 %v2036, %v1837
      %v2038 = vadd.f32 %v2037, %v1841
      %v2039 = vadd.f32 %v2038, %v1845
      %v2040 = vadd.f32 %v2039, %v1849
      %v2041 = vadd.f32 %v2040, %v1853
      %v2042 = vadd.f32 %v2041, %v1857
      %v2043 = vadd.f32 %v2042, %v1861
      %v2044 = vadd.f32 %v2043, %v1865
      %v2045 = vadd.f32 %v2044, %v1869
      %v2046 = vadd.f32 %v2045, %v1873
      %v2047 = vadd.f32 %v2046, %v1877
      %v2048 = vadd.f32 %v2047, %v1881
      %v2049 = vadd.f32 %v2048, %v1885
      %v2050 = vadd.f32 %v2049, %v1889
      %v2051 = vadd.f32 %v2050, %v1893
      %v2052 = vadd.f32 %v2051, %v1897
      %v2053 = vadd.f32 %v2052, %v1901
      %v2054 = vadd.f32 %v2053, %v1905
      %v2055 = vadd.f32 %v2054, %v1909
      %v2056 = vadd.f32 %v2055, %v1913
      %v2057 = vrot.slane %v2056, 4
      %v2058 = vadd.f32 %v2056, %v2057
      %v2059 = vrot.slane %v2058, 2
      %v2060 = vadd.f32 %v2058, %v2059
      %v2061 = vrot.slane %v2060, 1
      %v2062 = vadd.f32 %v2060, %v2061
      %v2067 = vcombine.low %v1951, %v1988
      %v2068 = vcombine.low %v2025, %v2062
      %v2070 = vunpack.c.l.s4 1966171168
      %v2071 = vunpack.c.0.s8 %v2070
      %v2072 = vlaneseq
      %v2073 = vshrl.u32 %v2072, 7
      %v2074 = vsub.s32 %v2071, %v2073
      %v2075 = vrot.slane %v2067, %v2074
      %v2077 = vunpack.c.l.s4 1966171168
      %v2078 = vunpack.c.0.s8 %v2077
      %v2079 = vlaneseq
      %v2080 = vshrl.u32 %v2079, 7
      %v2081 = vsub.s32 %v2078, %v2080
      %v2082 = vrot.slane %v2068, %v2081
      %v2083 = vcombine.low %v2075, %v2082
      %v2085 = vunpack.c.l.s4 1966171168
      %v2086 = vunpack.c.0.s8 %v2085
      %v2087 = vlaneseq
      %v2088 = vshrl.u32 %v2087, 7
      %v2089 = vsub.s32 %v2086, %v2088
      %v2090 = vrot.slane %v2083, %v2089
      %v2092 = vadd.f32 %v1914, %v2090
      %2093 = vst.msk [vmem:[#allocation2 + $0x4] sm:$0xf] %vm1350, %v2092
      %v2094 = vld [vmem:[%s1 + $0x20] sm:$0xff]
      %v2095 = vld [vmem:[%s1 + $0x28] sm:$0xff]
      %v2096 = vld [vmem:[%s1 + $0x60] sm:$0xff]
      %v2097 = vld [vmem:[%s1 + $0x68] sm:$0xff]
      %v2098 = vld [vmem:[%s1 + $0xa0] sm:$0xff]
      %v2099 = vld [vmem:[%s1 + $0xa8] sm:$0xff]
      %v2100 = vld [vmem:[%s1 + $0xe0] sm:$0xff]
      %v2101 = vld [vmem:[%s1 + $0xe8] sm:$0xff]
      %v2110 = vunpack.c.l.b16 %v2094
      %v2111 = vunpack.c.h.b16 %v2094
      %v2112 = vunpack.c.l.b16 %v2095
      %v2113 = vunpack.c.h.b16 %v2095
      %v2114 = vunpack.c.l.b16 %v2096
      %v2115 = vunpack.c.h.b16 %v2096
      %v2116 = vunpack.c.l.b16 %v2097
      %v2117 = vunpack.c.h.b16 %v2097
      %v2118 = vunpack.c.l.b16 %v2098
      %v2119 = vunpack.c.h.b16 %v2098
      %v2120 = vunpack.c.l.b16 %v2099
      %v2121 = vunpack.c.h.b16 %v2099
      %v2122 = vunpack.c.l.b16 %v2100
      %v2123 = vunpack.c.h.b16 %v2100
      %v2124 = vunpack.c.l.b16 %v2101
      %v2125 = vunpack.c.h.b16 %v2101
      %v2126 = vpack.c.b16 %v2114, %v2110
      %v2127 = vpack.c.b16 %v2115, %v2111
      %v2128 = vpack.c.b16 %v2116, %v2112
      %v2129 = vpack.c.b16 %v2117, %v2113
      %v2130 = vpack.c.b16 %v2122, %v2118
      %v2131 = vpack.c.b16 %v2123, %v2119
      %v2132 = vpack.c.b16 %v2124, %v2120
      %v2133 = vpack.c.b16 %v2125, %v2121
      %2142 = vmatprep.subr.bf16.mxu0 %v2127
      %2143 = vmatpush1.bf16.msra.mxu0 %v2126
      %2144 = vmatprep.subr.bf16.mxu0 %v2131
      %2145 = vmatpush1.bf16.msra.mxu0 %v2130
      %2146 = vmatprep.subr.bf16.mxu0 0
      %2147 = vmatpush1.bf16.msra.mxu0 0
      %2148 = vmatprep.subr.bf16.mxu0 0
      %2149 = vmatpush1.bf16.msra.mxu0 0
      %2150 = vmatprep.subr.bf16.mxu0 0
      %2151 = vmatpush1.bf16.msra.mxu0 0
      %2152 = vmatprep.subr.bf16.mxu0 0
      %2153 = vmatpush1.bf16.msra.mxu0 0
      %2154 = vmatprep.subr.bf16.mxu0 0
      %2155 = vmatpush1.bf16.msra.mxu0 0
      %2156 = vmatprep.subr.bf16.mxu0 0
      %2157 = vmatpush1.bf16.msra.mxu0 0
      %2158 = vmatprep.subr.bf16.mxu0 0
      %2159 = vmatpush1.bf16.msra.mxu0 0
      %2160 = vmatprep.subr.bf16.mxu0 0
      %2161 = vmatpush1.bf16.msra.mxu0 0
      %2162 = vmatprep.subr.bf16.mxu0 0
      %2163 = vmatpush1.bf16.msra.mxu0 0
      %2164 = vmatprep.subr.bf16.mxu0 0
      %2165 = vmatpush1.bf16.msra.mxu0 0
      %2166 = vmatprep.subr.bf16.mxu0 0
      %2167 = vmatpush1.bf16.msra.mxu0 0
      %2168 = vmatprep.subr.bf16.mxu0 0
      %2169 = vmatpush1.bf16.msra.mxu0 0
      %2170 = vmatprep.subr.bf16.mxu0 0
      %2171 = vmatpush1.bf16.msra.mxu0 0
      %2172 = vmatprep.subr.bf16.mxu0 0
      %2173 = vmatpush1.bf16.msra.mxu0 0
      %2174 = vmatprep.mubr.bf16.mxu0 0
      %2175 = vmatmul.mubr.bf16.gmra.mrb[0].mxu0 %v607
      %v2176 = vpop.f32.mrb[0].mxu0
      %v2177 = vadd.f32 0.0, %v2176
      %v2178 = vpop.f32.mrb[0].mxu0
      %v2179 = vadd.f32 0.0, %v2178
      %v2180 = vpop.f32.mrb[0].mxu0
      %v2181 = vadd.f32 0.0, %v2180
      %v2182 = vpop.f32.mrb[0].mxu0
      %v2183 = vadd.f32 0.0, %v2182
      %2184 = vmatprep.mubr.bf16.mxu0 0
      %2185 = vmatmul.mubr.bf16.gmra.mrb[0].mxu0 %v610
      %v2186 = vpop.f32.mrb[0].mxu0
      %v2187 = vadd.f32 0.0, %v2186
      %v2188 = vpop.f32.mrb[0].mxu0
      %v2189 = vadd.f32 0.0, %v2188
      %v2190 = vpop.f32.mrb[0].mxu0
      %v2191 = vadd.f32 0.0, %v2190
      %v2192 = vpop.f32.mrb[0].mxu0
      %v2193 = vadd.f32 0.0, %v2192
      %2194 = vmatprep.mubr.bf16.mxu0 0
      %2195 = vmatmul.mubr.bf16.gmra.mrb[0].mxu0 %v613
      %v2196 = vpop.f32.mrb[0].mxu0
      %v2197 = vadd.f32 0.0, %v2196
      %v2198 = vpop.f32.mrb[0].mxu0
      %v2199 = vadd.f32 0.0, %v2198
      %v2200 = vpop.f32.mrb[0].mxu0
      %v2201 = vadd.f32 0.0, %v2200
      %v2202 = vpop.f32.mrb[0].mxu0
      %v2203 = vadd.f32 0.0, %v2202
      %2204 = vmatprep.mubr.bf16.mxu0 0
      %2205 = vmatmul.mubr.bf16.gmra.mrb[0].mxu0 %v616
      %v2206 = vpop.f32.mrb[0].mxu0
      %v2207 = vadd.f32 0.0, %v2206
      %v2208 = vpop.f32.mrb[0].mxu0
      %v2209 = vadd.f32 0.0, %v2208
      %v2210 = vpop.f32.mrb[0].mxu0
      %v2211 = vadd.f32 0.0, %v2210
      %v2212 = vpop.f32.mrb[0].mxu0
      %v2213 = vadd.f32 0.0, %v2212
      %2214 = vmatprep.mubr.bf16.mxu0 0
      %2215 = vmatmul.mubr.bf16.gmra.mrb[0].mxu0 %v619
      %v2216 = vpop.f32.mrb[0].mxu0
      %v2217 = vadd.f32 0.0, %v2216
      %v2218 = vpop.f32.mrb[0].mxu0
      %v2219 = vadd.f32 0.0, %v2218
      %v2220 = vpop.f32.mrb[0].mxu0
      %v2221 = vadd.f32 0.0, %v2220
      %v2222 = vpop.f32.mrb[0].mxu0
      %v2223 = vadd.f32 0.0, %v2222
      %2224 = vmatprep.mubr.bf16.mxu0 0
      %2225 = vmatmul.mubr.bf16.gmra.mrb[0].mxu0 %v622
      %v2226 = vpop.f32.mrb[0].mxu0
      %v2227 = vadd.f32 0.0, %v2226
      %v2228 = vpop.f32.mrb[0].mxu0
      %v2229 = vadd.f32 0.0, %v2228
      %v2230 = vpop.f32.mrb[0].mxu0
      %v2231 = vadd.f32 0.0, %v2230
      %v2232 = vpop.f32.mrb[0].mxu0
      %v2233 = vadd.f32 0.0, %v2232
      %2234 = vmatprep.mubr.bf16.mxu0 0
      %2235 = vmatmul.mubr.bf16.gmra.mrb[0].mxu0 %v625
      %v2236 = vpop.f32.mrb[0].mxu0
      %v2237 = vadd.f32 0.0, %v2236
      %v2238 = vpop.f32.mrb[0].mxu0
      %v2239 = vadd.f32 0.0, %v2238
      %v2240 = vpop.f32.mrb[0].mxu0
      %v2241 = vadd.f32 0.0, %v2240
      %v2242 = vpop.f32.mrb[0].mxu0
      %v2243 = vadd.f32 0.0, %v2242
      %2244 = vmatprep.mubr.bf16.mxu0 0
      %2245 = vmatmul.mubr.bf16.gmra.mrb[0].mxu0 %v628
      %v2246 = vpop.f32.mrb[0].mxu0
      %v2247 = vadd.f32 0.0, %v2246
      %v2248 = vpop.f32.mrb[0].mxu0
      %v2249 = vadd.f32 0.0, %v2248
      %v2250 = vpop.f32.mrb[0].mxu0
      %v2251 = vadd.f32 0.0, %v2250
      %v2252 = vpop.f32.mrb[0].mxu0
      %v2253 = vadd.f32 0.0, %v2252
      %2254 = vmatprep.mubr.bf16.mxu0 0
      %2255 = vmatmul.mubr.bf16.gmra.mrb[0].mxu0 %v631
      %v2256 = vpop.f32.mrb[0].mxu0
      %v2257 = vadd.f32 0.0, %v2256
      %v2258 = vpop.f32.mrb[0].mxu0
      %v2259 = vadd.f32 0.0, %v2258
      %v2260 = vpop.f32.mrb[0].mxu0
      %v2261 = vadd.f32 0.0, %v2260
      %v2262 = vpop.f32.mrb[0].mxu0
      %v2263 = vadd.f32 0.0, %v2262
      %2264 = vmatprep.mubr.bf16.mxu0 0
      %2265 = vmatmul.mubr.bf16.gmra.mrb[0].mxu0 %v634
      %v2266 = vpop.f32.mrb[0].mxu0
      %v2267 = vadd.f32 0.0, %v2266
      %v2268 = vpop.f32.mrb[0].mxu0
      %v2269 = vadd.f32 0.0, %v2268
      %v2270 = vpop.f32.mrb[0].mxu0
      %v2271 = vadd.f32 0.0, %v2270
      %v2272 = vpop.f32.mrb[0].mxu0
      %v2273 = vadd.f32 0.0, %v2272
      %2274 = vmatprep.mubr.bf16.mxu0 0
      %2275 = vmatmul.mubr.bf16.gmra.mrb[0].mxu0 %v637
      %v2276 = vpop.f32.mrb[0].mxu0
      %v2277 = vadd.f32 0.0, %v2276
      %v2278 = vpop.f32.mrb[0].mxu0
      %v2279 = vadd.f32 0.0, %v2278
      %v2280 = vpop.f32.mrb[0].mxu0
      %v2281 = vadd.f32 0.0, %v2280
      %v2282 = vpop.f32.mrb[0].mxu0
      %v2283 = vadd.f32 0.0, %v2282
      %2284 = vmatprep.mubr.bf16.mxu0 0
      %2285 = vmatmul.mubr.bf16.gmra.mrb[0].mxu0 %v640
      %v2286 = vpop.f32.mrb[0].mxu0
      %v2287 = vadd.f32 0.0, %v2286
      %v2288 = vpop.f32.mrb[0].mxu0
      %v2289 = vadd.f32 0.0, %v2288
      %v2290 = vpop.f32.mrb[0].mxu0
      %v2291 = vadd.f32 0.0, %v2290
      %v2292 = vpop.f32.mrb[0].mxu0
      %v2293 = vadd.f32 0.0, %v2292
      %2294 = vmatprep.mubr.bf16.mxu0 0
      %2295 = vmatmul.mubr.bf16.gmra.mrb[0].mxu0 %v643
      %v2296 = vpop.f32.mrb[0].mxu0
      %v2297 = vadd.f32 0.0, %v2296
      %v2298 = vpop.f32.mrb[0].mxu0
      %v2299 = vadd.f32 0.0, %v2298
      %v2300 = vpop.f32.mrb[0].mxu0
      %v2301 = vadd.f32 0.0, %v2300
      %v2302 = vpop.f32.mrb[0].mxu0
      %v2303 = vadd.f32 0.0, %v2302
      %2304 = vmatprep.mubr.bf16.mxu0 0
      %2305 = vmatmul.mubr.bf16.gmra.mrb[0].mxu0 %v646
      %v2306 = vpop.f32.mrb[0].mxu0
      %v2307 = vadd.f32 0.0, %v2306
      %v2308 = vpop.f32.mrb[0].mxu0
      %v2309 = vadd.f32 0.0, %v2308
      %v2310 = vpop.f32.mrb[0].mxu0
      %v2311 = vadd.f32 0.0, %v2310
      %v2312 = vpop.f32.mrb[0].mxu0
      %v2313 = vadd.f32 0.0, %v2312
      %2314 = vmatprep.mubr.bf16.mxu0 0
      %2315 = vmatmul.mubr.bf16.gmra.mrb[0].mxu0 %v649
      %v2316 = vpop.f32.mrb[0].mxu0
      %v2317 = vadd.f32 0.0, %v2316
      %v2318 = vpop.f32.mrb[0].mxu0
      %v2319 = vadd.f32 0.0, %v2318
      %v2320 = vpop.f32.mrb[0].mxu0
      %v2321 = vadd.f32 0.0, %v2320
      %v2322 = vpop.f32.mrb[0].mxu0
      %v2323 = vadd.f32 0.0, %v2322
      %2324 = vmatprep.mubr.bf16.mxu0 0
      %2325 = vmatmul.mubr.bf16.gmra.mrb[0].mxu0 %v652
      %v2326 = vpop.f32.mrb[0].mxu0
      %v2327 = vadd.f32 0.0, %v2326
      %v2328 = vpop.f32.mrb[0].mxu0
      %v2329 = vadd.f32 0.0, %v2328
      %v2330 = vpop.f32.mrb[0].mxu0
      %v2331 = vadd.f32 0.0, %v2330
      %v2332 = vpop.f32.mrb[0].mxu0
      %v2333 = vadd.f32 0.0, %v2332
      %2334 = vdwg.mxu0
      %2335 = vmatprep.subr.bf16.mxu0 %v2129
      %2336 = vmatpush1.bf16.msra.mxu0 %v2128
      %2337 = vmatprep.subr.bf16.mxu0 %v2133
      %2338 = vmatpush1.bf16.msra.mxu0 %v2132
      %2339 = vmatprep.subr.bf16.mxu0 0
      %2340 = vmatpush1.bf16.msra.mxu0 0
      %2341 = vmatprep.subr.bf16.mxu0 0
      %2342 = vmatpush1.bf16.msra.mxu0 0
      %2343 = vmatprep.subr.bf16.mxu0 0
      %2344 = vmatpush1.bf16.msra.mxu0 0
      %2345 = vmatprep.subr.bf16.mxu0 0
      %2346 = vmatpush1.bf16.msra.mxu0 0
      %2347 = vmatprep.subr.bf16.mxu0 0
      %2348 = vmatpush1.bf16.msra.mxu0 0
      %2349 = vmatprep.subr.bf16.mxu0 0
      %2350 = vmatpush1.bf16.msra.mxu0 0
      %2351 = vmatprep.subr.bf16.mxu0 0
      %2352 = vmatpush1.bf16.msra.mxu0 0
      %2353 = vmatprep.subr.bf16.mxu0 0
      %2354 = vmatpush1.bf16.msra.mxu0 0
      %2355 = vmatprep.subr.bf16.mxu0 0
      %2356 = vmatpush1.bf16.msra.mxu0 0
      %2357 = vmatprep.subr.bf16.mxu0 0
      %2358 = vmatpush1.bf16.msra.mxu0 0
      %2359 = vmatprep.subr.bf16.mxu0 0
      %2360 = vmatpush1.bf16.msra.mxu0 0
      %2361 = vmatprep.subr.bf16.mxu0 0
      %2362 = vmatpush1.bf16.msra.mxu0 0
      %2363 = vmatprep.subr.bf16.mxu0 0
      %2364 = vmatpush1.bf16.msra.mxu0 0
      %2365 = vmatprep.subr.bf16.mxu0 0
      %2366 = vmatpush1.bf16.msra.mxu0 0
      %2367 = vmatprep.mubr.bf16.mxu0 0
      %2368 = vmatmul.mubr.bf16.gmra.mrb[0].mxu0 %v607
      %v2369 = vpop.f32.mrb[0].mxu0
      %v2370 = vadd.f32 0.0, %v2369
      %v2371 = vpop.f32.mrb[0].mxu0
      %v2372 = vadd.f32 0.0, %v2371
      %v2373 = vpop.f32.mrb[0].mxu0
      %v2374 = vadd.f32 0.0, %v2373
      %v2375 = vpop.f32.mrb[0].mxu0
      %v2376 = vadd.f32 0.0, %v2375
      %2377 = vmatprep.mubr.bf16.mxu0 0
      %2378 = vmatmul.mubr.bf16.gmra.mrb[0].mxu0 %v610
      %v2379 = vpop.f32.mrb[0].mxu0
      %v2380 = vadd.f32 0.0, %v2379
      %v2381 = vpop.f32.mrb[0].mxu0
      %v2382 = vadd.f32 0.0, %v2381
      %v2383 = vpop.f32.mrb[0].mxu0
      %v2384 = vadd.f32 0.0, %v2383
      %v2385 = vpop.f32.mrb[0].mxu0
      %v2386 = vadd.f32 0.0, %v2385
      %2387 = vmatprep.mubr.bf16.mxu0 0
      %2388 = vmatmul.mubr.bf16.gmra.mrb[0].mxu0 %v613
      %v2389 = vpop.f32.mrb[0].mxu0
      %v2390 = vadd.f32 0.0, %v2389
      %v2391 = vpop.f32.mrb[0].mxu0
      %v2392 = vadd.f32 0.0, %v2391
      %v2393 = vpop.f32.mrb[0].mxu0
      %v2394 = vadd.f32 0.0, %v2393
      %v2395 = vpop.f32.mrb[0].mxu0
      %v2396 = vadd.f32 0.0, %v2395
      %2397 = vmatprep.mubr.bf16.mxu0 0
      %2398 = vmatmul.mubr.bf16.gmra.mrb[0].mxu0 %v616
      %v2399 = vpop.f32.mrb[0].mxu0
      %v2400 = vadd.f32 0.0, %v2399
      %v2401 = vpop.f32.mrb[0].mxu0
      %v2402 = vadd.f32 0.0, %v2401
      %v2403 = vpop.f32.mrb[0].mxu0
      %v2404 = vadd.f32 0.0, %v2403
      %v2405 = vpop.f32.mrb[0].mxu0
      %v2406 = vadd.f32 0.0, %v2405
      %2407 = vmatprep.mubr.bf16.mxu0 0
      %2408 = vmatmul.mubr.bf16.gmra.mrb[0].mxu0 %v619
      %v2409 = vpop.f32.mrb[0].mxu0
      %v2410 = vadd.f32 0.0, %v2409
      %v2411 = vpop.f32.mrb[0].mxu0
      %v2412 = vadd.f32 0.0, %v2411
      %v2413 = vpop.f32.mrb[0].mxu0
      %v2414 = vadd.f32 0.0, %v2413
      %v2415 = vpop.f32.mrb[0].mxu0
      %v2416 = vadd.f32 0.0, %v2415
      %2417 = vmatprep.mubr.bf16.mxu0 0
      %2418 = vmatmul.mubr.bf16.gmra.mrb[0].mxu0 %v622
      %v2419 = vpop.f32.mrb[0].mxu0
      %v2420 = vadd.f32 0.0, %v2419
      %v2421 = vpop.f32.mrb[0].mxu0
      %v2422 = vadd.f32 0.0, %v2421
      %v2423 = vpop.f32.mrb[0].mxu0
      %v2424 = vadd.f32 0.0, %v2423
      %v2425 = vpop.f32.mrb[0].mxu0
      %v2426 = vadd.f32 0.0, %v2425
      %2427 = vmatprep.mubr.bf16.mxu0 0
      %2428 = vmatmul.mubr.bf16.gmra.mrb[0].mxu0 %v625
      %v2429 = vpop.f32.mrb[0].mxu0
      %v2430 = vadd.f32 0.0, %v2429
      %v2431 = vpop.f32.mrb[0].mxu0
      %v2432 = vadd.f32 0.0, %v2431
      %v2433 = vpop.f32.mrb[0].mxu0
      %v2434 = vadd.f32 0.0, %v2433
      %v2435 = vpop.f32.mrb[0].mxu0
      %v2436 = vadd.f32 0.0, %v2435
      %2437 = vmatprep.mubr.bf16.mxu0 0
      %2438 = vmatmul.mubr.bf16.gmra.mrb[0].mxu0 %v628
      %v2439 = vpop.f32.mrb[0].mxu0
      %v2440 = vadd.f32 0.0, %v2439
      %v2441 = vpop.f32.mrb[0].mxu0
      %v2442 = vadd.f32 0.0, %v2441
      %v2443 = vpop.f32.mrb[0].mxu0
      %v2444 = vadd.f32 0.0, %v2443
      %v2445 = vpop.f32.mrb[0].mxu0
      %v2446 = vadd.f32 0.0, %v2445
      %2447 = vmatprep.mubr.bf16.mxu0 0
      %2448 = vmatmul.mubr.bf16.gmra.mrb[0].mxu0 %v631
      %v2449 = vpop.f32.mrb[0].mxu0
      %v2450 = vadd.f32 0.0, %v2449
      %v2451 = vpop.f32.mrb[0].mxu0
      %v2452 = vadd.f32 0.0, %v2451
      %v2453 = vpop.f32.mrb[0].mxu0
      %v2454 = vadd.f32 0.0, %v2453
      %v2455 = vpop.f32.mrb[0].mxu0
      %v2456 = vadd.f32 0.0, %v2455
      %2457 = vmatprep.mubr.bf16.mxu0 0
      %2458 = vmatmul.mubr.bf16.gmra.mrb[0].mxu0 %v634
      %v2459 = vpop.f32.mrb[0].mxu0
      %v2460 = vadd.f32 0.0, %v2459
      %v2461 = vpop.f32.mrb[0].mxu0
      %v2462 = vadd.f32 0.0, %v2461
      %v2463 = vpop.f32.mrb[0].mxu0
      %v2464 = vadd.f32 0.0, %v2463
      %v2465 = vpop.f32.mrb[0].mxu0
      %v2466 = vadd.f32 0.0, %v2465
      %2467 = vmatprep.mubr.bf16.mxu0 0
      %2468 = vmatmul.mubr.bf16.gmra.mrb[0].mxu0 %v637
      %v2469 = vpop.f32.mrb[0].mxu0
      %v2470 = vadd.f32 0.0, %v2469
      %v2471 = vpop.f32.mrb[0].mxu0
      %v2472 = vadd.f32 0.0, %v2471
      %v2473 = vpop.f32.mrb[0].mxu0
      %v2474 = vadd.f32 0.0, %v2473
      %v2475 = vpop.f32.mrb[0].mxu0
      %v2476 = vadd.f32 0.0, %v2475
      %2477 = vmatprep.mubr.bf16.mxu0 0
      %2478 = vmatmul.mubr.bf16.gmra.mrb[0].mxu0 %v640
      %v2479 = vpop.f32.mrb[0].mxu0
      %v2480 = vadd.f32 0.0, %v2479
      %v2481 = vpop.f32.mrb[0].mxu0
      %v2482 = vadd.f32 0.0, %v2481
      %v2483 = vpop.f32.mrb[0].mxu0
      %v2484 = vadd.f32 0.0, %v2483
      %v2485 = vpop.f32.mrb[0].mxu0
      %v2486 = vadd.f32 0.0, %v2485
      %2487 = vmatprep.mubr.bf16.mxu0 0
      %2488 = vmatmul.mubr.bf16.gmra.mrb[0].mxu0 %v643
      %v2489 = vpop.f32.mrb[0].mxu0
      %v2490 = vadd.f32 0.0, %v2489
      %v2491 = vpop.f32.mrb[0].mxu0
      %v2492 = vadd.f32 0.0, %v2491
      %v2493 = vpop.f32.mrb[0].mxu0
      %v2494 = vadd.f32 0.0, %v2493
      %v2495 = vpop.f32.mrb[0].mxu0
      %v2496 = vadd.f32 0.0, %v2495
      %2497 = vmatprep.mubr.bf16.mxu0 0
      %2498 = vmatmul.mubr.bf16.gmra.mrb[0].mxu0 %v646
      %v2499 = vpop.f32.mrb[0].mxu0
      %v2500 = vadd.f32 0.0, %v2499
      %v2501 = vpop.f32.mrb[0].mxu0
      %v2502 = vadd.f32 0.0, %v2501
      %v2503 = vpop.f32.mrb[0].mxu0
      %v2504 = vadd.f32 0.0, %v2503
      %v2505 = vpop.f32.mrb[0].mxu0
      %v2506 = vadd.f32 0.0, %v2505
      %2507 = vmatprep.mubr.bf16.mxu0 0
      %2508 = vmatmul.mubr.bf16.gmra.mrb[0].mxu0 %v649
      %v2509 = vpop.f32.mrb[0].mxu0
      %v2510 = vadd.f32 0.0, %v2509
      %v2511 = vpop.f32.mrb[0].mxu0
      %v2512 = vadd.f32 0.0, %v2511
      %v2513 = vpop.f32.mrb[0].mxu0
      %v2514 = vadd.f32 0.0, %v2513
      %v2515 = vpop.f32.mrb[0].mxu0
      %v2516 = vadd.f32 0.0, %v2515
      %2517 = vmatprep.mubr.bf16.mxu0 0
      %2518 = vmatmul.mubr.bf16.gmra.mrb[0].mxu0 %v652
      %v2519 = vpop.f32.mrb[0].mxu0
      %v2520 = vadd.f32 0.0, %v2519
      %v2521 = vpop.f32.mrb[0].mxu0
      %v2522 = vadd.f32 0.0, %v2521
      %v2523 = vpop.f32.mrb[0].mxu0
      %v2524 = vadd.f32 0.0, %v2523
      %v2525 = vpop.f32.mrb[0].mxu0
      %v2526 = vadd.f32 0.0, %v2525
      %2527 = vdwg.mxu0
      %v2528 = vmax.f32 %v2177, 0.0
      %v2529 = vmax.f32 %v2179, 0.0
      %v2530 = vmax.f32 %v2370, 0.0
      %v2531 = vmax.f32 %v2372, 0.0
      %v2532 = vmax.f32 %v2181, 0.0
      %v2533 = vmax.f32 %v2183, 0.0
      %v2534 = vmax.f32 %v2374, 0.0
      %v2535 = vmax.f32 %v2376, 0.0
      %v2536 = vmax.f32 %v2187, 0.0
      %v2537 = vmax.f32 %v2189, 0.0
      %v2538 = vmax.f32 %v2380, 0.0
      %v2539 = vmax.f32 %v2382, 0.0
      %v2540 = vmax.f32 %v2191, 0.0
      %v2541 = vmax.f32 %v2193, 0.0
      %v2542 = vmax.f32 %v2384, 0.0
      %v2543 = vmax.f32 %v2386, 0.0
      %v2544 = vmax.f32 %v2197, 0.0
      %v2545 = vmax.f32 %v2199, 0.0
      %v2546 = vmax.f32 %v2390, 0.0
      %v2547 = vmax.f32 %v2392, 0.0
      %v2548 = vmax.f32 %v2201, 0.0
      %v2549 = vmax.f32 %v2203, 0.0
      %v2550 = vmax.f32 %v2394, 0.0
      %v2551 = vmax.f32 %v2396, 0.0
      %v2552 = vmax.f32 %v2207, 0.0
      %v2553 = vmax.f32 %v2209, 0.0
      %v2554 = vmax.f32 %v2400, 0.0
      %v2555 = vmax.f32 %v2402, 0.0
      %v2556 = vmax.f32 %v2211, 0.0
      %v2557 = vmax.f32 %v2213, 0.0
      %v2558 = vmax.f32 %v2404, 0.0
      %v2559 = vmax.f32 %v2406, 0.0
      %v2560 = vmax.f32 %v2217, 0.0
      %v2561 = vmax.f32 %v2219, 0.0
      %v2562 = vmax.f32 %v2410, 0.0
      %v2563 = vmax.f32 %v2412, 0.0
      %v2564 = vmax.f32 %v2221, 0.0
      %v2565 = vmax.f32 %v2223, 0.0
      %v2566 = vmax.f32 %v2414, 0.0
      %v2567 = vmax.f32 %v2416, 0.0
      %v2568 = vmax.f32 %v2227, 0.0
      %v2569 = vmax.f32 %v2229, 0.0
      %v2570 = vmax.f32 %v2420, 0.0
      %v2571 = vmax.f32 %v2422, 0.0
      %v2572 = vmax.f32 %v2231, 0.0
      %v2573 = vmax.f32 %v2233, 0.0
      %v2574 = vmax.f32 %v2424, 0.0
      %v2575 = vmax.f32 %v2426, 0.0
      %v2576 = vmax.f32 %v2237, 0.0
      %v2577 = vmax.f32 %v2239, 0.0
      %v2578 = vmax.f32 %v2430, 0.0
      %v2579 = vmax.f32 %v2432, 0.0
      %v2580 = vmax.f32 %v2241, 0.0
      %v2581 = vmax.f32 %v2243, 0.0
      %v2582 = vmax.f32 %v2434, 0.0
      %v2583 = vmax.f32 %v2436, 0.0
      %v2584 = vmax.f32 %v2247, 0.0
      %v2585 = vmax.f32 %v2249, 0.0
      %v2586 = vmax.f32 %v2440, 0.0
      %v2587 = vmax.f32 %v2442, 0.0
      %v2588 = vmax.f32 %v2251, 0.0
      %v2589 = vmax.f32 %v2253, 0.0
      %v2590 = vmax.f32 %v2444, 0.0
      %v2591 = vmax.f32 %v2446, 0.0
      %v2592 = vmax.f32 %v2257, 0.0
      %v2593 = vmax.f32 %v2259, 0.0
      %v2594 = vmax.f32 %v2450, 0.0
      %v2595 = vmax.f32 %v2452, 0.0
      %v2596 = vmax.f32 %v2261, 0.0
      %v2597 = vmax.f32 %v2263, 0.0
      %v2598 = vmax.f32 %v2454, 0.0
      %v2599 = vmax.f32 %v2456, 0.0
      %v2600 = vmax.f32 %v2267, 0.0
      %v2601 = vmax.f32 %v2269, 0.0
      %v2602 = vmax.f32 %v2460, 0.0
      %v2603 = vmax.f32 %v2462, 0.0
      %v2604 = vmax.f32 %v2271, 0.0
      %v2605 = vmax.f32 %v2273, 0.0
      %v2606 = vmax.f32 %v2464, 0.0
      %v2607 = vmax.f32 %v2466, 0.0
      %v2608 = vmax.f32 %v2277, 0.0
      %v2609 = vmax.f32 %v2279, 0.0
      %v2610 = vmax.f32 %v2470, 0.0
      %v2611 = vmax.f32 %v2472, 0.0
      %v2612 = vmax.f32 %v2281, 0.0
      %v2613 = vmax.f32 %v2283, 0.0
      %v2614 = vmax.f32 %v2474, 0.0
      %v2615 = vmax.f32 %v2476, 0.0
      %v2616 = vmax.f32 %v2287, 0.0
      %v2617 = vmax.f32 %v2289, 0.0
      %v2618 = vmax.f32 %v2480, 0.0
      %v2619 = vmax.f32 %v2482, 0.0
      %v2620 = vmax.f32 %v2291, 0.0
      %v2621 = vmax.f32 %v2293, 0.0
      %v2622 = vmax.f32 %v2484, 0.0
      %v2623 = vmax.f32 %v2486, 0.0
      %v2624 = vmax.f32 %v2297, 0.0
      %v2625 = vmax.f32 %v2299, 0.0
      %v2626 = vmax.f32 %v2490, 0.0
      %v2627 = vmax.f32 %v2492, 0.0
      %v2628 = vmax.f32 %v2301, 0.0
      %v2629 = vmax.f32 %v2303, 0.0
      %v2630 = vmax.f32 %v2494, 0.0
      %v2631 = vmax.f32 %v2496, 0.0
      %v2632 = vmax.f32 %v2307, 0.0
      %v2633 = vmax.f32 %v2309, 0.0
      %v2634 = vmax.f32 %v2500, 0.0
      %v2635 = vmax.f32 %v2502, 0.0
      %v2636 = vmax.f32 %v2311, 0.0
      %v2637 = vmax.f32 %v2313, 0.0
      %v2638 = vmax.f32 %v2504, 0.0
      %v2639 = vmax.f32 %v2506, 0.0
      %v2640 = vmax.f32 %v2317, 0.0
      %v2641 = vmax.f32 %v2319, 0.0
      %v2642 = vmax.f32 %v2510, 0.0
      %v2643 = vmax.f32 %v2512, 0.0
      %v2644 = vmax.f32 %v2321, 0.0
      %v2645 = vmax.f32 %v2323, 0.0
      %v2646 = vmax.f32 %v2514, 0.0
      %v2647 = vmax.f32 %v2516, 0.0
      %v2648 = vmax.f32 %v2327, 0.0
      %v2649 = vmax.f32 %v2329, 0.0
      %v2650 = vmax.f32 %v2520, 0.0
      %v2651 = vmax.f32 %v2522, 0.0
      %v2652 = vmax.f32 %v2331, 0.0
      %v2653 = vmax.f32 %v2333, 0.0
      %v2654 = vmax.f32 %v2524, 0.0
      %v2655 = vmax.f32 %v2526, 0.0
      %v2656 = vld [vmem:[#allocation2 + $0x8] sm:$0xf]
      %v2657 = vadd.f32 %v2528, %v2532
      %v2658 = vadd.f32 %v2657, %v2536
      %v2659 = vadd.f32 %v2658, %v2540
      %v2660 = vadd.f32 %v2659, %v2544
      %v2661 = vadd.f32 %v2660, %v2548
      %v2662 = vadd.f32 %v2661, %v2552
      %v2663 = vadd.f32 %v2662, %v2556
      %v2664 = vadd.f32 %v2663, %v2560
      %v2665 = vadd.f32 %v2664, %v2564
      %v2666 = vadd.f32 %v2665, %v2568
      %v2667 = vadd.f32 %v2666, %v2572
      %v2668 = vadd.f32 %v2667, %v2576
      %v2669 = vadd.f32 %v2668, %v2580
      %v2670 = vadd.f32 %v2669, %v2584
      %v2671 = vadd.f32 %v2670, %v2588
      %v2672 = vadd.f32 %v2671, %v2592
      %v2673 = vadd.f32 %v2672, %v2596
      %v2674 = vadd.f32 %v2673, %v2600
      %v2675 = vadd.f32 %v2674, %v2604
      %v2676 = vadd.f32 %v2675, %v2608
      %v2677 = vadd.f32 %v2676, %v2612
      %v2678 = vadd.f32 %v2677, %v2616
      %v2679 = vadd.f32 %v2678, %v2620
      %v2680 = vadd.f32 %v2679, %v2624
      %v2681 = vadd.f32 %v2680, %v2628
      %v2682 = vadd.f32 %v2681, %v2632
      %v2683 = vadd.f32 %v2682, %v2636
      %v2684 = vadd.f32 %v2683, %v2640
      %v2685 = vadd.f32 %v2684, %v2644
      %v2686 = vadd.f32 %v2685, %v2648
      %v2687 = vadd.f32 %v2686, %v2652
      %v2688 = vrot.slane %v2687, 4
      %v2689 = vadd.f32 %v2687, %v2688
      %v2690 = vrot.slane %v2689, 2
      %v2691 = vadd.f32 %v2689, %v2690
      %v2692 = vrot.slane %v2691, 1
      %v2693 = vadd.f32 %v2691, %v2692
      %v2694 = vadd.f32 %v2529, %v2533
      %v2695 = vadd.f32 %v2694, %v2537
      %v2696 = vadd.f32 %v2695, %v2541
      %v2697 = vadd.f32 %v2696, %v2545
      %v2698 = vadd.f32 %v2697, %v2549
      %v2699 = vadd.f32 %v2698, %v2553
      %v2700 = vadd.f32 %v2699, %v2557
      %v2701 = vadd.f32 %v2700, %v2561
      %v2702 = vadd.f32 %v2701, %v2565
      %v2703 = vadd.f32 %v2702, %v2569
      %v2704 = vadd.f32 %v2703, %v2573
      %v2705 = vadd.f32 %v2704, %v2577
      %v2706 = vadd.f32 %v2705, %v2581
      %v2707 = vadd.f32 %v2706, %v2585
      %v2708 = vadd.f32 %v2707, %v2589
      %v2709 = vadd.f32 %v2708, %v2593
      %v2710 = vadd.f32 %v2709, %v2597
      %v2711 = vadd.f32 %v2710, %v2601
      %v2712 = vadd.f32 %v2711, %v2605
      %v2713 = vadd.f32 %v2712, %v2609
      %v2714 = vadd.f32 %v2713, %v2613
      %v2715 = vadd.f32 %v2714, %v2617
      %v2716 = vadd.f32 %v2715, %v2621
      %v2717 = vadd.f32 %v2716, %v2625
      %v2718 = vadd.f32 %v2717, %v2629
      %v2719 = vadd.f32 %v2718, %v2633
      %v2720 = vadd.f32 %v2719, %v2637
      %v2721 = vadd.f32 %v2720, %v2641
      %v2722 = vadd.f32 %v2721, %v2645
      %v2723 = vadd.f32 %v2722, %v2649
      %v2724 = vadd.f32 %v2723, %v2653
      %v2725 = vrot.slane %v2724, 4
      %v2726 = vadd.f32 %v2724, %v2725
      %v2727 = vrot.slane %v2726, 2
      %v2728 = vadd.f32 %v2726, %v2727
      %v2729 = vrot.slane %v2728, 1
      %v2730 = vadd.f32 %v2728, %v2729
      %v2731 = vadd.f32 %v2530, %v2534
      %v2732 = vadd.f32 %v2731, %v2538
      %v2733 = vadd.f32 %v2732, %v2542
      %v2734 = vadd.f32 %v2733, %v2546
      %v2735 = vadd.f32 %v2734, %v2550
      %v2736 = vadd.f32 %v2735, %v2554
      %v2737 = vadd.f32 %v2736, %v2558
      %v2738 = vadd.f32 %v2737, %v2562
      %v2739 = vadd.f32 %v2738, %v2566
      %v2740 = vadd.f32 %v2739, %v2570
      %v2741 = vadd.f32 %v2740, %v2574
      %v2742 = vadd.f32 %v2741, %v2578
      %v2743 = vadd.f32 %v2742, %v2582
      %v2744 = vadd.f32 %v2743, %v2586
      %v2745 = vadd.f32 %v2744, %v2590
      %v2746 = vadd.f32 %v2745, %v2594
      %v2747 = vadd.f32 %v2746, %v2598
      %v2748 = vadd.f32 %v2747, %v2602
      %v2749 = vadd.f32 %v2748, %v2606
      %v2750 = vadd.f32 %v2749, %v2610
      %v2751 = vadd.f32 %v2750, %v2614
      %v2752 = vadd.f32 %v2751, %v2618
      %v2753 = vadd.f32 %v2752, %v2622
      %v2754 = vadd.f32 %v2753, %v2626
      %v2755 = vadd.f32 %v2754, %v2630
      %v2756 = vadd.f32 %v2755, %v2634
      %v2757 = vadd.f32 %v2756, %v2638
      %v2758 = vadd.f32 %v2757, %v2642
      %v2759 = vadd.f32 %v2758, %v2646
      %v2760 = vadd.f32 %v2759, %v2650
      %v2761 = vadd.f32 %v2760, %v2654
      %v2762 = vrot.slane %v2761, 4
      %v2763 = vadd.f32 %v2761, %v2762
      %v2764 = vrot.slane %v2763, 2
      %v2765 = vadd.f32 %v2763, %v2764
      %v2766 = vrot.slane %v2765, 1
      %v2767 = vadd.f32 %v2765, %v2766
      %v2768 = vadd.f32 %v2531, %v2535
      %v2769 = vadd.f32 %v2768, %v2539
      %v2770 = vadd.f32 %v2769, %v2543
      %v2771 = vadd.f32 %v2770, %v2547
      %v2772 = vadd.f32 %v2771, %v2551
      %v2773 = vadd.f32 %v2772, %v2555
      %v2774 = vadd.f32 %v2773, %v2559
      %v2775 = vadd.f32 %v2774, %v2563
      %v2776 = vadd.f32 %v2775, %v2567
      %v2777 = vadd.f32 %v2776, %v2571
      %v2778 = vadd.f32 %v2777, %v2575
      %v2779 = vadd.f32 %v2778, %v2579
      %v2780 = vadd.f32 %v2779, %v2583
      %v2781 = vadd.f32 %v2780, %v2587
      %v2782 = vadd.f32 %v2781, %v2591
      %v2783 = vadd.f32 %v2782, %v2595
      %v2784 = vadd.f32 %v2783, %v2599
      %v2785 = vadd.f32 %v2784, %v2603
      %v2786 = vadd.f32 %v2785, %v2607
      %v2787 = vadd.f32 %v2786, %v2611
      %v2788 = vadd.f32 %v2787, %v2615
      %v2789 = vadd.f32 %v2788, %v2619
      %v2790 = vadd.f32 %v2789, %v2623
      %v2791 = vadd.f32 %v2790, %v2627
      %v2792 = vadd.f32 %v2791, %v2631
      %v2793 = vadd.f32 %v2792, %v2635
      %v2794 = vadd.f32 %v2793, %v2639
      %v2795 = vadd.f32 %v2794, %v2643
      %v2796 = vadd.f32 %v2795, %v2647
      %v2797 = vadd.f32 %v2796, %v2651
      %v2798 = vadd.f32 %v2797, %v2655
      %v2799 = vrot.slane %v2798, 4
      %v2800 = vadd.f32 %v2798, %v2799
      %v2801 = vrot.slane %v2800, 2
      %v2802 = vadd.f32 %v2800, %v2801
      %v2803 = vrot.slane %v2802, 1
      %v2804 = vadd.f32 %v2802, %v2803
      %v2809 = vcombine.low %v2693, %v2730
      %v2810 = vcombine.low %v2767, %v2804
      %v2812 = vunpack.c.l.s4 1966171168
      %v2813 = vunpack.c.0.s8 %v2812
      %v2814 = vlaneseq
      %v2815 = vshrl.u32 %v2814, 7
      %v2816 = vsub.s32 %v2813, %v2815
      %v2817 = vrot.slane %v2809, %v2816
      %v2819 = vunpack.c.l.s4 1966171168
      %v2820 = vunpack.c.0.s8 %v2819
      %v2821 = vlaneseq
      %v2822 = vshrl.u32 %v2821, 7
      %v2823 = vsub.s32 %v2820, %v2822
      %v2824 = vrot.slane %v2810, %v2823
      %v2825 = vcombine.low %v2817, %v2824
      %v2827 = vunpack.c.l.s4 1966171168
      %v2828 = vunpack.c.0.s8 %v2827
      %v2829 = vlaneseq
      %v2830 = vshrl.u32 %v2829, 7
      %v2831 = vsub.s32 %v2828, %v2830
      %v2832 = vrot.slane %v2825, %v2831
      %v2834 = vadd.f32 %v2656, %v2832
      %2835 = vst.msk [vmem:[#allocation2 + $0x8] sm:$0xf] %vm1350, %v2834
      %v2836 = vld [vmem:[%s1 + $0x30] sm:$0xff]
      %v2837 = vld [vmem:[%s1 + $0x38] sm:$0xff]
      %v2838 = vld [vmem:[%s1 + $0x70] sm:$0xff]
      %v2839 = vld [vmem:[%s1 + $0x78] sm:$0xff]
      %v2840 = vld [vmem:[%s1 + $0xb0] sm:$0xff]
      %v2841 = vld [vmem:[%s1 + $0xb8] sm:$0xff]
      %v2842 = vld [vmem:[%s1 + $0xf0] sm:$0xff]
      %v2843 = vld [vmem:[%s1 + $0xf8] sm:$0xff]
      %v2852 = vunpack.c.l.b16 %v2836
      %v2853 = vunpack.c.h.b16 %v2836
      %v2854 = vunpack.c.l.b16 %v2837
      %v2855 = vunpack.c.h.b16 %v2837
      %v2856 = vunpack.c.l.b16 %v2838
      %v2857 = vunpack.c.h.b16 %v2838
      %v2858 = vunpack.c.l.b16 %v2839
      %v2859 = vunpack.c.h.b16 %v2839
      %v2860 = vunpack.c.l.b16 %v2840
      %v2861 = vunpack.c.h.b16 %v2840
      %v2862 = vunpack.c.l.b16 %v2841
      %v2863 = vunpack.c.h.b16 %v2841
      %v2864 = vunpack.c.l.b16 %v2842
      %v2865 = vunpack.c.h.b16 %v2842
      %v2866 = vunpack.c.l.b16 %v2843
      %v2867 = vunpack.c.h.b16 %v2843
      %v2868 = vpack.c.b16 %v2856, %v2852
      %v2869 = vpack.c.b16 %v2857, %v2853
      %v2870 = vpack.c.b16 %v2858, %v2854
      %v2871 = vpack.c.b16 %v2859, %v2855
      %v2872 = vpack.c.b16 %v2864, %v2860
      %v2873 = vpack.c.b16 %v2865, %v2861
      %v2874 = vpack.c.b16 %v2866, %v2862
      %v2875 = vpack.c.b16 %v2867, %v2863
      %2884 = vmatprep.subr.bf16.mxu0 %v2869
      %2885 = vmatpush1.bf16.msra.mxu0 %v2868
      %2886 = vmatprep.subr.bf16.mxu0 %v2873
      %2887 = vmatpush1.bf16.msra.mxu0 %v2872
      %2888 = vmatprep.subr.bf16.mxu0 0
      %2889 = vmatpush1.bf16.msra.mxu0 0
      %2890 = vmatprep.subr.bf16.mxu0 0
      %2891 = vmatpush1.bf16.msra.mxu0 0
      %2892 = vmatprep.subr.bf16.mxu0 0
      %2893 = vmatpush1.bf16.msra.mxu0 0
      %2894 = vmatprep.subr.bf16.mxu0 0
      %2895 = vmatpush1.bf16.msra.mxu0 0
      %2896 = vmatprep.subr.bf16.mxu0 0
      %2897 = vmatpush1.bf16.msra.mxu0 0
      %2898 = vmatprep.subr.bf16.mxu0 0
      %2899 = vmatpush1.bf16.msra.mxu0 0
      %2900 = vmatprep.subr.bf16.mxu0 0
      %2901 = vmatpush1.bf16.msra.mxu0 0
      %2902 = vmatprep.subr.bf16.mxu0 0
      %2903 = vmatpush1.bf16.msra.mxu0 0
      %2904 = vmatprep.subr.bf16.mxu0 0
      %2905 = vmatpush1.bf16.msra.mxu0 0
      %2906 = vmatprep.subr.bf16.mxu0 0
      %2907 = vmatpush1.bf16.msra.mxu0 0
      %2908 = vmatprep.subr.bf16.mxu0 0
      %2909 = vmatpush1.bf16.msra.mxu0 0
      %2910 = vmatprep.subr.bf16.mxu0 0
      %2911 = vmatpush1.bf16.msra.mxu0 0
      %2912 = vmatprep.subr.bf16.mxu0 0
      %2913 = vmatpush1.bf16.msra.mxu0 0
      %2914 = vmatprep.subr.bf16.mxu0 0
      %2915 = vmatpush1.bf16.msra.mxu0 0
      %2916 = vmatprep.mubr.bf16.mxu0 0
      %2917 = vmatmul.mubr.bf16.gmra.mrb[0].mxu0 %v607
      %v2918 = vpop.f32.mrb[0].mxu0
      %v2919 = vadd.f32 0.0, %v2918
      %v2920 = vpop.f32.mrb[0].mxu0
      %v2921 = vadd.f32 0.0, %v2920
      %v2922 = vpop.f32.mrb[0].mxu0
      %v2923 = vadd.f32 0.0, %v2922
      %v2924 = vpop.f32.mrb[0].mxu0
      %v2925 = vadd.f32 0.0, %v2924
      %2926 = vmatprep.mubr.bf16.mxu0 0
      %2927 = vmatmul.mubr.bf16.gmra.mrb[0].mxu0 %v610
      %v2928 = vpop.f32.mrb[0].mxu0
      %v2929 = vadd.f32 0.0, %v2928
      %v2930 = vpop.f32.mrb[0].mxu0
      %v2931 = vadd.f32 0.0, %v2930
      %v2932 = vpop.f32.mrb[0].mxu0
      %v2933 = vadd.f32 0.0, %v2932
      %v2934 = vpop.f32.mrb[0].mxu0
      %v2935 = vadd.f32 0.0, %v2934
      %2936 = vmatprep.mubr.bf16.mxu0 0
      %2937 = vmatmul.mubr.bf16.gmra.mrb[0].mxu0 %v613
      %v2938 = vpop.f32.mrb[0].mxu0
      %v2939 = vadd.f32 0.0, %v2938
      %v2940 = vpop.f32.mrb[0].mxu0
      %v2941 = vadd.f32 0.0, %v2940
      %v2942 = vpop.f32.mrb[0].mxu0
      %v2943 = vadd.f32 0.0, %v2942
      %v2944 = vpop.f32.mrb[0].mxu0
      %v2945 = vadd.f32 0.0, %v2944
      %2946 = vmatprep.mubr.bf16.mxu0 0
      %2947 = vmatmul.mubr.bf16.gmra.mrb[0].mxu0 %v616
      %v2948 = vpop.f32.mrb[0].mxu0
      %v2949 = vadd.f32 0.0, %v2948
      %v2950 = vpop.f32.mrb[0].mxu0
      %v2951 = vadd.f32 0.0, %v2950
      %v2952 = vpop.f32.mrb[0].mxu0
      %v2953 = vadd.f32 0.0, %v2952
      %v2954 = vpop.f32.mrb[0].mxu0
      %v2955 = vadd.f32 0.0, %v2954
      %2956 = vmatprep.mubr.bf16.mxu0 0
      %2957 = vmatmul.mubr.bf16.gmra.mrb[0].mxu0 %v619
      %v2958 = vpop.f32.mrb[0].mxu0
      %v2959 = vadd.f32 0.0, %v2958
      %v2960 = vpop.f32.mrb[0].mxu0
      %v2961 = vadd.f32 0.0, %v2960
      %v2962 = vpop.f32.mrb[0].mxu0
      %v2963 = vadd.f32 0.0, %v2962
      %v2964 = vpop.f32.mrb[0].mxu0
      %v2965 = vadd.f32 0.0, %v2964
      %2966 = vmatprep.mubr.bf16.mxu0 0
      %2967 = vmatmul.mubr.bf16.gmra.mrb[0].mxu0 %v622
      %v2968 = vpop.f32.mrb[0].mxu0
      %v2969 = vadd.f32 0.0, %v2968
      %v2970 = vpop.f32.mrb[0].mxu0
      %v2971 = vadd.f32 0.0, %v2970
      %v2972 = vpop.f32.mrb[0].mxu0
      %v2973 = vadd.f32 0.0, %v2972
      %v2974 = vpop.f32.mrb[0].mxu0
      %v2975 = vadd.f32 0.0, %v2974
      %2976 = vmatprep.mubr.bf16.mxu0 0
      %2977 = vmatmul.mubr.bf16.gmra.mrb[0].mxu0 %v625
      %v2978 = vpop.f32.mrb[0].mxu0
      %v2979 = vadd.f32 0.0, %v2978
      %v2980 = vpop.f32.mrb[0].mxu0
      %v2981 = vadd.f32 0.0, %v2980
      %v2982 = vpop.f32.mrb[0].mxu0
      %v2983 = vadd.f32 0.0, %v2982
      %v2984 = vpop.f32.mrb[0].mxu0
      %v2985 = vadd.f32 0.0, %v2984
      %2986 = vmatprep.mubr.bf16.mxu0 0
      %2987 = vmatmul.mubr.bf16.gmra.mrb[0].mxu0 %v628
      %v2988 = vpop.f32.mrb[0].mxu0
      %v2989 = vadd.f32 0.0, %v2988
      %v2990 = vpop.f32.mrb[0].mxu0
      %v2991 = vadd.f32 0.0, %v2990
      %v2992 = vpop.f32.mrb[0].mxu0
      %v2993 = vadd.f32 0.0, %v2992
      %v2994 = vpop.f32.mrb[0].mxu0
      %v2995 = vadd.f32 0.0, %v2994
      %2996 = vmatprep.mubr.bf16.mxu0 0
      %2997 = vmatmul.mubr.bf16.gmra.mrb[0].mxu0 %v631
      %v2998 = vpop.f32.mrb[0].mxu0
      %v2999 = vadd.f32 0.0, %v2998
      %v3000 = vpop.f32.mrb[0].mxu0
      %v3001 = vadd.f32 0.0, %v3000
      %v3002 = vpop.f32.mrb[0].mxu0
      %v3003 = vadd.f32 0.0, %v3002
      %v3004 = vpop.f32.mrb[0].mxu0
      %v3005 = vadd.f32 0.0, %v3004
      %3006 = vmatprep.mubr.bf16.mxu0 0
      %3007 = vmatmul.mubr.bf16.gmra.mrb[0].mxu0 %v634
      %v3008 = vpop.f32.mrb[0].mxu0
      %v3009 = vadd.f32 0.0, %v3008
      %v3010 = vpop.f32.mrb[0].mxu0
      %v3011 = vadd.f32 0.0, %v3010
      %v3012 = vpop.f32.mrb[0].mxu0
      %v3013 = vadd.f32 0.0, %v3012
      %v3014 = vpop.f32.mrb[0].mxu0
      %v3015 = vadd.f32 0.0, %v3014
      %3016 = vmatprep.mubr.bf16.mxu0 0
      %3017 = vmatmul.mubr.bf16.gmra.mrb[0].mxu0 %v637
      %v3018 = vpop.f32.mrb[0].mxu0
      %v3019 = vadd.f32 0.0, %v3018
      %v3020 = vpop.f32.mrb[0].mxu0
      %v3021 = vadd.f32 0.0, %v3020
      %v3022 = vpop.f32.mrb[0].mxu0
      %v3023 = vadd.f32 0.0, %v3022
      %v3024 = vpop.f32.mrb[0].mxu0
      %v3025 = vadd.f32 0.0, %v3024
      %3026 = vmatprep.mubr.bf16.mxu0 0
      %3027 = vmatmul.mubr.bf16.gmra.mrb[0].mxu0 %v640
      %v3028 = vpop.f32.mrb[0].mxu0
      %v3029 = vadd.f32 0.0, %v3028
      %v3030 = vpop.f32.mrb[0].mxu0
      %v3031 = vadd.f32 0.0, %v3030
      %v3032 = vpop.f32.mrb[0].mxu0
      %v3033 = vadd.f32 0.0, %v3032
      %v3034 = vpop.f32.mrb[0].mxu0
      %v3035 = vadd.f32 0.0, %v3034
      %3036 = vmatprep.mubr.bf16.mxu0 0
      %3037 = vmatmul.mubr.bf16.gmra.mrb[0].mxu0 %v643
      %v3038 = vpop.f32.mrb[0].mxu0
      %v3039 = vadd.f32 0.0, %v3038
      %v3040 = vpop.f32.mrb[0].mxu0
      %v3041 = vadd.f32 0.0, %v3040
      %v3042 = vpop.f32.mrb[0].mxu0
      %v3043 = vadd.f32 0.0, %v3042
      %v3044 = vpop.f32.mrb[0].mxu0
      %v3045 = vadd.f32 0.0, %v3044
      %3046 = vmatprep.mubr.bf16.mxu0 0
      %3047 = vmatmul.mubr.bf16.gmra.mrb[0].mxu0 %v646
      %v3048 = vpop.f32.mrb[0].mxu0
      %v3049 = vadd.f32 0.0, %v3048
      %v3050 = vpop.f32.mrb[0].mxu0
      %v3051 = vadd.f32 0.0, %v3050
      %v3052 = vpop.f32.mrb[0].mxu0
      %v3053 = vadd.f32 0.0, %v3052
      %v3054 = vpop.f32.mrb[0].mxu0
      %v3055 = vadd.f32 0.0, %v3054
      %3056 = vmatprep.mubr.bf16.mxu0 0
      %3057 = vmatmul.mubr.bf16.gmra.mrb[0].mxu0 %v649
      %v3058 = vpop.f32.mrb[0].mxu0
      %v3059 = vadd.f32 0.0, %v3058
      %v3060 = vpop.f32.mrb[0].mxu0
      %v3061 = vadd.f32 0.0, %v3060
      %v3062 = vpop.f32.mrb[0].mxu0
      %v3063 = vadd.f32 0.0, %v3062
      %v3064 = vpop.f32.mrb[0].mxu0
      %v3065 = vadd.f32 0.0, %v3064
      %3066 = vmatprep.mubr.bf16.mxu0 0
      %3067 = vmatmul.mubr.bf16.gmra.mrb[0].mxu0 %v652
      %v3068 = vpop.f32.mrb[0].mxu0
      %v3069 = vadd.f32 0.0, %v3068
      %v3070 = vpop.f32.mrb[0].mxu0
      %v3071 = vadd.f32 0.0, %v3070
      %v3072 = vpop.f32.mrb[0].mxu0
      %v3073 = vadd.f32 0.0, %v3072
      %v3074 = vpop.f32.mrb[0].mxu0
      %v3075 = vadd.f32 0.0, %v3074
      %3076 = vdwg.mxu0
      %3077 = vmatprep.subr.bf16.mxu0 %v2871
      %3078 = vmatpush1.bf16.msra.mxu0 %v2870
      %3079 = vmatprep.subr.bf16.mxu0 %v2875
      %3080 = vmatpush1.bf16.msra.mxu0 %v2874
      %3081 = vmatprep.subr.bf16.mxu0 0
      %3082 = vmatpush1.bf16.msra.mxu0 0
      %3083 = vmatprep.subr.bf16.mxu0 0
      %3084 = vmatpush1.bf16.msra.mxu0 0
      %3085 = vmatprep.subr.bf16.mxu0 0
      %3086 = vmatpush1.bf16.msra.mxu0 0
      %3087 = vmatprep.subr.bf16.mxu0 0
      %3088 = vmatpush1.bf16.msra.mxu0 0
      %3089 = vmatprep.subr.bf16.mxu0 0
      %3090 = vmatpush1.bf16.msra.mxu0 0
      %3091 = vmatprep.subr.bf16.mxu0 0
      %3092 = vmatpush1.bf16.msra.mxu0 0
      %3093 = vmatprep.subr.bf16.mxu0 0
      %3094 = vmatpush1.bf16.msra.mxu0 0
      %3095 = vmatprep.subr.bf16.mxu0 0
      %3096 = vmatpush1.bf16.msra.mxu0 0
      %3097 = vmatprep.subr.bf16.mxu0 0
      %3098 = vmatpush1.bf16.msra.mxu0 0
      %3099 = vmatprep.subr.bf16.mxu0 0
      %3100 = vmatpush1.bf16.msra.mxu0 0
      %3101 = vmatprep.subr.bf16.mxu0 0
      %3102 = vmatpush1.bf16.msra.mxu0 0
      %3103 = vmatprep.subr.bf16.mxu0 0
      %3104 = vmatpush1.bf16.msra.mxu0 0
      %3105 = vmatprep.subr.bf16.mxu0 0
      %3106 = vmatpush1.bf16.msra.mxu0 0
      %3107 = vmatprep.subr.bf16.mxu0 0
      %3108 = vmatpush1.bf16.msra.mxu0 0
      %3109 = vmatprep.mubr.bf16.mxu0 0
      %3110 = vmatmul.mubr.bf16.gmra.mrb[0].mxu0 %v607
      %v3111 = vpop.f32.mrb[0].mxu0
      %v3112 = vadd.f32 0.0, %v3111
      %v3113 = vpop.f32.mrb[0].mxu0
      %v3114 = vadd.f32 0.0, %v3113
      %v3115 = vpop.f32.mrb[0].mxu0
      %v3116 = vadd.f32 0.0, %v3115
      %v3117 = vpop.f32.mrb[0].mxu0
      %v3118 = vadd.f32 0.0, %v3117
      %3119 = vmatprep.mubr.bf16.mxu0 0
      %3120 = vmatmul.mubr.bf16.gmra.mrb[0].mxu0 %v610
      %v3121 = vpop.f32.mrb[0].mxu0
      %v3122 = vadd.f32 0.0, %v3121
      %v3123 = vpop.f32.mrb[0].mxu0
      %v3124 = vadd.f32 0.0, %v3123
      %v3125 = vpop.f32.mrb[0].mxu0
      %v3126 = vadd.f32 0.0, %v3125
      %v3127 = vpop.f32.mrb[0].mxu0
      %v3128 = vadd.f32 0.0, %v3127
      %3129 = vmatprep.mubr.bf16.mxu0 0
      %3130 = vmatmul.mubr.bf16.gmra.mrb[0].mxu0 %v613
      %v3131 = vpop.f32.mrb[0].mxu0
      %v3132 = vadd.f32 0.0, %v3131
      %v3133 = vpop.f32.mrb[0].mxu0
      %v3134 = vadd.f32 0.0, %v3133
      %v3135 = vpop.f32.mrb[0].mxu0
      %v3136 = vadd.f32 0.0, %v3135
      %v3137 = vpop.f32.mrb[0].mxu0
      %v3138 = vadd.f32 0.0, %v3137
      %3139 = vmatprep.mubr.bf16.mxu0 0
      %3140 = vmatmul.mubr.bf16.gmra.mrb[0].mxu0 %v616
      %v3141 = vpop.f32.mrb[0].mxu0
      %v3142 = vadd.f32 0.0, %v3141
      %v3143 = vpop.f32.mrb[0].mxu0
      %v3144 = vadd.f32 0.0, %v3143
      %v3145 = vpop.f32.mrb[0].mxu0
      %v3146 = vadd.f32 0.0, %v3145
      %v3147 = vpop.f32.mrb[0].mxu0
      %v3148 = vadd.f32 0.0, %v3147
      %3149 = vmatprep.mubr.bf16.mxu0 0
      %3150 = vmatmul.mubr.bf16.gmra.mrb[0].mxu0 %v619
      %v3151 = vpop.f32.mrb[0].mxu0
      %v3152 = vadd.f32 0.0, %v3151
      %v3153 = vpop.f32.mrb[0].mxu0
      %v3154 = vadd.f32 0.0, %v3153
      %v3155 = vpop.f32.mrb[0].mxu0
      %v3156 = vadd.f32 0.0, %v3155
      %v3157 = vpop.f32.mrb[0].mxu0
      %v3158 = vadd.f32 0.0, %v3157
      %3159 = vmatprep.mubr.bf16.mxu0 0
      %3160 = vmatmul.mubr.bf16.gmra.mrb[0].mxu0 %v622
      %v3161 = vpop.f32.mrb[0].mxu0
      %v3162 = vadd.f32 0.0, %v3161
      %v3163 = vpop.f32.mrb[0].mxu0
      %v3164 = vadd.f32 0.0, %v3163
      %v3165 = vpop.f32.mrb[0].mxu0
      %v3166 = vadd.f32 0.0, %v3165
      %v3167 = vpop.f32.mrb[0].mxu0
      %v3168 = vadd.f32 0.0, %v3167
      %3169 = vmatprep.mubr.bf16.mxu0 0
      %3170 = vmatmul.mubr.bf16.gmra.mrb[0].mxu0 %v625
      %v3171 = vpop.f32.mrb[0].mxu0
      %v3172 = vadd.f32 0.0, %v3171
      %v3173 = vpop.f32.mrb[0].mxu0
      %v3174 = vadd.f32 0.0, %v3173
      %v3175 = vpop.f32.mrb[0].mxu0
      %v3176 = vadd.f32 0.0, %v3175
      %v3177 = vpop.f32.mrb[0].mxu0
      %v3178 = vadd.f32 0.0, %v3177
      %3179 = vmatprep.mubr.bf16.mxu0 0
      %3180 = vmatmul.mubr.bf16.gmra.mrb[0].mxu0 %v628
      %v3181 = vpop.f32.mrb[0].mxu0
      %v3182 = vadd.f32 0.0, %v3181
      %v3183 = vpop.f32.mrb[0].mxu0
      %v3184 = vadd.f32 0.0, %v3183
      %v3185 = vpop.f32.mrb[0].mxu0
      %v3186 = vadd.f32 0.0, %v3185
      %v3187 = vpop.f32.mrb[0].mxu0
      %v3188 = vadd.f32 0.0, %v3187
      %3189 = vmatprep.mubr.bf16.mxu0 0
      %3190 = vmatmul.mubr.bf16.gmra.mrb[0].mxu0 %v631
      %v3191 = vpop.f32.mrb[0].mxu0
      %v3192 = vadd.f32 0.0, %v3191
      %v3193 = vpop.f32.mrb[0].mxu0
      %v3194 = vadd.f32 0.0, %v3193
      %v3195 = vpop.f32.mrb[0].mxu0
      %v3196 = vadd.f32 0.0, %v3195
      %v3197 = vpop.f32.mrb[0].mxu0
      %v3198 = vadd.f32 0.0, %v3197
      %3199 = vmatprep.mubr.bf16.mxu0 0
      %3200 = vmatmul.mubr.bf16.gmra.mrb[0].mxu0 %v634
      %v3201 = vpop.f32.mrb[0].mxu0
      %v3202 = vadd.f32 0.0, %v3201
      %v3203 = vpop.f32.mrb[0].mxu0
      %v3204 = vadd.f32 0.0, %v3203
      %v3205 = vpop.f32.mrb[0].mxu0
      %v3206 = vadd.f32 0.0, %v3205
      %v3207 = vpop.f32.mrb[0].mxu0
      %v3208 = vadd.f32 0.0, %v3207
      %3209 = vmatprep.mubr.bf16.mxu0 0
      %3210 = vmatmul.mubr.bf16.gmra.mrb[0].mxu0 %v637
      %v3211 = vpop.f32.mrb[0].mxu0
      %v3212 = vadd.f32 0.0, %v3211
      %v3213 = vpop.f32.mrb[0].mxu0
      %v3214 = vadd.f32 0.0, %v3213
      %v3215 = vpop.f32.mrb[0].mxu0
      %v3216 = vadd.f32 0.0, %v3215
      %v3217 = vpop.f32.mrb[0].mxu0
      %v3218 = vadd.f32 0.0, %v3217
      %3219 = vmatprep.mubr.bf16.mxu0 0
      %3220 = vmatmul.mubr.bf16.gmra.mrb[0].mxu0 %v640
      %v3221 = vpop.f32.mrb[0].mxu0
      %v3222 = vadd.f32 0.0, %v3221
      %v3223 = vpop.f32.mrb[0].mxu0
      %v3224 = vadd.f32 0.0, %v3223
      %v3225 = vpop.f32.mrb[0].mxu0
      %v3226 = vadd.f32 0.0, %v3225
      %v3227 = vpop.f32.mrb[0].mxu0
      %v3228 = vadd.f32 0.0, %v3227
      %3229 = vmatprep.mubr.bf16.mxu0 0
      %3230 = vmatmul.mubr.bf16.gmra.mrb[0].mxu0 %v643
      %v3231 = vpop.f32.mrb[0].mxu0
      %v3232 = vadd.f32 0.0, %v3231
      %v3233 = vpop.f32.mrb[0].mxu0
      %v3234 = vadd.f32 0.0, %v3233
      %v3235 = vpop.f32.mrb[0].mxu0
      %v3236 = vadd.f32 0.0, %v3235
      %v3237 = vpop.f32.mrb[0].mxu0
      %v3238 = vadd.f32 0.0, %v3237
      %3239 = vmatprep.mubr.bf16.mxu0 0
      %3240 = vmatmul.mubr.bf16.gmra.mrb[0].mxu0 %v646
      %v3241 = vpop.f32.mrb[0].mxu0
      %v3242 = vadd.f32 0.0, %v3241
      %v3243 = vpop.f32.mrb[0].mxu0
      %v3244 = vadd.f32 0.0, %v3243
      %v3245 = vpop.f32.mrb[0].mxu0
      %v3246 = vadd.f32 0.0, %v3245
      %v3247 = vpop.f32.mrb[0].mxu0
      %v3248 = vadd.f32 0.0, %v3247
      %3249 = vmatprep.mubr.bf16.mxu0 0
      %3250 = vmatmul.mubr.bf16.gmra.mrb[0].mxu0 %v649
      %v3251 = vpop.f32.mrb[0].mxu0
      %v3252 = vadd.f32 0.0, %v3251
      %v3253 = vpop.f32.mrb[0].mxu0
      %v3254 = vadd.f32 0.0, %v3253
      %v3255 = vpop.f32.mrb[0].mxu0
      %v3256 = vadd.f32 0.0, %v3255
      %v3257 = vpop.f32.mrb[0].mxu0
      %v3258 = vadd.f32 0.0, %v3257
      %3259 = vmatprep.mubr.bf16.mxu0 0
      %3260 = vmatmul.mubr.bf16.gmra.mrb[0].mxu0 %v652
      %v3261 = vpop.f32.mrb[0].mxu0
      %v3262 = vadd.f32 0.0, %v3261
      %v3263 = vpop.f32.mrb[0].mxu0
      %v3264 = vadd.f32 0.0, %v3263
      %v3265 = vpop.f32.mrb[0].mxu0
      %v3266 = vadd.f32 0.0, %v3265
      %v3267 = vpop.f32.mrb[0].mxu0
      %v3268 = vadd.f32 0.0, %v3267
      %3269 = vdwg.mxu0
      %v3270 = vmax.f32 %v2919, 0.0
      %v3271 = vmax.f32 %v2921, 0.0
      %v3272 = vmax.f32 %v3112, 0.0
      %v3273 = vmax.f32 %v3114, 0.0
      %v3274 = vmax.f32 %v2923, 0.0
      %v3275 = vmax.f32 %v2925, 0.0
      %v3276 = vmax.f32 %v3116, 0.0
      %v3277 = vmax.f32 %v3118, 0.0
      %v3278 = vmax.f32 %v2929, 0.0
      %v3279 = vmax.f32 %v2931, 0.0
      %v3280 = vmax.f32 %v3122, 0.0
      %v3281 = vmax.f32 %v3124, 0.0
      %v3282 = vmax.f32 %v2933, 0.0
      %v3283 = vmax.f32 %v2935, 0.0
      %v3284 = vmax.f32 %v3126, 0.0
      %v3285 = vmax.f32 %v3128, 0.0
      %v3286 = vmax.f32 %v2939, 0.0
      %v3287 = vmax.f32 %v2941, 0.0
      %v3288 = vmax.f32 %v3132, 0.0
      %v3289 = vmax.f32 %v3134, 0.0
      %v3290 = vmax.f32 %v2943, 0.0
      %v3291 = vmax.f32 %v2945, 0.0
      %v3292 = vmax.f32 %v3136, 0.0
      %v3293 = vmax.f32 %v3138, 0.0
      %v3294 = vmax.f32 %v2949, 0.0
      %v3295 = vmax.f32 %v2951, 0.0
      %v3296 = vmax.f32 %v3142, 0.0
      %v3297 = vmax.f32 %v3144, 0.0
      %v3298 = vmax.f32 %v2953, 0.0
      %v3299 = vmax.f32 %v2955, 0.0
      %v3300 = vmax.f32 %v3146, 0.0
      %v3301 = vmax.f32 %v3148, 0.0
      %v3302 = vmax.f32 %v2959, 0.0
      %v3303 = vmax.f32 %v2961, 0.0
      %v3304 = vmax.f32 %v3152, 0.0
      %v3305 = vmax.f32 %v3154, 0.0
      %v3306 = vmax.f32 %v2963, 0.0
      %v3307 = vmax.f32 %v2965, 0.0
      %v3308 = vmax.f32 %v3156, 0.0
      %v3309 = vmax.f32 %v3158, 0.0
      %v3310 = vmax.f32 %v2969, 0.0
      %v3311 = vmax.f32 %v2971, 0.0
      %v3312 = vmax.f32 %v3162, 0.0
      %v3313 = vmax.f32 %v3164, 0.0
      %v3314 = vmax.f32 %v2973, 0.0
      %v3315 = vmax.f32 %v2975, 0.0
      %v3316 = vmax.f32 %v3166, 0.0
      %v3317 = vmax.f32 %v3168, 0.0
      %v3318 = vmax.f32 %v2979, 0.0
      %v3319 = vmax.f32 %v2981, 0.0
      %v3320 = vmax.f32 %v3172, 0.0
      %v3321 = vmax.f32 %v3174, 0.0
      %v3322 = vmax.f32 %v2983, 0.0
      %v3323 = vmax.f32 %v2985, 0.0
      %v3324 = vmax.f32 %v3176, 0.0
      %v3325 = vmax.f32 %v3178, 0.0
      %v3326 = vmax.f32 %v2989, 0.0
      %v3327 = vmax.f32 %v2991, 0.0
      %v3328 = vmax.f32 %v3182, 0.0
      %v3329 = vmax.f32 %v3184, 0.0
      %v3330 = vmax.f32 %v2993, 0.0
      %v3331 = vmax.f32 %v2995, 0.0
      %v3332 = vmax.f32 %v3186, 0.0
      %v3333 = vmax.f32 %v3188, 0.0
      %v3334 = vmax.f32 %v2999, 0.0
      %v3335 = vmax.f32 %v3001, 0.0
      %v3336 = vmax.f32 %v3192, 0.0
      %v3337 = vmax.f32 %v3194, 0.0
      %v3338 = vmax.f32 %v3003, 0.0
      %v3339 = vmax.f32 %v3005, 0.0
      %v3340 = vmax.f32 %v3196, 0.0
      %v3341 = vmax.f32 %v3198, 0.0
      %v3342 = vmax.f32 %v3009, 0.0
      %v3343 = vmax.f32 %v3011, 0.0
      %v3344 = vmax.f32 %v3202, 0.0
      %v3345 = vmax.f32 %v3204, 0.0
      %v3346 = vmax.f32 %v3013, 0.0
      %v3347 = vmax.f32 %v3015, 0.0
      %v3348 = vmax.f32 %v3206, 0.0
      %v3349 = vmax.f32 %v3208, 0.0
      %v3350 = vmax.f32 %v3019, 0.0
      %v3351 = vmax.f32 %v3021, 0.0
      %v3352 = vmax.f32 %v3212, 0.0
      %v3353 = vmax.f32 %v3214, 0.0
      %v3354 = vmax.f32 %v3023, 0.0
      %v3355 = vmax.f32 %v3025, 0.0
      %v3356 = vmax.f32 %v3216, 0.0
      %v3357 = vmax.f32 %v3218, 0.0
      %v3358 = vmax.f32 %v3029, 0.0
      %v3359 = vmax.f32 %v3031, 0.0
      %v3360 = vmax.f32 %v3222, 0.0
      %v3361 = vmax.f32 %v3224, 0.0
      %v3362 = vmax.f32 %v3033, 0.0
      %v3363 = vmax.f32 %v3035, 0.0
      %v3364 = vmax.f32 %v3226, 0.0
      %v3365 = vmax.f32 %v3228, 0.0
      %v3366 = vmax.f32 %v3039, 0.0
      %v3367 = vmax.f32 %v3041, 0.0
      %v3368 = vmax.f32 %v3232, 0.0
      %v3369 = vmax.f32 %v3234, 0.0
      %v3370 = vmax.f32 %v3043, 0.0
      %v3371 = vmax.f32 %v3045, 0.0
      %v3372 = vmax.f32 %v3236, 0.0
      %v3373 = vmax.f32 %v3238, 0.0
      %v3374 = vmax.f32 %v3049, 0.0
      %v3375 = vmax.f32 %v3051, 0.0
      %v3376 = vmax.f32 %v3242, 0.0
      %v3377 = vmax.f32 %v3244, 0.0
      %v3378 = vmax.f32 %v3053, 0.0
      %v3379 = vmax.f32 %v3055, 0.0
      %v3380 = vmax.f32 %v3246, 0.0
      %v3381 = vmax.f32 %v3248, 0.0
      %v3382 = vmax.f32 %v3059, 0.0
      %v3383 = vmax.f32 %v3061, 0.0
      %v3384 = vmax.f32 %v3252, 0.0
      %v3385 = vmax.f32 %v3254, 0.0
      %v3386 = vmax.f32 %v3063, 0.0
      %v3387 = vmax.f32 %v3065, 0.0
      %v3388 = vmax.f32 %v3256, 0.0
      %v3389 = vmax.f32 %v3258, 0.0
      %v3390 = vmax.f32 %v3069, 0.0
      %v3391 = vmax.f32 %v3071, 0.0
      %v3392 = vmax.f32 %v3262, 0.0
      %v3393 = vmax.f32 %v3264, 0.0
      %v3394 = vmax.f32 %v3073, 0.0
      %v3395 = vmax.f32 %v3075, 0.0
      %v3396 = vmax.f32 %v3266, 0.0
      %v3397 = vmax.f32 %v3268, 0.0
      %v3398 = vld [vmem:[#allocation2 + $0xc] sm:$0xf]
      %v3399 = vadd.f32 %v3270, %v3274
      %v3400 = vadd.f32 %v3399, %v3278
      %v3401 = vadd.f32 %v3400, %v3282
      %v3402 = vadd.f32 %v3401, %v3286
      %v3403 = vadd.f32 %v3402, %v3290
      %v3404 = vadd.f32 %v3403, %v3294
      %v3405 = vadd.f32 %v3404, %v3298
      %v3406 = vadd.f32 %v3405, %v3302
      %v3407 = vadd.f32 %v3406, %v3306
      %v3408 = vadd.f32 %v3407, %v3310
      %v3409 = vadd.f32 %v3408, %v3314
      %v3410 = vadd.f32 %v3409, %v3318
      %v3411 = vadd.f32 %v3410, %v3322
      %v3412 = vadd.f32 %v3411, %v3326
      %v3413 = vadd.f32 %v3412, %v3330
      %v3414 = vadd.f32 %v3413, %v3334
      %v3415 = vadd.f32 %v3414, %v3338
      %v3416 = vadd.f32 %v3415, %v3342
      %v3417 = vadd.f32 %v3416, %v3346
      %v3418 = vadd.f32 %v3417, %v3350
      %v3419 = vadd.f32 %v3418, %v3354
      %v3420 = vadd.f32 %v3419, %v3358
      %v3421 = vadd.f32 %v3420, %v3362
      %v3422 = vadd.f32 %v3421, %v3366
      %v3423 = vadd.f32 %v3422, %v3370
      %v3424 = vadd.f32 %v3423, %v3374
      %v3425 = vadd.f32 %v3424, %v3378
      %v3426 = vadd.f32 %v3425, %v3382
      %v3427 = vadd.f32 %v3426, %v3386
      %v3428 = vadd.f32 %v3427, %v3390
      %v3429 = vadd.f32 %v3428, %v3394
      %v3430 = vrot.slane %v3429, 4
      %v3431 = vadd.f32 %v3429, %v3430
      %v3432 = vrot.slane %v3431, 2
      %v3433 = vadd.f32 %v3431, %v3432
      %v3434 = vrot.slane %v3433, 1
      %v3435 = vadd.f32 %v3433, %v3434
      %v3436 = vadd.f32 %v3271, %v3275
      %v3437 = vadd.f32 %v3436, %v3279
      %v3438 = vadd.f32 %v3437, %v3283
      %v3439 = vadd.f32 %v3438, %v3287
      %v3440 = vadd.f32 %v3439, %v3291
      %v3441 = vadd.f32 %v3440, %v3295
      %v3442 = vadd.f32 %v3441, %v3299
      %v3443 = vadd.f32 %v3442, %v3303
      %v3444 = vadd.f32 %v3443, %v3307
      %v3445 = vadd.f32 %v3444, %v3311
      %v3446 = vadd.f32 %v3445, %v3315
      %v3447 = vadd.f32 %v3446, %v3319
      %v3448 = vadd.f32 %v3447, %v3323
      %v3449 = vadd.f32 %v3448, %v3327
      %v3450 = vadd.f32 %v3449, %v3331
      %v3451 = vadd.f32 %v3450, %v3335
      %v3452 = vadd.f32 %v3451, %v3339
      %v3453 = vadd.f32 %v3452, %v3343
      %v3454 = vadd.f32 %v3453, %v3347
      %v3455 = vadd.f32 %v3454, %v3351
      %v3456 = vadd.f32 %v3455, %v3355
      %v3457 = vadd.f32 %v3456, %v3359
      %v3458 = vadd.f32 %v3457, %v3363
      %v3459 = vadd.f32 %v3458, %v3367
      %v3460 = vadd.f32 %v3459, %v3371
      %v3461 = vadd.f32 %v3460, %v3375
      %v3462 = vadd.f32 %v3461, %v3379
      %v3463 = vadd.f32 %v3462, %v3383
      %v3464 = vadd.f32 %v3463, %v3387
      %v3465 = vadd.f32 %v3464, %v3391
      %v3466 = vadd.f32 %v3465, %v3395
      %v3467 = vrot.slane %v3466, 4
      %v3468 = vadd.f32 %v3466, %v3467
      %v3469 = vrot.slane %v3468, 2
      %v3470 = vadd.f32 %v3468, %v3469
      %v3471 = vrot.slane %v3470, 1
      %v3472 = vadd.f32 %v3470, %v3471
      %v3473 = vadd.f32 %v3272, %v3276
      %v3474 = vadd.f32 %v3473, %v3280
      %v3475 = vadd.f32 %v3474, %v3284
      %v3476 = vadd.f32 %v3475, %v3288
      %v3477 = vadd.f32 %v3476, %v3292
      %v3478 = vadd.f32 %v3477, %v3296
      %v3479 = vadd.f32 %v3478, %v3300
      %v3480 = vadd.f32 %v3479, %v3304
      %v3481 = vadd.f32 %v3480, %v3308
      %v3482 = vadd.f32 %v3481, %v3312
      %v3483 = vadd.f32 %v3482, %v3316
      %v3484 = vadd.f32 %v3483, %v3320
      %v3485 = vadd.f32 %v3484, %v3324
      %v3486 = vadd.f32 %v3485, %v3328
      %v3487 = vadd.f32 %v3486, %v3332
      %v3488 = vadd.f32 %v3487, %v3336
      %v3489 = vadd.f32 %v3488, %v3340
      %v3490 = vadd.f32 %v3489, %v3344
      %v3491 = vadd.f32 %v3490, %v3348
      %v3492 = vadd.f32 %v3491, %v3352
      %v3493 = vadd.f32 %v3492, %v3356
      %v3494 = vadd.f32 %v3493, %v3360
      %v3495 = vadd.f32 %v3494, %v3364
      %v3496 = vadd.f32 %v3495, %v3368
      %v3497 = vadd.f32 %v3496, %v3372
      %v3498 = vadd.f32 %v3497, %v3376
      %v3499 = vadd.f32 %v3498, %v3380
      %v3500 = vadd.f32 %v3499, %v3384
      %v3501 = vadd.f32 %v3500, %v3388
      %v3502 = vadd.f32 %v3501, %v3392
      %v3503 = vadd.f32 %v3502, %v3396
      %v3504 = vrot.slane %v3503, 4
      %v3505 = vadd.f32 %v3503, %v3504
      %v3506 = vrot.slane %v3505, 2
      %v3507 = vadd.f32 %v3505, %v3506
      %v3508 = vrot.slane %v3507, 1
      %v3509 = vadd.f32 %v3507, %v3508
      %v3510 = vadd.f32 %v3273, %v3277
      %v3511 = vadd.f32 %v3510, %v3281
      %v3512 = vadd.f32 %v3511, %v3285
      %v3513 = vadd.f32 %v3512, %v3289
      %v3514 = vadd.f32 %v3513, %v3293
      %v3515 = vadd.f32 %v3514, %v3297
      %v3516 = vadd.f32 %v3515, %v3301
      %v3517 = vadd.f32 %v3516, %v3305
      %v3518 = vadd.f32 %v3517, %v3309
      %v3519 = vadd.f32 %v3518, %v3313
      %v3520 = vadd.f32 %v3519, %v3317
      %v3521 = vadd.f32 %v3520, %v3321
      %v3522 = vadd.f32 %v3521, %v3325
      %v3523 = vadd.f32 %v3522, %v3329
      %v3524 = vadd.f32 %v3523, %v3333
      %v3525 = vadd.f32 %v3524, %v3337
      %v3526 = vadd.f32 %v3525, %v3341
      %v3527 = vadd.f32 %v3526, %v3345
      %v3528 = vadd.f32 %v3527, %v3349
      %v3529 = vadd.f32 %v3528, %v3353
      %v3530 = vadd.f32 %v3529, %v3357
      %v3531 = vadd.f32 %v3530, %v3361
      %v3532 = vadd.f32 %v3531, %v3365
      %v3533 = vadd.f32 %v3532, %v3369
      %v3534 = vadd.f32 %v3533, %v3373
      %v3535 = vadd.f32 %v3534, %v3377
      %v3536 = vadd.f32 %v3535, %v3381
      %v3537 = vadd.f32 %v3536, %v3385
      %v3538 = vadd.f32 %v3537, %v3389
      %v3539 = vadd.f32 %v3538, %v3393
      %v3540 = vadd.f32 %v3539, %v3397
      %v3541 = vrot.slane %v3540, 4
      %v3542 = vadd.f32 %v3540, %v3541
      %v3543 = vrot.slane %v3542, 2
      %v3544 = vadd.f32 %v3542, %v3543
      %v3545 = vrot.slane %v3544, 1
      %v3546 = vadd.f32 %v3544, %v3545
      %v3551 = vcombine.low %v3435, %v3472
      %v3552 = vcombine.low %v3509, %v3546
      %v3554 = vunpack.c.l.s4 1966171168
      %v3555 = vunpack.c.0.s8 %v3554
      %v3556 = vlaneseq
      %v3557 = vshrl.u32 %v3556, 7
      %v3558 = vsub.s32 %v3555, %v3557
      %v3559 = vrot.slane %v3551, %v3558
      %v3561 = vunpack.c.l.s4 1966171168
      %v3562 = vunpack.c.0.s8 %v3561
      %v3563 = vlaneseq
      %v3564 = vshrl.u32 %v3563, 7
      %v3565 = vsub.s32 %v3562, %v3564
      %v3566 = vrot.slane %v3552, %v3565
      %v3567 = vcombine.low %v3559, %v3566
      %v3569 = vunpack.c.l.s4 1966171168
      %v3570 = vunpack.c.0.s8 %v3569
      %v3571 = vlaneseq
      %v3572 = vshrl.u32 %v3571, 7
      %v3573 = vsub.s32 %v3570, %v3572
      %v3574 = vrot.slane %v3567, %v3573
      %v3576 = vadd.f32 %v3398, %v3574
      %3577 = vst.msk [vmem:[#allocation2 + $0xc] sm:$0xf] %vm1350, %v3576
      // Predicated region
      $region73: #{siamese_forward.1} parent=67 // pred_check
        %p3578 = pneg %p439
      $region74: #{siamese_forward.1} parent=67 // pred_check_branch
        %3580 = sbr.rel (%p3578) target = $region76
      $region75: #{siamese_forward.1} parent=67 // pred_region
        %v3581 = vld [vmem:[#allocation2] sm:$0xff]
        %v3582 = vld [vmem:[#allocation2 + $0x8] sm:$0xff]
        %v3585 = vlaneseq
        %v3586 = vshrl.u32 %v3585, 7
        %v3587 = vsub.s32 0, %v3586
        %v3588 = vrot.slane %v3581, %v3587
        %v3589 = vlaneseq
        %v3590 = vshrl.u32 %v3589, 7
        %v3591 = vsub.s32 1, %v3590
        %v3592 = vrot.slane %v3581, %v3591
        %v3593 = vlaneseq
        %v3594 = vshrl.u32 %v3593, 7
        %v3595 = vsub.s32 2, %v3594
        %v3596 = vrot.slane %v3581, %v3595
        %v3597 = vlaneseq
        %v3598 = vshrl.u32 %v3597, 7
        %v3599 = vsub.s32 3, %v3598
        %v3600 = vrot.slane %v3581, %v3599
        %v3601 = vlaneseq
        %v3602 = vshrl.u32 %v3601, 7
        %v3603 = vsub.s32 4, %v3602
        %v3604 = vrot.slane %v3581, %v3603
        %v3605 = vlaneseq
        %v3606 = vshrl.u32 %v3605, 7
        %v3607 = vsub.s32 5, %v3606
        %v3608 = vrot.slane %v3581, %v3607
        %v3609 = vlaneseq
        %v3610 = vshrl.u32 %v3609, 7
        %v3611 = vsub.s32 6, %v3610
        %v3612 = vrot.slane %v3581, %v3611
        %v3613 = vlaneseq
        %v3614 = vshrl.u32 %v3613, 7
        %v3615 = vsub.s32 7, %v3614
        %v3616 = vrot.slane %v3581, %v3615
        %v3617 = vlaneseq
        %v3618 = vshrl.u32 %v3617, 7
        %v3619 = vsub.s32 0, %v3618
        %v3620 = vrot.slane %v3582, %v3619
        %v3621 = vlaneseq
        %v3622 = vshrl.u32 %v3621, 7
        %v3623 = vsub.s32 1, %v3622
        %v3624 = vrot.slane %v3582, %v3623
        %v3625 = vlaneseq
        %v3626 = vshrl.u32 %v3625, 7
        %v3627 = vsub.s32 2, %v3626
        %v3628 = vrot.slane %v3582, %v3627
        %v3629 = vlaneseq
        %v3630 = vshrl.u32 %v3629, 7
        %v3631 = vsub.s32 3, %v3630
        %v3632 = vrot.slane %v3582, %v3631
        %v3633 = vlaneseq
        %v3634 = vshrl.u32 %v3633, 7
        %v3635 = vsub.s32 4, %v3634
        %v3636 = vrot.slane %v3582, %v3635
        %v3637 = vlaneseq
        %v3638 = vshrl.u32 %v3637, 7
        %v3639 = vsub.s32 5, %v3638
        %v3640 = vrot.slane %v3582, %v3639
        %v3641 = vlaneseq
        %v3642 = vshrl.u32 %v3641, 7
        %v3643 = vsub.s32 6, %v3642
        %v3644 = vrot.slane %v3582, %v3643
        %v3645 = vlaneseq
        %v3646 = vshrl.u32 %v3645, 7
        %v3647 = vsub.s32 7, %v3646
        %v3648 = vrot.slane %v3582, %v3647
        %v3665 = vpack.c.bf16 %v3588, %v3588
        %v3666 = vpack.c.bf16 %v3592, %v3592
        %v3667 = vpack.c.bf16 %v3596, %v3596
        %v3668 = vpack.c.bf16 %v3600, %v3600
        %v3669 = vpack.c.bf16 %v3604, %v3604
        %v3670 = vpack.c.bf16 %v3608, %v3608
        %v3671 = vpack.c.bf16 %v3612, %v3612
        %v3672 = vpack.c.bf16 %v3616, %v3616
        %v3673 = vpack.c.bf16 %v3620, %v3620
        %v3674 = vpack.c.bf16 %v3624, %v3624
        %v3675 = vpack.c.bf16 %v3628, %v3628
        %v3676 = vpack.c.bf16 %v3632, %v3632
        %v3677 = vpack.c.bf16 %v3636, %v3636
        %v3678 = vpack.c.bf16 %v3640, %v3640
        %v3679 = vpack.c.bf16 %v3644, %v3644
        %v3680 = vpack.c.bf16 %v3648, %v3648
        %v3681 = vld [vmem:[%s2] sm:$0xff]
        %v3682 = vld [vmem:[%s2 + $0x8] sm:$0xff]
        %v3683 = vld [vmem:[%s2 + $0x10] sm:$0xff]
        %v3684 = vld [vmem:[%s2 + $0x18] sm:$0xff]
        %v3685 = vld [vmem:[%s2 + $0x20] sm:$0xff]
        %v3686 = vld [vmem:[%s2 + $0x28] sm:$0xff]
        %v3687 = vld [vmem:[%s2 + $0x30] sm:$0xff]
        %v3688 = vld [vmem:[%s2 + $0x38] sm:$0xff]
        %v3689 = vld [vmem:[%s2 + $0x40] sm:$0xff]
        %v3690 = vld [vmem:[%s2 + $0x48] sm:$0xff]
        %v3691 = vld [vmem:[%s2 + $0x50] sm:$0xff]
        %v3692 = vld [vmem:[%s2 + $0x58] sm:$0xff]
        %v3693 = vld [vmem:[%s2 + $0x60] sm:$0xff]
        %v3694 = vld [vmem:[%s2 + $0x68] sm:$0xff]
        %v3695 = vld [vmem:[%s2 + $0x70] sm:$0xff]
        %v3696 = vld [vmem:[%s2 + $0x78] sm:$0xff]
        %v3697 = vld [vmem:[%s2 + $0x80] sm:$0xff]
        %v3698 = vld [vmem:[%s2 + $0x88] sm:$0xff]
        %v3699 = vld [vmem:[%s2 + $0x90] sm:$0xff]
        %v3700 = vld [vmem:[%s2 + $0x98] sm:$0xff]
        %v3701 = vld [vmem:[%s2 + $0xa0] sm:$0xff]
        %v3702 = vld [vmem:[%s2 + $0xa8] sm:$0xff]
        %v3703 = vld [vmem:[%s2 + $0xb0] sm:$0xff]
        %v3704 = vld [vmem:[%s2 + $0xb8] sm:$0xff]
        %v3705 = vld [vmem:[%s2 + $0xc0] sm:$0xff]
        %v3706 = vld [vmem:[%s2 + $0xc8] sm:$0xff]
        %v3707 = vld [vmem:[%s2 + $0xd0] sm:$0xff]
        %v3708 = vld [vmem:[%s2 + $0xd8] sm:$0xff]
        %v3709 = vld [vmem:[%s2 + $0xe0] sm:$0xff]
        %v3710 = vld [vmem:[%s2 + $0xe8] sm:$0xff]
        %v3711 = vld [vmem:[%s2 + $0xf0] sm:$0xff]
        %v3712 = vld [vmem:[%s2 + $0xf8] sm:$0xff]
        %v3713 = vld [vmem:[%s2 + $0x100] sm:$0xff]
        %v3714 = vld [vmem:[%s2 + $0x108] sm:$0xff]
        %v3715 = vld [vmem:[%s2 + $0x110] sm:$0xff]
        %v3716 = vld [vmem:[%s2 + $0x118] sm:$0xff]
        %v3717 = vld [vmem:[%s2 + $0x120] sm:$0xff]
        %v3718 = vld [vmem:[%s2 + $0x128] sm:$0xff]
        %v3719 = vld [vmem:[%s2 + $0x130] sm:$0xff]
        %v3720 = vld [vmem:[%s2 + $0x138] sm:$0xff]
        %v3721 = vld [vmem:[%s2 + $0x140] sm:$0xff]
        %v3722 = vld [vmem:[%s2 + $0x148] sm:$0xff]
        %v3723 = vld [vmem:[%s2 + $0x150] sm:$0xff]
        %v3724 = vld [vmem:[%s2 + $0x158] sm:$0xff]
        %v3725 = vld [vmem:[%s2 + $0x160] sm:$0xff]
        %v3726 = vld [vmem:[%s2 + $0x168] sm:$0xff]
        %v3727 = vld [vmem:[%s2 + $0x170] sm:$0xff]
        %v3728 = vld [vmem:[%s2 + $0x178] sm:$0xff]
        %v3729 = vld [vmem:[%s2 + $0x180] sm:$0xff]
        %v3730 = vld [vmem:[%s2 + $0x188] sm:$0xff]
        %v3731 = vld [vmem:[%s2 + $0x190] sm:$0xff]
        %v3732 = vld [vmem:[%s2 + $0x198] sm:$0xff]
        %v3733 = vld [vmem:[%s2 + $0x1a0] sm:$0xff]
        %v3734 = vld [vmem:[%s2 + $0x1a8] sm:$0xff]
        %v3735 = vld [vmem:[%s2 + $0x1b0] sm:$0xff]
        %v3736 = vld [vmem:[%s2 + $0x1b8] sm:$0xff]
        %v3737 = vld [vmem:[%s2 + $0x1c0] sm:$0xff]
        %v3738 = vld [vmem:[%s2 + $0x1c8] sm:$0xff]
        %v3739 = vld [vmem:[%s2 + $0x1d0] sm:$0xff]
        %v3740 = vld [vmem:[%s2 + $0x1d8] sm:$0xff]
        %v3741 = vld [vmem:[%s2 + $0x1e0] sm:$0xff]
        %v3742 = vld [vmem:[%s2 + $0x1e8] sm:$0xff]
        %v3743 = vld [vmem:[%s2 + $0x1f0] sm:$0xff]
        %v3744 = vld [vmem:[%s2 + $0x1f8] sm:$0xff]
        %v3745 = vld [vmem:[%s2 + $0x200] sm:$0xff]
        %v3746 = vld [vmem:[%s2 + $0x208] sm:$0xff]
        %v3747 = vld [vmem:[%s2 + $0x210] sm:$0xff]
        %v3748 = vld [vmem:[%s2 + $0x218] sm:$0xff]
        %v3749 = vld [vmem:[%s2 + $0x220] sm:$0xff]
        %v3750 = vld [vmem:[%s2 + $0x228] sm:$0xff]
        %v3751 = vld [vmem:[%s2 + $0x230] sm:$0xff]
        %v3752 = vld [vmem:[%s2 + $0x238] sm:$0xff]
        %v3753 = vld [vmem:[%s2 + $0x240] sm:$0xff]
        %v3754 = vld [vmem:[%s2 + $0x248] sm:$0xff]
        %v3755 = vld [vmem:[%s2 + $0x250] sm:$0xff]
        %v3756 = vld [vmem:[%s2 + $0x258] sm:$0xff]
        %v3757 = vld [vmem:[%s2 + $0x260] sm:$0xff]
        %v3758 = vld [vmem:[%s2 + $0x268] sm:$0xff]
        %v3759 = vld [vmem:[%s2 + $0x270] sm:$0xff]
        %v3760 = vld [vmem:[%s2 + $0x278] sm:$0xff]
        %v3761 = vld [vmem:[%s2 + $0x280] sm:$0xff]
        %v3762 = vld [vmem:[%s2 + $0x288] sm:$0xff]
        %v3763 = vld [vmem:[%s2 + $0x290] sm:$0xff]
        %v3764 = vld [vmem:[%s2 + $0x298] sm:$0xff]
        %v3765 = vld [vmem:[%s2 + $0x2a0] sm:$0xff]
        %v3766 = vld [vmem:[%s2 + $0x2a8] sm:$0xff]
        %v3767 = vld [vmem:[%s2 + $0x2b0] sm:$0xff]
        %v3768 = vld [vmem:[%s2 + $0x2b8] sm:$0xff]
        %v3769 = vld [vmem:[%s2 + $0x2c0] sm:$0xff]
        %v3770 = vld [vmem:[%s2 + $0x2c8] sm:$0xff]
        %v3771 = vld [vmem:[%s2 + $0x2d0] sm:$0xff]
        %v3772 = vld [vmem:[%s2 + $0x2d8] sm:$0xff]
        %v3773 = vld [vmem:[%s2 + $0x2e0] sm:$0xff]
        %v3774 = vld [vmem:[%s2 + $0x2e8] sm:$0xff]
        %v3775 = vld [vmem:[%s2 + $0x2f0] sm:$0xff]
        %v3776 = vld [vmem:[%s2 + $0x2f8] sm:$0xff]
        %v3777 = vld [vmem:[%s2 + $0x300] sm:$0xff]
        %v3778 = vld [vmem:[%s2 + $0x308] sm:$0xff]
        %v3779 = vld [vmem:[%s2 + $0x310] sm:$0xff]
        %v3780 = vld [vmem:[%s2 + $0x318] sm:$0xff]
        %v3781 = vld [vmem:[%s2 + $0x320] sm:$0xff]
        %v3782 = vld [vmem:[%s2 + $0x328] sm:$0xff]
        %v3783 = vld [vmem:[%s2 + $0x330] sm:$0xff]
        %v3784 = vld [vmem:[%s2 + $0x338] sm:$0xff]
        %v3785 = vld [vmem:[%s2 + $0x340] sm:$0xff]
        %v3786 = vld [vmem:[%s2 + $0x348] sm:$0xff]
        %v3787 = vld [vmem:[%s2 + $0x350] sm:$0xff]
        %v3788 = vld [vmem:[%s2 + $0x358] sm:$0xff]
        %v3789 = vld [vmem:[%s2 + $0x360] sm:$0xff]
        %v3790 = vld [vmem:[%s2 + $0x368] sm:$0xff]
        %v3791 = vld [vmem:[%s2 + $0x370] sm:$0xff]
        %v3792 = vld [vmem:[%s2 + $0x378] sm:$0xff]
        %v3793 = vld [vmem:[%s2 + $0x380] sm:$0xff]
        %v3794 = vld [vmem:[%s2 + $0x388] sm:$0xff]
        %v3795 = vld [vmem:[%s2 + $0x390] sm:$0xff]
        %v3796 = vld [vmem:[%s2 + $0x398] sm:$0xff]
        %v3797 = vld [vmem:[%s2 + $0x3a0] sm:$0xff]
        %v3798 = vld [vmem:[%s2 + $0x3a8] sm:$0xff]
        %v3799 = vld [vmem:[%s2 + $0x3b0] sm:$0xff]
        %v3800 = vld [vmem:[%s2 + $0x3b8] sm:$0xff]
        %v3801 = vld [vmem:[%s2 + $0x3c0] sm:$0xff]
        %v3802 = vld [vmem:[%s2 + $0x3c8] sm:$0xff]
        %v3803 = vld [vmem:[%s2 + $0x3d0] sm:$0xff]
        %v3804 = vld [vmem:[%s2 + $0x3d8] sm:$0xff]
        %v3805 = vld [vmem:[%s2 + $0x3e0] sm:$0xff]
        %v3806 = vld [vmem:[%s2 + $0x3e8] sm:$0xff]
        %v3807 = vld [vmem:[%s2 + $0x3f0] sm:$0xff]
        %v3808 = vld [vmem:[%s2 + $0x3f8] sm:$0xff]
        %v3809 = vld [vmem:[%s2 + $0x400] sm:$0xff]
        %v3810 = vld [vmem:[%s2 + $0x408] sm:$0xff]
        %v3811 = vld [vmem:[%s2 + $0x410] sm:$0xff]
        %v3812 = vld [vmem:[%s2 + $0x418] sm:$0xff]
        %v3813 = vld [vmem:[%s2 + $0x420] sm:$0xff]
        %v3814 = vld [vmem:[%s2 + $0x428] sm:$0xff]
        %v3815 = vld [vmem:[%s2 + $0x430] sm:$0xff]
        %v3816 = vld [vmem:[%s2 + $0x438] sm:$0xff]
        %v3817 = vld [vmem:[%s2 + $0x440] sm:$0xff]
        %v3818 = vld [vmem:[%s2 + $0x448] sm:$0xff]
        %v3819 = vld [vmem:[%s2 + $0x450] sm:$0xff]
        %v3820 = vld [vmem:[%s2 + $0x458] sm:$0xff]
        %v3821 = vld [vmem:[%s2 + $0x460] sm:$0xff]
        %v3822 = vld [vmem:[%s2 + $0x468] sm:$0xff]
        %v3823 = vld [vmem:[%s2 + $0x470] sm:$0xff]
        %v3824 = vld [vmem:[%s2 + $0x478] sm:$0xff]
        %v3825 = vld [vmem:[%s2 + $0x480] sm:$0xff]
        %v3826 = vld [vmem:[%s2 + $0x488] sm:$0xff]
        %v3827 = vld [vmem:[%s2 + $0x490] sm:$0xff]
        %v3828 = vld [vmem:[%s2 + $0x498] sm:$0xff]
        %v3829 = vld [vmem:[%s2 + $0x4a0] sm:$0xff]
        %v3830 = vld [vmem:[%s2 + $0x4a8] sm:$0xff]
        %v3831 = vld [vmem:[%s2 + $0x4b0] sm:$0xff]
        %v3832 = vld [vmem:[%s2 + $0x4b8] sm:$0xff]
        %v3833 = vld [vmem:[%s2 + $0x4c0] sm:$0xff]
        %v3834 = vld [vmem:[%s2 + $0x4c8] sm:$0xff]
        %v3835 = vld [vmem:[%s2 + $0x4d0] sm:$0xff]
        %v3836 = vld [vmem:[%s2 + $0x4d8] sm:$0xff]
        %v3837 = vld [vmem:[%s2 + $0x4e0] sm:$0xff]
        %v3838 = vld [vmem:[%s2 + $0x4e8] sm:$0xff]
        %v3839 = vld [vmem:[%s2 + $0x4f0] sm:$0xff]
        %v3840 = vld [vmem:[%s2 + $0x4f8] sm:$0xff]
        %v3841 = vld [vmem:[%s2 + $0x500] sm:$0xff]
        %v3842 = vld [vmem:[%s2 + $0x508] sm:$0xff]
        %v3843 = vld [vmem:[%s2 + $0x510] sm:$0xff]
        %v3844 = vld [vmem:[%s2 + $0x518] sm:$0xff]
        %v3845 = vld [vmem:[%s2 + $0x520] sm:$0xff]
        %v3846 = vld [vmem:[%s2 + $0x528] sm:$0xff]
        %v3847 = vld [vmem:[%s2 + $0x530] sm:$0xff]
        %v3848 = vld [vmem:[%s2 + $0x538] sm:$0xff]
        %v3849 = vld [vmem:[%s2 + $0x540] sm:$0xff]
        %v3850 = vld [vmem:[%s2 + $0x548] sm:$0xff]
        %v3851 = vld [vmem:[%s2 + $0x550] sm:$0xff]
        %v3852 = vld [vmem:[%s2 + $0x558] sm:$0xff]
        %v3853 = vld [vmem:[%s2 + $0x560] sm:$0xff]
        %v3854 = vld [vmem:[%s2 + $0x568] sm:$0xff]
        %v3855 = vld [vmem:[%s2 + $0x570] sm:$0xff]
        %v3856 = vld [vmem:[%s2 + $0x578] sm:$0xff]
        %v3857 = vld [vmem:[%s2 + $0x580] sm:$0xff]
        %v3858 = vld [vmem:[%s2 + $0x588] sm:$0xff]
        %v3859 = vld [vmem:[%s2 + $0x590] sm:$0xff]
        %v3860 = vld [vmem:[%s2 + $0x598] sm:$0xff]
        %v3861 = vld [vmem:[%s2 + $0x5a0] sm:$0xff]
        %v3862 = vld [vmem:[%s2 + $0x5a8] sm:$0xff]
        %v3863 = vld [vmem:[%s2 + $0x5b0] sm:$0xff]
        %v3864 = vld [vmem:[%s2 + $0x5b8] sm:$0xff]
        %v3865 = vld [vmem:[%s2 + $0x5c0] sm:$0xff]
        %v3866 = vld [vmem:[%s2 + $0x5c8] sm:$0xff]
        %v3867 = vld [vmem:[%s2 + $0x5d0] sm:$0xff]
        %v3868 = vld [vmem:[%s2 + $0x5d8] sm:$0xff]
        %v3869 = vld [vmem:[%s2 + $0x5e0] sm:$0xff]
        %v3870 = vld [vmem:[%s2 + $0x5e8] sm:$0xff]
        %v3871 = vld [vmem:[%s2 + $0x5f0] sm:$0xff]
        %v3872 = vld [vmem:[%s2 + $0x5f8] sm:$0xff]
        %v3873 = vld [vmem:[%s2 + $0x600] sm:$0xff]
        %v3874 = vld [vmem:[%s2 + $0x608] sm:$0xff]
        %v3875 = vld [vmem:[%s2 + $0x610] sm:$0xff]
        %v3876 = vld [vmem:[%s2 + $0x618] sm:$0xff]
        %v3877 = vld [vmem:[%s2 + $0x620] sm:$0xff]
        %v3878 = vld [vmem:[%s2 + $0x628] sm:$0xff]
        %v3879 = vld [vmem:[%s2 + $0x630] sm:$0xff]
        %v3880 = vld [vmem:[%s2 + $0x638] sm:$0xff]
        %v3881 = vld [vmem:[%s2 + $0x640] sm:$0xff]
        %v3882 = vld [vmem:[%s2 + $0x648] sm:$0xff]
        %v3883 = vld [vmem:[%s2 + $0x650] sm:$0xff]
        %v3884 = vld [vmem:[%s2 + $0x658] sm:$0xff]
        %v3885 = vld [vmem:[%s2 + $0x660] sm:$0xff]
        %v3886 = vld [vmem:[%s2 + $0x668] sm:$0xff]
        %v3887 = vld [vmem:[%s2 + $0x670] sm:$0xff]
        %v3888 = vld [vmem:[%s2 + $0x678] sm:$0xff]
        %v3889 = vld [vmem:[%s2 + $0x680] sm:$0xff]
        %v3890 = vld [vmem:[%s2 + $0x688] sm:$0xff]
        %v3891 = vld [vmem:[%s2 + $0x690] sm:$0xff]
        %v3892 = vld [vmem:[%s2 + $0x698] sm:$0xff]
        %v3893 = vld [vmem:[%s2 + $0x6a0] sm:$0xff]
        %v3894 = vld [vmem:[%s2 + $0x6a8] sm:$0xff]
        %v3895 = vld [vmem:[%s2 + $0x6b0] sm:$0xff]
        %v3896 = vld [vmem:[%s2 + $0x6b8] sm:$0xff]
        %v3897 = vld [vmem:[%s2 + $0x6c0] sm:$0xff]
        %v3898 = vld [vmem:[%s2 + $0x6c8] sm:$0xff]
        %v3899 = vld [vmem:[%s2 + $0x6d0] sm:$0xff]
        %v3900 = vld [vmem:[%s2 + $0x6d8] sm:$0xff]
        %v3901 = vld [vmem:[%s2 + $0x6e0] sm:$0xff]
        %v3902 = vld [vmem:[%s2 + $0x6e8] sm:$0xff]
        %v3903 = vld [vmem:[%s2 + $0x6f0] sm:$0xff]
        %v3904 = vld [vmem:[%s2 + $0x6f8] sm:$0xff]
        %v3905 = vld [vmem:[%s2 + $0x700] sm:$0xff]
        %v3906 = vld [vmem:[%s2 + $0x708] sm:$0xff]
        %v3907 = vld [vmem:[%s2 + $0x710] sm:$0xff]
        %v3908 = vld [vmem:[%s2 + $0x718] sm:$0xff]
        %v3909 = vld [vmem:[%s2 + $0x720] sm:$0xff]
        %v3910 = vld [vmem:[%s2 + $0x728] sm:$0xff]
        %v3911 = vld [vmem:[%s2 + $0x730] sm:$0xff]
        %v3912 = vld [vmem:[%s2 + $0x738] sm:$0xff]
        %v3913 = vld [vmem:[%s2 + $0x740] sm:$0xff]
        %v3914 = vld [vmem:[%s2 + $0x748] sm:$0xff]
        %v3915 = vld [vmem:[%s2 + $0x750] sm:$0xff]
        %v3916 = vld [vmem:[%s2 + $0x758] sm:$0xff]
        %v3917 = vld [vmem:[%s2 + $0x760] sm:$0xff]
        %v3918 = vld [vmem:[%s2 + $0x768] sm:$0xff]
        %v3919 = vld [vmem:[%s2 + $0x770] sm:$0xff]
        %v3920 = vld [vmem:[%s2 + $0x778] sm:$0xff]
        %v3921 = vld [vmem:[%s2 + $0x780] sm:$0xff]
        %v3922 = vld [vmem:[%s2 + $0x788] sm:$0xff]
        %v3923 = vld [vmem:[%s2 + $0x790] sm:$0xff]
        %v3924 = vld [vmem:[%s2 + $0x798] sm:$0xff]
        %v3925 = vld [vmem:[%s2 + $0x7a0] sm:$0xff]
        %v3926 = vld [vmem:[%s2 + $0x7a8] sm:$0xff]
        %v3927 = vld [vmem:[%s2 + $0x7b0] sm:$0xff]
        %v3928 = vld [vmem:[%s2 + $0x7b8] sm:$0xff]
        %v3929 = vld [vmem:[%s2 + $0x7c0] sm:$0xff]
        %v3930 = vld [vmem:[%s2 + $0x7c8] sm:$0xff]
        %v3931 = vld [vmem:[%s2 + $0x7d0] sm:$0xff]
        %v3932 = vld [vmem:[%s2 + $0x7d8] sm:$0xff]
        %v3933 = vld [vmem:[%s2 + $0x7e0] sm:$0xff]
        %v3934 = vld [vmem:[%s2 + $0x7e8] sm:$0xff]
        %v3935 = vld [vmem:[%s2 + $0x7f0] sm:$0xff]
        %v3936 = vld [vmem:[%s2 + $0x7f8] sm:$0xff]
        %v3937 = vld [vmem:[%s2 + $0x800] sm:$0xff]
        %v3938 = vld [vmem:[%s2 + $0x808] sm:$0xff]
        %v3939 = vld [vmem:[%s2 + $0x810] sm:$0xff]
        %v3940 = vld [vmem:[%s2 + $0x818] sm:$0xff]
        %v3941 = vld [vmem:[%s2 + $0x820] sm:$0xff]
        %v3942 = vld [vmem:[%s2 + $0x828] sm:$0xff]
        %v3943 = vld [vmem:[%s2 + $0x830] sm:$0xff]
        %v3944 = vld [vmem:[%s2 + $0x838] sm:$0xff]
        %v3945 = vld [vmem:[%s2 + $0x840] sm:$0xff]
        %v3946 = vld [vmem:[%s2 + $0x848] sm:$0xff]
        %v3947 = vld [vmem:[%s2 + $0x850] sm:$0xff]
        %v3948 = vld [vmem:[%s2 + $0x858] sm:$0xff]
        %v3949 = vld [vmem:[%s2 + $0x860] sm:$0xff]
        %v3950 = vld [vmem:[%s2 + $0x868] sm:$0xff]
        %v3951 = vld [vmem:[%s2 + $0x870] sm:$0xff]
        %v3952 = vld [vmem:[%s2 + $0x878] sm:$0xff]
        %v3953 = vld [vmem:[%s2 + $0x880] sm:$0xff]
        %v3954 = vld [vmem:[%s2 + $0x888] sm:$0xff]
        %v3955 = vld [vmem:[%s2 + $0x890] sm:$0xff]
        %v3956 = vld [vmem:[%s2 + $0x898] sm:$0xff]
        %v3957 = vld [vmem:[%s2 + $0x8a0] sm:$0xff]
        %v3958 = vld [vmem:[%s2 + $0x8a8] sm:$0xff]
        %v3959 = vld [vmem:[%s2 + $0x8b0] sm:$0xff]
        %v3960 = vld [vmem:[%s2 + $0x8b8] sm:$0xff]
        %v3961 = vld [vmem:[%s2 + $0x8c0] sm:$0xff]
        %v3962 = vld [vmem:[%s2 + $0x8c8] sm:$0xff]
        %v3963 = vld [vmem:[%s2 + $0x8d0] sm:$0xff]
        %v3964 = vld [vmem:[%s2 + $0x8d8] sm:$0xff]
        %v3965 = vld [vmem:[%s2 + $0x8e0] sm:$0xff]
        %v3966 = vld [vmem:[%s2 + $0x8e8] sm:$0xff]
        %v3967 = vld [vmem:[%s2 + $0x8f0] sm:$0xff]
        %v3968 = vld [vmem:[%s2 + $0x8f8] sm:$0xff]
        %v3969 = vld [vmem:[%s2 + $0x900] sm:$0xff]
        %v3970 = vld [vmem:[%s2 + $0x908] sm:$0xff]
        %v3971 = vld [vmem:[%s2 + $0x910] sm:$0xff]
        %v3972 = vld [vmem:[%s2 + $0x918] sm:$0xff]
        %v3973 = vld [vmem:[%s2 + $0x920] sm:$0xff]
        %v3974 = vld [vmem:[%s2 + $0x928] sm:$0xff]
        %v3975 = vld [vmem:[%s2 + $0x930] sm:$0xff]
        %v3976 = vld [vmem:[%s2 + $0x938] sm:$0xff]
        %v3977 = vld [vmem:[%s2 + $0x940] sm:$0xff]
        %v3978 = vld [vmem:[%s2 + $0x948] sm:$0xff]
        %v3979 = vld [vmem:[%s2 + $0x950] sm:$0xff]
        %v3980 = vld [vmem:[%s2 + $0x958] sm:$0xff]
        %v3981 = vld [vmem:[%s2 + $0x960] sm:$0xff]
        %v3982 = vld [vmem:[%s2 + $0x968] sm:$0xff]
        %v3983 = vld [vmem:[%s2 + $0x970] sm:$0xff]
        %v3984 = vld [vmem:[%s2 + $0x978] sm:$0xff]
        %v3985 = vld [vmem:[%s2 + $0x980] sm:$0xff]
        %v3986 = vld [vmem:[%s2 + $0x988] sm:$0xff]
        %v3987 = vld [vmem:[%s2 + $0x990] sm:$0xff]
        %v3988 = vld [vmem:[%s2 + $0x998] sm:$0xff]
        %v3989 = vld [vmem:[%s2 + $0x9a0] sm:$0xff]
        %v3990 = vld [vmem:[%s2 + $0x9a8] sm:$0xff]
        %v3991 = vld [vmem:[%s2 + $0x9b0] sm:$0xff]
        %v3992 = vld [vmem:[%s2 + $0x9b8] sm:$0xff]
        %v3993 = vld [vmem:[%s2 + $0x9c0] sm:$0xff]
        %v3994 = vld [vmem:[%s2 + $0x9c8] sm:$0xff]
        %v3995 = vld [vmem:[%s2 + $0x9d0] sm:$0xff]
        %v3996 = vld [vmem:[%s2 + $0x9d8] sm:$0xff]
        %v3997 = vld [vmem:[%s2 + $0x9e0] sm:$0xff]
        %v3998 = vld [vmem:[%s2 + $0x9e8] sm:$0xff]
        %v3999 = vld [vmem:[%s2 + $0x9f0] sm:$0xff]
        %v4000 = vld [vmem:[%s2 + $0x9f8] sm:$0xff]
        %v4001 = vld [vmem:[%s2 + $0xa00] sm:$0xff]
        %v4002 = vld [vmem:[%s2 + $0xa08] sm:$0xff]
        %v4003 = vld [vmem:[%s2 + $0xa10] sm:$0xff]
        %v4004 = vld [vmem:[%s2 + $0xa18] sm:$0xff]
        %v4005 = vld [vmem:[%s2 + $0xa20] sm:$0xff]
        %v4006 = vld [vmem:[%s2 + $0xa28] sm:$0xff]
        %v4007 = vld [vmem:[%s2 + $0xa30] sm:$0xff]
        %v4008 = vld [vmem:[%s2 + $0xa38] sm:$0xff]
        %v4009 = vld [vmem:[%s2 + $0xa40] sm:$0xff]
        %v4010 = vld [vmem:[%s2 + $0xa48] sm:$0xff]
        %v4011 = vld [vmem:[%s2 + $0xa50] sm:$0xff]
        %v4012 = vld [vmem:[%s2 + $0xa58] sm:$0xff]
        %v4013 = vld [vmem:[%s2 + $0xa60] sm:$0xff]
        %v4014 = vld [vmem:[%s2 + $0xa68] sm:$0xff]
        %v4015 = vld [vmem:[%s2 + $0xa70] sm:$0xff]
        %v4016 = vld [vmem:[%s2 + $0xa78] sm:$0xff]
        %v4017 = vld [vmem:[%s2 + $0xa80] sm:$0xff]
        %v4018 = vld [vmem:[%s2 + $0xa88] sm:$0xff]
        %v4019 = vld [vmem:[%s2 + $0xa90] sm:$0xff]
        %v4020 = vld [vmem:[%s2 + $0xa98] sm:$0xff]
        %v4021 = vld [vmem:[%s2 + $0xaa0] sm:$0xff]
        %v4022 = vld [vmem:[%s2 + $0xaa8] sm:$0xff]
        %v4023 = vld [vmem:[%s2 + $0xab0] sm:$0xff]
        %v4024 = vld [vmem:[%s2 + $0xab8] sm:$0xff]
        %v4025 = vld [vmem:[%s2 + $0xac0] sm:$0xff]
        %v4026 = vld [vmem:[%s2 + $0xac8] sm:$0xff]
        %v4027 = vld [vmem:[%s2 + $0xad0] sm:$0xff]
        %v4028 = vld [vmem:[%s2 + $0xad8] sm:$0xff]
        %v4029 = vld [vmem:[%s2 + $0xae0] sm:$0xff]
        %v4030 = vld [vmem:[%s2 + $0xae8] sm:$0xff]
        %v4031 = vld [vmem:[%s2 + $0xaf0] sm:$0xff]
        %v4032 = vld [vmem:[%s2 + $0xaf8] sm:$0xff]
        %v4033 = vld [vmem:[%s2 + $0xb00] sm:$0xff]
        %v4034 = vld [vmem:[%s2 + $0xb08] sm:$0xff]
        %v4035 = vld [vmem:[%s2 + $0xb10] sm:$0xff]
        %v4036 = vld [vmem:[%s2 + $0xb18] sm:$0xff]
        %v4037 = vld [vmem:[%s2 + $0xb20] sm:$0xff]
        %v4038 = vld [vmem:[%s2 + $0xb28] sm:$0xff]
        %v4039 = vld [vmem:[%s2 + $0xb30] sm:$0xff]
        %v4040 = vld [vmem:[%s2 + $0xb38] sm:$0xff]
        %v4041 = vld [vmem:[%s2 + $0xb40] sm:$0xff]
        %v4042 = vld [vmem:[%s2 + $0xb48] sm:$0xff]
        %v4043 = vld [vmem:[%s2 + $0xb50] sm:$0xff]
        %v4044 = vld [vmem:[%s2 + $0xb58] sm:$0xff]
        %v4045 = vld [vmem:[%s2 + $0xb60] sm:$0xff]
        %v4046 = vld [vmem:[%s2 + $0xb68] sm:$0xff]
        %v4047 = vld [vmem:[%s2 + $0xb70] sm:$0xff]
        %v4048 = vld [vmem:[%s2 + $0xb78] sm:$0xff]
        %v4049 = vld [vmem:[%s2 + $0xb80] sm:$0xff]
        %v4050 = vld [vmem:[%s2 + $0xb88] sm:$0xff]
        %v4051 = vld [vmem:[%s2 + $0xb90] sm:$0xff]
        %v4052 = vld [vmem:[%s2 + $0xb98] sm:$0xff]
        %v4053 = vld [vmem:[%s2 + $0xba0] sm:$0xff]
        %v4054 = vld [vmem:[%s2 + $0xba8] sm:$0xff]
        %v4055 = vld [vmem:[%s2 + $0xbb0] sm:$0xff]
        %v4056 = vld [vmem:[%s2 + $0xbb8] sm:$0xff]
        %v4057 = vld [vmem:[%s2 + $0xbc0] sm:$0xff]
        %v4058 = vld [vmem:[%s2 + $0xbc8] sm:$0xff]
        %v4059 = vld [vmem:[%s2 + $0xbd0] sm:$0xff]
        %v4060 = vld [vmem:[%s2 + $0xbd8] sm:$0xff]
        %v4061 = vld [vmem:[%s2 + $0xbe0] sm:$0xff]
        %v4062 = vld [vmem:[%s2 + $0xbe8] sm:$0xff]
        %v4063 = vld [vmem:[%s2 + $0xbf0] sm:$0xff]
        %v4064 = vld [vmem:[%s2 + $0xbf8] sm:$0xff]
        %v4065 = vld [vmem:[%s2 + $0xc00] sm:$0xff]
        %v4066 = vld [vmem:[%s2 + $0xc08] sm:$0xff]
        %v4067 = vld [vmem:[%s2 + $0xc10] sm:$0xff]
        %v4068 = vld [vmem:[%s2 + $0xc18] sm:$0xff]
        %v4069 = vld [vmem:[%s2 + $0xc20] sm:$0xff]
        %v4070 = vld [vmem:[%s2 + $0xc28] sm:$0xff]
        %v4071 = vld [vmem:[%s2 + $0xc30] sm:$0xff]
        %v4072 = vld [vmem:[%s2 + $0xc38] sm:$0xff]
        %v4073 = vld [vmem:[%s2 + $0xc40] sm:$0xff]
        %v4074 = vld [vmem:[%s2 + $0xc48] sm:$0xff]
        %v4075 = vld [vmem:[%s2 + $0xc50] sm:$0xff]
        %v4076 = vld [vmem:[%s2 + $0xc58] sm:$0xff]
        %v4077 = vld [vmem:[%s2 + $0xc60] sm:$0xff]
        %v4078 = vld [vmem:[%s2 + $0xc68] sm:$0xff]
        %v4079 = vld [vmem:[%s2 + $0xc70] sm:$0xff]
        %v4080 = vld [vmem:[%s2 + $0xc78] sm:$0xff]
        %v4081 = vld [vmem:[%s2 + $0xc80] sm:$0xff]
        %v4082 = vld [vmem:[%s2 + $0xc88] sm:$0xff]
        %v4083 = vld [vmem:[%s2 + $0xc90] sm:$0xff]
        %v4084 = vld [vmem:[%s2 + $0xc98] sm:$0xff]
        %v4085 = vld [vmem:[%s2 + $0xca0] sm:$0xff]
        %v4086 = vld [vmem:[%s2 + $0xca8] sm:$0xff]
        %v4087 = vld [vmem:[%s2 + $0xcb0] sm:$0xff]
        %v4088 = vld [vmem:[%s2 + $0xcb8] sm:$0xff]
        %v4089 = vld [vmem:[%s2 + $0xcc0] sm:$0xff]
        %v4090 = vld [vmem:[%s2 + $0xcc8] sm:$0xff]
        %v4091 = vld [vmem:[%s2 + $0xcd0] sm:$0xff]
        %v4092 = vld [vmem:[%s2 + $0xcd8] sm:$0xff]
        %v4093 = vld [vmem:[%s2 + $0xce0] sm:$0xff]
        %v4094 = vld [vmem:[%s2 + $0xce8] sm:$0xff]
        %v4095 = vld [vmem:[%s2 + $0xcf0] sm:$0xff]
        %v4096 = vld [vmem:[%s2 + $0xcf8] sm:$0xff]
        %v4097 = vld [vmem:[%s2 + $0xd00] sm:$0xff]
        %v4098 = vld [vmem:[%s2 + $0xd08] sm:$0xff]
        %v4099 = vld [vmem:[%s2 + $0xd10] sm:$0xff]
        %v4100 = vld [vmem:[%s2 + $0xd18] sm:$0xff]
        %v4101 = vld [vmem:[%s2 + $0xd20] sm:$0xff]
        %v4102 = vld [vmem:[%s2 + $0xd28] sm:$0xff]
        %v4103 = vld [vmem:[%s2 + $0xd30] sm:$0xff]
        %v4104 = vld [vmem:[%s2 + $0xd38] sm:$0xff]
        %v4105 = vld [vmem:[%s2 + $0xd40] sm:$0xff]
        %v4106 = vld [vmem:[%s2 + $0xd48] sm:$0xff]
        %v4107 = vld [vmem:[%s2 + $0xd50] sm:$0xff]
        %v4108 = vld [vmem:[%s2 + $0xd58] sm:$0xff]
        %v4109 = vld [vmem:[%s2 + $0xd60] sm:$0xff]
        %v4110 = vld [vmem:[%s2 + $0xd68] sm:$0xff]
        %v4111 = vld [vmem:[%s2 + $0xd70] sm:$0xff]
        %v4112 = vld [vmem:[%s2 + $0xd78] sm:$0xff]
        %v4113 = vld [vmem:[%s2 + $0xd80] sm:$0xff]
        %v4114 = vld [vmem:[%s2 + $0xd88] sm:$0xff]
        %v4115 = vld [vmem:[%s2 + $0xd90] sm:$0xff]
        %v4116 = vld [vmem:[%s2 + $0xd98] sm:$0xff]
        %v4117 = vld [vmem:[%s2 + $0xda0] sm:$0xff]
        %v4118 = vld [vmem:[%s2 + $0xda8] sm:$0xff]
        %v4119 = vld [vmem:[%s2 + $0xdb0] sm:$0xff]
        %v4120 = vld [vmem:[%s2 + $0xdb8] sm:$0xff]
        %v4121 = vld [vmem:[%s2 + $0xdc0] sm:$0xff]
        %v4122 = vld [vmem:[%s2 + $0xdc8] sm:$0xff]
        %v4123 = vld [vmem:[%s2 + $0xdd0] sm:$0xff]
        %v4124 = vld [vmem:[%s2 + $0xdd8] sm:$0xff]
        %v4125 = vld [vmem:[%s2 + $0xde0] sm:$0xff]
        %v4126 = vld [vmem:[%s2 + $0xde8] sm:$0xff]
        %v4127 = vld [vmem:[%s2 + $0xdf0] sm:$0xff]
        %v4128 = vld [vmem:[%s2 + $0xdf8] sm:$0xff]
        %v4129 = vld [vmem:[%s2 + $0xe00] sm:$0xff]
        %v4130 = vld [vmem:[%s2 + $0xe08] sm:$0xff]
        %v4131 = vld [vmem:[%s2 + $0xe10] sm:$0xff]
        %v4132 = vld [vmem:[%s2 + $0xe18] sm:$0xff]
        %v4133 = vld [vmem:[%s2 + $0xe20] sm:$0xff]
        %v4134 = vld [vmem:[%s2 + $0xe28] sm:$0xff]
        %v4135 = vld [vmem:[%s2 + $0xe30] sm:$0xff]
        %v4136 = vld [vmem:[%s2 + $0xe38] sm:$0xff]
        %v4137 = vld [vmem:[%s2 + $0xe40] sm:$0xff]
        %v4138 = vld [vmem:[%s2 + $0xe48] sm:$0xff]
        %v4139 = vld [vmem:[%s2 + $0xe50] sm:$0xff]
        %v4140 = vld [vmem:[%s2 + $0xe58] sm:$0xff]
        %v4141 = vld [vmem:[%s2 + $0xe60] sm:$0xff]
        %v4142 = vld [vmem:[%s2 + $0xe68] sm:$0xff]
        %v4143 = vld [vmem:[%s2 + $0xe70] sm:$0xff]
        %v4144 = vld [vmem:[%s2 + $0xe78] sm:$0xff]
        %v4145 = vld [vmem:[%s2 + $0xe80] sm:$0xff]
        %v4146 = vld [vmem:[%s2 + $0xe88] sm:$0xff]
        %v4147 = vld [vmem:[%s2 + $0xe90] sm:$0xff]
        %v4148 = vld [vmem:[%s2 + $0xe98] sm:$0xff]
        %v4149 = vld [vmem:[%s2 + $0xea0] sm:$0xff]
        %v4150 = vld [vmem:[%s2 + $0xea8] sm:$0xff]
        %v4151 = vld [vmem:[%s2 + $0xeb0] sm:$0xff]
        %v4152 = vld [vmem:[%s2 + $0xeb8] sm:$0xff]
        %v4153 = vld [vmem:[%s2 + $0xec0] sm:$0xff]
        %v4154 = vld [vmem:[%s2 + $0xec8] sm:$0xff]
        %v4155 = vld [vmem:[%s2 + $0xed0] sm:$0xff]
        %v4156 = vld [vmem:[%s2 + $0xed8] sm:$0xff]
        %v4157 = vld [vmem:[%s2 + $0xee0] sm:$0xff]
        %v4158 = vld [vmem:[%s2 + $0xee8] sm:$0xff]
        %v4159 = vld [vmem:[%s2 + $0xef0] sm:$0xff]
        %v4160 = vld [vmem:[%s2 + $0xef8] sm:$0xff]
        %v4161 = vld [vmem:[%s2 + $0xf00] sm:$0xff]
        %v4162 = vld [vmem:[%s2 + $0xf08] sm:$0xff]
        %v4163 = vld [vmem:[%s2 + $0xf10] sm:$0xff]
        %v4164 = vld [vmem:[%s2 + $0xf18] sm:$0xff]
        %v4165 = vld [vmem:[%s2 + $0xf20] sm:$0xff]
        %v4166 = vld [vmem:[%s2 + $0xf28] sm:$0xff]
        %v4167 = vld [vmem:[%s2 + $0xf30] sm:$0xff]
        %v4168 = vld [vmem:[%s2 + $0xf38] sm:$0xff]
        %v4169 = vld [vmem:[%s2 + $0xf40] sm:$0xff]
        %v4170 = vld [vmem:[%s2 + $0xf48] sm:$0xff]
        %v4171 = vld [vmem:[%s2 + $0xf50] sm:$0xff]
        %v4172 = vld [vmem:[%s2 + $0xf58] sm:$0xff]
        %v4173 = vld [vmem:[%s2 + $0xf60] sm:$0xff]
        %v4174 = vld [vmem:[%s2 + $0xf68] sm:$0xff]
        %v4175 = vld [vmem:[%s2 + $0xf70] sm:$0xff]
        %v4176 = vld [vmem:[%s2 + $0xf78] sm:$0xff]
        %v4177 = vld [vmem:[%s2 + $0xf80] sm:$0xff]
        %v4178 = vld [vmem:[%s2 + $0xf88] sm:$0xff]
        %v4179 = vld [vmem:[%s2 + $0xf90] sm:$0xff]
        %v4180 = vld [vmem:[%s2 + $0xf98] sm:$0xff]
        %v4181 = vld [vmem:[%s2 + $0xfa0] sm:$0xff]
        %v4182 = vld [vmem:[%s2 + $0xfa8] sm:$0xff]
        %v4183 = vld [vmem:[%s2 + $0xfb0] sm:$0xff]
        %v4184 = vld [vmem:[%s2 + $0xfb8] sm:$0xff]
        %v4185 = vld [vmem:[%s2 + $0xfc0] sm:$0xff]
        %v4186 = vld [vmem:[%s2 + $0xfc8] sm:$0xff]
        %v4187 = vld [vmem:[%s2 + $0xfd0] sm:$0xff]
        %v4188 = vld [vmem:[%s2 + $0xfd8] sm:$0xff]
        %v4189 = vld [vmem:[%s2 + $0xfe0] sm:$0xff]
        %v4190 = vld [vmem:[%s2 + $0xfe8] sm:$0xff]
        %v4191 = vld [vmem:[%s2 + $0xff0] sm:$0xff]
        %v4192 = vld [vmem:[%s2 + $0xff8] sm:$0xff]
        %v4193 = vld [vmem:[%s3] sm:$0xf]
        %v4706 = vunpack.c.l.b16 %v3681
        %v4707 = vunpack.c.h.b16 %v3681
        %v4708 = vunpack.c.l.b16 %v3682
        %v4709 = vunpack.c.h.b16 %v3682
        %v4710 = vunpack.c.l.b16 %v3683
        %v4711 = vunpack.c.h.b16 %v3683
        %v4712 = vunpack.c.l.b16 %v3684
        %v4713 = vunpack.c.h.b16 %v3684
        %v4714 = vunpack.c.l.b16 %v3685
        %v4715 = vunpack.c.h.b16 %v3685
        %v4716 = vunpack.c.l.b16 %v3686
        %v4717 = vunpack.c.h.b16 %v3686
        %v4718 = vunpack.c.l.b16 %v3687
        %v4719 = vunpack.c.h.b16 %v3687
        %v4720 = vunpack.c.l.b16 %v3688
        %v4721 = vunpack.c.h.b16 %v3688
        %v4722 = vunpack.c.l.b16 %v3689
        %v4723 = vunpack.c.h.b16 %v3689
        %v4724 = vunpack.c.l.b16 %v3690
        %v4725 = vunpack.c.h.b16 %v3690
        %v4726 = vunpack.c.l.b16 %v3691
        %v4727 = vunpack.c.h.b16 %v3691
        %v4728 = vunpack.c.l.b16 %v3692
        %v4729 = vunpack.c.h.b16 %v3692
        %v4730 = vunpack.c.l.b16 %v3693
        %v4731 = vunpack.c.h.b16 %v3693
        %v4732 = vunpack.c.l.b16 %v3694
        %v4733 = vunpack.c.h.b16 %v3694
        %v4734 = vunpack.c.l.b16 %v3695
        %v4735 = vunpack.c.h.b16 %v3695
        %v4736 = vunpack.c.l.b16 %v3696
        %v4737 = vunpack.c.h.b16 %v3696
        %v4738 = vunpack.c.l.b16 %v3697
        %v4739 = vunpack.c.h.b16 %v3697
        %v4740 = vunpack.c.l.b16 %v3698
        %v4741 = vunpack.c.h.b16 %v3698
        %v4742 = vunpack.c.l.b16 %v3699
        %v4743 = vunpack.c.h.b16 %v3699
        %v4744 = vunpack.c.l.b16 %v3700
        %v4745 = vunpack.c.h.b16 %v3700
        %v4746 = vunpack.c.l.b16 %v3701
        %v4747 = vunpack.c.h.b16 %v3701
        %v4748 = vunpack.c.l.b16 %v3702
        %v4749 = vunpack.c.h.b16 %v3702
        %v4750 = vunpack.c.l.b16 %v3703
        %v4751 = vunpack.c.h.b16 %v3703
        %v4752 = vunpack.c.l.b16 %v3704
        %v4753 = vunpack.c.h.b16 %v3704
        %v4754 = vunpack.c.l.b16 %v3705
        %v4755 = vunpack.c.h.b16 %v3705
        %v4756 = vunpack.c.l.b16 %v3706
        %v4757 = vunpack.c.h.b16 %v3706
        %v4758 = vunpack.c.l.b16 %v3707
        %v4759 = vunpack.c.h.b16 %v3707
        %v4760 = vunpack.c.l.b16 %v3708
        %v4761 = vunpack.c.h.b16 %v3708
        %v4762 = vunpack.c.l.b16 %v3709
        %v4763 = vunpack.c.h.b16 %v3709
        %v4764 = vunpack.c.l.b16 %v3710
        %v4765 = vunpack.c.h.b16 %v3710
        %v4766 = vunpack.c.l.b16 %v3711
        %v4767 = vunpack.c.h.b16 %v3711
        %v4768 = vunpack.c.l.b16 %v3712
        %v4769 = vunpack.c.h.b16 %v3712
        %v4770 = vunpack.c.l.b16 %v3713
        %v4771 = vunpack.c.h.b16 %v3713
        %v4772 = vunpack.c.l.b16 %v3714
        %v4773 = vunpack.c.h.b16 %v3714
        %v4774 = vunpack.c.l.b16 %v3715
        %v4775 = vunpack.c.h.b16 %v3715
        %v4776 = vunpack.c.l.b16 %v3716
        %v4777 = vunpack.c.h.b16 %v3716
        %v4778 = vunpack.c.l.b16 %v3717
        %v4779 = vunpack.c.h.b16 %v3717
        %v4780 = vunpack.c.l.b16 %v3718
        %v4781 = vunpack.c.h.b16 %v3718
        %v4782 = vunpack.c.l.b16 %v3719
        %v4783 = vunpack.c.h.b16 %v3719
        %v4784 = vunpack.c.l.b16 %v3720
        %v4785 = vunpack.c.h.b16 %v3720
        %v4786 = vunpack.c.l.b16 %v3721
        %v4787 = vunpack.c.h.b16 %v3721
        %v4788 = vunpack.c.l.b16 %v3722
        %v4789 = vunpack.c.h.b16 %v3722
        %v4790 = vunpack.c.l.b16 %v3723
        %v4791 = vunpack.c.h.b16 %v3723
        %v4792 = vunpack.c.l.b16 %v3724
        %v4793 = vunpack.c.h.b16 %v3724
        %v4794 = vunpack.c.l.b16 %v3725
        %v4795 = vunpack.c.h.b16 %v3725
        %v4796 = vunpack.c.l.b16 %v3726
        %v4797 = vunpack.c.h.b16 %v3726
        %v4798 = vunpack.c.l.b16 %v3727
        %v4799 = vunpack.c.h.b16 %v3727
        %v4800 = vunpack.c.l.b16 %v3728
        %v4801 = vunpack.c.h.b16 %v3728
        %v4802 = vunpack.c.l.b16 %v3729
        %v4803 = vunpack.c.h.b16 %v3729
        %v4804 = vunpack.c.l.b16 %v3730
        %v4805 = vunpack.c.h.b16 %v3730
        %v4806 = vunpack.c.l.b16 %v3731
        %v4807 = vunpack.c.h.b16 %v3731
        %v4808 = vunpack.c.l.b16 %v3732
        %v4809 = vunpack.c.h.b16 %v3732
        %v4810 = vunpack.c.l.b16 %v3733
        %v4811 = vunpack.c.h.b16 %v3733
        %v4812 = vunpack.c.l.b16 %v3734
        %v4813 = vunpack.c.h.b16 %v3734
        %v4814 = vunpack.c.l.b16 %v3735
        %v4815 = vunpack.c.h.b16 %v3735
        %v4816 = vunpack.c.l.b16 %v3736
        %v4817 = vunpack.c.h.b16 %v3736
        %v4818 = vunpack.c.l.b16 %v3737
        %v4819 = vunpack.c.h.b16 %v3737
        %v4820 = vunpack.c.l.b16 %v3738
        %v4821 = vunpack.c.h.b16 %v3738
        %v4822 = vunpack.c.l.b16 %v3739
        %v4823 = vunpack.c.h.b16 %v3739
        %v4824 = vunpack.c.l.b16 %v3740
        %v4825 = vunpack.c.h.b16 %v3740
        %v4826 = vunpack.c.l.b16 %v3741
        %v4827 = vunpack.c.h.b16 %v3741
        %v4828 = vunpack.c.l.b16 %v3742
        %v4829 = vunpack.c.h.b16 %v3742
        %v4830 = vunpack.c.l.b16 %v3743
        %v4831 = vunpack.c.h.b16 %v3743
        %v4832 = vunpack.c.l.b16 %v3744
        %v4833 = vunpack.c.h.b16 %v3744
        %v4834 = vunpack.c.l.b16 %v3745
        %v4835 = vunpack.c.h.b16 %v3745
        %v4836 = vunpack.c.l.b16 %v3746
        %v4837 = vunpack.c.h.b16 %v3746
        %v4838 = vunpack.c.l.b16 %v3747
        %v4839 = vunpack.c.h.b16 %v3747
        %v4840 = vunpack.c.l.b16 %v3748
        %v4841 = vunpack.c.h.b16 %v3748
        %v4842 = vunpack.c.l.b16 %v3749
        %v4843 = vunpack.c.h.b16 %v3749
        %v4844 = vunpack.c.l.b16 %v3750
        %v4845 = vunpack.c.h.b16 %v3750
        %v4846 = vunpack.c.l.b16 %v3751
        %v4847 = vunpack.c.h.b16 %v3751
        %v4848 = vunpack.c.l.b16 %v3752
        %v4849 = vunpack.c.h.b16 %v3752
        %v4850 = vunpack.c.l.b16 %v3753
        %v4851 = vunpack.c.h.b16 %v3753
        %v4852 = vunpack.c.l.b16 %v3754
        %v4853 = vunpack.c.h.b16 %v3754
        %v4854 = vunpack.c.l.b16 %v3755
        %v4855 = vunpack.c.h.b16 %v3755
        %v4856 = vunpack.c.l.b16 %v3756
        %v4857 = vunpack.c.h.b16 %v3756
        %v4858 = vunpack.c.l.b16 %v3757
        %v4859 = vunpack.c.h.b16 %v3757
        %v4860 = vunpack.c.l.b16 %v3758
        %v4861 = vunpack.c.h.b16 %v3758
        %v4862 = vunpack.c.l.b16 %v3759
        %v4863 = vunpack.c.h.b16 %v3759
        %v4864 = vunpack.c.l.b16 %v3760
        %v4865 = vunpack.c.h.b16 %v3760
        %v4866 = vunpack.c.l.b16 %v3761
        %v4867 = vunpack.c.h.b16 %v3761
        %v4868 = vunpack.c.l.b16 %v3762
        %v4869 = vunpack.c.h.b16 %v3762
        %v4870 = vunpack.c.l.b16 %v3763
        %v4871 = vunpack.c.h.b16 %v3763
        %v4872 = vunpack.c.l.b16 %v3764
        %v4873 = vunpack.c.h.b16 %v3764
        %v4874 = vunpack.c.l.b16 %v3765
        %v4875 = vunpack.c.h.b16 %v3765
        %v4876 = vunpack.c.l.b16 %v3766
        %v4877 = vunpack.c.h.b16 %v3766
        %v4878 = vunpack.c.l.b16 %v3767
        %v4879 = vunpack.c.h.b16 %v3767
        %v4880 = vunpack.c.l.b16 %v3768
        %v4881 = vunpack.c.h.b16 %v3768
        %v4882 = vunpack.c.l.b16 %v3769
        %v4883 = vunpack.c.h.b16 %v3769
        %v4884 = vunpack.c.l.b16 %v3770
        %v4885 = vunpack.c.h.b16 %v3770
        %v4886 = vunpack.c.l.b16 %v3771
        %v4887 = vunpack.c.h.b16 %v3771
        %v4888 = vunpack.c.l.b16 %v3772
        %v4889 = vunpack.c.h.b16 %v3772
        %v4890 = vunpack.c.l.b16 %v3773
        %v4891 = vunpack.c.h.b16 %v3773
        %v4892 = vunpack.c.l.b16 %v3774
        %v4893 = vunpack.c.h.b16 %v3774
        %v4894 = vunpack.c.l.b16 %v3775
        %v4895 = vunpack.c.h.b16 %v3775
        %v4896 = vunpack.c.l.b16 %v3776
        %v4897 = vunpack.c.h.b16 %v3776
        %v4898 = vunpack.c.l.b16 %v3777
        %v4899 = vunpack.c.h.b16 %v3777
        %v4900 = vunpack.c.l.b16 %v3778
        %v4901 = vunpack.c.h.b16 %v3778
        %v4902 = vunpack.c.l.b16 %v3779
        %v4903 = vunpack.c.h.b16 %v3779
        %v4904 = vunpack.c.l.b16 %v3780
        %v4905 = vunpack.c.h.b16 %v3780
        %v4906 = vunpack.c.l.b16 %v3781
        %v4907 = vunpack.c.h.b16 %v3781
        %v4908 = vunpack.c.l.b16 %v3782
        %v4909 = vunpack.c.h.b16 %v3782
        %v4910 = vunpack.c.l.b16 %v3783
        %v4911 = vunpack.c.h.b16 %v3783
        %v4912 = vunpack.c.l.b16 %v3784
        %v4913 = vunpack.c.h.b16 %v3784
        %v4914 = vunpack.c.l.b16 %v3785
        %v4915 = vunpack.c.h.b16 %v3785
        %v4916 = vunpack.c.l.b16 %v3786
        %v4917 = vunpack.c.h.b16 %v3786
        %v4918 = vunpack.c.l.b16 %v3787
        %v4919 = vunpack.c.h.b16 %v3787
        %v4920 = vunpack.c.l.b16 %v3788
        %v4921 = vunpack.c.h.b16 %v3788
        %v4922 = vunpack.c.l.b16 %v3789
        %v4923 = vunpack.c.h.b16 %v3789
        %v4924 = vunpack.c.l.b16 %v3790
        %v4925 = vunpack.c.h.b16 %v3790
        %v4926 = vunpack.c.l.b16 %v3791
        %v4927 = vunpack.c.h.b16 %v3791
        %v4928 = vunpack.c.l.b16 %v3792
        %v4929 = vunpack.c.h.b16 %v3792
        %v4930 = vunpack.c.l.b16 %v3793
        %v4931 = vunpack.c.h.b16 %v3793
        %v4932 = vunpack.c.l.b16 %v3794
        %v4933 = vunpack.c.h.b16 %v3794
        %v4934 = vunpack.c.l.b16 %v3795
        %v4935 = vunpack.c.h.b16 %v3795
        %v4936 = vunpack.c.l.b16 %v3796
        %v4937 = vunpack.c.h.b16 %v3796
        %v4938 = vunpack.c.l.b16 %v3797
        %v4939 = vunpack.c.h.b16 %v3797
        %v4940 = vunpack.c.l.b16 %v3798
        %v4941 = vunpack.c.h.b16 %v3798
        %v4942 = vunpack.c.l.b16 %v3799
        %v4943 = vunpack.c.h.b16 %v3799
        %v4944 = vunpack.c.l.b16 %v3800
        %v4945 = vunpack.c.h.b16 %v3800
        %v4946 = vunpack.c.l.b16 %v3801
        %v4947 = vunpack.c.h.b16 %v3801
        %v4948 = vunpack.c.l.b16 %v3802
        %v4949 = vunpack.c.h.b16 %v3802
        %v4950 = vunpack.c.l.b16 %v3803
        %v4951 = vunpack.c.h.b16 %v3803
        %v4952 = vunpack.c.l.b16 %v3804
        %v4953 = vunpack.c.h.b16 %v3804
        %v4954 = vunpack.c.l.b16 %v3805
        %v4955 = vunpack.c.h.b16 %v3805
        %v4956 = vunpack.c.l.b16 %v3806
        %v4957 = vunpack.c.h.b16 %v3806
        %v4958 = vunpack.c.l.b16 %v3807
        %v4959 = vunpack.c.h.b16 %v3807
        %v4960 = vunpack.c.l.b16 %v3808
        %v4961 = vunpack.c.h.b16 %v3808
        %v4962 = vunpack.c.l.b16 %v3809
        %v4963 = vunpack.c.h.b16 %v3809
        %v4964 = vunpack.c.l.b16 %v3810
        %v4965 = vunpack.c.h.b16 %v3810
        %v4966 = vunpack.c.l.b16 %v3811
        %v4967 = vunpack.c.h.b16 %v3811
        %v4968 = vunpack.c.l.b16 %v3812
        %v4969 = vunpack.c.h.b16 %v3812
        %v4970 = vunpack.c.l.b16 %v3813
        %v4971 = vunpack.c.h.b16 %v3813
        %v4972 = vunpack.c.l.b16 %v3814
        %v4973 = vunpack.c.h.b16 %v3814
        %v4974 = vunpack.c.l.b16 %v3815
        %v4975 = vunpack.c.h.b16 %v3815
        %v4976 = vunpack.c.l.b16 %v3816
        %v4977 = vunpack.c.h.b16 %v3816
        %v4978 = vunpack.c.l.b16 %v3817
        %v4979 = vunpack.c.h.b16 %v3817
        %v4980 = vunpack.c.l.b16 %v3818
        %v4981 = vunpack.c.h.b16 %v3818
        %v4982 = vunpack.c.l.b16 %v3819
        %v4983 = vunpack.c.h.b16 %v3819
        %v4984 = vunpack.c.l.b16 %v3820
        %v4985 = vunpack.c.h.b16 %v3820
        %v4986 = vunpack.c.l.b16 %v3821
        %v4987 = vunpack.c.h.b16 %v3821
        %v4988 = vunpack.c.l.b16 %v3822
        %v4989 = vunpack.c.h.b16 %v3822
        %v4990 = vunpack.c.l.b16 %v3823
        %v4991 = vunpack.c.h.b16 %v3823
        %v4992 = vunpack.c.l.b16 %v3824
        %v4993 = vunpack.c.h.b16 %v3824
        %v4994 = vunpack.c.l.b16 %v3825
        %v4995 = vunpack.c.h.b16 %v3825
        %v4996 = vunpack.c.l.b16 %v3826
        %v4997 = vunpack.c.h.b16 %v3826
        %v4998 = vunpack.c.l.b16 %v3827
        %v4999 = vunpack.c.h.b16 %v3827
        %v5000 = vunpack.c.l.b16 %v3828
        %v5001 = vunpack.c.h.b16 %v3828
        %v5002 = vunpack.c.l.b16 %v3829
        %v5003 = vunpack.c.h.b16 %v3829
        %v5004 = vunpack.c.l.b16 %v3830
        %v5005 = vunpack.c.h.b16 %v3830
        %v5006 = vunpack.c.l.b16 %v3831
        %v5007 = vunpack.c.h.b16 %v3831
        %v5008 = vunpack.c.l.b16 %v3832
        %v5009 = vunpack.c.h.b16 %v3832
        %v5010 = vunpack.c.l.b16 %v3833
        %v5011 = vunpack.c.h.b16 %v3833
        %v5012 = vunpack.c.l.b16 %v3834
        %v5013 = vunpack.c.h.b16 %v3834
        %v5014 = vunpack.c.l.b16 %v3835
        %v5015 = vunpack.c.h.b16 %v3835
        %v5016 = vunpack.c.l.b16 %v3836
        %v5017 = vunpack.c.h.b16 %v3836
        %v5018 = vunpack.c.l.b16 %v3837
        %v5019 = vunpack.c.h.b16 %v3837
        %v5020 = vunpack.c.l.b16 %v3838
        %v5021 = vunpack.c.h.b16 %v3838
        %v5022 = vunpack.c.l.b16 %v3839
        %v5023 = vunpack.c.h.b16 %v3839
        %v5024 = vunpack.c.l.b16 %v3840
        %v5025 = vunpack.c.h.b16 %v3840
        %v5026 = vunpack.c.l.b16 %v3841
        %v5027 = vunpack.c.h.b16 %v3841
        %v5028 = vunpack.c.l.b16 %v3842
        %v5029 = vunpack.c.h.b16 %v3842
        %v5030 = vunpack.c.l.b16 %v3843
        %v5031 = vunpack.c.h.b16 %v3843
        %v5032 = vunpack.c.l.b16 %v3844
        %v5033 = vunpack.c.h.b16 %v3844
        %v5034 = vunpack.c.l.b16 %v3845
        %v5035 = vunpack.c.h.b16 %v3845
        %v5036 = vunpack.c.l.b16 %v3846
        %v5037 = vunpack.c.h.b16 %v3846
        %v5038 = vunpack.c.l.b16 %v3847
        %v5039 = vunpack.c.h.b16 %v3847
        %v5040 = vunpack.c.l.b16 %v3848
        %v5041 = vunpack.c.h.b16 %v3848
        %v5042 = vunpack.c.l.b16 %v3849
        %v5043 = vunpack.c.h.b16 %v3849
        %v5044 = vunpack.c.l.b16 %v3850
        %v5045 = vunpack.c.h.b16 %v3850
        %v5046 = vunpack.c.l.b16 %v3851
        %v5047 = vunpack.c.h.b16 %v3851
        %v5048 = vunpack.c.l.b16 %v3852
        %v5049 = vunpack.c.h.b16 %v3852
        %v5050 = vunpack.c.l.b16 %v3853
        %v5051 = vunpack.c.h.b16 %v3853
        %v5052 = vunpack.c.l.b16 %v3854
        %v5053 = vunpack.c.h.b16 %v3854
        %v5054 = vunpack.c.l.b16 %v3855
        %v5055 = vunpack.c.h.b16 %v3855
        %v5056 = vunpack.c.l.b16 %v3856
        %v5057 = vunpack.c.h.b16 %v3856
        %v5058 = vunpack.c.l.b16 %v3857
        %v5059 = vunpack.c.h.b16 %v3857
        %v5060 = vunpack.c.l.b16 %v3858
        %v5061 = vunpack.c.h.b16 %v3858
        %v5062 = vunpack.c.l.b16 %v3859
        %v5063 = vunpack.c.h.b16 %v3859
        %v5064 = vunpack.c.l.b16 %v3860
        %v5065 = vunpack.c.h.b16 %v3860
        %v5066 = vunpack.c.l.b16 %v3861
        %v5067 = vunpack.c.h.b16 %v3861
        %v5068 = vunpack.c.l.b16 %v3862
        %v5069 = vunpack.c.h.b16 %v3862
        %v5070 = vunpack.c.l.b16 %v3863
        %v5071 = vunpack.c.h.b16 %v3863
        %v5072 = vunpack.c.l.b16 %v3864
        %v5073 = vunpack.c.h.b16 %v3864
        %v5074 = vunpack.c.l.b16 %v3865
        %v5075 = vunpack.c.h.b16 %v3865
        %v5076 = vunpack.c.l.b16 %v3866
        %v5077 = vunpack.c.h.b16 %v3866
        %v5078 = vunpack.c.l.b16 %v3867
        %v5079 = vunpack.c.h.b16 %v3867
        %v5080 = vunpack.c.l.b16 %v3868
        %v5081 = vunpack.c.h.b16 %v3868
        %v5082 = vunpack.c.l.b16 %v3869
        %v5083 = vunpack.c.h.b16 %v3869
        %v5084 = vunpack.c.l.b16 %v3870
        %v5085 = vunpack.c.h.b16 %v3870
        %v5086 = vunpack.c.l.b16 %v3871
        %v5087 = vunpack.c.h.b16 %v3871
        %v5088 = vunpack.c.l.b16 %v3872
        %v5089 = vunpack.c.h.b16 %v3872
        %v5090 = vunpack.c.l.b16 %v3873
        %v5091 = vunpack.c.h.b16 %v3873
        %v5092 = vunpack.c.l.b16 %v3874
        %v5093 = vunpack.c.h.b16 %v3874
        %v5094 = vunpack.c.l.b16 %v3875
        %v5095 = vunpack.c.h.b16 %v3875
        %v5096 = vunpack.c.l.b16 %v3876
        %v5097 = vunpack.c.h.b16 %v3876
        %v5098 = vunpack.c.l.b16 %v3877
        %v5099 = vunpack.c.h.b16 %v3877
        %v5100 = vunpack.c.l.b16 %v3878
        %v5101 = vunpack.c.h.b16 %v3878
        %v5102 = vunpack.c.l.b16 %v3879
        %v5103 = vunpack.c.h.b16 %v3879
        %v5104 = vunpack.c.l.b16 %v3880
        %v5105 = vunpack.c.h.b16 %v3880
        %v5106 = vunpack.c.l.b16 %v3881
        %v5107 = vunpack.c.h.b16 %v3881
        %v5108 = vunpack.c.l.b16 %v3882
        %v5109 = vunpack.c.h.b16 %v3882
        %v5110 = vunpack.c.l.b16 %v3883
        %v5111 = vunpack.c.h.b16 %v3883
        %v5112 = vunpack.c.l.b16 %v3884
        %v5113 = vunpack.c.h.b16 %v3884
        %v5114 = vunpack.c.l.b16 %v3885
        %v5115 = vunpack.c.h.b16 %v3885
        %v5116 = vunpack.c.l.b16 %v3886
        %v5117 = vunpack.c.h.b16 %v3886
        %v5118 = vunpack.c.l.b16 %v3887
        %v5119 = vunpack.c.h.b16 %v3887
        %v5120 = vunpack.c.l.b16 %v3888
        %v5121 = vunpack.c.h.b16 %v3888
        %v5122 = vunpack.c.l.b16 %v3889
        %v5123 = vunpack.c.h.b16 %v3889
        %v5124 = vunpack.c.l.b16 %v3890
        %v5125 = vunpack.c.h.b16 %v3890
        %v5126 = vunpack.c.l.b16 %v3891
        %v5127 = vunpack.c.h.b16 %v3891
        %v5128 = vunpack.c.l.b16 %v3892
        %v5129 = vunpack.c.h.b16 %v3892
        %v5130 = vunpack.c.l.b16 %v3893
        %v5131 = vunpack.c.h.b16 %v3893
        %v5132 = vunpack.c.l.b16 %v3894
        %v5133 = vunpack.c.h.b16 %v3894
        %v5134 = vunpack.c.l.b16 %v3895
        %v5135 = vunpack.c.h.b16 %v3895
        %v5136 = vunpack.c.l.b16 %v3896
        %v5137 = vunpack.c.h.b16 %v3896
        %v5138 = vunpack.c.l.b16 %v3897
        %v5139 = vunpack.c.h.b16 %v3897
        %v5140 = vunpack.c.l.b16 %v3898
        %v5141 = vunpack.c.h.b16 %v3898
        %v5142 = vunpack.c.l.b16 %v3899
        %v5143 = vunpack.c.h.b16 %v3899
        %v5144 = vunpack.c.l.b16 %v3900
        %v5145 = vunpack.c.h.b16 %v3900
        %v5146 = vunpack.c.l.b16 %v3901
        %v5147 = vunpack.c.h.b16 %v3901
        %v5148 = vunpack.c.l.b16 %v3902
        %v5149 = vunpack.c.h.b16 %v3902
        %v5150 = vunpack.c.l.b16 %v3903
        %v5151 = vunpack.c.h.b16 %v3903
        %v5152 = vunpack.c.l.b16 %v3904
        %v5153 = vunpack.c.h.b16 %v3904
        %v5154 = vunpack.c.l.b16 %v3905
        %v5155 = vunpack.c.h.b16 %v3905
        %v5156 = vunpack.c.l.b16 %v3906
        %v5157 = vunpack.c.h.b16 %v3906
        %v5158 = vunpack.c.l.b16 %v3907
        %v5159 = vunpack.c.h.b16 %v3907
        %v5160 = vunpack.c.l.b16 %v3908
        %v5161 = vunpack.c.h.b16 %v3908
        %v5162 = vunpack.c.l.b16 %v3909
        %v5163 = vunpack.c.h.b16 %v3909
        %v5164 = vunpack.c.l.b16 %v3910
        %v5165 = vunpack.c.h.b16 %v3910
        %v5166 = vunpack.c.l.b16 %v3911
        %v5167 = vunpack.c.h.b16 %v3911
        %v5168 = vunpack.c.l.b16 %v3912
        %v5169 = vunpack.c.h.b16 %v3912
        %v5170 = vunpack.c.l.b16 %v3913
        %v5171 = vunpack.c.h.b16 %v3913
        %v5172 = vunpack.c.l.b16 %v3914
        %v5173 = vunpack.c.h.b16 %v3914
        %v5174 = vunpack.c.l.b16 %v3915
        %v5175 = vunpack.c.h.b16 %v3915
        %v5176 = vunpack.c.l.b16 %v3916
        %v5177 = vunpack.c.h.b16 %v3916
        %v5178 = vunpack.c.l.b16 %v3917
        %v5179 = vunpack.c.h.b16 %v3917
        %v5180 = vunpack.c.l.b16 %v3918
        %v5181 = vunpack.c.h.b16 %v3918
        %v5182 = vunpack.c.l.b16 %v3919
        %v5183 = vunpack.c.h.b16 %v3919
        %v5184 = vunpack.c.l.b16 %v3920
        %v5185 = vunpack.c.h.b16 %v3920
        %v5186 = vunpack.c.l.b16 %v3921
        %v5187 = vunpack.c.h.b16 %v3921
        %v5188 = vunpack.c.l.b16 %v3922
        %v5189 = vunpack.c.h.b16 %v3922
        %v5190 = vunpack.c.l.b16 %v3923
        %v5191 = vunpack.c.h.b16 %v3923
        %v5192 = vunpack.c.l.b16 %v3924
        %v5193 = vunpack.c.h.b16 %v3924
        %v5194 = vunpack.c.l.b16 %v3925
        %v5195 = vunpack.c.h.b16 %v3925
        %v5196 = vunpack.c.l.b16 %v3926
        %v5197 = vunpack.c.h.b16 %v3926
        %v5198 = vunpack.c.l.b16 %v3927
        %v5199 = vunpack.c.h.b16 %v3927
        %v5200 = vunpack.c.l.b16 %v3928
        %v5201 = vunpack.c.h.b16 %v3928
        %v5202 = vunpack.c.l.b16 %v3929
        %v5203 = vunpack.c.h.b16 %v3929
        %v5204 = vunpack.c.l.b16 %v3930
        %v5205 = vunpack.c.h.b16 %v3930
        %v5206 = vunpack.c.l.b16 %v3931
        %v5207 = vunpack.c.h.b16 %v3931
        %v5208 = vunpack.c.l.b16 %v3932
        %v5209 = vunpack.c.h.b16 %v3932
        %v5210 = vunpack.c.l.b16 %v3933
        %v5211 = vunpack.c.h.b16 %v3933
        %v5212 = vunpack.c.l.b16 %v3934
        %v5213 = vunpack.c.h.b16 %v3934
        %v5214 = vunpack.c.l.b16 %v3935
        %v5215 = vunpack.c.h.b16 %v3935
        %v5216 = vunpack.c.l.b16 %v3936
        %v5217 = vunpack.c.h.b16 %v3936
        %v5218 = vunpack.c.l.b16 %v3937
        %v5219 = vunpack.c.h.b16 %v3937
        %v5220 = vunpack.c.l.b16 %v3938
        %v5221 = vunpack.c.h.b16 %v3938
        %v5222 = vunpack.c.l.b16 %v3939
        %v5223 = vunpack.c.h.b16 %v3939
        %v5224 = vunpack.c.l.b16 %v3940
        %v5225 = vunpack.c.h.b16 %v3940
        %v5226 = vunpack.c.l.b16 %v3941
        %v5227 = vunpack.c.h.b16 %v3941
        %v5228 = vunpack.c.l.b16 %v3942
        %v5229 = vunpack.c.h.b16 %v3942
        %v5230 = vunpack.c.l.b16 %v3943
        %v5231 = vunpack.c.h.b16 %v3943
        %v5232 = vunpack.c.l.b16 %v3944
        %v5233 = vunpack.c.h.b16 %v3944
        %v5234 = vunpack.c.l.b16 %v3945
        %v5235 = vunpack.c.h.b16 %v3945
        %v5236 = vunpack.c.l.b16 %v3946
        %v5237 = vunpack.c.h.b16 %v3946
        %v5238 = vunpack.c.l.b16 %v3947
        %v5239 = vunpack.c.h.b16 %v3947
        %v5240 = vunpack.c.l.b16 %v3948
        %v5241 = vunpack.c.h.b16 %v3948
        %v5242 = vunpack.c.l.b16 %v3949
        %v5243 = vunpack.c.h.b16 %v3949
        %v5244 = vunpack.c.l.b16 %v3950
        %v5245 = vunpack.c.h.b16 %v3950
        %v5246 = vunpack.c.l.b16 %v3951
        %v5247 = vunpack.c.h.b16 %v3951
        %v5248 = vunpack.c.l.b16 %v3952
        %v5249 = vunpack.c.h.b16 %v3952
        %v5250 = vunpack.c.l.b16 %v3953
        %v5251 = vunpack.c.h.b16 %v3953
        %v5252 = vunpack.c.l.b16 %v3954
        %v5253 = vunpack.c.h.b16 %v3954
        %v5254 = vunpack.c.l.b16 %v3955
        %v5255 = vunpack.c.h.b16 %v3955
        %v5256 = vunpack.c.l.b16 %v3956
        %v5257 = vunpack.c.h.b16 %v3956
        %v5258 = vunpack.c.l.b16 %v3957
        %v5259 = vunpack.c.h.b16 %v3957
        %v5260 = vunpack.c.l.b16 %v3958
        %v5261 = vunpack.c.h.b16 %v3958
        %v5262 = vunpack.c.l.b16 %v3959
        %v5263 = vunpack.c.h.b16 %v3959
        %v5264 = vunpack.c.l.b16 %v3960
        %v5265 = vunpack.c.h.b16 %v3960
        %v5266 = vunpack.c.l.b16 %v3961
        %v5267 = vunpack.c.h.b16 %v3961
        %v5268 = vunpack.c.l.b16 %v3962
        %v5269 = vunpack.c.h.b16 %v3962
        %v5270 = vunpack.c.l.b16 %v3963
        %v5271 = vunpack.c.h.b16 %v3963
        %v5272 = vunpack.c.l.b16 %v3964
        %v5273 = vunpack.c.h.b16 %v3964
        %v5274 = vunpack.c.l.b16 %v3965
        %v5275 = vunpack.c.h.b16 %v3965
        %v5276 = vunpack.c.l.b16 %v3966
        %v5277 = vunpack.c.h.b16 %v3966
        %v5278 = vunpack.c.l.b16 %v3967
        %v5279 = vunpack.c.h.b16 %v3967
        %v5280 = vunpack.c.l.b16 %v3968
        %v5281 = vunpack.c.h.b16 %v3968
        %v5282 = vunpack.c.l.b16 %v3969
        %v5283 = vunpack.c.h.b16 %v3969
        %v5284 = vunpack.c.l.b16 %v3970
        %v5285 = vunpack.c.h.b16 %v3970
        %v5286 = vunpack.c.l.b16 %v3971
        %v5287 = vunpack.c.h.b16 %v3971
        %v5288 = vunpack.c.l.b16 %v3972
        %v5289 = vunpack.c.h.b16 %v3972
        %v5290 = vunpack.c.l.b16 %v3973
        %v5291 = vunpack.c.h.b16 %v3973
        %v5292 = vunpack.c.l.b16 %v3974
        %v5293 = vunpack.c.h.b16 %v3974
        %v5294 = vunpack.c.l.b16 %v3975
        %v5295 = vunpack.c.h.b16 %v3975
        %v5296 = vunpack.c.l.b16 %v3976
        %v5297 = vunpack.c.h.b16 %v3976
        %v5298 = vunpack.c.l.b16 %v3977
        %v5299 = vunpack.c.h.b16 %v3977
        %v5300 = vunpack.c.l.b16 %v3978
        %v5301 = vunpack.c.h.b16 %v3978
        %v5302 = vunpack.c.l.b16 %v3979
        %v5303 = vunpack.c.h.b16 %v3979
        %v5304 = vunpack.c.l.b16 %v3980
        %v5305 = vunpack.c.h.b16 %v3980
        %v5306 = vunpack.c.l.b16 %v3981
        %v5307 = vunpack.c.h.b16 %v3981
        %v5308 = vunpack.c.l.b16 %v3982
        %v5309 = vunpack.c.h.b16 %v3982
        %v5310 = vunpack.c.l.b16 %v3983
        %v5311 = vunpack.c.h.b16 %v3983
        %v5312 = vunpack.c.l.b16 %v3984
        %v5313 = vunpack.c.h.b16 %v3984
        %v5314 = vunpack.c.l.b16 %v3985
        %v5315 = vunpack.c.h.b16 %v3985
        %v5316 = vunpack.c.l.b16 %v3986
        %v5317 = vunpack.c.h.b16 %v3986
        %v5318 = vunpack.c.l.b16 %v3987
        %v5319 = vunpack.c.h.b16 %v3987
        %v5320 = vunpack.c.l.b16 %v3988
        %v5321 = vunpack.c.h.b16 %v3988
        %v5322 = vunpack.c.l.b16 %v3989
        %v5323 = vunpack.c.h.b16 %v3989
        %v5324 = vunpack.c.l.b16 %v3990
        %v5325 = vunpack.c.h.b16 %v3990
        %v5326 = vunpack.c.l.b16 %v3991
        %v5327 = vunpack.c.h.b16 %v3991
        %v5328 = vunpack.c.l.b16 %v3992
        %v5329 = vunpack.c.h.b16 %v3992
        %v5330 = vunpack.c.l.b16 %v3993
        %v5331 = vunpack.c.h.b16 %v3993
        %v5332 = vunpack.c.l.b16 %v3994
        %v5333 = vunpack.c.h.b16 %v3994
        %v5334 = vunpack.c.l.b16 %v3995
        %v5335 = vunpack.c.h.b16 %v3995
        %v5336 = vunpack.c.l.b16 %v3996
        %v5337 = vunpack.c.h.b16 %v3996
        %v5338 = vunpack.c.l.b16 %v3997
        %v5339 = vunpack.c.h.b16 %v3997
        %v5340 = vunpack.c.l.b16 %v3998
        %v5341 = vunpack.c.h.b16 %v3998
        %v5342 = vunpack.c.l.b16 %v3999
        %v5343 = vunpack.c.h.b16 %v3999
        %v5344 = vunpack.c.l.b16 %v4000
        %v5345 = vunpack.c.h.b16 %v4000
        %v5346 = vunpack.c.l.b16 %v4001
        %v5347 = vunpack.c.h.b16 %v4001
        %v5348 = vunpack.c.l.b16 %v4002
        %v5349 = vunpack.c.h.b16 %v4002
        %v5350 = vunpack.c.l.b16 %v4003
        %v5351 = vunpack.c.h.b16 %v4003
        %v5352 = vunpack.c.l.b16 %v4004
        %v5353 = vunpack.c.h.b16 %v4004
        %v5354 = vunpack.c.l.b16 %v4005
        %v5355 = vunpack.c.h.b16 %v4005
        %v5356 = vunpack.c.l.b16 %v4006
        %v5357 = vunpack.c.h.b16 %v4006
        %v5358 = vunpack.c.l.b16 %v4007
        %v5359 = vunpack.c.h.b16 %v4007
        %v5360 = vunpack.c.l.b16 %v4008
        %v5361 = vunpack.c.h.b16 %v4008
        %v5362 = vunpack.c.l.b16 %v4009
        %v5363 = vunpack.c.h.b16 %v4009
        %v5364 = vunpack.c.l.b16 %v4010
        %v5365 = vunpack.c.h.b16 %v4010
        %v5366 = vunpack.c.l.b16 %v4011
        %v5367 = vunpack.c.h.b16 %v4011
        %v5368 = vunpack.c.l.b16 %v4012
        %v5369 = vunpack.c.h.b16 %v4012
        %v5370 = vunpack.c.l.b16 %v4013
        %v5371 = vunpack.c.h.b16 %v4013
        %v5372 = vunpack.c.l.b16 %v4014
        %v5373 = vunpack.c.h.b16 %v4014
        %v5374 = vunpack.c.l.b16 %v4015
        %v5375 = vunpack.c.h.b16 %v4015
        %v5376 = vunpack.c.l.b16 %v4016
        %v5377 = vunpack.c.h.b16 %v4016
        %v5378 = vunpack.c.l.b16 %v4017
        %v5379 = vunpack.c.h.b16 %v4017
        %v5380 = vunpack.c.l.b16 %v4018
        %v5381 = vunpack.c.h.b16 %v4018
        %v5382 = vunpack.c.l.b16 %v4019
        %v5383 = vunpack.c.h.b16 %v4019
        %v5384 = vunpack.c.l.b16 %v4020
        %v5385 = vunpack.c.h.b16 %v4020
        %v5386 = vunpack.c.l.b16 %v4021
        %v5387 = vunpack.c.h.b16 %v4021
        %v5388 = vunpack.c.l.b16 %v4022
        %v5389 = vunpack.c.h.b16 %v4022
        %v5390 = vunpack.c.l.b16 %v4023
        %v5391 = vunpack.c.h.b16 %v4023
        %v5392 = vunpack.c.l.b16 %v4024
        %v5393 = vunpack.c.h.b16 %v4024
        %v5394 = vunpack.c.l.b16 %v4025
        %v5395 = vunpack.c.h.b16 %v4025
        %v5396 = vunpack.c.l.b16 %v4026
        %v5397 = vunpack.c.h.b16 %v4026
        %v5398 = vunpack.c.l.b16 %v4027
        %v5399 = vunpack.c.h.b16 %v4027
        %v5400 = vunpack.c.l.b16 %v4028
        %v5401 = vunpack.c.h.b16 %v4028
        %v5402 = vunpack.c.l.b16 %v4029
        %v5403 = vunpack.c.h.b16 %v4029
        %v5404 = vunpack.c.l.b16 %v4030
        %v5405 = vunpack.c.h.b16 %v4030
        %v5406 = vunpack.c.l.b16 %v4031
        %v5407 = vunpack.c.h.b16 %v4031
        %v5408 = vunpack.c.l.b16 %v4032
        %v5409 = vunpack.c.h.b16 %v4032
        %v5410 = vunpack.c.l.b16 %v4033
        %v5411 = vunpack.c.h.b16 %v4033
        %v5412 = vunpack.c.l.b16 %v4034
        %v5413 = vunpack.c.h.b16 %v4034
        %v5414 = vunpack.c.l.b16 %v4035
        %v5415 = vunpack.c.h.b16 %v4035
        %v5416 = vunpack.c.l.b16 %v4036
        %v5417 = vunpack.c.h.b16 %v4036
        %v5418 = vunpack.c.l.b16 %v4037
        %v5419 = vunpack.c.h.b16 %v4037
        %v5420 = vunpack.c.l.b16 %v4038
        %v5421 = vunpack.c.h.b16 %v4038
        %v5422 = vunpack.c.l.b16 %v4039
        %v5423 = vunpack.c.h.b16 %v4039
        %v5424 = vunpack.c.l.b16 %v4040
        %v5425 = vunpack.c.h.b16 %v4040
        %v5426 = vunpack.c.l.b16 %v4041
        %v5427 = vunpack.c.h.b16 %v4041
        %v5428 = vunpack.c.l.b16 %v4042
        %v5429 = vunpack.c.h.b16 %v4042
        %v5430 = vunpack.c.l.b16 %v4043
        %v5431 = vunpack.c.h.b16 %v4043
        %v5432 = vunpack.c.l.b16 %v4044
        %v5433 = vunpack.c.h.b16 %v4044
        %v5434 = vunpack.c.l.b16 %v4045
        %v5435 = vunpack.c.h.b16 %v4045
        %v5436 = vunpack.c.l.b16 %v4046
        %v5437 = vunpack.c.h.b16 %v4046
        %v5438 = vunpack.c.l.b16 %v4047
        %v5439 = vunpack.c.h.b16 %v4047
        %v5440 = vunpack.c.l.b16 %v4048
        %v5441 = vunpack.c.h.b16 %v4048
        %v5442 = vunpack.c.l.b16 %v4049
        %v5443 = vunpack.c.h.b16 %v4049
        %v5444 = vunpack.c.l.b16 %v4050
        %v5445 = vunpack.c.h.b16 %v4050
        %v5446 = vunpack.c.l.b16 %v4051
        %v5447 = vunpack.c.h.b16 %v4051
        %v5448 = vunpack.c.l.b16 %v4052
        %v5449 = vunpack.c.h.b16 %v4052
        %v5450 = vunpack.c.l.b16 %v4053
        %v5451 = vunpack.c.h.b16 %v4053
        %v5452 = vunpack.c.l.b16 %v4054
        %v5453 = vunpack.c.h.b16 %v4054
        %v5454 = vunpack.c.l.b16 %v4055
        %v5455 = vunpack.c.h.b16 %v4055
        %v5456 = vunpack.c.l.b16 %v4056
        %v5457 = vunpack.c.h.b16 %v4056
        %v5458 = vunpack.c.l.b16 %v4057
        %v5459 = vunpack.c.h.b16 %v4057
        %v5460 = vunpack.c.l.b16 %v4058
        %v5461 = vunpack.c.h.b16 %v4058
        %v5462 = vunpack.c.l.b16 %v4059
        %v5463 = vunpack.c.h.b16 %v4059
        %v5464 = vunpack.c.l.b16 %v4060
        %v5465 = vunpack.c.h.b16 %v4060
        %v5466 = vunpack.c.l.b16 %v4061
        %v5467 = vunpack.c.h.b16 %v4061
        %v5468 = vunpack.c.l.b16 %v4062
        %v5469 = vunpack.c.h.b16 %v4062
        %v5470 = vunpack.c.l.b16 %v4063
        %v5471 = vunpack.c.h.b16 %v4063
        %v5472 = vunpack.c.l.b16 %v4064
        %v5473 = vunpack.c.h.b16 %v4064
        %v5474 = vunpack.c.l.b16 %v4065
        %v5475 = vunpack.c.h.b16 %v4065
        %v5476 = vunpack.c.l.b16 %v4066
        %v5477 = vunpack.c.h.b16 %v4066
        %v5478 = vunpack.c.l.b16 %v4067
        %v5479 = vunpack.c.h.b16 %v4067
        %v5480 = vunpack.c.l.b16 %v4068
        %v5481 = vunpack.c.h.b16 %v4068
        %v5482 = vunpack.c.l.b16 %v4069
        %v5483 = vunpack.c.h.b16 %v4069
        %v5484 = vunpack.c.l.b16 %v4070
        %v5485 = vunpack.c.h.b16 %v4070
        %v5486 = vunpack.c.l.b16 %v4071
        %v5487 = vunpack.c.h.b16 %v4071
        %v5488 = vunpack.c.l.b16 %v4072
        %v5489 = vunpack.c.h.b16 %v4072
        %v5490 = vunpack.c.l.b16 %v4073
        %v5491 = vunpack.c.h.b16 %v4073
        %v5492 = vunpack.c.l.b16 %v4074
        %v5493 = vunpack.c.h.b16 %v4074
        %v5494 = vunpack.c.l.b16 %v4075
        %v5495 = vunpack.c.h.b16 %v4075
        %v5496 = vunpack.c.l.b16 %v4076
        %v5497 = vunpack.c.h.b16 %v4076
        %v5498 = vunpack.c.l.b16 %v4077
        %v5499 = vunpack.c.h.b16 %v4077
        %v5500 = vunpack.c.l.b16 %v4078
        %v5501 = vunpack.c.h.b16 %v4078
        %v5502 = vunpack.c.l.b16 %v4079
        %v5503 = vunpack.c.h.b16 %v4079
        %v5504 = vunpack.c.l.b16 %v4080
        %v5505 = vunpack.c.h.b16 %v4080
        %v5506 = vunpack.c.l.b16 %v4081
        %v5507 = vunpack.c.h.b16 %v4081
        %v5508 = vunpack.c.l.b16 %v4082
        %v5509 = vunpack.c.h.b16 %v4082
        %v5510 = vunpack.c.l.b16 %v4083
        %v5511 = vunpack.c.h.b16 %v4083
        %v5512 = vunpack.c.l.b16 %v4084
        %v5513 = vunpack.c.h.b16 %v4084
        %v5514 = vunpack.c.l.b16 %v4085
        %v5515 = vunpack.c.h.b16 %v4085
        %v5516 = vunpack.c.l.b16 %v4086
        %v5517 = vunpack.c.h.b16 %v4086
        %v5518 = vunpack.c.l.b16 %v4087
        %v5519 = vunpack.c.h.b16 %v4087
        %v5520 = vunpack.c.l.b16 %v4088
        %v5521 = vunpack.c.h.b16 %v4088
        %v5522 = vunpack.c.l.b16 %v4089
        %v5523 = vunpack.c.h.b16 %v4089
        %v5524 = vunpack.c.l.b16 %v4090
        %v5525 = vunpack.c.h.b16 %v4090
        %v5526 = vunpack.c.l.b16 %v4091
        %v5527 = vunpack.c.h.b16 %v4091
        %v5528 = vunpack.c.l.b16 %v4092
        %v5529 = vunpack.c.h.b16 %v4092
        %v5530 = vunpack.c.l.b16 %v4093
        %v5531 = vunpack.c.h.b16 %v4093
        %v5532 = vunpack.c.l.b16 %v4094
        %v5533 = vunpack.c.h.b16 %v4094
        %v5534 = vunpack.c.l.b16 %v4095
        %v5535 = vunpack.c.h.b16 %v4095
        %v5536 = vunpack.c.l.b16 %v4096
        %v5537 = vunpack.c.h.b16 %v4096
        %v5538 = vunpack.c.l.b16 %v4097
        %v5539 = vunpack.c.h.b16 %v4097
        %v5540 = vunpack.c.l.b16 %v4098
        %v5541 = vunpack.c.h.b16 %v4098
        %v5542 = vunpack.c.l.b16 %v4099
        %v5543 = vunpack.c.h.b16 %v4099
        %v5544 = vunpack.c.l.b16 %v4100
        %v5545 = vunpack.c.h.b16 %v4100
        %v5546 = vunpack.c.l.b16 %v4101
        %v5547 = vunpack.c.h.b16 %v4101
        %v5548 = vunpack.c.l.b16 %v4102
        %v5549 = vunpack.c.h.b16 %v4102
        %v5550 = vunpack.c.l.b16 %v4103
        %v5551 = vunpack.c.h.b16 %v4103
        %v5552 = vunpack.c.l.b16 %v4104
        %v5553 = vunpack.c.h.b16 %v4104
        %v5554 = vunpack.c.l.b16 %v4105
        %v5555 = vunpack.c.h.b16 %v4105
        %v5556 = vunpack.c.l.b16 %v4106
        %v5557 = vunpack.c.h.b16 %v4106
        %v5558 = vunpack.c.l.b16 %v4107
        %v5559 = vunpack.c.h.b16 %v4107
        %v5560 = vunpack.c.l.b16 %v4108
        %v5561 = vunpack.c.h.b16 %v4108
        %v5562 = vunpack.c.l.b16 %v4109
        %v5563 = vunpack.c.h.b16 %v4109
        %v5564 = vunpack.c.l.b16 %v4110
        %v5565 = vunpack.c.h.b16 %v4110
        %v5566 = vunpack.c.l.b16 %v4111
        %v5567 = vunpack.c.h.b16 %v4111
        %v5568 = vunpack.c.l.b16 %v4112
        %v5569 = vunpack.c.h.b16 %v4112
        %v5570 = vunpack.c.l.b16 %v4113
        %v5571 = vunpack.c.h.b16 %v4113
        %v5572 = vunpack.c.l.b16 %v4114
        %v5573 = vunpack.c.h.b16 %v4114
        %v5574 = vunpack.c.l.b16 %v4115
        %v5575 = vunpack.c.h.b16 %v4115
        %v5576 = vunpack.c.l.b16 %v4116
        %v5577 = vunpack.c.h.b16 %v4116
        %v5578 = vunpack.c.l.b16 %v4117
        %v5579 = vunpack.c.h.b16 %v4117
        %v5580 = vunpack.c.l.b16 %v4118
        %v5581 = vunpack.c.h.b16 %v4118
        %v5582 = vunpack.c.l.b16 %v4119
        %v5583 = vunpack.c.h.b16 %v4119
        %v5584 = vunpack.c.l.b16 %v4120
        %v5585 = vunpack.c.h.b16 %v4120
        %v5586 = vunpack.c.l.b16 %v4121
        %v5587 = vunpack.c.h.b16 %v4121
        %v5588 = vunpack.c.l.b16 %v4122
        %v5589 = vunpack.c.h.b16 %v4122
        %v5590 = vunpack.c.l.b16 %v4123
        %v5591 = vunpack.c.h.b16 %v4123
        %v5592 = vunpack.c.l.b16 %v4124
        %v5593 = vunpack.c.h.b16 %v4124
        %v5594 = vunpack.c.l.b16 %v4125
        %v5595 = vunpack.c.h.b16 %v4125
        %v5596 = vunpack.c.l.b16 %v4126
        %v5597 = vunpack.c.h.b16 %v4126
        %v5598 = vunpack.c.l.b16 %v4127
        %v5599 = vunpack.c.h.b16 %v4127
        %v5600 = vunpack.c.l.b16 %v4128
        %v5601 = vunpack.c.h.b16 %v4128
        %v5602 = vunpack.c.l.b16 %v4129
        %v5603 = vunpack.c.h.b16 %v4129
        %v5604 = vunpack.c.l.b16 %v4130
        %v5605 = vunpack.c.h.b16 %v4130
        %v5606 = vunpack.c.l.b16 %v4131
        %v5607 = vunpack.c.h.b16 %v4131
        %v5608 = vunpack.c.l.b16 %v4132
        %v5609 = vunpack.c.h.b16 %v4132
        %v5610 = vunpack.c.l.b16 %v4133
        %v5611 = vunpack.c.h.b16 %v4133
        %v5612 = vunpack.c.l.b16 %v4134
        %v5613 = vunpack.c.h.b16 %v4134
        %v5614 = vunpack.c.l.b16 %v4135
        %v5615 = vunpack.c.h.b16 %v4135
        %v5616 = vunpack.c.l.b16 %v4136
        %v5617 = vunpack.c.h.b16 %v4136
        %v5618 = vunpack.c.l.b16 %v4137
        %v5619 = vunpack.c.h.b16 %v4137
        %v5620 = vunpack.c.l.b16 %v4138
        %v5621 = vunpack.c.h.b16 %v4138
        %v5622 = vunpack.c.l.b16 %v4139
        %v5623 = vunpack.c.h.b16 %v4139
        %v5624 = vunpack.c.l.b16 %v4140
        %v5625 = vunpack.c.h.b16 %v4140
        %v5626 = vunpack.c.l.b16 %v4141
        %v5627 = vunpack.c.h.b16 %v4141
        %v5628 = vunpack.c.l.b16 %v4142
        %v5629 = vunpack.c.h.b16 %v4142
        %v5630 = vunpack.c.l.b16 %v4143
        %v5631 = vunpack.c.h.b16 %v4143
        %v5632 = vunpack.c.l.b16 %v4144
        %v5633 = vunpack.c.h.b16 %v4144
        %v5634 = vunpack.c.l.b16 %v4145
        %v5635 = vunpack.c.h.b16 %v4145
        %v5636 = vunpack.c.l.b16 %v4146
        %v5637 = vunpack.c.h.b16 %v4146
        %v5638 = vunpack.c.l.b16 %v4147
        %v5639 = vunpack.c.h.b16 %v4147
        %v5640 = vunpack.c.l.b16 %v4148
        %v5641 = vunpack.c.h.b16 %v4148
        %v5642 = vunpack.c.l.b16 %v4149
        %v5643 = vunpack.c.h.b16 %v4149
        %v5644 = vunpack.c.l.b16 %v4150
        %v5645 = vunpack.c.h.b16 %v4150
        %v5646 = vunpack.c.l.b16 %v4151
        %v5647 = vunpack.c.h.b16 %v4151
        %v5648 = vunpack.c.l.b16 %v4152
        %v5649 = vunpack.c.h.b16 %v4152
        %v5650 = vunpack.c.l.b16 %v4153
        %v5651 = vunpack.c.h.b16 %v4153
        %v5652 = vunpack.c.l.b16 %v4154
        %v5653 = vunpack.c.h.b16 %v4154
        %v5654 = vunpack.c.l.b16 %v4155
        %v5655 = vunpack.c.h.b16 %v4155
        %v5656 = vunpack.c.l.b16 %v4156
        %v5657 = vunpack.c.h.b16 %v4156
        %v5658 = vunpack.c.l.b16 %v4157
        %v5659 = vunpack.c.h.b16 %v4157
        %v5660 = vunpack.c.l.b16 %v4158
        %v5661 = vunpack.c.h.b16 %v4158
        %v5662 = vunpack.c.l.b16 %v4159
        %v5663 = vunpack.c.h.b16 %v4159
        %v5664 = vunpack.c.l.b16 %v4160
        %v5665 = vunpack.c.h.b16 %v4160
        %v5666 = vunpack.c.l.b16 %v4161
        %v5667 = vunpack.c.h.b16 %v4161
        %v5668 = vunpack.c.l.b16 %v4162
        %v5669 = vunpack.c.h.b16 %v4162
        %v5670 = vunpack.c.l.b16 %v4163
        %v5671 = vunpack.c.h.b16 %v4163
        %v5672 = vunpack.c.l.b16 %v4164
        %v5673 = vunpack.c.h.b16 %v4164
        %v5674 = vunpack.c.l.b16 %v4165
        %v5675 = vunpack.c.h.b16 %v4165
        %v5676 = vunpack.c.l.b16 %v4166
        %v5677 = vunpack.c.h.b16 %v4166
        %v5678 = vunpack.c.l.b16 %v4167
        %v5679 = vunpack.c.h.b16 %v4167
        %v5680 = vunpack.c.l.b16 %v4168
        %v5681 = vunpack.c.h.b16 %v4168
        %v5682 = vunpack.c.l.b16 %v4169
        %v5683 = vunpack.c.h.b16 %v4169
        %v5684 = vunpack.c.l.b16 %v4170
        %v5685 = vunpack.c.h.b16 %v4170
        %v5686 = vunpack.c.l.b16 %v4171
        %v5687 = vunpack.c.h.b16 %v4171
        %v5688 = vunpack.c.l.b16 %v4172
        %v5689 = vunpack.c.h.b16 %v4172
        %v5690 = vunpack.c.l.b16 %v4173
        %v5691 = vunpack.c.h.b16 %v4173
        %v5692 = vunpack.c.l.b16 %v4174
        %v5693 = vunpack.c.h.b16 %v4174
        %v5694 = vunpack.c.l.b16 %v4175
        %v5695 = vunpack.c.h.b16 %v4175
        %v5696 = vunpack.c.l.b16 %v4176
        %v5697 = vunpack.c.h.b16 %v4176
        %v5698 = vunpack.c.l.b16 %v4177
        %v5699 = vunpack.c.h.b16 %v4177
        %v5700 = vunpack.c.l.b16 %v4178
        %v5701 = vunpack.c.h.b16 %v4178
        %v5702 = vunpack.c.l.b16 %v4179
        %v5703 = vunpack.c.h.b16 %v4179
        %v5704 = vunpack.c.l.b16 %v4180
        %v5705 = vunpack.c.h.b16 %v4180
        %v5706 = vunpack.c.l.b16 %v4181
        %v5707 = vunpack.c.h.b16 %v4181
        %v5708 = vunpack.c.l.b16 %v4182
        %v5709 = vunpack.c.h.b16 %v4182
        %v5710 = vunpack.c.l.b16 %v4183
        %v5711 = vunpack.c.h.b16 %v4183
        %v5712 = vunpack.c.l.b16 %v4184
        %v5713 = vunpack.c.h.b16 %v4184
        %v5714 = vunpack.c.l.b16 %v4185
        %v5715 = vunpack.c.h.b16 %v4185
        %v5716 = vunpack.c.l.b16 %v4186
        %v5717 = vunpack.c.h.b16 %v4186
        %v5718 = vunpack.c.l.b16 %v4187
        %v5719 = vunpack.c.h.b16 %v4187
        %v5720 = vunpack.c.l.b16 %v4188
        %v5721 = vunpack.c.h.b16 %v4188
        %v5722 = vunpack.c.l.b16 %v4189
        %v5723 = vunpack.c.h.b16 %v4189
        %v5724 = vunpack.c.l.b16 %v4190
        %v5725 = vunpack.c.h.b16 %v4190
        %v5726 = vunpack.c.l.b16 %v4191
        %v5727 = vunpack.c.h.b16 %v4191
        %v5728 = vunpack.c.l.b16 %v4192
        %v5729 = vunpack.c.h.b16 %v4192
        %v5730 = vpack.c.b16 %v4710, %v4706
        %v5731 = vpack.c.b16 %v4711, %v4707
        %v5732 = vpack.c.b16 %v4712, %v4708
        %v5733 = vpack.c.b16 %v4713, %v4709
        %v5734 = vpack.c.b16 %v4718, %v4714
        %v5735 = vpack.c.b16 %v4719, %v4715
        %v5736 = vpack.c.b16 %v4720, %v4716
        %v5737 = vpack.c.b16 %v4721, %v4717
        %v5738 = vpack.c.b16 %v4726, %v4722
        %v5739 = vpack.c.b16 %v4727, %v4723
        %v5740 = vpack.c.b16 %v4728, %v4724
        %v5741 = vpack.c.b16 %v4729, %v4725
        %v5742 = vpack.c.b16 %v4734, %v4730
        %v5743 = vpack.c.b16 %v4735, %v4731
        %v5744 = vpack.c.b16 %v4736, %v4732
        %v5745 = vpack.c.b16 %v4737, %v4733
        %v5746 = vpack.c.b16 %v4742, %v4738
        %v5747 = vpack.c.b16 %v4743, %v4739
        %v5748 = vpack.c.b16 %v4744, %v4740
        %v5749 = vpack.c.b16 %v4745, %v4741
        %v5750 = vpack.c.b16 %v4750, %v4746
        %v5751 = vpack.c.b16 %v4751, %v4747
        %v5752 = vpack.c.b16 %v4752, %v4748
        %v5753 = vpack.c.b16 %v4753, %v4749
        %v5754 = vpack.c.b16 %v4758, %v4754
        %v5755 = vpack.c.b16 %v4759, %v4755
        %v5756 = vpack.c.b16 %v4760, %v4756
        %v5757 = vpack.c.b16 %v4761, %v4757
        %v5758 = vpack.c.b16 %v4766, %v4762
        %v5759 = vpack.c.b16 %v4767, %v4763
        %v5760 = vpack.c.b16 %v4768, %v4764
        %v5761 = vpack.c.b16 %v4769, %v4765
        %v5762 = vpack.c.b16 %v4774, %v4770
        %v5763 = vpack.c.b16 %v4775, %v4771
        %v5764 = vpack.c.b16 %v4776, %v4772
        %v5765 = vpack.c.b16 %v4777, %v4773
        %v5766 = vpack.c.b16 %v4782, %v4778
        %v5767 = vpack.c.b16 %v4783, %v4779
        %v5768 = vpack.c.b16 %v4784, %v4780
        %v5769 = vpack.c.b16 %v4785, %v4781
        %v5770 = vpack.c.b16 %v4790, %v4786
        %v5771 = vpack.c.b16 %v4791, %v4787
        %v5772 = vpack.c.b16 %v4792, %v4788
        %v5773 = vpack.c.b16 %v4793, %v4789
        %v5774 = vpack.c.b16 %v4798, %v4794
        %v5775 = vpack.c.b16 %v4799, %v4795
        %v5776 = vpack.c.b16 %v4800, %v4796
        %v5777 = vpack.c.b16 %v4801, %v4797
        %v5778 = vpack.c.b16 %v4806, %v4802
        %v5779 = vpack.c.b16 %v4807, %v4803
        %v5780 = vpack.c.b16 %v4808, %v4804
        %v5781 = vpack.c.b16 %v4809, %v4805
        %v5782 = vpack.c.b16 %v4814, %v4810
        %v5783 = vpack.c.b16 %v4815, %v4811
        %v5784 = vpack.c.b16 %v4816, %v4812
        %v5785 = vpack.c.b16 %v4817, %v4813
        %v5786 = vpack.c.b16 %v4822, %v4818
        %v5787 = vpack.c.b16 %v4823, %v4819
        %v5788 = vpack.c.b16 %v4824, %v4820
        %v5789 = vpack.c.b16 %v4825, %v4821
        %v5790 = vpack.c.b16 %v4830, %v4826
        %v5791 = vpack.c.b16 %v4831, %v4827
        %v5792 = vpack.c.b16 %v4832, %v4828
        %v5793 = vpack.c.b16 %v4833, %v4829
        %v5794 = vpack.c.b16 %v4838, %v4834
        %v5795 = vpack.c.b16 %v4839, %v4835
        %v5796 = vpack.c.b16 %v4840, %v4836
        %v5797 = vpack.c.b16 %v4841, %v4837
        %v5798 = vpack.c.b16 %v4846, %v4842
        %v5799 = vpack.c.b16 %v4847, %v4843
        %v5800 = vpack.c.b16 %v4848, %v4844
        %v5801 = vpack.c.b16 %v4849, %v4845
        %v5802 = vpack.c.b16 %v4854, %v4850
        %v5803 = vpack.c.b16 %v4855, %v4851
        %v5804 = vpack.c.b16 %v4856, %v4852
        %v5805 = vpack.c.b16 %v4857, %v4853
        %v5806 = vpack.c.b16 %v4862, %v4858
        %v5807 = vpack.c.b16 %v4863, %v4859
        %v5808 = vpack.c.b16 %v4864, %v4860
        %v5809 = vpack.c.b16 %v4865, %v4861
        %v5810 = vpack.c.b16 %v4870, %v4866
        %v5811 = vpack.c.b16 %v4871, %v4867
        %v5812 = vpack.c.b16 %v4872, %v4868
        %v5813 = vpack.c.b16 %v4873, %v4869
        %v5814 = vpack.c.b16 %v4878, %v4874
        %v5815 = vpack.c.b16 %v4879, %v4875
        %v5816 = vpack.c.b16 %v4880, %v4876
        %v5817 = vpack.c.b16 %v4881, %v4877
        %v5818 = vpack.c.b16 %v4886, %v4882
        %v5819 = vpack.c.b16 %v4887, %v4883
        %v5820 = vpack.c.b16 %v4888, %v4884
        %v5821 = vpack.c.b16 %v4889, %v4885
        %v5822 = vpack.c.b16 %v4894, %v4890
        %v5823 = vpack.c.b16 %v4895, %v4891
        %v5824 = vpack.c.b16 %v4896, %v4892
        %v5825 = vpack.c.b16 %v4897, %v4893
        %v5826 = vpack.c.b16 %v4902, %v4898
        %v5827 = vpack.c.b16 %v4903, %v4899
        %v5828 = vpack.c.b16 %v4904, %v4900
        %v5829 = vpack.c.b16 %v4905, %v4901
        %v5830 = vpack.c.b16 %v4910, %v4906
        %v5831 = vpack.c.b16 %v4911, %v4907
        %v5832 = vpack.c.b16 %v4912, %v4908
        %v5833 = vpack.c.b16 %v4913, %v4909
        %v5834 = vpack.c.b16 %v4918, %v4914
        %v5835 = vpack.c.b16 %v4919, %v4915
        %v5836 = vpack.c.b16 %v4920, %v4916
        %v5837 = vpack.c.b16 %v4921, %v4917
        %v5838 = vpack.c.b16 %v4926, %v4922
        %v5839 = vpack.c.b16 %v4927, %v4923
        %v5840 = vpack.c.b16 %v4928, %v4924
        %v5841 = vpack.c.b16 %v4929, %v4925
        %v5842 = vpack.c.b16 %v4934, %v4930
        %v5843 = vpack.c.b16 %v4935, %v4931
        %v5844 = vpack.c.b16 %v4936, %v4932
        %v5845 = vpack.c.b16 %v4937, %v4933
        %v5846 = vpack.c.b16 %v4942, %v4938
        %v5847 = vpack.c.b16 %v4943, %v4939
        %v5848 = vpack.c.b16 %v4944, %v4940
        %v5849 = vpack.c.b16 %v4945, %v4941
        %v5850 = vpack.c.b16 %v4950, %v4946
        %v5851 = vpack.c.b16 %v4951, %v4947
        %v5852 = vpack.c.b16 %v4952, %v4948
        %v5853 = vpack.c.b16 %v4953, %v4949
        %v5854 = vpack.c.b16 %v4958, %v4954
        %v5855 = vpack.c.b16 %v4959, %v4955
        %v5856 = vpack.c.b16 %v4960, %v4956
        %v5857 = vpack.c.b16 %v4961, %v4957
        %v5858 = vpack.c.b16 %v4966, %v4962
        %v5859 = vpack.c.b16 %v4967, %v4963
        %v5860 = vpack.c.b16 %v4968, %v4964
        %v5861 = vpack.c.b16 %v4969, %v4965
        %v5862 = vpack.c.b16 %v4974, %v4970
        %v5863 = vpack.c.b16 %v4975, %v4971
        %v5864 = vpack.c.b16 %v4976, %v4972
        %v5865 = vpack.c.b16 %v4977, %v4973
        %v5866 = vpack.c.b16 %v4982, %v4978
        %v5867 = vpack.c.b16 %v4983, %v4979
        %v5868 = vpack.c.b16 %v4984, %v4980
        %v5869 = vpack.c.b16 %v4985, %v4981
        %v5870 = vpack.c.b16 %v4990, %v4986
        %v5871 = vpack.c.b16 %v4991, %v4987
        %v5872 = vpack.c.b16 %v4992, %v4988
        %v5873 = vpack.c.b16 %v4993, %v4989
        %v5874 = vpack.c.b16 %v4998, %v4994
        %v5875 = vpack.c.b16 %v4999, %v4995
        %v5876 = vpack.c.b16 %v5000, %v4996
        %v5877 = vpack.c.b16 %v5001, %v4997
        %v5878 = vpack.c.b16 %v5006, %v5002
        %v5879 = vpack.c.b16 %v5007, %v5003
        %v5880 = vpack.c.b16 %v5008, %v5004
        %v5881 = vpack.c.b16 %v5009, %v5005
        %v5882 = vpack.c.b16 %v5014, %v5010
        %v5883 = vpack.c.b16 %v5015, %v5011
        %v5884 = vpack.c.b16 %v5016, %v5012
        %v5885 = vpack.c.b16 %v5017, %v5013
        %v5886 = vpack.c.b16 %v5022, %v5018
        %v5887 = vpack.c.b16 %v5023, %v5019
        %v5888 = vpack.c.b16 %v5024, %v5020
        %v5889 = vpack.c.b16 %v5025, %v5021
        %v5890 = vpack.c.b16 %v5030, %v5026
        %v5891 = vpack.c.b16 %v5031, %v5027
        %v5892 = vpack.c.b16 %v5032, %v5028
        %v5893 = vpack.c.b16 %v5033, %v5029
        %v5894 = vpack.c.b16 %v5038, %v5034
        %v5895 = vpack.c.b16 %v5039, %v5035
        %v5896 = vpack.c.b16 %v5040, %v5036
        %v5897 = vpack.c.b16 %v5041, %v5037
        %v5898 = vpack.c.b16 %v5046, %v5042
        %v5899 = vpack.c.b16 %v5047, %v5043
        %v5900 = vpack.c.b16 %v5048, %v5044
        %v5901 = vpack.c.b16 %v5049, %v5045
        %v5902 = vpack.c.b16 %v5054, %v5050
        %v5903 = vpack.c.b16 %v5055, %v5051
        %v5904 = vpack.c.b16 %v5056, %v5052
        %v5905 = vpack.c.b16 %v5057, %v5053
        %v5906 = vpack.c.b16 %v5062, %v5058
        %v5907 = vpack.c.b16 %v5063, %v5059
        %v5908 = vpack.c.b16 %v5064, %v5060
        %v5909 = vpack.c.b16 %v5065, %v5061
        %v5910 = vpack.c.b16 %v5070, %v5066
        %v5911 = vpack.c.b16 %v5071, %v5067
        %v5912 = vpack.c.b16 %v5072, %v5068
        %v5913 = vpack.c.b16 %v5073, %v5069
        %v5914 = vpack.c.b16 %v5078, %v5074
        %v5915 = vpack.c.b16 %v5079, %v5075
        %v5916 = vpack.c.b16 %v5080, %v5076
        %v5917 = vpack.c.b16 %v5081, %v5077
        %v5918 = vpack.c.b16 %v5086, %v5082
        %v5919 = vpack.c.b16 %v5087, %v5083
        %v5920 = vpack.c.b16 %v5088, %v5084
        %v5921 = vpack.c.b16 %v5089, %v5085
        %v5922 = vpack.c.b16 %v5094, %v5090
        %v5923 = vpack.c.b16 %v5095, %v5091
        %v5924 = vpack.c.b16 %v5096, %v5092
        %v5925 = vpack.c.b16 %v5097, %v5093
        %v5926 = vpack.c.b16 %v5102, %v5098
        %v5927 = vpack.c.b16 %v5103, %v5099
        %v5928 = vpack.c.b16 %v5104, %v5100
        %v5929 = vpack.c.b16 %v5105, %v5101
        %v5930 = vpack.c.b16 %v5110, %v5106
        %v5931 = vpack.c.b16 %v5111, %v5107
        %v5932 = vpack.c.b16 %v5112, %v5108
        %v5933 = vpack.c.b16 %v5113, %v5109
        %v5934 = vpack.c.b16 %v5118, %v5114
        %v5935 = vpack.c.b16 %v5119, %v5115
        %v5936 = vpack.c.b16 %v5120, %v5116
        %v5937 = vpack.c.b16 %v5121, %v5117
        %v5938 = vpack.c.b16 %v5126, %v5122
        %v5939 = vpack.c.b16 %v5127, %v5123
        %v5940 = vpack.c.b16 %v5128, %v5124
        %v5941 = vpack.c.b16 %v5129, %v5125
        %v5942 = vpack.c.b16 %v5134, %v5130
        %v5943 = vpack.c.b16 %v5135, %v5131
        %v5944 = vpack.c.b16 %v5136, %v5132
        %v5945 = vpack.c.b16 %v5137, %v5133
        %v5946 = vpack.c.b16 %v5142, %v5138
        %v5947 = vpack.c.b16 %v5143, %v5139
        %v5948 = vpack.c.b16 %v5144, %v5140
        %v5949 = vpack.c.b16 %v5145, %v5141
        %v5950 = vpack.c.b16 %v5150, %v5146
        %v5951 = vpack.c.b16 %v5151, %v5147
        %v5952 = vpack.c.b16 %v5152, %v5148
        %v5953 = vpack.c.b16 %v5153, %v5149
        %v5954 = vpack.c.b16 %v5158, %v5154
        %v5955 = vpack.c.b16 %v5159, %v5155
        %v5956 = vpack.c.b16 %v5160, %v5156
        %v5957 = vpack.c.b16 %v5161, %v5157
        %v5958 = vpack.c.b16 %v5166, %v5162
        %v5959 = vpack.c.b16 %v5167, %v5163
        %v5960 = vpack.c.b16 %v5168, %v5164
        %v5961 = vpack.c.b16 %v5169, %v5165
        %v5962 = vpack.c.b16 %v5174, %v5170
        %v5963 = vpack.c.b16 %v5175, %v5171
        %v5964 = vpack.c.b16 %v5176, %v5172
        %v5965 = vpack.c.b16 %v5177, %v5173
        %v5966 = vpack.c.b16 %v5182, %v5178
        %v5967 = vpack.c.b16 %v5183, %v5179
        %v5968 = vpack.c.b16 %v5184, %v5180
        %v5969 = vpack.c.b16 %v5185, %v5181
        %v5970 = vpack.c.b16 %v5190, %v5186
        %v5971 = vpack.c.b16 %v5191, %v5187
        %v5972 = vpack.c.b16 %v5192, %v5188
        %v5973 = vpack.c.b16 %v5193, %v5189
        %v5974 = vpack.c.b16 %v5198, %v5194
        %v5975 = vpack.c.b16 %v5199, %v5195
        %v5976 = vpack.c.b16 %v5200, %v5196
        %v5977 = vpack.c.b16 %v5201, %v5197
        %v5978 = vpack.c.b16 %v5206, %v5202
        %v5979 = vpack.c.b16 %v5207, %v5203
        %v5980 = vpack.c.b16 %v5208, %v5204
        %v5981 = vpack.c.b16 %v5209, %v5205
        %v5982 = vpack.c.b16 %v5214, %v5210
        %v5983 = vpack.c.b16 %v5215, %v5211
        %v5984 = vpack.c.b16 %v5216, %v5212
        %v5985 = vpack.c.b16 %v5217, %v5213
        %v5986 = vpack.c.b16 %v5222, %v5218
        %v5987 = vpack.c.b16 %v5223, %v5219
        %v5988 = vpack.c.b16 %v5224, %v5220
        %v5989 = vpack.c.b16 %v5225, %v5221
        %v5990 = vpack.c.b16 %v5230, %v5226
        %v5991 = vpack.c.b16 %v5231, %v5227
        %v5992 = vpack.c.b16 %v5232, %v5228
        %v5993 = vpack.c.b16 %v5233, %v5229
        %v5994 = vpack.c.b16 %v5238, %v5234
        %v5995 = vpack.c.b16 %v5239, %v5235
        %v5996 = vpack.c.b16 %v5240, %v5236
        %v5997 = vpack.c.b16 %v5241, %v5237
        %v5998 = vpack.c.b16 %v5246, %v5242
        %v5999 = vpack.c.b16 %v5247, %v5243
        %v6000 = vpack.c.b16 %v5248, %v5244
        %v6001 = vpack.c.b16 %v5249, %v5245
        %v6002 = vpack.c.b16 %v5254, %v5250
        %v6003 = vpack.c.b16 %v5255, %v5251
        %v6004 = vpack.c.b16 %v5256, %v5252
        %v6005 = vpack.c.b16 %v5257, %v5253
        %v6006 = vpack.c.b16 %v5262, %v5258
        %v6007 = vpack.c.b16 %v5263, %v5259
        %v6008 = vpack.c.b16 %v5264, %v5260
        %v6009 = vpack.c.b16 %v5265, %v5261
        %v6010 = vpack.c.b16 %v5270, %v5266
        %v6011 = vpack.c.b16 %v5271, %v5267
        %v6012 = vpack.c.b16 %v5272, %v5268
        %v6013 = vpack.c.b16 %v5273, %v5269
        %v6014 = vpack.c.b16 %v5278, %v5274
        %v6015 = vpack.c.b16 %v5279, %v5275
        %v6016 = vpack.c.b16 %v5280, %v5276
        %v6017 = vpack.c.b16 %v5281, %v5277
        %v6018 = vpack.c.b16 %v5286, %v5282
        %v6019 = vpack.c.b16 %v5287, %v5283
        %v6020 = vpack.c.b16 %v5288, %v5284
        %v6021 = vpack.c.b16 %v5289, %v5285
        %v6022 = vpack.c.b16 %v5294, %v5290
        %v6023 = vpack.c.b16 %v5295, %v5291
        %v6024 = vpack.c.b16 %v5296, %v5292
        %v6025 = vpack.c.b16 %v5297, %v5293
        %v6026 = vpack.c.b16 %v5302, %v5298
        %v6027 = vpack.c.b16 %v5303, %v5299
        %v6028 = vpack.c.b16 %v5304, %v5300
        %v6029 = vpack.c.b16 %v5305, %v5301
        %v6030 = vpack.c.b16 %v5310, %v5306
        %v6031 = vpack.c.b16 %v5311, %v5307
        %v6032 = vpack.c.b16 %v5312, %v5308
        %v6033 = vpack.c.b16 %v5313, %v5309
        %v6034 = vpack.c.b16 %v5318, %v5314
        %v6035 = vpack.c.b16 %v5319, %v5315
        %v6036 = vpack.c.b16 %v5320, %v5316
        %v6037 = vpack.c.b16 %v5321, %v5317
        %v6038 = vpack.c.b16 %v5326, %v5322
        %v6039 = vpack.c.b16 %v5327, %v5323
        %v6040 = vpack.c.b16 %v5328, %v5324
        %v6041 = vpack.c.b16 %v5329, %v5325
        %v6042 = vpack.c.b16 %v5334, %v5330
        %v6043 = vpack.c.b16 %v5335, %v5331
        %v6044 = vpack.c.b16 %v5336, %v5332
        %v6045 = vpack.c.b16 %v5337, %v5333
        %v6046 = vpack.c.b16 %v5342, %v5338
        %v6047 = vpack.c.b16 %v5343, %v5339
        %v6048 = vpack.c.b16 %v5344, %v5340
        %v6049 = vpack.c.b16 %v5345, %v5341
        %v6050 = vpack.c.b16 %v5350, %v5346
        %v6051 = vpack.c.b16 %v5351, %v5347
        %v6052 = vpack.c.b16 %v5352, %v5348
        %v6053 = vpack.c.b16 %v5353, %v5349
        %v6054 = vpack.c.b16 %v5358, %v5354
        %v6055 = vpack.c.b16 %v5359, %v5355
        %v6056 = vpack.c.b16 %v5360, %v5356
        %v6057 = vpack.c.b16 %v5361, %v5357
        %v6058 = vpack.c.b16 %v5366, %v5362
        %v6059 = vpack.c.b16 %v5367, %v5363
        %v6060 = vpack.c.b16 %v5368, %v5364
        %v6061 = vpack.c.b16 %v5369, %v5365
        %v6062 = vpack.c.b16 %v5374, %v5370
        %v6063 = vpack.c.b16 %v5375, %v5371
        %v6064 = vpack.c.b16 %v5376, %v5372
        %v6065 = vpack.c.b16 %v5377, %v5373
        %v6066 = vpack.c.b16 %v5382, %v5378
        %v6067 = vpack.c.b16 %v5383, %v5379
        %v6068 = vpack.c.b16 %v5384, %v5380
        %v6069 = vpack.c.b16 %v5385, %v5381
        %v6070 = vpack.c.b16 %v5390, %v5386
        %v6071 = vpack.c.b16 %v5391, %v5387
        %v6072 = vpack.c.b16 %v5392, %v5388
        %v6073 = vpack.c.b16 %v5393, %v5389
        %v6074 = vpack.c.b16 %v5398, %v5394
        %v6075 = vpack.c.b16 %v5399, %v5395
        %v6076 = vpack.c.b16 %v5400, %v5396
        %v6077 = vpack.c.b16 %v5401, %v5397
        %v6078 = vpack.c.b16 %v5406, %v5402
        %v6079 = vpack.c.b16 %v5407, %v5403
        %v6080 = vpack.c.b16 %v5408, %v5404
        %v6081 = vpack.c.b16 %v5409, %v5405
        %v6082 = vpack.c.b16 %v5414, %v5410
        %v6083 = vpack.c.b16 %v5415, %v5411
        %v6084 = vpack.c.b16 %v5416, %v5412
        %v6085 = vpack.c.b16 %v5417, %v5413
        %v6086 = vpack.c.b16 %v5422, %v5418
        %v6087 = vpack.c.b16 %v5423, %v5419
        %v6088 = vpack.c.b16 %v5424, %v5420
        %v6089 = vpack.c.b16 %v5425, %v5421
        %v6090 = vpack.c.b16 %v5430, %v5426
        %v6091 = vpack.c.b16 %v5431, %v5427
        %v6092 = vpack.c.b16 %v5432, %v5428
        %v6093 = vpack.c.b16 %v5433, %v5429
        %v6094 = vpack.c.b16 %v5438, %v5434
        %v6095 = vpack.c.b16 %v5439, %v5435
        %v6096 = vpack.c.b16 %v5440, %v5436
        %v6097 = vpack.c.b16 %v5441, %v5437
        %v6098 = vpack.c.b16 %v5446, %v5442
        %v6099 = vpack.c.b16 %v5447, %v5443
        %v6100 = vpack.c.b16 %v5448, %v5444
        %v6101 = vpack.c.b16 %v5449, %v5445
        %v6102 = vpack.c.b16 %v5454, %v5450
        %v6103 = vpack.c.b16 %v5455, %v5451
        %v6104 = vpack.c.b16 %v5456, %v5452
        %v6105 = vpack.c.b16 %v5457, %v5453
        %v6106 = vpack.c.b16 %v5462, %v5458
        %v6107 = vpack.c.b16 %v5463, %v5459
        %v6108 = vpack.c.b16 %v5464, %v5460
        %v6109 = vpack.c.b16 %v5465, %v5461
        %v6110 = vpack.c.b16 %v5470, %v5466
        %v6111 = vpack.c.b16 %v5471, %v5467
        %v6112 = vpack.c.b16 %v5472, %v5468
        %v6113 = vpack.c.b16 %v5473, %v5469
        %v6114 = vpack.c.b16 %v5478, %v5474
        %v6115 = vpack.c.b16 %v5479, %v5475
        %v6116 = vpack.c.b16 %v5480, %v5476
        %v6117 = vpack.c.b16 %v5481, %v5477
        %v6118 = vpack.c.b16 %v5486, %v5482
        %v6119 = vpack.c.b16 %v5487, %v5483
        %v6120 = vpack.c.b16 %v5488, %v5484
        %v6121 = vpack.c.b16 %v5489, %v5485
        %v6122 = vpack.c.b16 %v5494, %v5490
        %v6123 = vpack.c.b16 %v5495, %v5491
        %v6124 = vpack.c.b16 %v5496, %v5492
        %v6125 = vpack.c.b16 %v5497, %v5493
        %v6126 = vpack.c.b16 %v5502, %v5498
        %v6127 = vpack.c.b16 %v5503, %v5499
        %v6128 = vpack.c.b16 %v5504, %v5500
        %v6129 = vpack.c.b16 %v5505, %v5501
        %v6130 = vpack.c.b16 %v5510, %v5506
        %v6131 = vpack.c.b16 %v5511, %v5507
        %v6132 = vpack.c.b16 %v5512, %v5508
        %v6133 = vpack.c.b16 %v5513, %v5509
        %v6134 = vpack.c.b16 %v5518, %v5514
        %v6135 = vpack.c.b16 %v5519, %v5515
        %v6136 = vpack.c.b16 %v5520, %v5516
        %v6137 = vpack.c.b16 %v5521, %v5517
        %v6138 = vpack.c.b16 %v5526, %v5522
        %v6139 = vpack.c.b16 %v5527, %v5523
        %v6140 = vpack.c.b16 %v5528, %v5524
        %v6141 = vpack.c.b16 %v5529, %v5525
        %v6142 = vpack.c.b16 %v5534, %v5530
        %v6143 = vpack.c.b16 %v5535, %v5531
        %v6144 = vpack.c.b16 %v5536, %v5532
        %v6145 = vpack.c.b16 %v5537, %v5533
        %v6146 = vpack.c.b16 %v5542, %v5538
        %v6147 = vpack.c.b16 %v5543, %v5539
        %v6148 = vpack.c.b16 %v5544, %v5540
        %v6149 = vpack.c.b16 %v5545, %v5541
        %v6150 = vpack.c.b16 %v5550, %v5546
        %v6151 = vpack.c.b16 %v5551, %v5547
        %v6152 = vpack.c.b16 %v5552, %v5548
        %v6153 = vpack.c.b16 %v5553, %v5549
        %v6154 = vpack.c.b16 %v5558, %v5554
        %v6155 = vpack.c.b16 %v5559, %v5555
        %v6156 = vpack.c.b16 %v5560, %v5556
        %v6157 = vpack.c.b16 %v5561, %v5557
        %v6158 = vpack.c.b16 %v5566, %v5562
        %v6159 = vpack.c.b16 %v5567, %v5563
        %v6160 = vpack.c.b16 %v5568, %v5564
        %v6161 = vpack.c.b16 %v5569, %v5565
        %v6162 = vpack.c.b16 %v5574, %v5570
        %v6163 = vpack.c.b16 %v5575, %v5571
        %v6164 = vpack.c.b16 %v5576, %v5572
        %v6165 = vpack.c.b16 %v5577, %v5573
        %v6166 = vpack.c.b16 %v5582, %v5578
        %v6167 = vpack.c.b16 %v5583, %v5579
        %v6168 = vpack.c.b16 %v5584, %v5580
        %v6169 = vpack.c.b16 %v5585, %v5581
        %v6170 = vpack.c.b16 %v5590, %v5586
        %v6171 = vpack.c.b16 %v5591, %v5587
        %v6172 = vpack.c.b16 %v5592, %v5588
        %v6173 = vpack.c.b16 %v5593, %v5589
        %v6174 = vpack.c.b16 %v5598, %v5594
        %v6175 = vpack.c.b16 %v5599, %v5595
        %v6176 = vpack.c.b16 %v5600, %v5596
        %v6177 = vpack.c.b16 %v5601, %v5597
        %v6178 = vpack.c.b16 %v5606, %v5602
        %v6179 = vpack.c.b16 %v5607, %v5603
        %v6180 = vpack.c.b16 %v5608, %v5604
        %v6181 = vpack.c.b16 %v5609, %v5605
        %v6182 = vpack.c.b16 %v5614, %v5610
        %v6183 = vpack.c.b16 %v5615, %v5611
        %v6184 = vpack.c.b16 %v5616, %v5612
        %v6185 = vpack.c.b16 %v5617, %v5613
        %v6186 = vpack.c.b16 %v5622, %v5618
        %v6187 = vpack.c.b16 %v5623, %v5619
        %v6188 = vpack.c.b16 %v5624, %v5620
        %v6189 = vpack.c.b16 %v5625, %v5621
        %v6190 = vpack.c.b16 %v5630, %v5626
        %v6191 = vpack.c.b16 %v5631, %v5627
        %v6192 = vpack.c.b16 %v5632, %v5628
        %v6193 = vpack.c.b16 %v5633, %v5629
        %v6194 = vpack.c.b16 %v5638, %v5634
        %v6195 = vpack.c.b16 %v5639, %v5635
        %v6196 = vpack.c.b16 %v5640, %v5636
        %v6197 = vpack.c.b16 %v5641, %v5637
        %v6198 = vpack.c.b16 %v5646, %v5642
        %v6199 = vpack.c.b16 %v5647, %v5643
        %v6200 = vpack.c.b16 %v5648, %v5644
        %v6201 = vpack.c.b16 %v5649, %v5645
        %v6202 = vpack.c.b16 %v5654, %v5650
        %v6203 = vpack.c.b16 %v5655, %v5651
        %v6204 = vpack.c.b16 %v5656, %v5652
        %v6205 = vpack.c.b16 %v5657, %v5653
        %v6206 = vpack.c.b16 %v5662, %v5658
        %v6207 = vpack.c.b16 %v5663, %v5659
        %v6208 = vpack.c.b16 %v5664, %v5660
        %v6209 = vpack.c.b16 %v5665, %v5661
        %v6210 = vpack.c.b16 %v5670, %v5666
        %v6211 = vpack.c.b16 %v5671, %v5667
        %v6212 = vpack.c.b16 %v5672, %v5668
        %v6213 = vpack.c.b16 %v5673, %v5669
        %v6214 = vpack.c.b16 %v5678, %v5674
        %v6215 = vpack.c.b16 %v5679, %v5675
        %v6216 = vpack.c.b16 %v5680, %v5676
        %v6217 = vpack.c.b16 %v5681, %v5677
        %v6218 = vpack.c.b16 %v5686, %v5682
        %v6219 = vpack.c.b16 %v5687, %v5683
        %v6220 = vpack.c.b16 %v5688, %v5684
        %v6221 = vpack.c.b16 %v5689, %v5685
        %v6222 = vpack.c.b16 %v5694, %v5690
        %v6223 = vpack.c.b16 %v5695, %v5691
        %v6224 = vpack.c.b16 %v5696, %v5692
        %v6225 = vpack.c.b16 %v5697, %v5693
        %v6226 = vpack.c.b16 %v5702, %v5698
        %v6227 = vpack.c.b16 %v5703, %v5699
        %v6228 = vpack.c.b16 %v5704, %v5700
        %v6229 = vpack.c.b16 %v5705, %v5701
        %v6230 = vpack.c.b16 %v5710, %v5706
        %v6231 = vpack.c.b16 %v5711, %v5707
        %v6232 = vpack.c.b16 %v5712, %v5708
        %v6233 = vpack.c.b16 %v5713, %v5709
        %v6234 = vpack.c.b16 %v5718, %v5714
        %v6235 = vpack.c.b16 %v5719, %v5715
        %v6236 = vpack.c.b16 %v5720, %v5716
        %v6237 = vpack.c.b16 %v5721, %v5717
        %v6238 = vpack.c.b16 %v5726, %v5722
        %v6239 = vpack.c.b16 %v5727, %v5723
        %v6240 = vpack.c.b16 %v5728, %v5724
        %v6241 = vpack.c.b16 %v5729, %v5725
        %v6755 = vlaneseq
        %v6756 = vshrl.u32 %v6755, 7
        %v6757 = vsub.s32 0, %v6756
        %v6758 = vrot.slane %v4193, %v6757
        %v6759 = vlaneseq
        %v6760 = vshrl.u32 %v6759, 7
        %v6761 = vsub.s32 1, %v6760
        %v6762 = vrot.slane %v4193, %v6761
        %v6763 = vlaneseq
        %v6764 = vshrl.u32 %v6763, 7
        %v6765 = vsub.s32 2, %v6764
        %v6766 = vrot.slane %v4193, %v6765
        %v6767 = vlaneseq
        %v6768 = vshrl.u32 %v6767, 7
        %v6769 = vsub.s32 3, %v6768
        %v6770 = vrot.slane %v4193, %v6769
        %6775 = vmatprep.subr.bf16.mxu0 %v5731
        %6776 = vmatpush1.bf16.msra.mxu0 %v5730
        %6777 = vmatprep.subr.bf16.mxu0 %v5735
        %6778 = vmatpush1.bf16.msra.mxu0 %v5734
        %6779 = vmatprep.subr.bf16.mxu0 %v5739
        %6780 = vmatpush1.bf16.msra.mxu0 %v5738
        %6781 = vmatprep.subr.bf16.mxu0 %v5743
        %6782 = vmatpush1.bf16.msra.mxu0 %v5742
        %6783 = vmatprep.subr.bf16.mxu0 %v5747
        %6784 = vmatpush1.bf16.msra.mxu0 %v5746
        %6785 = vmatprep.subr.bf16.mxu0 %v5751
        %6786 = vmatpush1.bf16.msra.mxu0 %v5750
        %6787 = vmatprep.subr.bf16.mxu0 %v5755
        %6788 = vmatpush1.bf16.msra.mxu0 %v5754
        %6789 = vmatprep.subr.bf16.mxu0 %v5759
        %6790 = vmatpush1.bf16.msra.mxu0 %v5758
        %6791 = vmatprep.subr.bf16.mxu0 %v5763
        %6792 = vmatpush1.bf16.msra.mxu0 %v5762
        %6793 = vmatprep.subr.bf16.mxu0 %v5767
        %6794 = vmatpush1.bf16.msra.mxu0 %v5766
        %6795 = vmatprep.subr.bf16.mxu0 %v5771
        %6796 = vmatpush1.bf16.msra.mxu0 %v5770
        %6797 = vmatprep.subr.bf16.mxu0 %v5775
        %6798 = vmatpush1.bf16.msra.mxu0 %v5774
        %6799 = vmatprep.subr.bf16.mxu0 %v5779
        %6800 = vmatpush1.bf16.msra.mxu0 %v5778
        %6801 = vmatprep.subr.bf16.mxu0 %v5783
        %6802 = vmatpush1.bf16.msra.mxu0 %v5782
        %6803 = vmatprep.subr.bf16.mxu0 %v5787
        %6804 = vmatpush1.bf16.msra.mxu0 %v5786
        %6805 = vmatprep.subr.bf16.mxu0 %v5791
        %6806 = vmatpush1.bf16.msra.mxu0 %v5790
        %6807 = vmatprep.mubr.bf16.mxu0 %v3666
        %6808 = vmatmul.mubr.bf16.gmra.mrb[0].mxu0 %v3665
        %v6809 = vpop.f32.mrb[0].mxu0
        %v6810 = vadd.f32 %v6758, %v6809
        %v6811 = vpop.f32.mrb[0].mxu0
        %v6812 = vadd.f32 %v6762, %v6811
        %v6813 = vpop.f32.mrb[0].mxu0
        %v6814 = vpop.f32.mrb[0].mxu0
        %6815 = vdwg.mxu0
        %6816 = vmatprep.subr.bf16.mxu0 %v5795
        %6817 = vmatpush1.bf16.msra.mxu0 %v5794
        %6818 = vmatprep.subr.bf16.mxu0 %v5799
        %6819 = vmatpush1.bf16.msra.mxu0 %v5798
        %6820 = vmatprep.subr.bf16.mxu0 %v5803
        %6821 = vmatpush1.bf16.msra.mxu0 %v5802
        %6822 = vmatprep.subr.bf16.mxu0 %v5807
        %6823 = vmatpush1.bf16.msra.mxu0 %v5806
        %6824 = vmatprep.subr.bf16.mxu0 %v5811
        %6825 = vmatpush1.bf16.msra.mxu0 %v5810
        %6826 = vmatprep.subr.bf16.mxu0 %v5815
        %6827 = vmatpush1.bf16.msra.mxu0 %v5814
        %6828 = vmatprep.subr.bf16.mxu0 %v5819
        %6829 = vmatpush1.bf16.msra.mxu0 %v5818
        %6830 = vmatprep.subr.bf16.mxu0 %v5823
        %6831 = vmatpush1.bf16.msra.mxu0 %v5822
        %6832 = vmatprep.subr.bf16.mxu0 %v5827
        %6833 = vmatpush1.bf16.msra.mxu0 %v5826
        %6834 = vmatprep.subr.bf16.mxu0 %v5831
        %6835 = vmatpush1.bf16.msra.mxu0 %v5830
        %6836 = vmatprep.subr.bf16.mxu0 %v5835
        %6837 = vmatpush1.bf16.msra.mxu0 %v5834
        %6838 = vmatprep.subr.bf16.mxu0 %v5839
        %6839 = vmatpush1.bf16.msra.mxu0 %v5838
        %6840 = vmatprep.subr.bf16.mxu0 %v5843
        %6841 = vmatpush1.bf16.msra.mxu0 %v5842
        %6842 = vmatprep.subr.bf16.mxu0 %v5847
        %6843 = vmatpush1.bf16.msra.mxu0 %v5846
        %6844 = vmatprep.subr.bf16.mxu0 %v5851
        %6845 = vmatpush1.bf16.msra.mxu0 %v5850
        %6846 = vmatprep.subr.bf16.mxu0 %v5855
        %6847 = vmatpush1.bf16.msra.mxu0 %v5854
        %6848 = vmatprep.mubr.bf16.mxu0 %v3668
        %6849 = vmatmul.mubr.bf16.gmra.mrb[0].mxu0 %v3667
        %v6850 = vpop.f32.mrb[0].mxu0
        %v6851 = vadd.f32 %v6810, %v6850
        %v6852 = vpop.f32.mrb[0].mxu0
        %v6853 = vadd.f32 %v6812, %v6852
        %v6854 = vpop.f32.mrb[0].mxu0
        %v6855 = vpop.f32.mrb[0].mxu0
        %6856 = vdwg.mxu0
        %6857 = vmatprep.subr.bf16.mxu0 %v5859
        %6858 = vmatpush1.bf16.msra.mxu0 %v5858
        %6859 = vmatprep.subr.bf16.mxu0 %v5863
        %6860 = vmatpush1.bf16.msra.mxu0 %v5862
        %6861 = vmatprep.subr.bf16.mxu0 %v5867
        %6862 = vmatpush1.bf16.msra.mxu0 %v5866
        %6863 = vmatprep.subr.bf16.mxu0 %v5871
        %6864 = vmatpush1.bf16.msra.mxu0 %v5870
        %6865 = vmatprep.subr.bf16.mxu0 %v5875
        %6866 = vmatpush1.bf16.msra.mxu0 %v5874
        %6867 = vmatprep.subr.bf16.mxu0 %v5879
        %6868 = vmatpush1.bf16.msra.mxu0 %v5878
        %6869 = vmatprep.subr.bf16.mxu0 %v5883
        %6870 = vmatpush1.bf16.msra.mxu0 %v5882
        %6871 = vmatprep.subr.bf16.mxu0 %v5887
        %6872 = vmatpush1.bf16.msra.mxu0 %v5886
        %6873 = vmatprep.subr.bf16.mxu0 %v5891
        %6874 = vmatpush1.bf16.msra.mxu0 %v5890
        %6875 = vmatprep.subr.bf16.mxu0 %v5895
        %6876 = vmatpush1.bf16.msra.mxu0 %v5894
        %6877 = vmatprep.subr.bf16.mxu0 %v5899
        %6878 = vmatpush1.bf16.msra.mxu0 %v5898
        %6879 = vmatprep.subr.bf16.mxu0 %v5903
        %6880 = vmatpush1.bf16.msra.mxu0 %v5902
        %6881 = vmatprep.subr.bf16.mxu0 %v5907
        %6882 = vmatpush1.bf16.msra.mxu0 %v5906
        %6883 = vmatprep.subr.bf16.mxu0 %v5911
        %6884 = vmatpush1.bf16.msra.mxu0 %v5910
        %6885 = vmatprep.subr.bf16.mxu0 %v5915
        %6886 = vmatpush1.bf16.msra.mxu0 %v5914
        %6887 = vmatprep.subr.bf16.mxu0 %v5919
        %6888 = vmatpush1.bf16.msra.mxu0 %v5918
        %6889 = vmatprep.mubr.bf16.mxu0 %v3670
        %6890 = vmatmul.mubr.bf16.gmra.mrb[0].mxu0 %v3669
        %v6891 = vpop.f32.mrb[0].mxu0
        %v6892 = vadd.f32 %v6851, %v6891
        %v6893 = vpop.f32.mrb[0].mxu0
        %v6894 = vadd.f32 %v6853, %v6893
        %v6895 = vpop.f32.mrb[0].mxu0
        %v6896 = vpop.f32.mrb[0].mxu0
        %6897 = vdwg.mxu0
        %6898 = vmatprep.subr.bf16.mxu0 %v5923
        %6899 = vmatpush1.bf16.msra.mxu0 %v5922
        %6900 = vmatprep.subr.bf16.mxu0 %v5927
        %6901 = vmatpush1.bf16.msra.mxu0 %v5926
        %6902 = vmatprep.subr.bf16.mxu0 %v5931
        %6903 = vmatpush1.bf16.msra.mxu0 %v5930
        %6904 = vmatprep.subr.bf16.mxu0 %v5935
        %6905 = vmatpush1.bf16.msra.mxu0 %v5934
        %6906 = vmatprep.subr.bf16.mxu0 %v5939
        %6907 = vmatpush1.bf16.msra.mxu0 %v5938
        %6908 = vmatprep.subr.bf16.mxu0 %v5943
        %6909 = vmatpush1.bf16.msra.mxu0 %v5942
        %6910 = vmatprep.subr.bf16.mxu0 %v5947
        %6911 = vmatpush1.bf16.msra.mxu0 %v5946
        %6912 = vmatprep.subr.bf16.mxu0 %v5951
        %6913 = vmatpush1.bf16.msra.mxu0 %v5950
        %6914 = vmatprep.subr.bf16.mxu0 %v5955
        %6915 = vmatpush1.bf16.msra.mxu0 %v5954
        %6916 = vmatprep.subr.bf16.mxu0 %v5959
        %6917 = vmatpush1.bf16.msra.mxu0 %v5958
        %6918 = vmatprep.subr.bf16.mxu0 %v5963
        %6919 = vmatpush1.bf16.msra.mxu0 %v5962
        %6920 = vmatprep.subr.bf16.mxu0 %v5967
        %6921 = vmatpush1.bf16.msra.mxu0 %v5966
        %6922 = vmatprep.subr.bf16.mxu0 %v5971
        %6923 = vmatpush1.bf16.msra.mxu0 %v5970
        %6924 = vmatprep.subr.bf16.mxu0 %v5975
        %6925 = vmatpush1.bf16.msra.mxu0 %v5974
        %6926 = vmatprep.subr.bf16.mxu0 %v5979
        %6927 = vmatpush1.bf16.msra.mxu0 %v5978
        %6928 = vmatprep.subr.bf16.mxu0 %v5983
        %6929 = vmatpush1.bf16.msra.mxu0 %v5982
        %6930 = vmatprep.mubr.bf16.mxu0 %v3672
        %6931 = vmatmul.mubr.bf16.gmra.mrb[0].mxu0 %v3671
        %v6932 = vpop.f32.mrb[0].mxu0
        %v6933 = vadd.f32 %v6892, %v6932
        %v6934 = vpop.f32.mrb[0].mxu0
        %v6935 = vadd.f32 %v6894, %v6934
        %v6936 = vpop.f32.mrb[0].mxu0
        %v6937 = vpop.f32.mrb[0].mxu0
        %6938 = vdwg.mxu0
        %6939 = vmatprep.subr.bf16.mxu0 %v5987
        %6940 = vmatpush1.bf16.msra.mxu0 %v5986
        %6941 = vmatprep.subr.bf16.mxu0 %v5991
        %6942 = vmatpush1.bf16.msra.mxu0 %v5990
        %6943 = vmatprep.subr.bf16.mxu0 %v5995
        %6944 = vmatpush1.bf16.msra.mxu0 %v5994
        %6945 = vmatprep.subr.bf16.mxu0 %v5999
        %6946 = vmatpush1.bf16.msra.mxu0 %v5998
        %6947 = vmatprep.subr.bf16.mxu0 %v6003
        %6948 = vmatpush1.bf16.msra.mxu0 %v6002
        %6949 = vmatprep.subr.bf16.mxu0 %v6007
        %6950 = vmatpush1.bf16.msra.mxu0 %v6006
        %6951 = vmatprep.subr.bf16.mxu0 %v6011
        %6952 = vmatpush1.bf16.msra.mxu0 %v6010
        %6953 = vmatprep.subr.bf16.mxu0 %v6015
        %6954 = vmatpush1.bf16.msra.mxu0 %v6014
        %6955 = vmatprep.subr.bf16.mxu0 %v6019
        %6956 = vmatpush1.bf16.msra.mxu0 %v6018
        %6957 = vmatprep.subr.bf16.mxu0 %v6023
        %6958 = vmatpush1.bf16.msra.mxu0 %v6022
        %6959 = vmatprep.subr.bf16.mxu0 %v6027
        %6960 = vmatpush1.bf16.msra.mxu0 %v6026
        %6961 = vmatprep.subr.bf16.mxu0 %v6031
        %6962 = vmatpush1.bf16.msra.mxu0 %v6030
        %6963 = vmatprep.subr.bf16.mxu0 %v6035
        %6964 = vmatpush1.bf16.msra.mxu0 %v6034
        %6965 = vmatprep.subr.bf16.mxu0 %v6039
        %6966 = vmatpush1.bf16.msra.mxu0 %v6038
        %6967 = vmatprep.subr.bf16.mxu0 %v6043
        %6968 = vmatpush1.bf16.msra.mxu0 %v6042
        %6969 = vmatprep.subr.bf16.mxu0 %v6047
        %6970 = vmatpush1.bf16.msra.mxu0 %v6046
        %6971 = vmatprep.mubr.bf16.mxu0 %v3674
        %6972 = vmatmul.mubr.bf16.gmra.mrb[0].mxu0 %v3673
        %v6973 = vpop.f32.mrb[0].mxu0
        %v6974 = vadd.f32 %v6933, %v6973
        %v6975 = vpop.f32.mrb[0].mxu0
        %v6976 = vadd.f32 %v6935, %v6975
        %v6977 = vpop.f32.mrb[0].mxu0
        %v6978 = vpop.f32.mrb[0].mxu0
        %6979 = vdwg.mxu0
        %6980 = vmatprep.subr.bf16.mxu0 %v6051
        %6981 = vmatpush1.bf16.msra.mxu0 %v6050
        %6982 = vmatprep.subr.bf16.mxu0 %v6055
        %6983 = vmatpush1.bf16.msra.mxu0 %v6054
        %6984 = vmatprep.subr.bf16.mxu0 %v6059
        %6985 = vmatpush1.bf16.msra.mxu0 %v6058
        %6986 = vmatprep.subr.bf16.mxu0 %v6063
        %6987 = vmatpush1.bf16.msra.mxu0 %v6062
        %6988 = vmatprep.subr.bf16.mxu0 %v6067
        %6989 = vmatpush1.bf16.msra.mxu0 %v6066
        %6990 = vmatprep.subr.bf16.mxu0 %v6071
        %6991 = vmatpush1.bf16.msra.mxu0 %v6070
        %6992 = vmatprep.subr.bf16.mxu0 %v6075
        %6993 = vmatpush1.bf16.msra.mxu0 %v6074
        %6994 = vmatprep.subr.bf16.mxu0 %v6079
        %6995 = vmatpush1.bf16.msra.mxu0 %v6078
        %6996 = vmatprep.subr.bf16.mxu0 %v6083
        %6997 = vmatpush1.bf16.msra.mxu0 %v6082
        %6998 = vmatprep.subr.bf16.mxu0 %v6087
        %6999 = vmatpush1.bf16.msra.mxu0 %v6086
        %7000 = vmatprep.subr.bf16.mxu0 %v6091
        %7001 = vmatpush1.bf16.msra.mxu0 %v6090
        %7002 = vmatprep.subr.bf16.mxu0 %v6095
        %7003 = vmatpush1.bf16.msra.mxu0 %v6094
        %7004 = vmatprep.subr.bf16.mxu0 %v6099
        %7005 = vmatpush1.bf16.msra.mxu0 %v6098
        %7006 = vmatprep.subr.bf16.mxu0 %v6103
        %7007 = vmatpush1.bf16.msra.mxu0 %v6102
        %7008 = vmatprep.subr.bf16.mxu0 %v6107
        %7009 = vmatpush1.bf16.msra.mxu0 %v6106
        %7010 = vmatprep.subr.bf16.mxu0 %v6111
        %7011 = vmatpush1.bf16.msra.mxu0 %v6110
        %7012 = vmatprep.mubr.bf16.mxu0 %v3676
        %7013 = vmatmul.mubr.bf16.gmra.mrb[0].mxu0 %v3675
        %v7014 = vpop.f32.mrb[0].mxu0
        %v7015 = vadd.f32 %v6974, %v7014
        %v7016 = vpop.f32.mrb[0].mxu0
        %v7017 = vadd.f32 %v6976, %v7016
        %v7018 = vpop.f32.mrb[0].mxu0
        %v7019 = vpop.f32.mrb[0].mxu0
        %7020 = vdwg.mxu0
        %7021 = vmatprep.subr.bf16.mxu0 %v6115
        %7022 = vmatpush1.bf16.msra.mxu0 %v6114
        %7023 = vmatprep.subr.bf16.mxu0 %v6119
        %7024 = vmatpush1.bf16.msra.mxu0 %v6118
        %7025 = vmatprep.subr.bf16.mxu0 %v6123
        %7026 = vmatpush1.bf16.msra.mxu0 %v6122
        %7027 = vmatprep.subr.bf16.mxu0 %v6127
        %7028 = vmatpush1.bf16.msra.mxu0 %v6126
        %7029 = vmatprep.subr.bf16.mxu0 %v6131
        %7030 = vmatpush1.bf16.msra.mxu0 %v6130
        %7031 = vmatprep.subr.bf16.mxu0 %v6135
        %7032 = vmatpush1.bf16.msra.mxu0 %v6134
        %7033 = vmatprep.subr.bf16.mxu0 %v6139
        %7034 = vmatpush1.bf16.msra.mxu0 %v6138
        %7035 = vmatprep.subr.bf16.mxu0 %v6143
        %7036 = vmatpush1.bf16.msra.mxu0 %v6142
        %7037 = vmatprep.subr.bf16.mxu0 %v6147
        %7038 = vmatpush1.bf16.msra.mxu0 %v6146
        %7039 = vmatprep.subr.bf16.mxu0 %v6151
        %7040 = vmatpush1.bf16.msra.mxu0 %v6150
        %7041 = vmatprep.subr.bf16.mxu0 %v6155
        %7042 = vmatpush1.bf16.msra.mxu0 %v6154
        %7043 = vmatprep.subr.bf16.mxu0 %v6159
        %7044 = vmatpush1.bf16.msra.mxu0 %v6158
        %7045 = vmatprep.subr.bf16.mxu0 %v6163
        %7046 = vmatpush1.bf16.msra.mxu0 %v6162
        %7047 = vmatprep.subr.bf16.mxu0 %v6167
        %7048 = vmatpush1.bf16.msra.mxu0 %v6166
        %7049 = vmatprep.subr.bf16.mxu0 %v6171
        %7050 = vmatpush1.bf16.msra.mxu0 %v6170
        %7051 = vmatprep.subr.bf16.mxu0 %v6175
        %7052 = vmatpush1.bf16.msra.mxu0 %v6174
        %7053 = vmatprep.mubr.bf16.mxu0 %v3678
        %7054 = vmatmul.mubr.bf16.gmra.mrb[0].mxu0 %v3677
        %v7055 = vpop.f32.mrb[0].mxu0
        %v7056 = vadd.f32 %v7015, %v7055
        %v7057 = vpop.f32.mrb[0].mxu0
        %v7058 = vadd.f32 %v7017, %v7057
        %v7059 = vpop.f32.mrb[0].mxu0
        %v7060 = vpop.f32.mrb[0].mxu0
        %7061 = vdwg.mxu0
        %7062 = vmatprep.subr.bf16.mxu0 %v6179
        %7063 = vmatpush1.bf16.msra.mxu0 %v6178
        %7064 = vmatprep.subr.bf16.mxu0 %v6183
        %7065 = vmatpush1.bf16.msra.mxu0 %v6182
        %7066 = vmatprep.subr.bf16.mxu0 %v6187
        %7067 = vmatpush1.bf16.msra.mxu0 %v6186
        %7068 = vmatprep.subr.bf16.mxu0 %v6191
        %7069 = vmatpush1.bf16.msra.mxu0 %v6190
        %7070 = vmatprep.subr.bf16.mxu0 %v6195
        %7071 = vmatpush1.bf16.msra.mxu0 %v6194
        %7072 = vmatprep.subr.bf16.mxu0 %v6199
        %7073 = vmatpush1.bf16.msra.mxu0 %v6198
        %7074 = vmatprep.subr.bf16.mxu0 %v6203
        %7075 = vmatpush1.bf16.msra.mxu0 %v6202
        %7076 = vmatprep.subr.bf16.mxu0 %v6207
        %7077 = vmatpush1.bf16.msra.mxu0 %v6206
        %7078 = vmatprep.subr.bf16.mxu0 %v6211
        %7079 = vmatpush1.bf16.msra.mxu0 %v6210
        %7080 = vmatprep.subr.bf16.mxu0 %v6215
        %7081 = vmatpush1.bf16.msra.mxu0 %v6214
        %7082 = vmatprep.subr.bf16.mxu0 %v6219
        %7083 = vmatpush1.bf16.msra.mxu0 %v6218
        %7084 = vmatprep.subr.bf16.mxu0 %v6223
        %7085 = vmatpush1.bf16.msra.mxu0 %v6222
        %7086 = vmatprep.subr.bf16.mxu0 %v6227
        %7087 = vmatpush1.bf16.msra.mxu0 %v6226
        %7088 = vmatprep.subr.bf16.mxu0 %v6231
        %7089 = vmatpush1.bf16.msra.mxu0 %v6230
        %7090 = vmatprep.subr.bf16.mxu0 %v6235
        %7091 = vmatpush1.bf16.msra.mxu0 %v6234
        %7092 = vmatprep.subr.bf16.mxu0 %v6239
        %7093 = vmatpush1.bf16.msra.mxu0 %v6238
        %7094 = vmatprep.mubr.bf16.mxu0 %v3680
        %7095 = vmatmul.mubr.bf16.gmra.mrb[0].mxu0 %v3679
        %v7096 = vpop.f32.mrb[0].mxu0
        %v7097 = vadd.f32 %v7056, %v7096
        %v7098 = vpop.f32.mrb[0].mxu0
        %v7099 = vadd.f32 %v7058, %v7098
        %v7100 = vpop.f32.mrb[0].mxu0
        %v7101 = vpop.f32.mrb[0].mxu0
        %7102 = vdwg.mxu0
        %7103 = vmatprep.subr.bf16.mxu0 %v5733
        %7104 = vmatpush1.bf16.msra.mxu0 %v5732
        %7105 = vmatprep.subr.bf16.mxu0 %v5737
        %7106 = vmatpush1.bf16.msra.mxu0 %v5736
        %7107 = vmatprep.subr.bf16.mxu0 %v5741
        %7108 = vmatpush1.bf16.msra.mxu0 %v5740
        %7109 = vmatprep.subr.bf16.mxu0 %v5745
        %7110 = vmatpush1.bf16.msra.mxu0 %v5744
        %7111 = vmatprep.subr.bf16.mxu0 %v5749
        %7112 = vmatpush1.bf16.msra.mxu0 %v5748
        %7113 = vmatprep.subr.bf16.mxu0 %v5753
        %7114 = vmatpush1.bf16.msra.mxu0 %v5752
        %7115 = vmatprep.subr.bf16.mxu0 %v5757
        %7116 = vmatpush1.bf16.msra.mxu0 %v5756
        %7117 = vmatprep.subr.bf16.mxu0 %v5761
        %7118 = vmatpush1.bf16.msra.mxu0 %v5760
        %7119 = vmatprep.subr.bf16.mxu0 %v5765
        %7120 = vmatpush1.bf16.msra.mxu0 %v5764
        %7121 = vmatprep.subr.bf16.mxu0 %v5769
        %7122 = vmatpush1.bf16.msra.mxu0 %v5768
        %7123 = vmatprep.subr.bf16.mxu0 %v5773
        %7124 = vmatpush1.bf16.msra.mxu0 %v5772
        %7125 = vmatprep.subr.bf16.mxu0 %v5777
        %7126 = vmatpush1.bf16.msra.mxu0 %v5776
        %7127 = vmatprep.subr.bf16.mxu0 %v5781
        %7128 = vmatpush1.bf16.msra.mxu0 %v5780
        %7129 = vmatprep.subr.bf16.mxu0 %v5785
        %7130 = vmatpush1.bf16.msra.mxu0 %v5784
        %7131 = vmatprep.subr.bf16.mxu0 %v5789
        %7132 = vmatpush1.bf16.msra.mxu0 %v5788
        %7133 = vmatprep.subr.bf16.mxu0 %v5793
        %7134 = vmatpush1.bf16.msra.mxu0 %v5792
        %7135 = vmatprep.mubr.bf16.mxu0 %v3666
        %7136 = vmatmul.mubr.bf16.gmra.mrb[0].mxu0 %v3665
        %v7137 = vpop.f32.mrb[0].mxu0
        %v7138 = vadd.f32 %v6766, %v7137
        %v7139 = vpop.f32.mrb[0].mxu0
        %v7140 = vadd.f32 %v6770, %v7139
        %v7141 = vpop.f32.mrb[0].mxu0
        %v7142 = vpop.f32.mrb[0].mxu0
        %7143 = vdwg.mxu0
        %7144 = vmatprep.subr.bf16.mxu0 %v5797
        %7145 = vmatpush1.bf16.msra.mxu0 %v5796
        %7146 = vmatprep.subr.bf16.mxu0 %v5801
        %7147 = vmatpush1.bf16.msra.mxu0 %v5800
        %7148 = vmatprep.subr.bf16.mxu0 %v5805
        %7149 = vmatpush1.bf16.msra.mxu0 %v5804
        %7150 = vmatprep.subr.bf16.mxu0 %v5809
        %7151 = vmatpush1.bf16.msra.mxu0 %v5808
        %7152 = vmatprep.subr.bf16.mxu0 %v5813
        %7153 = vmatpush1.bf16.msra.mxu0 %v5812
        %7154 = vmatprep.subr.bf16.mxu0 %v5817
        %7155 = vmatpush1.bf16.msra.mxu0 %v5816
        %7156 = vmatprep.subr.bf16.mxu0 %v5821
        %7157 = vmatpush1.bf16.msra.mxu0 %v5820
        %7158 = vmatprep.subr.bf16.mxu0 %v5825
        %7159 = vmatpush1.bf16.msra.mxu0 %v5824
        %7160 = vmatprep.subr.bf16.mxu0 %v5829
        %7161 = vmatpush1.bf16.msra.mxu0 %v5828
        %7162 = vmatprep.subr.bf16.mxu0 %v5833
        %7163 = vmatpush1.bf16.msra.mxu0 %v5832
        %7164 = vmatprep.subr.bf16.mxu0 %v5837
        %7165 = vmatpush1.bf16.msra.mxu0 %v5836
        %7166 = vmatprep.subr.bf16.mxu0 %v5841
        %7167 = vmatpush1.bf16.msra.mxu0 %v5840
        %7168 = vmatprep.subr.bf16.mxu0 %v5845
        %7169 = vmatpush1.bf16.msra.mxu0 %v5844
        %7170 = vmatprep.subr.bf16.mxu0 %v5849
        %7171 = vmatpush1.bf16.msra.mxu0 %v5848
        %7172 = vmatprep.subr.bf16.mxu0 %v5853
        %7173 = vmatpush1.bf16.msra.mxu0 %v5852
        %7174 = vmatprep.subr.bf16.mxu0 %v5857
        %7175 = vmatpush1.bf16.msra.mxu0 %v5856
        %7176 = vmatprep.mubr.bf16.mxu0 %v3668
        %7177 = vmatmul.mubr.bf16.gmra.mrb[0].mxu0 %v3667
        %v7178 = vpop.f32.mrb[0].mxu0
        %v7179 = vadd.f32 %v7138, %v7178
        %v7180 = vpop.f32.mrb[0].mxu0
        %v7181 = vadd.f32 %v7140, %v7180
        %v7182 = vpop.f32.mrb[0].mxu0
        %v7183 = vpop.f32.mrb[0].mxu0
        %7184 = vdwg.mxu0
        %7185 = vmatprep.subr.bf16.mxu0 %v5861
        %7186 = vmatpush1.bf16.msra.mxu0 %v5860
        %7187 = vmatprep.subr.bf16.mxu0 %v5865
        %7188 = vmatpush1.bf16.msra.mxu0 %v5864
        %7189 = vmatprep.subr.bf16.mxu0 %v5869
        %7190 = vmatpush1.bf16.msra.mxu0 %v5868
        %7191 = vmatprep.subr.bf16.mxu0 %v5873
        %7192 = vmatpush1.bf16.msra.mxu0 %v5872
        %7193 = vmatprep.subr.bf16.mxu0 %v5877
        %7194 = vmatpush1.bf16.msra.mxu0 %v5876
        %7195 = vmatprep.subr.bf16.mxu0 %v5881
        %7196 = vmatpush1.bf16.msra.mxu0 %v5880
        %7197 = vmatprep.subr.bf16.mxu0 %v5885
        %7198 = vmatpush1.bf16.msra.mxu0 %v5884
        %7199 = vmatprep.subr.bf16.mxu0 %v5889
        %7200 = vmatpush1.bf16.msra.mxu0 %v5888
        %7201 = vmatprep.subr.bf16.mxu0 %v5893
        %7202 = vmatpush1.bf16.msra.mxu0 %v5892
        %7203 = vmatprep.subr.bf16.mxu0 %v5897
        %7204 = vmatpush1.bf16.msra.mxu0 %v5896
        %7205 = vmatprep.subr.bf16.mxu0 %v5901
        %7206 = vmatpush1.bf16.msra.mxu0 %v5900
        %7207 = vmatprep.subr.bf16.mxu0 %v5905
        %7208 = vmatpush1.bf16.msra.mxu0 %v5904
        %7209 = vmatprep.subr.bf16.mxu0 %v5909
        %7210 = vmatpush1.bf16.msra.mxu0 %v5908
        %7211 = vmatprep.subr.bf16.mxu0 %v5913
        %7212 = vmatpush1.bf16.msra.mxu0 %v5912
        %7213 = vmatprep.subr.bf16.mxu0 %v5917
        %7214 = vmatpush1.bf16.msra.mxu0 %v5916
        %7215 = vmatprep.subr.bf16.mxu0 %v5921
        %7216 = vmatpush1.bf16.msra.mxu0 %v5920
        %7217 = vmatprep.mubr.bf16.mxu0 %v3670
        %7218 = vmatmul.mubr.bf16.gmra.mrb[0].mxu0 %v3669
        %v7219 = vpop.f32.mrb[0].mxu0
        %v7220 = vadd.f32 %v7179, %v7219
        %v7221 = vpop.f32.mrb[0].mxu0
        %v7222 = vadd.f32 %v7181, %v7221
        %v7223 = vpop.f32.mrb[0].mxu0
        %v7224 = vpop.f32.mrb[0].mxu0
        %7225 = vdwg.mxu0
        %7226 = vmatprep.subr.bf16.mxu0 %v5925
        %7227 = vmatpush1.bf16.msra.mxu0 %v5924
        %7228 = vmatprep.subr.bf16.mxu0 %v5929
        %7229 = vmatpush1.bf16.msra.mxu0 %v5928
        %7230 = vmatprep.subr.bf16.mxu0 %v5933
        %7231 = vmatpush1.bf16.msra.mxu0 %v5932
        %7232 = vmatprep.subr.bf16.mxu0 %v5937
        %7233 = vmatpush1.bf16.msra.mxu0 %v5936
        %7234 = vmatprep.subr.bf16.mxu0 %v5941
        %7235 = vmatpush1.bf16.msra.mxu0 %v5940
        %7236 = vmatprep.subr.bf16.mxu0 %v5945
        %7237 = vmatpush1.bf16.msra.mxu0 %v5944
        %7238 = vmatprep.subr.bf16.mxu0 %v5949
        %7239 = vmatpush1.bf16.msra.mxu0 %v5948
        %7240 = vmatprep.subr.bf16.mxu0 %v5953
        %7241 = vmatpush1.bf16.msra.mxu0 %v5952
        %7242 = vmatprep.subr.bf16.mxu0 %v5957
        %7243 = vmatpush1.bf16.msra.mxu0 %v5956
        %7244 = vmatprep.subr.bf16.mxu0 %v5961
        %7245 = vmatpush1.bf16.msra.mxu0 %v5960
        %7246 = vmatprep.subr.bf16.mxu0 %v5965
        %7247 = vmatpush1.bf16.msra.mxu0 %v5964
        %7248 = vmatprep.subr.bf16.mxu0 %v5969
        %7249 = vmatpush1.bf16.msra.mxu0 %v5968
        %7250 = vmatprep.subr.bf16.mxu0 %v5973
        %7251 = vmatpush1.bf16.msra.mxu0 %v5972
        %7252 = vmatprep.subr.bf16.mxu0 %v5977
        %7253 = vmatpush1.bf16.msra.mxu0 %v5976
        %7254 = vmatprep.subr.bf16.mxu0 %v5981
        %7255 = vmatpush1.bf16.msra.mxu0 %v5980
        %7256 = vmatprep.subr.bf16.mxu0 %v5985
        %7257 = vmatpush1.bf16.msra.mxu0 %v5984
        %7258 = vmatprep.mubr.bf16.mxu0 %v3672
        %7259 = vmatmul.mubr.bf16.gmra.mrb[0].mxu0 %v3671
        %v7260 = vpop.f32.mrb[0].mxu0
        %v7261 = vadd.f32 %v7220, %v7260
        %v7262 = vpop.f32.mrb[0].mxu0
        %v7263 = vadd.f32 %v7222, %v7262
        %v7264 = vpop.f32.mrb[0].mxu0
        %v7265 = vpop.f32.mrb[0].mxu0
        %7266 = vdwg.mxu0
        %7267 = vmatprep.subr.bf16.mxu0 %v5989
        %7268 = vmatpush1.bf16.msra.mxu0 %v5988
        %7269 = vmatprep.subr.bf16.mxu0 %v5993
        %7270 = vmatpush1.bf16.msra.mxu0 %v5992
        %7271 = vmatprep.subr.bf16.mxu0 %v5997
        %7272 = vmatpush1.bf16.msra.mxu0 %v5996
        %7273 = vmatprep.subr.bf16.mxu0 %v6001
        %7274 = vmatpush1.bf16.msra.mxu0 %v6000
        %7275 = vmatprep.subr.bf16.mxu0 %v6005
        %7276 = vmatpush1.bf16.msra.mxu0 %v6004
        %7277 = vmatprep.subr.bf16.mxu0 %v6009
        %7278 = vmatpush1.bf16.msra.mxu0 %v6008
        %7279 = vmatprep.subr.bf16.mxu0 %v6013
        %7280 = vmatpush1.bf16.msra.mxu0 %v6012
        %7281 = vmatprep.subr.bf16.mxu0 %v6017
        %7282 = vmatpush1.bf16.msra.mxu0 %v6016
        %7283 = vmatprep.subr.bf16.mxu0 %v6021
        %7284 = vmatpush1.bf16.msra.mxu0 %v6020
        %7285 = vmatprep.subr.bf16.mxu0 %v6025
        %7286 = vmatpush1.bf16.msra.mxu0 %v6024
        %7287 = vmatprep.subr.bf16.mxu0 %v6029
        %7288 = vmatpush1.bf16.msra.mxu0 %v6028
        %7289 = vmatprep.subr.bf16.mxu0 %v6033
        %7290 = vmatpush1.bf16.msra.mxu0 %v6032
        %7291 = vmatprep.subr.bf16.mxu0 %v6037
        %7292 = vmatpush1.bf16.msra.mxu0 %v6036
        %7293 = vmatprep.subr.bf16.mxu0 %v6041
        %7294 = vmatpush1.bf16.msra.mxu0 %v6040
        %7295 = vmatprep.subr.bf16.mxu0 %v6045
        %7296 = vmatpush1.bf16.msra.mxu0 %v6044
        %7297 = vmatprep.subr.bf16.mxu0 %v6049
        %7298 = vmatpush1.bf16.msra.mxu0 %v6048
        %7299 = vmatprep.mubr.bf16.mxu0 %v3674
        %7300 = vmatmul.mubr.bf16.gmra.mrb[0].mxu0 %v3673
        %v7301 = vpop.f32.mrb[0].mxu0
        %v7302 = vadd.f32 %v7261, %v7301
        %v7303 = vpop.f32.mrb[0].mxu0
        %v7304 = vadd.f32 %v7263, %v7303
        %v7305 = vpop.f32.mrb[0].mxu0
        %v7306 = vpop.f32.mrb[0].mxu0
        %7307 = vdwg.mxu0
        %7308 = vmatprep.subr.bf16.mxu0 %v6053
        %7309 = vmatpush1.bf16.msra.mxu0 %v6052
        %7310 = vmatprep.subr.bf16.mxu0 %v6057
        %7311 = vmatpush1.bf16.msra.mxu0 %v6056
        %7312 = vmatprep.subr.bf16.mxu0 %v6061
        %7313 = vmatpush1.bf16.msra.mxu0 %v6060
        %7314 = vmatprep.subr.bf16.mxu0 %v6065
        %7315 = vmatpush1.bf16.msra.mxu0 %v6064
        %7316 = vmatprep.subr.bf16.mxu0 %v6069
        %7317 = vmatpush1.bf16.msra.mxu0 %v6068
        %7318 = vmatprep.subr.bf16.mxu0 %v6073
        %7319 = vmatpush1.bf16.msra.mxu0 %v6072
        %7320 = vmatprep.subr.bf16.mxu0 %v6077
        %7321 = vmatpush1.bf16.msra.mxu0 %v6076
        %7322 = vmatprep.subr.bf16.mxu0 %v6081
        %7323 = vmatpush1.bf16.msra.mxu0 %v6080
        %7324 = vmatprep.subr.bf16.mxu0 %v6085
        %7325 = vmatpush1.bf16.msra.mxu0 %v6084
        %7326 = vmatprep.subr.bf16.mxu0 %v6089
        %7327 = vmatpush1.bf16.msra.mxu0 %v6088
        %7328 = vmatprep.subr.bf16.mxu0 %v6093
        %7329 = vmatpush1.bf16.msra.mxu0 %v6092
        %7330 = vmatprep.subr.bf16.mxu0 %v6097
        %7331 = vmatpush1.bf16.msra.mxu0 %v6096
        %7332 = vmatprep.subr.bf16.mxu0 %v6101
        %7333 = vmatpush1.bf16.msra.mxu0 %v6100
        %7334 = vmatprep.subr.bf16.mxu0 %v6105
        %7335 = vmatpush1.bf16.msra.mxu0 %v6104
        %7336 = vmatprep.subr.bf16.mxu0 %v6109
        %7337 = vmatpush1.bf16.msra.mxu0 %v6108
        %7338 = vmatprep.subr.bf16.mxu0 %v6113
        %7339 = vmatpush1.bf16.msra.mxu0 %v6112
        %7340 = vmatprep.mubr.bf16.mxu0 %v3676
        %7341 = vmatmul.mubr.bf16.gmra.mrb[0].mxu0 %v3675
        %v7342 = vpop.f32.mrb[0].mxu0
        %v7343 = vadd.f32 %v7302, %v7342
        %v7344 = vpop.f32.mrb[0].mxu0
        %v7345 = vadd.f32 %v7304, %v7344
        %v7346 = vpop.f32.mrb[0].mxu0
        %v7347 = vpop.f32.mrb[0].mxu0
        %7348 = vdwg.mxu0
        %7349 = vmatprep.subr.bf16.mxu0 %v6117
        %7350 = vmatpush1.bf16.msra.mxu0 %v6116
        %7351 = vmatprep.subr.bf16.mxu0 %v6121
        %7352 = vmatpush1.bf16.msra.mxu0 %v6120
        %7353 = vmatprep.subr.bf16.mxu0 %v6125
        %7354 = vmatpush1.bf16.msra.mxu0 %v6124
        %7355 = vmatprep.subr.bf16.mxu0 %v6129
        %7356 = vmatpush1.bf16.msra.mxu0 %v6128
        %7357 = vmatprep.subr.bf16.mxu0 %v6133
        %7358 = vmatpush1.bf16.msra.mxu0 %v6132
        %7359 = vmatprep.subr.bf16.mxu0 %v6137
        %7360 = vmatpush1.bf16.msra.mxu0 %v6136
        %7361 = vmatprep.subr.bf16.mxu0 %v6141
        %7362 = vmatpush1.bf16.msra.mxu0 %v6140
        %7363 = vmatprep.subr.bf16.mxu0 %v6145
        %7364 = vmatpush1.bf16.msra.mxu0 %v6144
        %7365 = vmatprep.subr.bf16.mxu0 %v6149
        %7366 = vmatpush1.bf16.msra.mxu0 %v6148
        %7367 = vmatprep.subr.bf16.mxu0 %v6153
        %7368 = vmatpush1.bf16.msra.mxu0 %v6152
        %7369 = vmatprep.subr.bf16.mxu0 %v6157
        %7370 = vmatpush1.bf16.msra.mxu0 %v6156
        %7371 = vmatprep.subr.bf16.mxu0 %v6161
        %7372 = vmatpush1.bf16.msra.mxu0 %v6160
        %7373 = vmatprep.subr.bf16.mxu0 %v6165
        %7374 = vmatpush1.bf16.msra.mxu0 %v6164
        %7375 = vmatprep.subr.bf16.mxu0 %v6169
        %7376 = vmatpush1.bf16.msra.mxu0 %v6168
        %7377 = vmatprep.subr.bf16.mxu0 %v6173
        %7378 = vmatpush1.bf16.msra.mxu0 %v6172
        %7379 = vmatprep.subr.bf16.mxu0 %v6177
        %7380 = vmatpush1.bf16.msra.mxu0 %v6176
        %7381 = vmatprep.mubr.bf16.mxu0 %v3678
        %7382 = vmatmul.mubr.bf16.gmra.mrb[0].mxu0 %v3677
        %v7383 = vpop.f32.mrb[0].mxu0
        %v7384 = vadd.f32 %v7343, %v7383
        %v7385 = vpop.f32.mrb[0].mxu0
        %v7386 = vadd.f32 %v7345, %v7385
        %v7387 = vpop.f32.mrb[0].mxu0
        %v7388 = vpop.f32.mrb[0].mxu0
        %7389 = vdwg.mxu0
        %7390 = vmatprep.subr.bf16.mxu0 %v6181
        %7391 = vmatpush1.bf16.msra.mxu0 %v6180
        %7392 = vmatprep.subr.bf16.mxu0 %v6185
        %7393 = vmatpush1.bf16.msra.mxu0 %v6184
        %7394 = vmatprep.subr.bf16.mxu0 %v6189
        %7395 = vmatpush1.bf16.msra.mxu0 %v6188
        %7396 = vmatprep.subr.bf16.mxu0 %v6193
        %7397 = vmatpush1.bf16.msra.mxu0 %v6192
        %7398 = vmatprep.subr.bf16.mxu0 %v6197
        %7399 = vmatpush1.bf16.msra.mxu0 %v6196
        %7400 = vmatprep.subr.bf16.mxu0 %v6201
        %7401 = vmatpush1.bf16.msra.mxu0 %v6200
        %7402 = vmatprep.subr.bf16.mxu0 %v6205
        %7403 = vmatpush1.bf16.msra.mxu0 %v6204
        %7404 = vmatprep.subr.bf16.mxu0 %v6209
        %7405 = vmatpush1.bf16.msra.mxu0 %v6208
        %7406 = vmatprep.subr.bf16.mxu0 %v6213
        %7407 = vmatpush1.bf16.msra.mxu0 %v6212
        %7408 = vmatprep.subr.bf16.mxu0 %v6217
        %7409 = vmatpush1.bf16.msra.mxu0 %v6216
        %7410 = vmatprep.subr.bf16.mxu0 %v6221
        %7411 = vmatpush1.bf16.msra.mxu0 %v6220
        %7412 = vmatprep.subr.bf16.mxu0 %v6225
        %7413 = vmatpush1.bf16.msra.mxu0 %v6224
        %7414 = vmatprep.subr.bf16.mxu0 %v6229
        %7415 = vmatpush1.bf16.msra.mxu0 %v6228
        %7416 = vmatprep.subr.bf16.mxu0 %v6233
        %7417 = vmatpush1.bf16.msra.mxu0 %v6232
        %7418 = vmatprep.subr.bf16.mxu0 %v6237
        %7419 = vmatpush1.bf16.msra.mxu0 %v6236
        %7420 = vmatprep.subr.bf16.mxu0 %v6241
        %7421 = vmatpush1.bf16.msra.mxu0 %v6240
        %7422 = vmatprep.mubr.bf16.mxu0 %v3680
        %7423 = vmatmul.mubr.bf16.gmra.mrb[0].mxu0 %v3679
        %v7424 = vpop.f32.mrb[0].mxu0
        %v7425 = vadd.f32 %v7384, %v7424
        %v7426 = vpop.f32.mrb[0].mxu0
        %v7427 = vadd.f32 %v7386, %v7426
        %v7428 = vpop.f32.mrb[0].mxu0
        %v7429 = vpop.f32.mrb[0].mxu0
        %7430 = vdwg.mxu0
        %v7431 = vmax.f32 %v7097, 0.0
        %v7432 = vmax.f32 %v7099, 0.0
        %v7433 = vmax.f32 %v7425, 0.0
        %v7434 = vmax.f32 %v7427, 0.0
        %v7435 = vpack.c.bf16 %v7431, %v7431
        %v7436 = vpack.c.bf16 %v7432, %v7432
        %v7437 = vpack.c.bf16 %v7433, %v7433
        %v7438 = vpack.c.bf16 %v7434, %v7434
        %v7439 = vld [vmem:[%s4] sm:$0xff]
        %v7440 = vld [vmem:[%s4 + $0x8] sm:$0xff]
        %v7441 = vld [vmem:[%s4 + $0x10] sm:$0xff]
        %v7442 = vld [vmem:[%s4 + $0x18] sm:$0xff]
        %v7443 = vld [vmem:[%s4 + $0x20] sm:$0xff]
        %v7444 = vld [vmem:[%s4 + $0x28] sm:$0xff]
        %v7445 = vld [vmem:[%s4 + $0x30] sm:$0xff]
        %v7446 = vld [vmem:[%s4 + $0x38] sm:$0xff]
        %v7447 = vld [vmem:[%s4 + $0x40] sm:$0xff]
        %v7448 = vld [vmem:[%s4 + $0x48] sm:$0xff]
        %v7449 = vld [vmem:[%s4 + $0x50] sm:$0xff]
        %v7450 = vld [vmem:[%s4 + $0x58] sm:$0xff]
        %v7451 = vld [vmem:[%s4 + $0x60] sm:$0xff]
        %v7452 = vld [vmem:[%s4 + $0x68] sm:$0xff]
        %v7453 = vld [vmem:[%s4 + $0x70] sm:$0xff]
        %v7454 = vld [vmem:[%s4 + $0x78] sm:$0xff]
        %v7455 = vld [vmem:[%s4 + $0x80] sm:$0xff]
        %v7456 = vld [vmem:[%s4 + $0x88] sm:$0xff]
        %v7457 = vld [vmem:[%s4 + $0x90] sm:$0xff]
        %v7458 = vld [vmem:[%s4 + $0x98] sm:$0xff]
        %v7459 = vld [vmem:[%s4 + $0xa0] sm:$0xff]
        %v7460 = vld [vmem:[%s4 + $0xa8] sm:$0xff]
        %v7461 = vld [vmem:[%s4 + $0xb0] sm:$0xff]
        %v7462 = vld [vmem:[%s4 + $0xb8] sm:$0xff]
        %v7463 = vld [vmem:[%s4 + $0xc0] sm:$0xff]
        %v7464 = vld [vmem:[%s4 + $0xc8] sm:$0xff]
        %v7465 = vld [vmem:[%s4 + $0xd0] sm:$0xff]
        %v7466 = vld [vmem:[%s4 + $0xd8] sm:$0xff]
        %v7467 = vld [vmem:[%s4 + $0xe0] sm:$0xff]
        %v7468 = vld [vmem:[%s4 + $0xe8] sm:$0xff]
        %v7469 = vld [vmem:[%s4 + $0xf0] sm:$0xff]
        %v7470 = vld [vmem:[%s4 + $0xf8] sm:$0xff]
        %v7471 = vld [vmem:[%s4 + $0x100] sm:$0xff]
        %v7472 = vld [vmem:[%s4 + $0x108] sm:$0xff]
        %v7473 = vld [vmem:[%s4 + $0x110] sm:$0xff]
        %v7474 = vld [vmem:[%s4 + $0x118] sm:$0xff]
        %v7475 = vld [vmem:[%s4 + $0x120] sm:$0xff]
        %v7476 = vld [vmem:[%s4 + $0x128] sm:$0xff]
        %v7477 = vld [vmem:[%s4 + $0x130] sm:$0xff]
        %v7478 = vld [vmem:[%s4 + $0x138] sm:$0xff]
        %v7479 = vld [vmem:[%s4 + $0x140] sm:$0xff]
        %v7480 = vld [vmem:[%s4 + $0x148] sm:$0xff]
        %v7481 = vld [vmem:[%s4 + $0x150] sm:$0xff]
        %v7482 = vld [vmem:[%s4 + $0x158] sm:$0xff]
        %v7483 = vld [vmem:[%s4 + $0x160] sm:$0xff]
        %v7484 = vld [vmem:[%s4 + $0x168] sm:$0xff]
        %v7485 = vld [vmem:[%s4 + $0x170] sm:$0xff]
        %v7486 = vld [vmem:[%s4 + $0x178] sm:$0xff]
        %v7487 = vld [vmem:[%s4 + $0x180] sm:$0xff]
        %v7488 = vld [vmem:[%s4 + $0x188] sm:$0xff]
        %v7489 = vld [vmem:[%s4 + $0x190] sm:$0xff]
        %v7490 = vld [vmem:[%s4 + $0x198] sm:$0xff]
        %v7491 = vld [vmem:[%s4 + $0x1a0] sm:$0xff]
        %v7492 = vld [vmem:[%s4 + $0x1a8] sm:$0xff]
        %v7493 = vld [vmem:[%s4 + $0x1b0] sm:$0xff]
        %v7494 = vld [vmem:[%s4 + $0x1b8] sm:$0xff]
        %v7495 = vld [vmem:[%s4 + $0x1c0] sm:$0xff]
        %v7496 = vld [vmem:[%s4 + $0x1c8] sm:$0xff]
        %v7497 = vld [vmem:[%s4 + $0x1d0] sm:$0xff]
        %v7498 = vld [vmem:[%s4 + $0x1d8] sm:$0xff]
        %v7499 = vld [vmem:[%s4 + $0x1e0] sm:$0xff]
        %v7500 = vld [vmem:[%s4 + $0x1e8] sm:$0xff]
        %v7501 = vld [vmem:[%s4 + $0x1f0] sm:$0xff]
        %v7502 = vld [vmem:[%s4 + $0x1f8] sm:$0xff]
        %v7503 = vld [vmem:[%s5] sm:$0x3]
        %v7568 = vunpack.c.l.b16 %v7439
        %v7569 = vunpack.c.h.b16 %v7439
        %v7570 = vunpack.c.l.b16 %v7440
        %v7571 = vunpack.c.h.b16 %v7440
        %v7572 = vunpack.c.l.b16 %v7441
        %v7573 = vunpack.c.h.b16 %v7441
        %v7574 = vunpack.c.l.b16 %v7442
        %v7575 = vunpack.c.h.b16 %v7442
        %v7576 = vunpack.c.l.b16 %v7443
        %v7577 = vunpack.c.h.b16 %v7443
        %v7578 = vunpack.c.l.b16 %v7444
        %v7579 = vunpack.c.h.b16 %v7444
        %v7580 = vunpack.c.l.b16 %v7445
        %v7581 = vunpack.c.h.b16 %v7445
        %v7582 = vunpack.c.l.b16 %v7446
        %v7583 = vunpack.c.h.b16 %v7446
        %v7584 = vunpack.c.l.b16 %v7447
        %v7585 = vunpack.c.h.b16 %v7447
        %v7586 = vunpack.c.l.b16 %v7448
        %v7587 = vunpack.c.h.b16 %v7448
        %v7588 = vunpack.c.l.b16 %v7449
        %v7589 = vunpack.c.h.b16 %v7449
        %v7590 = vunpack.c.l.b16 %v7450
        %v7591 = vunpack.c.h.b16 %v7450
        %v7592 = vunpack.c.l.b16 %v7451
        %v7593 = vunpack.c.h.b16 %v7451
        %v7594 = vunpack.c.l.b16 %v7452
        %v7595 = vunpack.c.h.b16 %v7452
        %v7596 = vunpack.c.l.b16 %v7453
        %v7597 = vunpack.c.h.b16 %v7453
        %v7598 = vunpack.c.l.b16 %v7454
        %v7599 = vunpack.c.h.b16 %v7454
        %v7600 = vunpack.c.l.b16 %v7455
        %v7601 = vunpack.c.h.b16 %v7455
        %v7602 = vunpack.c.l.b16 %v7456
        %v7603 = vunpack.c.h.b16 %v7456
        %v7604 = vunpack.c.l.b16 %v7457
        %v7605 = vunpack.c.h.b16 %v7457
        %v7606 = vunpack.c.l.b16 %v7458
        %v7607 = vunpack.c.h.b16 %v7458
        %v7608 = vunpack.c.l.b16 %v7459
        %v7609 = vunpack.c.h.b16 %v7459
        %v7610 = vunpack.c.l.b16 %v7460
        %v7611 = vunpack.c.h.b16 %v7460
        %v7612 = vunpack.c.l.b16 %v7461
        %v7613 = vunpack.c.h.b16 %v7461
        %v7614 = vunpack.c.l.b16 %v7462
        %v7615 = vunpack.c.h.b16 %v7462
        %v7616 = vunpack.c.l.b16 %v7463
        %v7617 = vunpack.c.h.b16 %v7463
        %v7618 = vunpack.c.l.b16 %v7464
        %v7619 = vunpack.c.h.b16 %v7464
        %v7620 = vunpack.c.l.b16 %v7465
        %v7621 = vunpack.c.h.b16 %v7465
        %v7622 = vunpack.c.l.b16 %v7466
        %v7623 = vunpack.c.h.b16 %v7466
        %v7624 = vunpack.c.l.b16 %v7467
        %v7625 = vunpack.c.h.b16 %v7467
        %v7626 = vunpack.c.l.b16 %v7468
        %v7627 = vunpack.c.h.b16 %v7468
        %v7628 = vunpack.c.l.b16 %v7469
        %v7629 = vunpack.c.h.b16 %v7469
        %v7630 = vunpack.c.l.b16 %v7470
        %v7631 = vunpack.c.h.b16 %v7470
        %v7632 = vunpack.c.l.b16 %v7471
        %v7633 = vunpack.c.h.b16 %v7471
        %v7634 = vunpack.c.l.b16 %v7472
        %v7635 = vunpack.c.h.b16 %v7472
        %v7636 = vunpack.c.l.b16 %v7473
        %v7637 = vunpack.c.h.b16 %v7473
        %v7638 = vunpack.c.l.b16 %v7474
        %v7639 = vunpack.c.h.b16 %v7474
        %v7640 = vunpack.c.l.b16 %v7475
        %v7641 = vunpack.c.h.b16 %v7475
        %v7642 = vunpack.c.l.b16 %v7476
        %v7643 = vunpack.c.h.b16 %v7476
        %v7644 = vunpack.c.l.b16 %v7477
        %v7645 = vunpack.c.h.b16 %v7477
        %v7646 = vunpack.c.l.b16 %v7478
        %v7647 = vunpack.c.h.b16 %v7478
        %v7648 = vunpack.c.l.b16 %v7479
        %v7649 = vunpack.c.h.b16 %v7479
        %v7650 = vunpack.c.l.b16 %v7480
        %v7651 = vunpack.c.h.b16 %v7480
        %v7652 = vunpack.c.l.b16 %v7481
        %v7653 = vunpack.c.h.b16 %v7481
        %v7654 = vunpack.c.l.b16 %v7482
        %v7655 = vunpack.c.h.b16 %v7482
        %v7656 = vunpack.c.l.b16 %v7483
        %v7657 = vunpack.c.h.b16 %v7483
        %v7658 = vunpack.c.l.b16 %v7484
        %v7659 = vunpack.c.h.b16 %v7484
        %v7660 = vunpack.c.l.b16 %v7485
        %v7661 = vunpack.c.h.b16 %v7485
        %v7662 = vunpack.c.l.b16 %v7486
        %v7663 = vunpack.c.h.b16 %v7486
        %v7664 = vunpack.c.l.b16 %v7487
        %v7665 = vunpack.c.h.b16 %v7487
        %v7666 = vunpack.c.l.b16 %v7488
        %v7667 = vunpack.c.h.b16 %v7488
        %v7668 = vunpack.c.l.b16 %v7489
        %v7669 = vunpack.c.h.b16 %v7489
        %v7670 = vunpack.c.l.b16 %v7490
        %v7671 = vunpack.c.h.b16 %v7490
        %v7672 = vunpack.c.l.b16 %v7491
        %v7673 = vunpack.c.h.b16 %v7491
        %v7674 = vunpack.c.l.b16 %v7492
        %v7675 = vunpack.c.h.b16 %v7492
        %v7676 = vunpack.c.l.b16 %v7493
        %v7677 = vunpack.c.h.b16 %v7493
        %v7678 = vunpack.c.l.b16 %v7494
        %v7679 = vunpack.c.h.b16 %v7494
        %v7680 = vunpack.c.l.b16 %v7495
        %v7681 = vunpack.c.h.b16 %v7495
        %v7682 = vunpack.c.l.b16 %v7496
        %v7683 = vunpack.c.h.b16 %v7496
        %v7684 = vunpack.c.l.b16 %v7497
        %v7685 = vunpack.c.h.b16 %v7497
        %v7686 = vunpack.c.l.b16 %v7498
        %v7687 = vunpack.c.h.b16 %v7498
        %v7688 = vunpack.c.l.b16 %v7499
        %v7689 = vunpack.c.h.b16 %v7499
        %v7690 = vunpack.c.l.b16 %v7500
        %v7691 = vunpack.c.h.b16 %v7500
        %v7692 = vunpack.c.l.b16 %v7501
        %v7693 = vunpack.c.h.b16 %v7501
        %v7694 = vunpack.c.l.b16 %v7502
        %v7695 = vunpack.c.h.b16 %v7502
        %v7696 = vpack.c.b16 %v7570, %v7568
        %v7697 = vpack.c.b16 %v7571, %v7569
        %v7698 = vpack.c.b16 %v7574, %v7572
        %v7699 = vpack.c.b16 %v7575, %v7573
        %v7700 = vpack.c.b16 %v7578, %v7576
        %v7701 = vpack.c.b16 %v7579, %v7577
        %v7702 = vpack.c.b16 %v7582, %v7580
        %v7703 = vpack.c.b16 %v7583, %v7581
        %v7704 = vpack.c.b16 %v7586, %v7584
        %v7705 = vpack.c.b16 %v7587, %v7585
        %v7706 = vpack.c.b16 %v7590, %v7588
        %v7707 = vpack.c.b16 %v7591, %v7589
        %v7708 = vpack.c.b16 %v7594, %v7592
        %v7709 = vpack.c.b16 %v7595, %v7593
        %v7710 = vpack.c.b16 %v7598, %v7596
        %v7711 = vpack.c.b16 %v7599, %v7597
        %v7712 = vpack.c.b16 %v7602, %v7600
        %v7713 = vpack.c.b16 %v7603, %v7601
        %v7714 = vpack.c.b16 %v7606, %v7604
        %v7715 = vpack.c.b16 %v7607, %v7605
        %v7716 = vpack.c.b16 %v7610, %v7608
        %v7717 = vpack.c.b16 %v7611, %v7609
        %v7718 = vpack.c.b16 %v7614, %v7612
        %v7719 = vpack.c.b16 %v7615, %v7613
        %v7720 = vpack.c.b16 %v7618, %v7616
        %v7721 = vpack.c.b16 %v7619, %v7617
        %v7722 = vpack.c.b16 %v7622, %v7620
        %v7723 = vpack.c.b16 %v7623, %v7621
        %v7724 = vpack.c.b16 %v7626, %v7624
        %v7725 = vpack.c.b16 %v7627, %v7625
        %v7726 = vpack.c.b16 %v7630, %v7628
        %v7727 = vpack.c.b16 %v7631, %v7629
        %v7728 = vpack.c.b16 %v7634, %v7632
        %v7729 = vpack.c.b16 %v7635, %v7633
        %v7730 = vpack.c.b16 %v7638, %v7636
        %v7731 = vpack.c.b16 %v7639, %v7637
        %v7732 = vpack.c.b16 %v7642, %v7640
        %v7733 = vpack.c.b16 %v7643, %v7641
        %v7734 = vpack.c.b16 %v7646, %v7644
        %v7735 = vpack.c.b16 %v7647, %v7645
        %v7736 = vpack.c.b16 %v7650, %v7648
        %v7737 = vpack.c.b16 %v7651, %v7649
        %v7738 = vpack.c.b16 %v7654, %v7652
        %v7739 = vpack.c.b16 %v7655, %v7653
        %v7740 = vpack.c.b16 %v7658, %v7656
        %v7741 = vpack.c.b16 %v7659, %v7657
        %v7742 = vpack.c.b16 %v7662, %v7660
        %v7743 = vpack.c.b16 %v7663, %v7661
        %v7744 = vpack.c.b16 %v7666, %v7664
        %v7745 = vpack.c.b16 %v7667, %v7665
        %v7746 = vpack.c.b16 %v7670, %v7668
        %v7747 = vpack.c.b16 %v7671, %v7669
        %v7748 = vpack.c.b16 %v7674, %v7672
        %v7749 = vpack.c.b16 %v7675, %v7673
        %v7750 = vpack.c.b16 %v7678, %v7676
        %v7751 = vpack.c.b16 %v7679, %v7677
        %v7752 = vpack.c.b16 %v7682, %v7680
        %v7753 = vpack.c.b16 %v7683, %v7681
        %v7754 = vpack.c.b16 %v7686, %v7684
        %v7755 = vpack.c.b16 %v7687, %v7685
        %v7756 = vpack.c.b16 %v7690, %v7688
        %v7757 = vpack.c.b16 %v7691, %v7689
        %v7758 = vpack.c.b16 %v7694, %v7692
        %v7759 = vpack.c.b16 %v7695, %v7693
        %v7825 = vlaneseq
        %v7826 = vshrl.u32 %v7825, 7
        %v7827 = vsub.s32 0, %v7826
        %v7828 = vrot.slane %v7503, %v7827
        %v7829 = vlaneseq
        %v7830 = vshrl.u32 %v7829, 7
        %v7831 = vsub.s32 1, %v7830
        %v7832 = vrot.slane %v7503, %v7831
        %7835 = vmatprep.subr.bf16.mxu0 %v7697
        %7836 = vmatpush1.bf16.msra.mxu0 %v7696
        %7837 = vmatprep.subr.bf16.mxu0 %v7699
        %7838 = vmatpush1.bf16.msra.mxu0 %v7698
        %7839 = vmatprep.subr.bf16.mxu0 %v7701
        %7840 = vmatpush1.bf16.msra.mxu0 %v7700
        %7841 = vmatprep.subr.bf16.mxu0 %v7703
        %7842 = vmatpush1.bf16.msra.mxu0 %v7702
        %7843 = vmatprep.subr.bf16.mxu0 %v7705
        %7844 = vmatpush1.bf16.msra.mxu0 %v7704
        %7845 = vmatprep.subr.bf16.mxu0 %v7707
        %7846 = vmatpush1.bf16.msra.mxu0 %v7706
        %7847 = vmatprep.subr.bf16.mxu0 %v7709
        %7848 = vmatpush1.bf16.msra.mxu0 %v7708
        %7849 = vmatprep.subr.bf16.mxu0 %v7711
        %7850 = vmatpush1.bf16.msra.mxu0 %v7710
        %7851 = vmatprep.subr.bf16.mxu0 %v7713
        %7852 = vmatpush1.bf16.msra.mxu0 %v7712
        %7853 = vmatprep.subr.bf16.mxu0 %v7715
        %7854 = vmatpush1.bf16.msra.mxu0 %v7714
        %7855 = vmatprep.subr.bf16.mxu0 %v7717
        %7856 = vmatpush1.bf16.msra.mxu0 %v7716
        %7857 = vmatprep.subr.bf16.mxu0 %v7719
        %7858 = vmatpush1.bf16.msra.mxu0 %v7718
        %7859 = vmatprep.subr.bf16.mxu0 %v7721
        %7860 = vmatpush1.bf16.msra.mxu0 %v7720
        %7861 = vmatprep.subr.bf16.mxu0 %v7723
        %7862 = vmatpush1.bf16.msra.mxu0 %v7722
        %7863 = vmatprep.subr.bf16.mxu0 %v7725
        %7864 = vmatpush1.bf16.msra.mxu0 %v7724
        %7865 = vmatprep.subr.bf16.mxu0 %v7727
        %7866 = vmatpush1.bf16.msra.mxu0 %v7726
        %7867 = vmatprep.mubr.bf16.mxu0 %v7436
        %7868 = vmatmul.mubr.bf16.gmra.mrb[0].mxu0 %v7435
        %v7869 = vpop.f32.mrb[0].mxu0
        %v7870 = vadd.f32 %v7828, %v7869
        %v7871 = vpop.f32.mrb[0].mxu0
        %v7872 = vadd.f32 %v7832, %v7871
        %v7873 = vpop.f32.mrb[0].mxu0
        %v7874 = vpop.f32.mrb[0].mxu0
        %7875 = vdwg.mxu0
        %7876 = vmatprep.subr.bf16.mxu0 %v7729
        %7877 = vmatpush1.bf16.msra.mxu0 %v7728
        %7878 = vmatprep.subr.bf16.mxu0 %v7731
        %7879 = vmatpush1.bf16.msra.mxu0 %v7730
        %7880 = vmatprep.subr.bf16.mxu0 %v7733
        %7881 = vmatpush1.bf16.msra.mxu0 %v7732
        %7882 = vmatprep.subr.bf16.mxu0 %v7735
        %7883 = vmatpush1.bf16.msra.mxu0 %v7734
        %7884 = vmatprep.subr.bf16.mxu0 %v7737
        %7885 = vmatpush1.bf16.msra.mxu0 %v7736
        %7886 = vmatprep.subr.bf16.mxu0 %v7739
        %7887 = vmatpush1.bf16.msra.mxu0 %v7738
        %7888 = vmatprep.subr.bf16.mxu0 %v7741
        %7889 = vmatpush1.bf16.msra.mxu0 %v7740
        %7890 = vmatprep.subr.bf16.mxu0 %v7743
        %7891 = vmatpush1.bf16.msra.mxu0 %v7742
        %7892 = vmatprep.subr.bf16.mxu0 %v7745
        %7893 = vmatpush1.bf16.msra.mxu0 %v7744
        %7894 = vmatprep.subr.bf16.mxu0 %v7747
        %7895 = vmatpush1.bf16.msra.mxu0 %v7746
        %7896 = vmatprep.subr.bf16.mxu0 %v7749
        %7897 = vmatpush1.bf16.msra.mxu0 %v7748
        %7898 = vmatprep.subr.bf16.mxu0 %v7751
        %7899 = vmatpush1.bf16.msra.mxu0 %v7750
        %7900 = vmatprep.subr.bf16.mxu0 %v7753
        %7901 = vmatpush1.bf16.msra.mxu0 %v7752
        %7902 = vmatprep.subr.bf16.mxu0 %v7755
        %7903 = vmatpush1.bf16.msra.mxu0 %v7754
        %7904 = vmatprep.subr.bf16.mxu0 %v7757
        %7905 = vmatpush1.bf16.msra.mxu0 %v7756
        %7906 = vmatprep.subr.bf16.mxu0 %v7759
        %7907 = vmatpush1.bf16.msra.mxu0 %v7758
        %7908 = vmatprep.mubr.bf16.mxu0 %v7438
        %7909 = vmatmul.mubr.bf16.gmra.mrb[0].mxu0 %v7437
        %v7910 = vpop.f32.mrb[0].mxu0
        %v7911 = vadd.f32 %v7870, %v7910
        %v7912 = vpop.f32.mrb[0].mxu0
        %v7913 = vadd.f32 %v7872, %v7912
        %v7914 = vpop.f32.mrb[0].mxu0
        %v7915 = vpop.f32.mrb[0].mxu0
        %7916 = vdwg.mxu0
        %v7917 = vmax.f32 %v7911, 0.0
        %v7918 = vmax.f32 %v7913, 0.0
        %v7919 = vpack.c.bf16 %v7917, %v7917
        %v7920 = vpack.c.bf16 %v7918, %v7918
        %v7921 = vld [vmem:[%s6] sm:$0xf]
        %v7922 = vld [vmem:[%s6 + $0x4] sm:$0xf]
        %v7923 = vld [vmem:[%s6 + $0x8] sm:$0xf]
        %v7924 = vld [vmem:[%s6 + $0xc] sm:$0xf]
        %v7925 = vld [vmem:[%s6 + $0x10] sm:$0xf]
        %v7926 = vld [vmem:[%s6 + $0x14] sm:$0xf]
        %v7927 = vld [vmem:[%s6 + $0x18] sm:$0xf]
        %v7928 = vld [vmem:[%s6 + $0x1c] sm:$0xf]
        %v7929 = vld [vmem:[%s6 + $0x20] sm:$0xf]
        %v7930 = vld [vmem:[%s6 + $0x24] sm:$0xf]
        %v7931 = vld [vmem:[%s6 + $0x28] sm:$0xf]
        %v7932 = vld [vmem:[%s6 + $0x2c] sm:$0xf]
        %v7933 = vld [vmem:[%s6 + $0x30] sm:$0xf]
        %v7934 = vld [vmem:[%s6 + $0x34] sm:$0xf]
        %v7935 = vld [vmem:[%s6 + $0x38] sm:$0xf]
        %v7936 = vld [vmem:[%s6 + $0x3c] sm:$0xf]
        %v7937 = vld [vmem:[%s6 + $0x40] sm:$0xf]
        %v7938 = vld [vmem:[%s6 + $0x44] sm:$0xf]
        %v7939 = vld [vmem:[%s6 + $0x48] sm:$0xf]
        %v7940 = vld [vmem:[%s6 + $0x4c] sm:$0xf]
        %v7941 = vld [vmem:[%s6 + $0x50] sm:$0xf]
        %v7942 = vld [vmem:[%s6 + $0x54] sm:$0xf]
        %v7943 = vld [vmem:[%s6 + $0x58] sm:$0xf]
        %v7944 = vld [vmem:[%s6 + $0x5c] sm:$0xf]
        %v7945 = vld [vmem:[%s6 + $0x60] sm:$0xf]
        %v7946 = vld [vmem:[%s6 + $0x64] sm:$0xf]
        %v7947 = vld [vmem:[%s6 + $0x68] sm:$0xf]
        %v7948 = vld [vmem:[%s6 + $0x6c] sm:$0xf]
        %v7949 = vld [vmem:[%s6 + $0x70] sm:$0xf]
        %v7950 = vld [vmem:[%s6 + $0x74] sm:$0xf]
        %v7951 = vld [vmem:[%s6 + $0x78] sm:$0xf]
        %v7952 = vld [vmem:[%s6 + $0x7c] sm:$0xf]
        %v7953 = vld [vmem:[%s7] sm:$0x1]
        %v7986 = vunpack.c.l.b16 %v7921
        %v7987 = vunpack.c.l.b16 %v7922
        %v7988 = vunpack.c.l.b16 %v7923
        %v7989 = vunpack.c.l.b16 %v7924
        %v7990 = vunpack.c.l.b16 %v7925
        %v7991 = vunpack.c.l.b16 %v7926
        %v7992 = vunpack.c.l.b16 %v7927
        %v7993 = vunpack.c.l.b16 %v7928
        %v7994 = vunpack.c.l.b16 %v7929
        %v7995 = vunpack.c.l.b16 %v7930
        %v7996 = vunpack.c.l.b16 %v7931
        %v7997 = vunpack.c.l.b16 %v7932
        %v7998 = vunpack.c.l.b16 %v7933
        %v7999 = vunpack.c.l.b16 %v7934
        %v8000 = vunpack.c.l.b16 %v7935
        %v8001 = vunpack.c.l.b16 %v7936
        %v8002 = vunpack.c.l.b16 %v7937
        %v8003 = vunpack.c.l.b16 %v7938
        %v8004 = vunpack.c.l.b16 %v7939
        %v8005 = vunpack.c.l.b16 %v7940
        %v8006 = vunpack.c.l.b16 %v7941
        %v8007 = vunpack.c.l.b16 %v7942
        %v8008 = vunpack.c.l.b16 %v7943
        %v8009 = vunpack.c.l.b16 %v7944
        %v8010 = vunpack.c.l.b16 %v7945
        %v8011 = vunpack.c.l.b16 %v7946
        %v8012 = vunpack.c.l.b16 %v7947
        %v8013 = vunpack.c.l.b16 %v7948
        %v8014 = vunpack.c.l.b16 %v7949
        %v8015 = vunpack.c.l.b16 %v7950
        %v8016 = vunpack.c.l.b16 %v7951
        %v8017 = vunpack.c.l.b16 %v7952
        %v8018 = vpack.c.b16 %v7987, %v7986
        %v8019 = vpack.c.b16 %v7989, %v7988
        %v8020 = vpack.c.b16 %v7991, %v7990
        %v8021 = vpack.c.b16 %v7993, %v7992
        %v8022 = vpack.c.b16 %v7995, %v7994
        %v8023 = vpack.c.b16 %v7997, %v7996
        %v8024 = vpack.c.b16 %v7999, %v7998
        %v8025 = vpack.c.b16 %v8001, %v8000
        %v8026 = vpack.c.b16 %v8003, %v8002
        %v8027 = vpack.c.b16 %v8005, %v8004
        %v8028 = vpack.c.b16 %v8007, %v8006
        %v8029 = vpack.c.b16 %v8009, %v8008
        %v8030 = vpack.c.b16 %v8011, %v8010
        %v8031 = vpack.c.b16 %v8013, %v8012
        %v8032 = vpack.c.b16 %v8015, %v8014
        %v8033 = vpack.c.b16 %v8017, %v8016
        %8050 = vmatprep.subr.bf16.mxu0 0
        %8051 = vmatpush1.bf16.msra.mxu0 %v8018
        %8052 = vmatprep.subr.bf16.mxu0 0
        %8053 = vmatpush1.bf16.msra.mxu0 %v8019
        %8054 = vmatprep.subr.bf16.mxu0 0
        %8055 = vmatpush1.bf16.msra.mxu0 %v8020
        %8056 = vmatprep.subr.bf16.mxu0 0
        %8057 = vmatpush1.bf16.msra.mxu0 %v8021
        %8058 = vmatprep.subr.bf16.mxu0 0
        %8059 = vmatpush1.bf16.msra.mxu0 %v8022
        %8060 = vmatprep.subr.bf16.mxu0 0
        %8061 = vmatpush1.bf16.msra.mxu0 %v8023
        %8062 = vmatprep.subr.bf16.mxu0 0
        %8063 = vmatpush1.bf16.msra.mxu0 %v8024
        %8064 = vmatprep.subr.bf16.mxu0 0
        %8065 = vmatpush1.bf16.msra.mxu0 %v8025
        %8066 = vmatprep.subr.bf16.mxu0 0
        %8067 = vmatpush1.bf16.msra.mxu0 %v8026
        %8068 = vmatprep.subr.bf16.mxu0 0
        %8069 = vmatpush1.bf16.msra.mxu0 %v8027
        %8070 = vmatprep.subr.bf16.mxu0 0
        %8071 = vmatpush1.bf16.msra.mxu0 %v8028
        %8072 = vmatprep.subr.bf16.mxu0 0
        %8073 = vmatpush1.bf16.msra.mxu0 %v8029
        %8074 = vmatprep.subr.bf16.mxu0 0
        %8075 = vmatpush1.bf16.msra.mxu0 %v8030
        %8076 = vmatprep.subr.bf16.mxu0 0
        %8077 = vmatpush1.bf16.msra.mxu0 %v8031
        %8078 = vmatprep.subr.bf16.mxu0 0
        %8079 = vmatpush1.bf16.msra.mxu0 %v8032
        %8080 = vmatprep.subr.bf16.mxu0 0
        %8081 = vmatpush1.bf16.msra.mxu0 %v8033
        %8082 = vmatprep.mubr.bf16.mxu0 %v7920
        %8083 = vmatmul.mubr.bf16.gmra.mrb[0].mxu0 %v7919
        %v8084 = vpop.f32.mrb[0].mxu0
        %v8085 = vadd.f32 %v7953, %v8084
        %v8086 = vpop.f32.mrb[0].mxu0
        %v8087 = vpop.f32.mrb[0].mxu0
        %v8088 = vpop.f32.mrb[0].mxu0
        %8089 = vdwg.mxu0
        %v8090 = vpack.c.bf16 %v8085, %v8085
        %v8091 = vld [vmem:[%s8] sm:$0xf]
        %v8092 = vld [vmem:[%s8 + $0x4] sm:$0xf]
        %v8093 = vld [vmem:[%s8 + $0x8] sm:$0xf]
        %v8094 = vld [vmem:[%s8 + $0xc] sm:$0xf]
        %v8095 = vld [vmem:[%s8 + $0x10] sm:$0xf]
        %v8096 = vld [vmem:[%s8 + $0x14] sm:$0xf]
        %v8097 = vld [vmem:[%s8 + $0x18] sm:$0xf]
        %v8098 = vld [vmem:[%s8 + $0x1c] sm:$0xf]
        %v8099 = vld [vmem:[%s9] sm:$0x1]
        %v8108 = vunpack.c.l.b16 %v8091
        %v8109 = vunpack.c.l.b16 %v8092
        %v8110 = vunpack.c.l.b16 %v8093
        %v8111 = vunpack.c.l.b16 %v8094
        %v8112 = vunpack.c.l.b16 %v8095
        %v8113 = vunpack.c.l.b16 %v8096
        %v8114 = vunpack.c.l.b16 %v8097
        %v8115 = vunpack.c.l.b16 %v8098
        %v8116 = vpack.c.b16 %v8109, %v8108
        %v8117 = vpack.c.b16 %v8111, %v8110
        %v8118 = vpack.c.b16 %v8113, %v8112
        %v8119 = vpack.c.b16 %v8115, %v8114
        %vm8124 = vcmask 523264
        %v8126 = vsel %vm8124, %v8090, 0
        %8128 = vmatprep.subr.bf16.mxu0 0
        %8129 = vmatpush1.bf16.msra.mxu0 %v8116
        %8130 = vmatprep.subr.bf16.mxu0 0
        %8131 = vmatpush1.bf16.msra.mxu0 %v8117
        %8132 = vmatprep.subr.bf16.mxu0 0
        %8133 = vmatpush1.bf16.msra.mxu0 %v8118
        %8134 = vmatprep.subr.bf16.mxu0 0
        %8135 = vmatpush1.bf16.msra.mxu0 %v8119
        %8136 = vmatprep.subr.bf16.mxu0 0
        %8137 = vmatpush1.bf16.msra.mxu0 0
        %8138 = vmatprep.subr.bf16.mxu0 0
        %8139 = vmatpush1.bf16.msra.mxu0 0
        %8140 = vmatprep.subr.bf16.mxu0 0
        %8141 = vmatpush1.bf16.msra.mxu0 0
        %8142 = vmatprep.subr.bf16.mxu0 0
        %8143 = vmatpush1.bf16.msra.mxu0 0
        %8144 = vmatprep.subr.bf16.mxu0 0
        %8145 = vmatpush1.bf16.msra.mxu0 0
        %8146 = vmatprep.subr.bf16.mxu0 0
        %8147 = vmatpush1.bf16.msra.mxu0 0
        %8148 = vmatprep.subr.bf16.mxu0 0
        %8149 = vmatpush1.bf16.msra.mxu0 0
        %8150 = vmatprep.subr.bf16.mxu0 0
        %8151 = vmatpush1.bf16.msra.mxu0 0
        %8152 = vmatprep.subr.bf16.mxu0 0
        %8153 = vmatpush1.bf16.msra.mxu0 0
        %8154 = vmatprep.subr.bf16.mxu0 0
        %8155 = vmatpush1.bf16.msra.mxu0 0
        %8156 = vmatprep.subr.bf16.mxu0 0
        %8157 = vmatpush1.bf16.msra.mxu0 0
        %8158 = vmatprep.subr.bf16.mxu0 0
        %8159 = vmatpush1.bf16.msra.mxu0 0
        %8160 = vmatprep.mubr.bf16.mxu0 0
        %8161 = vmatmul.mubr.bf16.gmra.mrb[0].mxu0 %v8126
        %v8162 = vpop.f32.mrb[0].mxu0
        %v8163 = vadd.f32 %v8099, %v8162
        %v8164 = vpop.f32.mrb[0].mxu0
        %v8165 = vpop.f32.mrb[0].mxu0
        %v8166 = vpop.f32.mrb[0].mxu0
        %8167 = vdwg.mxu0
        %v8168 = vmax.f32 %v8163, 0.0
        %v8169 = vpack.c.bf16 %v8168, %v8168
        %v8170 = vld [vmem:[%s10] sm:$0xf]
        %v8171 = vld [vmem:[%s10 + $0x4] sm:$0xf]
        %v8172 = vld [vmem:[%s10 + $0x8] sm:$0xf]
        %v8173 = vld [vmem:[%s10 + $0xc] sm:$0xf]
        %v8174 = vld [vmem:[%s11] sm:$0x1]
        %v8179 = vunpack.c.l.b16 %v8170
        %v8180 = vunpack.c.l.b16 %v8171
        %v8181 = vunpack.c.l.b16 %v8172
        %v8182 = vunpack.c.l.b16 %v8173
        %v8183 = vpack.c.b16 %v8180, %v8179
        %v8184 = vpack.c.b16 %v8182, %v8181
        %v8188 = vsel %vm605, %v8169, 0
        %8190 = vmatprep.subr.bf16.mxu0 0
        %8191 = vmatpush1.bf16.msra.mxu0 %v8183
        %8192 = vmatprep.subr.bf16.mxu0 0
        %8193 = vmatpush1.bf16.msra.mxu0 %v8184
        %8194 = vmatprep.subr.bf16.mxu0 0
        %8195 = vmatpush1.bf16.msra.mxu0 0
        %8196 = vmatprep.subr.bf16.mxu0 0
        %8197 = vmatpush1.bf16.msra.mxu0 0
        %8198 = vmatprep.subr.bf16.mxu0 0
        %8199 = vmatpush1.bf16.msra.mxu0 0
        %8200 = vmatprep.subr.bf16.mxu0 0
        %8201 = vmatpush1.bf16.msra.mxu0 0
        %8202 = vmatprep.subr.bf16.mxu0 0
        %8203 = vmatpush1.bf16.msra.mxu0 0
        %8204 = vmatprep.subr.bf16.mxu0 0
        %8205 = vmatpush1.bf16.msra.mxu0 0
        %8206 = vmatprep.subr.bf16.mxu0 0
        %8207 = vmatpush1.bf16.msra.mxu0 0
        %8208 = vmatprep.subr.bf16.mxu0 0
        %8209 = vmatpush1.bf16.msra.mxu0 0
        %8210 = vmatprep.subr.bf16.mxu0 0
        %8211 = vmatpush1.bf16.msra.mxu0 0
        %8212 = vmatprep.subr.bf16.mxu0 0
        %8213 = vmatpush1.bf16.msra.mxu0 0
        %8214 = vmatprep.subr.bf16.mxu0 0
        %8215 = vmatpush1.bf16.msra.mxu0 0
        %8216 = vmatprep.subr.bf16.mxu0 0
        %8217 = vmatpush1.bf16.msra.mxu0 0
        %8218 = vmatprep.subr.bf16.mxu0 0
        %8219 = vmatpush1.bf16.msra.mxu0 0
        %8220 = vmatprep.subr.bf16.mxu0 0
        %8221 = vmatpush1.bf16.msra.mxu0 0
        %8222 = vmatprep.mubr.bf16.mxu0 0
        %8223 = vmatmul.mubr.bf16.gmra.mrb[0].mxu0 %v8188
        %v8224 = vpop.f32.mrb[0].mxu0
        %v8225 = vadd.f32 %v8174, %v8224
        %v8226 = vpop.f32.mrb[0].mxu0
        %v8227 = vpop.f32.mrb[0].mxu0
        %v8228 = vpop.f32.mrb[0].mxu0
        %8229 = vdwg.mxu0
        %v8230 = vadd.f32 %v8085, %v8225
        %8231 = vst [vmem:[%s437] sm:$0x1] %v8230
      $region76: #{siamese_forward.1} parent=67 // pred_fallthru
        _
      %p8232 = scmp.lt.s32.totalorder %s27, 1
      %s8233 = scalar_select %p8232, %s27, 1
      %s8234 = scalar_lea.vmem %s12, %s8233
      // Predicated region
      $region77: #{siamese_forward.1} parent=67 // pred_check
        %p8235 = pneg %p312
      $region78: #{siamese_forward.1} parent=67 // pred_check_branch
        %8237 = sbr.rel (%p8235) target = $region80
      $region79: #{siamese_forward.1} parent=67 // pred_region
        _
      $region80: #{siamese_forward.1} parent=67 // pred_fallthru
        _
    $region68: #{siamese_forward.1} parent=5 // pred_fallthru
      _
    %p8238 = scmp.le.s32.totalorder 2, %s18
    // Predicated region
    $region81: #{siamese_forward.1} parent=5 // pred_check
      %p8239 = pneg %p8238
    $region82: #{siamese_forward.1} parent=5 // pred_check_branch
      %8241 = sbr.rel (%p8239) target = $region84
    $region83: #{siamese_forward.1} parent=5 // pred_region
      %s8242 = ssub.s32 %s18, 2
      // Predicated region
      $region85: #{siamese_forward.1} parent=83 // pred_check
        %p8243 = pneg %p318
      $region86: #{siamese_forward.1} parent=83 // pred_check_branch
        %8245 = sbr.rel (%p8243) target = $region88
      $region87: #{siamese_forward.1} parent=83 // pred_region
        %p8246 = scmp.lt.s32.totalorder %s29, 1
        %s8247 = scalar_select %p8246, %s29, 1
        %s8248 = scalar_lea.vmem %s12, %s8247
      $region88: #{siamese_forward.1} parent=83 // pred_fallthru
        _
    $region84: #{siamese_forward.1} parent=5 // pred_fallthru
      _
  $region6: #{siamese_forward.1} parent=0 // loop_footer
    %s22 = sadd.s32 1, %s18
  $region7: #{siamese_forward.1} parent=0 // loop_footer_branch
    %17 = sbr.rel target = $region3
  $region8: #{siamese_forward.1} parent=0 // loop_exit
    _

</llo_original>
